<compile_context>
chip_gen: v7x
topology: tpu7x:2x2x1
jax: 0.10.0
libtpu: 0.0.40
codegen_flags: <defaults>
</compile_context>

<pallas_src>
import functools

import numpy as np

import jax
import jax.numpy as jnp
from jax.experimental import pallas as pl
from jax.experimental.pallas import tpu as pltpu


# ----------------------------- fused Pallas kernel ---------------------------

def _autoencoder_kernel(x_ref, r_ref, c_ref, b_ref, o_ref, *, stages, group):
    # Unrolled loop over the images of this grid step; the per-image pipelines
    # are independent, so the scheduler can interleave their MXU pushes.
    for g in range(group):
        h = x_ref[g]                                   # (Cin*Hin, Win) for image g
        for st in stages:
            kind, k = st["kind"], st["k"]
            ro, rr, rc = st["r_off"], st["r_rows"], st["r_cols"]
            co, cr, wout = st["c_off"], st["c_rows"], st["wout"]
            if kind == "pool":
                # one fused column-tap matmul, k row-tap matmuls, VPU max tree
                ccat = c_ref[co:co + cr, 0:k * wout]
                y = jnp.dot(h, ccat, preferred_element_type=jnp.float32)
                out = None
                for dy in range(k):
                    t = r_ref[ro + dy * rr:ro + (dy + 1) * rr, 0:rc]
                    p = jnp.dot(t, y, preferred_element_type=jnp.float32)
                    for dx in range(k):
                        blk = p[:, dx * wout:(dx + 1) * wout]
                        out = blk if out is None else jnp.maximum(out, blk)
                h = out
            else:
                if kind == "conv_col_first":           # A_j @ (X @ C_cat[:, j])
                    ccat = c_ref[co:co + cr, 0:k * wout]
                    y = jnp.dot(h, ccat, preferred_element_type=jnp.float32)
                    acc = None
                    for j in range(k):
                        a = r_ref[ro + j * rr:ro + (j + 1) * rr, 0:rc]
                        t = jnp.dot(a, y[:, j * wout:(j + 1) * wout],
                                    preferred_element_type=jnp.float32)
                        acc = t if acc is None else acc + t
                else:                                  # (A_vcat @ X) @ C_j  (row-first)
                    a = r_ref[ro:ro + k * rr, 0:rc]
                    z = jnp.dot(a, h, preferred_element_type=jnp.float32)
                    ccat = c_ref[co:co + cr, 0:k * wout]
                    acc = None
                    for j in range(k):
                        t = jnp.dot(z[j * rr:(j + 1) * rr, :],
                                    ccat[:, j * wout:(j + 1) * wout],
                                    preferred_element_type=jnp.float32)
                        acc = t if acc is None else acc + t
                acc = acc + b_ref[st["b_off"]:st["b_off"] + rr, 0:1]   # lane broadcast
                if st["act"] == "relu":
                    acc = jnp.maximum(acc, 0.0)
                else:
                    acc = jnp.tanh(acc)
                h = acc
        o_ref[g] = h.astype(o_ref.dtype)


def autoencoder_forward(x, operands, stages, out_chw, group_size=8):
    n, c, h, w = x.shape
    x3d = x.reshape(n, c * h, w)                  # per image: rows = c*H + h, lanes = w
    r_slab, c_slab, b_slab = operands
    out_c, (out_h, out_w) = out_chw

    g = min(n, group_size)                        # images per grid step
    while n % g:
        g -= 1

    out3d = pl.pallas_call(
        functools.partial(_autoencoder_kernel, stages=stages, group=g),
        grid=(n // g,),
        out_shape=jax.ShapeDtypeStruct((n, out_c * out_h, out_w), jnp.float32),
        in_specs=[
            pl.BlockSpec((g, c * h, w), lambda i: (i, 0, 0)),
            pl.BlockSpec(r_slab.shape, lambda i: (0, 0)),   # resident, DMA'd once
            pl.BlockSpec(c_slab.shape, lambda i: (0, 0)),
            pl.BlockSpec(b_slab.shape, lambda i: (0, 0)),
        ],
        out_specs=pl.BlockSpec((g, out_c * out_h, out_w), lambda i: (i, 0, 0)),
        compiler_params=pltpu.CompilerParams(
            dimension_semantics=("parallel",)),   # image groups shard over v7x TCs
    )(x3d, r_slab, c_slab, b_slab)
    return out3d.reshape(n, out_c, out_h, out_w)


# --------------------- operand (structure matrix) prep -----------------------
# Runs once, in numpy, outside jit.

def _tap_maps(in_size, out_size, k, stride, padding, transposed):
    """m[t, a, o] = 1 iff input coord a feeds output coord o via kernel tap t."""
    maps = np.zeros((k, in_size, out_size), np.float32)
    for t in range(k):
        for o in range(out_size):
            if transposed:                      # conv_transpose: o = s*a + t - p
                num = o + padding - t
                if num % stride != 0:
                    continue
                a = num // stride
            else:                               # conv: a = s*o + t - p
                a = stride * o + t - padding
            if 0 <= a < in_size:
                maps[t, a, o] = 1.0
    return maps


def _pad_rows(a, mult=8):
    pad = (-a.shape[0]) % mult
    return np.pad(a, ((0, pad), (0, 0))) if pad else a


class _Slab:
    """Packs many small constant matrices into one 2-D slab (one DMA)."""

    def __init__(self):
        self._blocks, self._off = [], 0

    def add(self, block):
        block = _pad_rows(np.asarray(block, np.float32))
        off = self._off
        self._blocks.append(block)
        self._off += block.shape[0]
        return off

    def finalize(self):
        width = max(b.shape[1] for b in self._blocks)
        return np.concatenate(
            [np.pad(b, ((0, 0), (0, width - b.shape[1]))) for b in self._blocks],
            axis=0)


def _conv_stage(r_slab, c_slab, b_slab, weight, bias, chw, stride, padding,
                transposed, act):
    c_in, h_in, w_in = chw
    w = np.asarray(weight, np.float32)
    # torch Conv2d: (Cout, Cin, kh, kw); ConvTranspose2d: (Cin, Cout, kh, kw)
    w_eff = w.transpose(1, 0, 2, 3) if transposed else w
    cout, cin, kh, kw = w_eff.shape
    assert cin == c_in
    if transposed:
        h_out = (h_in - 1) * stride - 2 * padding + kh
        w_out = (w_in - 1) * stride - 2 * padding + kw
    else:
        h_out = (h_in + 2 * padding - kh) // stride + 1
        w_out = (w_in + 2 * padding - kw) // stride + 1
    trow = _tap_maps(h_in, h_out, kh, stride, padding, transposed)   # (kh, Hin, Hout)
    tcol = _tap_maps(w_in, w_out, kw, stride, padding, transposed)   # (kw, Win, Wout)

    # Row operand: A_j[(o,oy),(c,h)] = sum_i w_eff[o,c,i,j]*trow[i,h,oy], stacked over j.
    a = np.einsum("ocij,ihy->joych", w_eff, trow)
    r_block = a.reshape(kw * cout * h_out, cin * h_in)
    # Column operand: per-image width-tap maps concatenated over j (no batch kron).
    c_block = np.concatenate(list(tcol), axis=1)                     # (Win, kw*Wout)
    # Bias as a single column; broadcast over lanes happens in-kernel (VPU).
    b_block = np.repeat(np.asarray(bias, np.float32), h_out)[:, None]

    rr, rc = cout * h_out, cin * h_in
    # Contraction order: A_j @ (X @ C_j)  vs  (A_vcat @ X) @ C_j -- fewer MACs wins.
    macs_col_first = rc * w_in * kw * w_out + kw * rr * rc * w_out
    macs_row_first = kw * rr * rc * w_in + kw * rr * w_in * w_out
    kind = "conv_col_first" if macs_col_first <= macs_row_first else "conv_row_first"

    stage = dict(kind=kind, k=kw, act=act,
                 r_off=r_slab.add(r_block), r_rows=rr, r_cols=rc,
                 c_off=c_slab.add(c_block), c_rows=w_in, wout=w_out,
                 b_off=b_slab.add(b_block))
    return stage, (cout, h_out, w_out)


def _pool_stage(r_slab, c_slab, chw, k, stride):
    c, h_in, w_in = chw
    h_out = (h_in - k) // stride + 1
    w_out = (w_in - k) // stride + 1
    trow = _tap_maps(h_in, h_out, k, stride, 0, False)
    tcol = _tap_maps(w_in, w_out, k, stride, 0, False)
    eye_c = np.eye(c, dtype=np.float32)
    r_block = np.concatenate([np.kron(eye_c, trow[d].T) for d in range(k)], axis=0)
    c_block = np.concatenate(list(tcol), axis=1)                     # (Win, k*Wout)
    stage = dict(kind="pool", k=k, act=None,
                 r_off=r_slab.add(r_block), r_rows=c * h_out, r_cols=c * h_in,
                 c_off=c_slab.add(c_block), c_rows=w_in, wout=w_out, b_off=0)
    return stage, (c, h_out, w_out)


def prepare_operands(params, in_chw=(1, 28, 28)):
    r_slab, c_slab, b_slab = _Slab(), _Slab(), _Slab()
    stages = []
    chw = in_chw
    st, chw = _conv_stage(r_slab, c_slab, b_slab, params["enc1_w"], params["enc1_b"],
                          chw, 3, 1, False, "relu"); stages.append(st)
    st, chw = _pool_stage(r_slab, c_slab, chw, 2, 2); stages.append(st)
    st, chw = _conv_stage(r_slab, c_slab, b_slab, params["enc2_w"], params["enc2_b"],
                          chw, 2, 1, False, "relu"); stages.append(st)
    st, chw = _pool_stage(r_slab, c_slab, chw, 2, 1); stages.append(st)
    st, chw = _conv_stage(r_slab, c_slab, b_slab, params["dec1_w"], params["dec1_b"],
                          chw, 2, 0, True, "relu"); stages.append(st)
    st, chw = _conv_stage(r_slab, c_slab, b_slab, params["dec2_w"], params["dec2_b"],
                          chw, 3, 1, True, "relu"); stages.append(st)
    st, chw = _conv_stage(r_slab, c_slab, b_slab, params["dec3_w"], params["dec3_b"],
                          chw, 2, 1, True, "tanh"); stages.append(st)
    operands = tuple(jnp.asarray(s.finalize()) for s in (r_slab, c_slab, b_slab))
    out_chw = (chw[0], (chw[1], chw[2]))
    return operands, tuple(stages), out_chw


# ------------------------------ parameters -----------------------------------

def init_params(key):
    def uinit(k, shape, fan_in):
        bound = 1.0 / (fan_in ** 0.5)
        return jax.random.uniform(k, shape, jnp.float32, -bound, bound)

    ks = jax.random.split(key, 10)
    p = {}
    p["enc1_w"] = uinit(ks[0], (16, 1, 3, 3), 1 * 3 * 3)
    p["enc1_b"] = uinit(ks[1], (16,), 1 * 3 * 3)
    p["enc2_w"] = uinit(ks[2], (8, 16, 3, 3), 16 * 3 * 3)
    p["enc2_b"] = uinit(ks[3], (8,), 16 * 3 * 3)
    p["dec1_w"] = uinit(ks[4], (8, 16, 3, 3), 16 * 3 * 3)
    p["dec1_b"] = uinit(ks[5], (16,), 16 * 3 * 3)
    p["dec2_w"] = uinit(ks[6], (16, 8, 5, 5), 8 * 5 * 5)
    p["dec2_b"] = uinit(ks[7], (8,), 8 * 5 * 5)
    p["dec3_w"] = uinit(ks[8], (8, 1, 2, 2), 1 * 2 * 2)
    p["dec3_b"] = uinit(ks[9], (1,), 1 * 2 * 2)
    return p


# ---------------------- pure-XLA reference (validation) ----------------------

def _ref_conv2d(x, w, b, stride, padding):
    out = jax.lax.conv_general_dilated(
        x, w, window_strides=(stride, stride),
        padding=[(padding, padding), (padding, padding)],
        dimension_numbers=("NCHW", "OIHW", "NCHW"),
        precision=jax.lax.Precision.HIGHEST)
    return out + b[None, :, None, None]


def _ref_conv_transpose2d(x, w, b, stride, padding):
    k = w.shape[2]
    w_conv = jnp.flip(w, (2, 3)).transpose(1, 0, 2, 3)   # (Cout, Cin, kh, kw)
    out = jax.lax.conv_general_dilated(
        x, w_conv, window_strides=(1, 1),
        padding=[(k - 1 - padding, k - 1 - padding)] * 2,
        lhs_dilation=(stride, stride),
        dimension_numbers=("NCHW", "OIHW", "NCHW"),
        precision=jax.lax.Precision.HIGHEST)
    return out + b[None, :, None, None]


def _ref_maxpool(x, k, stride):
    return jax.lax.reduce_window(x, -jnp.inf, jax.lax.max,
                                 (1, 1, k, k), (1, 1, stride, stride), "VALID")


def reference_forward(params, x):
    x = jnp.maximum(_ref_conv2d(x, params["enc1_w"], params["enc1_b"], 3, 1), 0.0)
    x = _ref_maxpool(x, 2, 2)
    x = jnp.maximum(_ref_conv2d(x, params["enc2_w"], params["enc2_b"], 2, 1), 0.0)
    x = _ref_maxpool(x, 2, 1)
    x = jnp.maximum(_ref_conv_transpose2d(x, params["dec1_w"], params["dec1_b"], 2, 0), 0.0)
    x = jnp.maximum(_ref_conv_transpose2d(x, params["dec2_w"], params["dec2_b"], 3, 1), 0.0)
    x = jnp.tanh(_ref_conv_transpose2d(x, params["dec3_w"], params["dec3_b"], 2, 1))
    return x


# ----------------------------------- main -------------------------------------

if __name__ == "__main__":
    key = jax.random.PRNGKey(0)
    pkey, xkey = jax.random.split(key)
    params = init_params(pkey)
    # MNIST-style input implied by the module: N=2, C=1, 28x28 (NCHW)
    x = jax.random.normal(xkey, (2, 1, 28, 28), jnp.float32)

    operands, stages, out_chw = prepare_operands(params, in_chw=(1, 28, 28))

    fwd = jax.jit(lambda xx, ops: autoencoder_forward(xx, ops, stages, out_chw))
    y = jax.block_until_ready(fwd(x, operands))

    assert y.shape == (2, 1, 28, 28), y.shape
    assert bool(jnp.all(jnp.isfinite(y)))
    assert bool(jnp.all(jnp.abs(y) <= 1.0 + 1e-6))   # tanh output range

    # numerical check against a pure-XLA reference of the PyTorch module
    y_ref = jax.jit(reference_forward)(params, x)
    max_err = float(jnp.max(jnp.abs(y - y_ref)))
    assert max_err < 5e-2, f"kernel mismatch vs reference, max abs err={max_err}"

    print("KERNEL_OK")
</pallas_src>

<mosaic_0001>
module attributes {stable_mosaic.version = 11 : i64} {
  func.func @_autoencoder_kernel(%arg0: i32, %arg1: memref<2x28x28xf32, #tpu.memory_space<vmem>>, %arg2: memref<1640x160xf32, #tpu.memory_space<vmem>>, %arg3: memref<96x75xf32, #tpu.memory_space<vmem>>, %arg4: memref<416x1xf32, #tpu.memory_space<vmem>>, %arg5: memref<2x28x28xf32, #tpu.memory_space<vmem>>) attributes {dimension_semantics = [#tpu.dimension_semantics<parallel>], iteration_bounds = array<i64: 1>, scalar_prefetch = 0 : i64, scratch_operands = 0 : i64, tpu.core_type = #tpu.core_type<tc>, window_params = [{transform_indices = @transform_0, window_bounds = array<i64: 2, 28, 28>}, {pipeline_mode = #tpu.pipeline_mode<synchronous>, transform_indices = @transform_1, window_bounds = array<i64: 1640, 160>}, {pipeline_mode = #tpu.pipeline_mode<synchronous>, transform_indices = @transform_2, window_bounds = array<i64: 96, 75>}, {pipeline_mode = #tpu.pipeline_mode<synchronous>, transform_indices = @transform_3, window_bounds = array<i64: 416, 1>}, {transform_indices = @transform_4, window_bounds = array<i64: 2, 28, 28>}]} {
    %c0 = arith.constant 0 : index
    %c0_0 = arith.constant 0 : index
    %c0_1 = arith.constant 0 : index
    %0 = vector.load %arg1[%c0, %c0_0, %c0_1] : memref<2x28x28xf32, #tpu.memory_space<vmem>>, vector<1x28x28xf32>
    %1 = vector.shape_cast %0 : vector<1x28x28xf32> to vector<28x28xf32>
    %c0_2 = arith.constant 0 : index
    %c0_3 = arith.constant 0 : index
    %2 = vector.load %arg3[%c0_2, %c0_3] : memref<96x75xf32, #tpu.memory_space<vmem>>, vector<28x30xf32>
    %cst = arith.constant dense<0.000000e+00> : vector<28x30xf32>
    %3 = tpu.matmul %1, %2, %cst {dimension_numbers = #tpu.dot_dimension_numbers<[1], [0], [0], [1], [0, 0, 1, 1], [], []>} : vector<28x28xf32>, vector<28x30xf32>, vector<28x30xf32> -> vector<28x30xf32>
    %c0_4 = arith.constant 0 : index
    %c0_5 = arith.constant 0 : index
    %4 = vector.load %arg2[%c0_4, %c0_5] : memref<1640x160xf32, #tpu.memory_space<vmem>>, vector<160x28xf32>
    %5 = vector.extract_strided_slice %3 {offsets = [0, 0], sizes = [28, 10], strides = [1, 1]} : vector<28x30xf32> to vector<28x10xf32>
    %cst_6 = arith.constant dense<0.000000e+00> : vector<160x10xf32>
    %6 = tpu.matmul %4, %5, %cst_6 {dimension_numbers = #tpu.dot_dimension_numbers<[1], [0], [0], [1], [0, 0, 1, 1], [], []>} : vector<160x28xf32>, vector<28x10xf32>, vector<160x10xf32> -> vector<160x10xf32>
    %c160 = arith.constant 160 : index
    %c0_7 = arith.constant 0 : index
    %7 = vector.load %arg2[%c160, %c0_7] : memref<1640x160xf32, #tpu.memory_space<vmem>>, vector<160x28xf32>
    %8 = vector.extract_strided_slice %3 {offsets = [0, 10], sizes = [28, 10], strides = [1, 1]} : vector<28x30xf32> to vector<28x10xf32>
    %cst_8 = arith.constant dense<0.000000e+00> : vector<160x10xf32>
    %9 = tpu.matmul %7, %8, %cst_8 {dimension_numbers = #tpu.dot_dimension_numbers<[1], [0], [0], [1], [0, 0, 1, 1], [], []>} : vector<160x28xf32>, vector<28x10xf32>, vector<160x10xf32> -> vector<160x10xf32>
    %10 = arith.addf %6, %9 : vector<160x10xf32>
    %c320 = arith.constant 320 : index
    %c0_9 = arith.constant 0 : index
    %11 = vector.load %arg2[%c320, %c0_9] : memref<1640x160xf32, #tpu.memory_space<vmem>>, vector<160x28xf32>
    %12 = vector.extract_strided_slice %3 {offsets = [0, 20], sizes = [28, 10], strides = [1, 1]} : vector<28x30xf32> to vector<28x10xf32>
    %cst_10 = arith.constant dense<0.000000e+00> : vector<160x10xf32>
    %13 = tpu.matmul %11, %12, %cst_10 {dimension_numbers = #tpu.dot_dimension_numbers<[1], [0], [0], [1], [0, 0, 1, 1], [], []>} : vector<160x28xf32>, vector<28x10xf32>, vector<160x10xf32> -> vector<160x10xf32>
    %14 = arith.addf %10, %13 : vector<160x10xf32>
    %c0_11 = arith.constant 0 : index
    %c0_12 = arith.constant 0 : index
    %15 = vector.load %arg4[%c0_11, %c0_12] : memref<416x1xf32, #tpu.memory_space<vmem>>, vector<160x1xf32>
    %16 = vector.broadcast %15 : vector<160x1xf32> to vector<160x10xf32>
    %17 = arith.addf %14, %16 : vector<160x10xf32>
    %cst_13 = arith.constant 0.000000e+00 : f32
    %18 = vector.broadcast %cst_13 : f32 to vector<160x10xf32>
    %19 = arith.maximumf %17, %18 : vector<160x10xf32>
    %c32 = arith.constant 32 : index
    %c0_14 = arith.constant 0 : index
    %20 = vector.load %arg3[%c32, %c0_14] : memref<96x75xf32, #tpu.memory_space<vmem>>, vector<10x10xf32>
    %cst_15 = arith.constant dense<0.000000e+00> : vector<160x10xf32>
    %21 = tpu.matmul %19, %20, %cst_15 {dimension_numbers = #tpu.dot_dimension_numbers<[1], [0], [0], [1], [0, 0, 1, 1], [], []>} : vector<160x10xf32>, vector<10x10xf32>, vector<160x10xf32> -> vector<160x10xf32>
    %c480 = arith.constant 480 : index
    %c0_16 = arith.constant 0 : index
    %22 = vector.load %arg2[%c480, %c0_16] : memref<1640x160xf32, #tpu.memory_space<vmem>>, vector<80x160xf32>
    %cst_17 = arith.constant dense<0.000000e+00> : vector<80x10xf32>
    %23 = tpu.matmul %22, %21, %cst_17 {dimension_numbers = #tpu.dot_dimension_numbers<[1], [0], [0], [1], [0, 0, 1, 1], [], []>} : vector<80x160xf32>, vector<160x10xf32>, vector<80x10xf32> -> vector<80x10xf32>
    %24 = vector.extract_strided_slice %23 {offsets = [0, 0], sizes = [80, 5], strides = [1, 1]} : vector<80x10xf32> to vector<80x5xf32>
    %25 = vector.extract_strided_slice %23 {offsets = [0, 5], sizes = [80, 5], strides = [1, 1]} : vector<80x10xf32> to vector<80x5xf32>
    %26 = arith.maximumf %24, %25 : vector<80x5xf32>
    %c560 = arith.constant 560 : index
    %c0_18 = arith.constant 0 : index
    %27 = vector.load %arg2[%c560, %c0_18] : memref<1640x160xf32, #tpu.memory_space<vmem>>, vector<80x160xf32>
    %cst_19 = arith.constant dense<0.000000e+00> : vector<80x10xf32>
    %28 = tpu.matmul %27, %21, %cst_19 {dimension_numbers = #tpu.dot_dimension_numbers<[1], [0], [0], [1], [0, 0, 1, 1], [], []>} : vector<80x160xf32>, vector<160x10xf32>, vector<80x10xf32> -> vector<80x10xf32>
    %29 = vector.extract_strided_slice %28 {offsets = [0, 0], sizes = [80, 5], strides = [1, 1]} : vector<80x10xf32> to vector<80x5xf32>
    %30 = arith.maximumf %26, %29 : vector<80x5xf32>
    %31 = vector.extract_strided_slice %28 {offsets = [0, 5], sizes = [80, 5], strides = [1, 1]} : vector<80x10xf32> to vector<80x5xf32>
    %32 = arith.maximumf %30, %31 : vector<80x5xf32>
    %c48 = arith.constant 48 : index
    %c0_20 = arith.constant 0 : index
    %33 = vector.load %arg3[%c48, %c0_20] : memref<96x75xf32, #tpu.memory_space<vmem>>, vector<5x9xf32>
    %cst_21 = arith.constant dense<0.000000e+00> : vector<80x9xf32>
    %34 = tpu.matmul %32, %33, %cst_21 {dimension_numbers = #tpu.dot_dimension_numbers<[1], [0], [0], [1], [0, 0, 1, 1], [], []>} : vector<80x5xf32>, vector<5x9xf32>, vector<80x9xf32> -> vector<80x9xf32>
    %c640 = arith.constant 640 : index
    %c0_22 = arith.constant 0 : index
    %35 = vector.load %arg2[%c640, %c0_22] : memref<1640x160xf32, #tpu.memory_space<vmem>>, vector<24x80xf32>
    %36 = vector.extract_strided_slice %34 {offsets = [0, 0], sizes = [80, 3], strides = [1, 1]} : vector<80x9xf32> to vector<80x3xf32>
    %cst_23 = arith.constant dense<0.000000e+00> : vector<24x3xf32>
    %37 = tpu.matmul %35, %36, %cst_23 {dimension_numbers = #tpu.dot_dimension_numbers<[1], [0], [0], [1], [0, 0, 1, 1], [], []>} : vector<24x80xf32>, vector<80x3xf32>, vector<24x3xf32> -> vector<24x3xf32>
    %c664 = arith.constant 664 : index
    %c0_24 = arith.constant 0 : index
    %38 = vector.load %arg2[%c664, %c0_24] : memref<1640x160xf32, #tpu.memory_space<vmem>>, vector<24x80xf32>
    %39 = vector.extract_strided_slice %34 {offsets = [0, 3], sizes = [80, 3], strides = [1, 1]} : vector<80x9xf32> to vector<80x3xf32>
    %cst_25 = arith.constant dense<0.000000e+00> : vector<24x3xf32>
    %40 = tpu.matmul %38, %39, %cst_25 {dimension_numbers = #tpu.dot_dimension_numbers<[1], [0], [0], [1], [0, 0, 1, 1], [], []>} : vector<24x80xf32>, vector<80x3xf32>, vector<24x3xf32> -> vector<24x3xf32>
    %41 = arith.addf %37, %40 : vector<24x3xf32>
    %c688 = arith.constant 688 : index
    %c0_26 = arith.constant 0 : index
    %42 = vector.load %arg2[%c688, %c0_26] : memref<1640x160xf32, #tpu.memory_space<vmem>>, vector<24x80xf32>
    %43 = vector.extract_strided_slice %34 {offsets = [0, 6], sizes = [80, 3], strides = [1, 1]} : vector<80x9xf32> to vector<80x3xf32>
    %cst_27 = arith.constant dense<0.000000e+00> : vector<24x3xf32>
    %44 = tpu.matmul %42, %43, %cst_27 {dimension_numbers = #tpu.dot_dimension_numbers<[1], [0], [0], [1], [0, 0, 1, 1], [], []>} : vector<24x80xf32>, vector<80x3xf32>, vector<24x3xf32> -> vector<24x3xf32>
    %45 = arith.addf %41, %44 : vector<24x3xf32>
    %c160_28 = arith.constant 160 : index
    %c0_29 = arith.constant 0 : index
    %46 = vector.load %arg4[%c160_28, %c0_29] : memref<416x1xf32, #tpu.memory_space<vmem>>, vector<24x1xf32>
    %47 = vector.broadcast %46 : vector<24x1xf32> to vector<24x3xf32>
    %48 = arith.addf %45, %47 : vector<24x3xf32>
    %cst_30 = arith.constant 0.000000e+00 : f32
    %49 = vector.broadcast %cst_30 : f32 to vector<24x3xf32>
    %50 = arith.maximumf %48, %49 : vector<24x3xf32>
    %c56 = arith.constant 56 : index
    %c0_31 = arith.constant 0 : index
    %51 = vector.load %arg3[%c56, %c0_31] : memref<96x75xf32, #tpu.memory_space<vmem>>, vector<3x4xf32>
    %cst_32 = arith.constant dense<0.000000e+00> : vector<24x4xf32>
    %52 = tpu.matmul %50, %51, %cst_32 {dimension_numbers = #tpu.dot_dimension_numbers<[1], [0], [0], [1], [0, 0, 1, 1], [], []>} : vector<24x3xf32>, vector<3x4xf32>, vector<24x4xf32> -> vector<24x4xf32>
    %c712 = arith.constant 712 : index
    %c0_33 = arith.constant 0 : index
    %53 = vector.load %arg2[%c712, %c0_33] : memref<1640x160xf32, #tpu.memory_space<vmem>>, vector<16x24xf32>
    %cst_34 = arith.constant dense<0.000000e+00> : vector<16x4xf32>
    %54 = tpu.matmul %53, %52, %cst_34 {dimension_numbers = #tpu.dot_dimension_numbers<[1], [0], [0], [1], [0, 0, 1, 1], [], []>} : vector<16x24xf32>, vector<24x4xf32>, vector<16x4xf32> -> vector<16x4xf32>
    %55 = vector.extract_strided_slice %54 {offsets = [0, 0], sizes = [16, 2], strides = [1, 1]} : vector<16x4xf32> to vector<16x2xf32>
    %56 = vector.extract_strided_slice %54 {offsets = [0, 2], sizes = [16, 2], strides = [1, 1]} : vector<16x4xf32> to vector<16x2xf32>
    %57 = arith.maximumf %55, %56 : vector<16x2xf32>
    %c728 = arith.constant 728 : index
    %c0_35 = arith.constant 0 : index
    %58 = vector.load %arg2[%c728, %c0_35] : memref<1640x160xf32, #tpu.memory_space<vmem>>, vector<16x24xf32>
    %cst_36 = arith.constant dense<0.000000e+00> : vector<16x4xf32>
    %59 = tpu.matmul %58, %52, %cst_36 {dimension_numbers = #tpu.dot_dimension_numbers<[1], [0], [0], [1], [0, 0, 1, 1], [], []>} : vector<16x24xf32>, vector<24x4xf32>, vector<16x4xf32> -> vector<16x4xf32>
    %60 = vector.extract_strided_slice %59 {offsets = [0, 0], sizes = [16, 2], strides = [1, 1]} : vector<16x4xf32> to vector<16x2xf32>
    %61 = arith.maximumf %57, %60 : vector<16x2xf32>
    %62 = vector.extract_strided_slice %59 {offsets = [0, 2], sizes = [16, 2], strides = [1, 1]} : vector<16x4xf32> to vector<16x2xf32>
    %63 = arith.maximumf %61, %62 : vector<16x2xf32>
    %c744 = arith.constant 744 : index
    %c0_37 = arith.constant 0 : index
    %64 = vector.load %arg2[%c744, %c0_37] : memref<1640x160xf32, #tpu.memory_space<vmem>>, vector<240x16xf32>
    %cst_38 = arith.constant dense<0.000000e+00> : vector<240x2xf32>
    %65 = tpu.matmul %64, %63, %cst_38 {dimension_numbers = #tpu.dot_dimension_numbers<[1], [0], [0], [1], [0, 0, 1, 1], [], []>} : vector<240x16xf32>, vector<16x2xf32>, vector<240x2xf32> -> vector<240x2xf32>
    %c64 = arith.constant 64 : index
    %c0_39 = arith.constant 0 : index
    %66 = vector.load %arg3[%c64, %c0_39] : memref<96x75xf32, #tpu.memory_space<vmem>>, vector<2x15xf32>
    %67 = vector.extract_strided_slice %65 {offsets = [0, 0], sizes = [80, 2], strides = [1, 1]} : vector<240x2xf32> to vector<80x2xf32>
    %68 = vector.extract_strided_slice %66 {offsets = [0, 0], sizes = [2, 5], strides = [1, 1]} : vector<2x15xf32> to vector<2x5xf32>
    %cst_40 = arith.constant dense<0.000000e+00> : vector<80x5xf32>
    %69 = tpu.matmul %67, %68, %cst_40 {dimension_numbers = #tpu.dot_dimension_numbers<[1], [0], [0], [1], [0, 0, 1, 1], [], []>} : vector<80x2xf32>, vector<2x5xf32>, vector<80x5xf32> -> vector<80x5xf32>
    %70 = vector.extract_strided_slice %65 {offsets = [80, 0], sizes = [80, 2], strides = [1, 1]} : vector<240x2xf32> to vector<80x2xf32>
    %71 = vector.extract_strided_slice %66 {offsets = [0, 5], sizes = [2, 5], strides = [1, 1]} : vector<2x15xf32> to vector<2x5xf32>
    %cst_41 = arith.constant dense<0.000000e+00> : vector<80x5xf32>
    %72 = tpu.matmul %70, %71, %cst_41 {dimension_numbers = #tpu.dot_dimension_numbers<[1], [0], [0], [1], [0, 0, 1, 1], [], []>} : vector<80x2xf32>, vector<2x5xf32>, vector<80x5xf32> -> vector<80x5xf32>
    %73 = arith.addf %69, %72 : vector<80x5xf32>
    %74 = vector.extract_strided_slice %65 {offsets = [160, 0], sizes = [80, 2], strides = [1, 1]} : vector<240x2xf32> to vector<80x2xf32>
    %75 = vector.extract_strided_slice %66 {offsets = [0, 10], sizes = [2, 5], strides = [1, 1]} : vector<2x15xf32> to vector<2x5xf32>
    %cst_42 = arith.constant dense<0.000000e+00> : vector<80x5xf32>
    %76 = tpu.matmul %74, %75, %cst_42 {dimension_numbers = #tpu.dot_dimension_numbers<[1], [0], [0], [1], [0, 0, 1, 1], [], []>} : vector<80x2xf32>, vector<2x5xf32>, vector<80x5xf32> -> vector<80x5xf32>
    %77 = arith.addf %73, %76 : vector<80x5xf32>
    %c184 = arith.constant 184 : index
    %c0_43 = arith.constant 0 : index
    %78 = vector.load %arg4[%c184, %c0_43] : memref<416x1xf32, #tpu.memory_space<vmem>>, vector<80x1xf32>
    %79 = vector.broadcast %78 : vector<80x1xf32> to vector<80x5xf32>
    %80 = arith.addf %77, %79 : vector<80x5xf32>
    %cst_44 = arith.constant 0.000000e+00 : f32
    %81 = vector.broadcast %cst_44 : f32 to vector<80x5xf32>
    %82 = arith.maximumf %80, %81 : vector<80x5xf32>
    %c984 = arith.constant 984 : index
    %c0_45 = arith.constant 0 : index
    %83 = vector.load %arg2[%c984, %c0_45] : memref<1640x160xf32, #tpu.memory_space<vmem>>, vector<600x80xf32>
    %cst_46 = arith.constant dense<0.000000e+00> : vector<600x5xf32>
    %84 = tpu.matmul %83, %82, %cst_46 {dimension_numbers = #tpu.dot_dimension_numbers<[1], [0], [0], [1], [0, 0, 1, 1], [], []>} : vector<600x80xf32>, vector<80x5xf32>, vector<600x5xf32> -> vector<600x5xf32>
    %c72 = arith.constant 72 : index
    %c0_47 = arith.constant 0 : index
    %85 = vector.load %arg3[%c72, %c0_47] : memref<96x75xf32, #tpu.memory_space<vmem>>, vector<5x75xf32>
    %86 = vector.extract_strided_slice %84 {offsets = [0, 0], sizes = [120, 5], strides = [1, 1]} : vector<600x5xf32> to vector<120x5xf32>
    %87 = vector.extract_strided_slice %85 {offsets = [0, 0], sizes = [5, 15], strides = [1, 1]} : vector<5x75xf32> to vector<5x15xf32>
    %cst_48 = arith.constant dense<0.000000e+00> : vector<120x15xf32>
    %88 = tpu.matmul %86, %87, %cst_48 {dimension_numbers = #tpu.dot_dimension_numbers<[1], [0], [0], [1], [0, 0, 1, 1], [], []>} : vector<120x5xf32>, vector<5x15xf32>, vector<120x15xf32> -> vector<120x15xf32>
    %89 = vector.extract_strided_slice %84 {offsets = [120, 0], sizes = [120, 5], strides = [1, 1]} : vector<600x5xf32> to vector<120x5xf32>
    %90 = vector.extract_strided_slice %85 {offsets = [0, 15], sizes = [5, 15], strides = [1, 1]} : vector<5x75xf32> to vector<5x15xf32>
    %cst_49 = arith.constant dense<0.000000e+00> : vector<120x15xf32>
    %91 = tpu.matmul %89, %90, %cst_49 {dimension_numbers = #tpu.dot_dimension_numbers<[1], [0], [0], [1], [0, 0, 1, 1], [], []>} : vector<120x5xf32>, vector<5x15xf32>, vector<120x15xf32> -> vector<120x15xf32>
    %92 = arith.addf %88, %91 : vector<120x15xf32>
    %93 = vector.extract_strided_slice %84 {offsets = [240, 0], sizes = [120, 5], strides = [1, 1]} : vector<600x5xf32> to vector<120x5xf32>
    %94 = vector.extract_strided_slice %85 {offsets = [0, 30], sizes = [5, 15], strides = [1, 1]} : vector<5x75xf32> to vector<5x15xf32>
    %cst_50 = arith.constant dense<0.000000e+00> : vector<120x15xf32>
    %95 = tpu.matmul %93, %94, %cst_50 {dimension_numbers = #tpu.dot_dimension_numbers<[1], [0], [0], [1], [0, 0, 1, 1], [], []>} : vector<120x5xf32>, vector<5x15xf32>, vector<120x15xf32> -> vector<120x15xf32>
    %96 = arith.addf %92, %95 : vector<120x15xf32>
    %97 = vector.extract_strided_slice %84 {offsets = [360, 0], sizes = [120, 5], strides = [1, 1]} : vector<600x5xf32> to vector<120x5xf32>
    %98 = vector.extract_strided_slice %85 {offsets = [0, 45], sizes = [5, 15], strides = [1, 1]} : vector<5x75xf32> to vector<5x15xf32>
    %cst_51 = arith.constant dense<0.000000e+00> : vector<120x15xf32>
    %99 = tpu.matmul %97, %98, %cst_51 {dimension_numbers = #tpu.dot_dimension_numbers<[1], [0], [0], [1], [0, 0, 1, 1], [], []>} : vector<120x5xf32>, vector<5x15xf32>, vector<120x15xf32> -> vector<120x15xf32>
    %100 = arith.addf %96, %99 : vector<120x15xf32>
    %101 = vector.extract_strided_slice %84 {offsets = [480, 0], sizes = [120, 5], strides = [1, 1]} : vector<600x5xf32> to vector<120x5xf32>
    %102 = vector.extract_strided_slice %85 {offsets = [0, 60], sizes = [5, 15], strides = [1, 1]} : vector<5x75xf32> to vector<5x15xf32>
    %cst_52 = arith.constant dense<0.000000e+00> : vector<120x15xf32>
    %103 = tpu.matmul %101, %102, %cst_52 {dimension_numbers = #tpu.dot_dimension_numbers<[1], [0], [0], [1], [0, 0, 1, 1], [], []>} : vector<120x5xf32>, vector<5x15xf32>, vector<120x15xf32> -> vector<120x15xf32>
    %104 = arith.addf %100, %103 : vector<120x15xf32>
    %c264 = arith.constant 264 : index
    %c0_53 = arith.constant 0 : index
    %105 = vector.load %arg4[%c264, %c0_53] : memref<416x1xf32, #tpu.memory_space<vmem>>, vector<120x1xf32>
    %106 = vector.broadcast %105 : vector<120x1xf32> to vector<120x15xf32>
    %107 = arith.addf %104, %106 : vector<120x15xf32>
    %cst_54 = arith.constant 0.000000e+00 : f32
    %108 = vector.broadcast %cst_54 : f32 to vector<120x15xf32>
    %109 = arith.maximumf %107, %108 : vector<120x15xf32>
    %c1584 = arith.constant 1584 : index
    %c0_55 = arith.constant 0 : index
    %110 = vector.load %arg2[%c1584, %c0_55] : memref<1640x160xf32, #tpu.memory_space<vmem>>, vector<56x120xf32>
    %cst_56 = arith.constant dense<0.000000e+00> : vector<56x15xf32>
    %111 = tpu.matmul %110, %109, %cst_56 {dimension_numbers = #tpu.dot_dimension_numbers<[1], [0], [0], [1], [0, 0, 1, 1], [], []>} : vector<56x120xf32>, vector<120x15xf32>, vector<56x15xf32> -> vector<56x15xf32>
    %c80 = arith.constant 80 : index
    %c0_57 = arith.constant 0 : index
    %112 = vector.load %arg3[%c80, %c0_57] : memref<96x75xf32, #tpu.memory_space<vmem>>, vector<15x56xf32>
    %113 = vector.extract_strided_slice %111 {offsets = [0, 0], sizes = [28, 15], strides = [1, 1]} : vector<56x15xf32> to vector<28x15xf32>
    %114 = vector.extract_strided_slice %112 {offsets = [0, 0], sizes = [15, 28], strides = [1, 1]} : vector<15x56xf32> to vector<15x28xf32>
    %cst_58 = arith.constant dense<0.000000e+00> : vector<28x28xf32>
    %115 = tpu.matmul %113, %114, %cst_58 {dimension_numbers = #tpu.dot_dimension_numbers<[1], [0], [0], [1], [0, 0, 1, 1], [], []>} : vector<28x15xf32>, vector<15x28xf32>, vector<28x28xf32> -> vector<28x28xf32>
    %116 = vector.extract_strided_slice %111 {offsets = [28, 0], sizes = [28, 15], strides = [1, 1]} : vector<56x15xf32> to vector<28x15xf32>
    %117 = vector.extract_strided_slice %112 {offsets = [0, 28], sizes = [15, 28], strides = [1, 1]} : vector<15x56xf32> to vector<15x28xf32>
    %cst_59 = arith.constant dense<0.000000e+00> : vector<28x28xf32>
    %118 = tpu.matmul %116, %117, %cst_59 {dimension_numbers = #tpu.dot_dimension_numbers<[1], [0], [0], [1], [0, 0, 1, 1], [], []>} : vector<28x15xf32>, vector<15x28xf32>, vector<28x28xf32> -> vector<28x28xf32>
    %119 = arith.addf %115, %118 : vector<28x28xf32>
    %c384 = arith.constant 384 : index
    %c0_60 = arith.constant 0 : index
    %120 = vector.load %arg4[%c384, %c0_60] : memref<416x1xf32, #tpu.memory_space<vmem>>, vector<28x1xf32>
    %121 = vector.broadcast %120 : vector<28x1xf32> to vector<28x28xf32>
    %122 = arith.addf %119, %121 : vector<28x28xf32>
    %123 = math.tanh %122 : vector<28x28xf32>
    %c0_61 = arith.constant 0 : index
    %c0_62 = arith.constant 0 : index
    %c0_63 = arith.constant 0 : index
    %124 = vector.load %arg5[%c0_61, %c0_62, %c0_63] : memref<2x28x28xf32, #tpu.memory_space<vmem>>, vector<1x28x28xf32>
    %125 = vector.shape_cast %124 : vector<1x28x28xf32> to vector<28x28xf32>
    %126 = vector.shape_cast %123 : vector<28x28xf32> to vector<1x28x28xf32>
    tpu.vector_store %arg5[%c0_61, %c0_62, %c0_63], %126 {strides = array<i32>} : memref<2x28x28xf32, #tpu.memory_space<vmem>>, vector<1x28x28xf32>,
    %c1 = arith.constant 1 : index
    %c0_64 = arith.constant 0 : index
    %c0_65 = arith.constant 0 : index
    %127 = vector.load %arg1[%c1, %c0_64, %c0_65] : memref<2x28x28xf32, #tpu.memory_space<vmem>>, vector<1x28x28xf32>
    %128 = vector.shape_cast %127 : vector<1x28x28xf32> to vector<28x28xf32>
    %c0_66 = arith.constant 0 : index
    %c0_67 = arith.constant 0 : index
    %129 = vector.load %arg3[%c0_66, %c0_67] : memref<96x75xf32, #tpu.memory_space<vmem>>, vector<28x30xf32>
    %cst_68 = arith.constant dense<0.000000e+00> : vector<28x30xf32>
    %130 = tpu.matmul %128, %129, %cst_68 {dimension_numbers = #tpu.dot_dimension_numbers<[1], [0], [0], [1], [0, 0, 1, 1], [], []>} : vector<28x28xf32>, vector<28x30xf32>, vector<28x30xf32> -> vector<28x30xf32>
    %c0_69 = arith.constant 0 : index
    %c0_70 = arith.constant 0 : index
    %131 = vector.load %arg2[%c0_69, %c0_70] : memref<1640x160xf32, #tpu.memory_space<vmem>>, vector<160x28xf32>
    %132 = vector.extract_strided_slice %130 {offsets = [0, 0], sizes = [28, 10], strides = [1, 1]} : vector<28x30xf32> to vector<28x10xf32>
    %cst_71 = arith.constant dense<0.000000e+00> : vector<160x10xf32>
    %133 = tpu.matmul %131, %132, %cst_71 {dimension_numbers = #tpu.dot_dimension_numbers<[1], [0], [0], [1], [0, 0, 1, 1], [], []>} : vector<160x28xf32>, vector<28x10xf32>, vector<160x10xf32> -> vector<160x10xf32>
    %c160_72 = arith.constant 160 : index
    %c0_73 = arith.constant 0 : index
    %134 = vector.load %arg2[%c160_72, %c0_73] : memref<1640x160xf32, #tpu.memory_space<vmem>>, vector<160x28xf32>
    %135 = vector.extract_strided_slice %130 {offsets = [0, 10], sizes = [28, 10], strides = [1, 1]} : vector<28x30xf32> to vector<28x10xf32>
    %cst_74 = arith.constant dense<0.000000e+00> : vector<160x10xf32>
    %136 = tpu.matmul %134, %135, %cst_74 {dimension_numbers = #tpu.dot_dimension_numbers<[1], [0], [0], [1], [0, 0, 1, 1], [], []>} : vector<160x28xf32>, vector<28x10xf32>, vector<160x10xf32> -> vector<160x10xf32>
    %137 = arith.addf %133, %136 : vector<160x10xf32>
    %c320_75 = arith.constant 320 : index
    %c0_76 = arith.constant 0 : index
    %138 = vector.load %arg2[%c320_75, %c0_76] : memref<1640x160xf32, #tpu.memory_space<vmem>>, vector<160x28xf32>
    %139 = vector.extract_strided_slice %130 {offsets = [0, 20], sizes = [28, 10], strides = [1, 1]} : vector<28x30xf32> to vector<28x10xf32>
    %cst_77 = arith.constant dense<0.000000e+00> : vector<160x10xf32>
    %140 = tpu.matmul %138, %139, %cst_77 {dimension_numbers = #tpu.dot_dimension_numbers<[1], [0], [0], [1], [0, 0, 1, 1], [], []>} : vector<160x28xf32>, vector<28x10xf32>, vector<160x10xf32> -> vector<160x10xf32>
    %141 = arith.addf %137, %140 : vector<160x10xf32>
    %c0_78 = arith.constant 0 : index
    %c0_79 = arith.constant 0 : index
    %142 = vector.load %arg4[%c0_78, %c0_79] : memref<416x1xf32, #tpu.memory_space<vmem>>, vector<160x1xf32>
    %143 = vector.broadcast %142 : vector<160x1xf32> to vector<160x10xf32>
    %144 = arith.addf %141, %143 : vector<160x10xf32>
    %cst_80 = arith.constant 0.000000e+00 : f32
    %145 = vector.broadcast %cst_80 : f32 to vector<160x10xf32>
    %146 = arith.maximumf %144, %145 : vector<160x10xf32>
    %c32_81 = arith.constant 32 : index
    %c0_82 = arith.constant 0 : index
    %147 = vector.load %arg3[%c32_81, %c0_82] : memref<96x75xf32, #tpu.memory_space<vmem>>, vector<10x10xf32>
    %cst_83 = arith.constant dense<0.000000e+00> : vector<160x10xf32>
    %148 = tpu.matmul %146, %147, %cst_83 {dimension_numbers = #tpu.dot_dimension_numbers<[1], [0], [0], [1], [0, 0, 1, 1], [], []>} : vector<160x10xf32>, vector<10x10xf32>, vector<160x10xf32> -> vector<160x10xf32>
    %c480_84 = arith.constant 480 : index
    %c0_85 = arith.constant 0 : index
    %149 = vector.load %arg2[%c480_84, %c0_85] : memref<1640x160xf32, #tpu.memory_space<vmem>>, vector<80x160xf32>
    %cst_86 = arith.constant dense<0.000000e+00> : vector<80x10xf32>
    %150 = tpu.matmul %149, %148, %cst_86 {dimension_numbers = #tpu.dot_dimension_numbers<[1], [0], [0], [1], [0, 0, 1, 1], [], []>} : vector<80x160xf32>, vector<160x10xf32>, vector<80x10xf32> -> vector<80x10xf32>
    %151 = vector.extract_strided_slice %150 {offsets = [0, 0], sizes = [80, 5], strides = [1, 1]} : vector<80x10xf32> to vector<80x5xf32>
    %152 = vector.extract_strided_slice %150 {offsets = [0, 5], sizes = [80, 5], strides = [1, 1]} : vector<80x10xf32> to vector<80x5xf32>
    %153 = arith.maximumf %151, %152 : vector<80x5xf32>
    %c560_87 = arith.constant 560 : index
    %c0_88 = arith.constant 0 : index
    %154 = vector.load %arg2[%c560_87, %c0_88] : memref<1640x160xf32, #tpu.memory_space<vmem>>, vector<80x160xf32>
    %cst_89 = arith.constant dense<0.000000e+00> : vector<80x10xf32>
    %155 = tpu.matmul %154, %148, %cst_89 {dimension_numbers = #tpu.dot_dimension_numbers<[1], [0], [0], [1], [0, 0, 1, 1], [], []>} : vector<80x160xf32>, vector<160x10xf32>, vector<80x10xf32> -> vector<80x10xf32>
    %156 = vector.extract_strided_slice %155 {offsets = [0, 0], sizes = [80, 5], strides = [1, 1]} : vector<80x10xf32> to vector<80x5xf32>
    %157 = arith.maximumf %153, %156 : vector<80x5xf32>
    %158 = vector.extract_strided_slice %155 {offsets = [0, 5], sizes = [80, 5], strides = [1, 1]} : vector<80x10xf32> to vector<80x5xf32>
    %159 = arith.maximumf %157, %158 : vector<80x5xf32>
    %c48_90 = arith.constant 48 : index
    %c0_91 = arith.constant 0 : index
    %160 = vector.load %arg3[%c48_90, %c0_91] : memref<96x75xf32, #tpu.memory_space<vmem>>, vector<5x9xf32>
    %cst_92 = arith.constant dense<0.000000e+00> : vector<80x9xf32>
    %161 = tpu.matmul %159, %160, %cst_92 {dimension_numbers = #tpu.dot_dimension_numbers<[1], [0], [0], [1], [0, 0, 1, 1], [], []>} : vector<80x5xf32>, vector<5x9xf32>, vector<80x9xf32> -> vector<80x9xf32>
    %c640_93 = arith.constant 640 : index
    %c0_94 = arith.constant 0 : index
    %162 = vector.load %arg2[%c640_93, %c0_94] : memref<1640x160xf32, #tpu.memory_space<vmem>>, vector<24x80xf32>
    %163 = vector.extract_strided_slice %161 {offsets = [0, 0], sizes = [80, 3], strides = [1, 1]} : vector<80x9xf32> to vector<80x3xf32>
    %cst_95 = arith.constant dense<0.000000e+00> : vector<24x3xf32>
    %164 = tpu.matmul %162, %163, %cst_95 {dimension_numbers = #tpu.dot_dimension_numbers<[1], [0], [0], [1], [0, 0, 1, 1], [], []>} : vector<24x80xf32>, vector<80x3xf32>, vector<24x3xf32> -> vector<24x3xf32>
    %c664_96 = arith.constant 664 : index
    %c0_97 = arith.constant 0 : index
    %165 = vector.load %arg2[%c664_96, %c0_97] : memref<1640x160xf32, #tpu.memory_space<vmem>>, vector<24x80xf32>
    %166 = vector.extract_strided_slice %161 {offsets = [0, 3], sizes = [80, 3], strides = [1, 1]} : vector<80x9xf32> to vector<80x3xf32>
    %cst_98 = arith.constant dense<0.000000e+00> : vector<24x3xf32>
    %167 = tpu.matmul %165, %166, %cst_98 {dimension_numbers = #tpu.dot_dimension_numbers<[1], [0], [0], [1], [0, 0, 1, 1], [], []>} : vector<24x80xf32>, vector<80x3xf32>, vector<24x3xf32> -> vector<24x3xf32>
    %168 = arith.addf %164, %167 : vector<24x3xf32>
    %c688_99 = arith.constant 688 : index
    %c0_100 = arith.constant 0 : index
    %169 = vector.load %arg2[%c688_99, %c0_100] : memref<1640x160xf32, #tpu.memory_space<vmem>>, vector<24x80xf32>
    %170 = vector.extract_strided_slice %161 {offsets = [0, 6], sizes = [80, 3], strides = [1, 1]} : vector<80x9xf32> to vector<80x3xf32>
    %cst_101 = arith.constant dense<0.000000e+00> : vector<24x3xf32>
    %171 = tpu.matmul %169, %170, %cst_101 {dimension_numbers = #tpu.dot_dimension_numbers<[1], [0], [0], [1], [0, 0, 1, 1], [], []>} : vector<24x80xf32>, vector<80x3xf32>, vector<24x3xf32> -> vector<24x3xf32>
    %172 = arith.addf %168, %171 : vector<24x3xf32>
    %c160_102 = arith.constant 160 : index
    %c0_103 = arith.constant 0 : index
    %173 = vector.load %arg4[%c160_102, %c0_103] : memref<416x1xf32, #tpu.memory_space<vmem>>, vector<24x1xf32>
    %174 = vector.broadcast %173 : vector<24x1xf32> to vector<24x3xf32>
    %175 = arith.addf %172, %174 : vector<24x3xf32>
    %cst_104 = arith.constant 0.000000e+00 : f32
    %176 = vector.broadcast %cst_104 : f32 to vector<24x3xf32>
    %177 = arith.maximumf %175, %176 : vector<24x3xf32>
    %c56_105 = arith.constant 56 : index
    %c0_106 = arith.constant 0 : index
    %178 = vector.load %arg3[%c56_105, %c0_106] : memref<96x75xf32, #tpu.memory_space<vmem>>, vector<3x4xf32>
    %cst_107 = arith.constant dense<0.000000e+00> : vector<24x4xf32>
    %179 = tpu.matmul %177, %178, %cst_107 {dimension_numbers = #tpu.dot_dimension_numbers<[1], [0], [0], [1], [0, 0, 1, 1], [], []>} : vector<24x3xf32>, vector<3x4xf32>, vector<24x4xf32> -> vector<24x4xf32>
    %c712_108 = arith.constant 712 : index
    %c0_109 = arith.constant 0 : index
    %180 = vector.load %arg2[%c712_108, %c0_109] : memref<1640x160xf32, #tpu.memory_space<vmem>>, vector<16x24xf32>
    %cst_110 = arith.constant dense<0.000000e+00> : vector<16x4xf32>
    %181 = tpu.matmul %180, %179, %cst_110 {dimension_numbers = #tpu.dot_dimension_numbers<[1], [0], [0], [1], [0, 0, 1, 1], [], []>} : vector<16x24xf32>, vector<24x4xf32>, vector<16x4xf32> -> vector<16x4xf32>
    %182 = vector.extract_strided_slice %181 {offsets = [0, 0], sizes = [16, 2], strides = [1, 1]} : vector<16x4xf32> to vector<16x2xf32>
    %183 = vector.extract_strided_slice %181 {offsets = [0, 2], sizes = [16, 2], strides = [1, 1]} : vector<16x4xf32> to vector<16x2xf32>
    %184 = arith.maximumf %182, %183 : vector<16x2xf32>
    %c728_111 = arith.constant 728 : index
    %c0_112 = arith.constant 0 : index
    %185 = vector.load %arg2[%c728_111, %c0_112] : memref<1640x160xf32, #tpu.memory_space<vmem>>, vector<16x24xf32>
    %cst_113 = arith.constant dense<0.000000e+00> : vector<16x4xf32>
    %186 = tpu.matmul %185, %179, %cst_113 {dimension_numbers = #tpu.dot_dimension_numbers<[1], [0], [0], [1], [0, 0, 1, 1], [], []>} : vector<16x24xf32>, vector<24x4xf32>, vector<16x4xf32> -> vector<16x4xf32>
    %187 = vector.extract_strided_slice %186 {offsets = [0, 0], sizes = [16, 2], strides = [1, 1]} : vector<16x4xf32> to vector<16x2xf32>
    %188 = arith.maximumf %184, %187 : vector<16x2xf32>
    %189 = vector.extract_strided_slice %186 {offsets = [0, 2], sizes = [16, 2], strides = [1, 1]} : vector<16x4xf32> to vector<16x2xf32>
    %190 = arith.maximumf %188, %189 : vector<16x2xf32>
    %c744_114 = arith.constant 744 : index
    %c0_115 = arith.constant 0 : index
    %191 = vector.load %arg2[%c744_114, %c0_115] : memref<1640x160xf32, #tpu.memory_space<vmem>>, vector<240x16xf32>
    %cst_116 = arith.constant dense<0.000000e+00> : vector<240x2xf32>
    %192 = tpu.matmul %191, %190, %cst_116 {dimension_numbers = #tpu.dot_dimension_numbers<[1], [0], [0], [1], [0, 0, 1, 1], [], []>} : vector<240x16xf32>, vector<16x2xf32>, vector<240x2xf32> -> vector<240x2xf32>
    %c64_117 = arith.constant 64 : index
    %c0_118 = arith.constant 0 : index
    %193 = vector.load %arg3[%c64_117, %c0_118] : memref<96x75xf32, #tpu.memory_space<vmem>>, vector<2x15xf32>
    %194 = vector.extract_strided_slice %192 {offsets = [0, 0], sizes = [80, 2], strides = [1, 1]} : vector<240x2xf32> to vector<80x2xf32>
    %195 = vector.extract_strided_slice %193 {offsets = [0, 0], sizes = [2, 5], strides = [1, 1]} : vector<2x15xf32> to vector<2x5xf32>
    %cst_119 = arith.constant dense<0.000000e+00> : vector<80x5xf32>
    %196 = tpu.matmul %194, %195, %cst_119 {dimension_numbers = #tpu.dot_dimension_numbers<[1], [0], [0], [1], [0, 0, 1, 1], [], []>} : vector<80x2xf32>, vector<2x5xf32>, vector<80x5xf32> -> vector<80x5xf32>
    %197 = vector.extract_strided_slice %192 {offsets = [80, 0], sizes = [80, 2], strides = [1, 1]} : vector<240x2xf32> to vector<80x2xf32>
    %198 = vector.extract_strided_slice %193 {offsets = [0, 5], sizes = [2, 5], strides = [1, 1]} : vector<2x15xf32> to vector<2x5xf32>
    %cst_120 = arith.constant dense<0.000000e+00> : vector<80x5xf32>
    %199 = tpu.matmul %197, %198, %cst_120 {dimension_numbers = #tpu.dot_dimension_numbers<[1], [0], [0], [1], [0, 0, 1, 1], [], []>} : vector<80x2xf32>, vector<2x5xf32>, vector<80x5xf32> -> vector<80x5xf32>
    %200 = arith.addf %196, %199 : vector<80x5xf32>
    %201 = vector.extract_strided_slice %192 {offsets = [160, 0], sizes = [80, 2], strides = [1, 1]} : vector<240x2xf32> to vector<80x2xf32>
    %202 = vector.extract_strided_slice %193 {offsets = [0, 10], sizes = [2, 5], strides = [1, 1]} : vector<2x15xf32> to vector<2x5xf32>
    %cst_121 = arith.constant dense<0.000000e+00> : vector<80x5xf32>
    %203 = tpu.matmul %201, %202, %cst_121 {dimension_numbers = #tpu.dot_dimension_numbers<[1], [0], [0], [1], [0, 0, 1, 1], [], []>} : vector<80x2xf32>, vector<2x5xf32>, vector<80x5xf32> -> vector<80x5xf32>
    %204 = arith.addf %200, %203 : vector<80x5xf32>
    %c184_122 = arith.constant 184 : index
    %c0_123 = arith.constant 0 : index
    %205 = vector.load %arg4[%c184_122, %c0_123] : memref<416x1xf32, #tpu.memory_space<vmem>>, vector<80x1xf32>
    %206 = vector.broadcast %205 : vector<80x1xf32> to vector<80x5xf32>
    %207 = arith.addf %204, %206 : vector<80x5xf32>
    %cst_124 = arith.constant 0.000000e+00 : f32
    %208 = vector.broadcast %cst_124 : f32 to vector<80x5xf32>
    %209 = arith.maximumf %207, %208 : vector<80x5xf32>
    %c984_125 = arith.constant 984 : index
    %c0_126 = arith.constant 0 : index
    %210 = vector.load %arg2[%c984_125, %c0_126] : memref<1640x160xf32, #tpu.memory_space<vmem>>, vector<600x80xf32>
    %cst_127 = arith.constant dense<0.000000e+00> : vector<600x5xf32>
    %211 = tpu.matmul %210, %209, %cst_127 {dimension_numbers = #tpu.dot_dimension_numbers<[1], [0], [0], [1], [0, 0, 1, 1], [], []>} : vector<600x80xf32>, vector<80x5xf32>, vector<600x5xf32> -> vector<600x5xf32>
    %c72_128 = arith.constant 72 : index
    %c0_129 = arith.constant 0 : index
    %212 = vector.load %arg3[%c72_128, %c0_129] : memref<96x75xf32, #tpu.memory_space<vmem>>, vector<5x75xf32>
    %213 = vector.extract_strided_slice %211 {offsets = [0, 0], sizes = [120, 5], strides = [1, 1]} : vector<600x5xf32> to vector<120x5xf32>
    %214 = vector.extract_strided_slice %212 {offsets = [0, 0], sizes = [5, 15], strides = [1, 1]} : vector<5x75xf32> to vector<5x15xf32>
    %cst_130 = arith.constant dense<0.000000e+00> : vector<120x15xf32>
    %215 = tpu.matmul %213, %214, %cst_130 {dimension_numbers = #tpu.dot_dimension_numbers<[1], [0], [0], [1], [0, 0, 1, 1], [], []>} : vector<120x5xf32>, vector<5x15xf32>, vector<120x15xf32> -> vector<120x15xf32>
    %216 = vector.extract_strided_slice %211 {offsets = [120, 0], sizes = [120, 5], strides = [1, 1]} : vector<600x5xf32> to vector<120x5xf32>
    %217 = vector.extract_strided_slice %212 {offsets = [0, 15], sizes = [5, 15], strides = [1, 1]} : vector<5x75xf32> to vector<5x15xf32>
    %cst_131 = arith.constant dense<0.000000e+00> : vector<120x15xf32>
    %218 = tpu.matmul %216, %217, %cst_131 {dimension_numbers = #tpu.dot_dimension_numbers<[1], [0], [0], [1], [0, 0, 1, 1], [], []>} : vector<120x5xf32>, vector<5x15xf32>, vector<120x15xf32> -> vector<120x15xf32>
    %219 = arith.addf %215, %218 : vector<120x15xf32>
    %220 = vector.extract_strided_slice %211 {offsets = [240, 0], sizes = [120, 5], strides = [1, 1]} : vector<600x5xf32> to vector<120x5xf32>
    %221 = vector.extract_strided_slice %212 {offsets = [0, 30], sizes = [5, 15], strides = [1, 1]} : vector<5x75xf32> to vector<5x15xf32>
    %cst_132 = arith.constant dense<0.000000e+00> : vector<120x15xf32>
    %222 = tpu.matmul %220, %221, %cst_132 {dimension_numbers = #tpu.dot_dimension_numbers<[1], [0], [0], [1], [0, 0, 1, 1], [], []>} : vector<120x5xf32>, vector<5x15xf32>, vector<120x15xf32> -> vector<120x15xf32>
    %223 = arith.addf %219, %222 : vector<120x15xf32>
    %224 = vector.extract_strided_slice %211 {offsets = [360, 0], sizes = [120, 5], strides = [1, 1]} : vector<600x5xf32> to vector<120x5xf32>
    %225 = vector.extract_strided_slice %212 {offsets = [0, 45], sizes = [5, 15], strides = [1, 1]} : vector<5x75xf32> to vector<5x15xf32>
    %cst_133 = arith.constant dense<0.000000e+00> : vector<120x15xf32>
    %226 = tpu.matmul %224, %225, %cst_133 {dimension_numbers = #tpu.dot_dimension_numbers<[1], [0], [0], [1], [0, 0, 1, 1], [], []>} : vector<120x5xf32>, vector<5x15xf32>, vector<120x15xf32> -> vector<120x15xf32>
    %227 = arith.addf %223, %226 : vector<120x15xf32>
    %228 = vector.extract_strided_slice %211 {offsets = [480, 0], sizes = [120, 5], strides = [1, 1]} : vector<600x5xf32> to vector<120x5xf32>
    %229 = vector.extract_strided_slice %212 {offsets = [0, 60], sizes = [5, 15], strides = [1, 1]} : vector<5x75xf32> to vector<5x15xf32>
    %cst_134 = arith.constant dense<0.000000e+00> : vector<120x15xf32>
    %230 = tpu.matmul %228, %229, %cst_134 {dimension_numbers = #tpu.dot_dimension_numbers<[1], [0], [0], [1], [0, 0, 1, 1], [], []>} : vector<120x5xf32>, vector<5x15xf32>, vector<120x15xf32> -> vector<120x15xf32>
    %231 = arith.addf %227, %230 : vector<120x15xf32>
    %c264_135 = arith.constant 264 : index
    %c0_136 = arith.constant 0 : index
    %232 = vector.load %arg4[%c264_135, %c0_136] : memref<416x1xf32, #tpu.memory_space<vmem>>, vector<120x1xf32>
    %233 = vector.broadcast %232 : vector<120x1xf32> to vector<120x15xf32>
    %234 = arith.addf %231, %233 : vector<120x15xf32>
    %cst_137 = arith.constant 0.000000e+00 : f32
    %235 = vector.broadcast %cst_137 : f32 to vector<120x15xf32>
    %236 = arith.maximumf %234, %235 : vector<120x15xf32>
    %c1584_138 = arith.constant 1584 : index
    %c0_139 = arith.constant 0 : index
    %237 = vector.load %arg2[%c1584_138, %c0_139] : memref<1640x160xf32, #tpu.memory_space<vmem>>, vector<56x120xf32>
    %cst_140 = arith.constant dense<0.000000e+00> : vector<56x15xf32>
    %238 = tpu.matmul %237, %236, %cst_140 {dimension_numbers = #tpu.dot_dimension_numbers<[1], [0], [0], [1], [0, 0, 1, 1], [], []>} : vector<56x120xf32>, vector<120x15xf32>, vector<56x15xf32> -> vector<56x15xf32>
    %c80_141 = arith.constant 80 : index
    %c0_142 = arith.constant 0 : index
    %239 = vector.load %arg3[%c80_141, %c0_142] : memref<96x75xf32, #tpu.memory_space<vmem>>, vector<15x56xf32>
    %240 = vector.extract_strided_slice %238 {offsets = [0, 0], sizes = [28, 15], strides = [1, 1]} : vector<56x15xf32> to vector<28x15xf32>
    %241 = vector.extract_strided_slice %239 {offsets = [0, 0], sizes = [15, 28], strides = [1, 1]} : vector<15x56xf32> to vector<15x28xf32>
    %cst_143 = arith.constant dense<0.000000e+00> : vector<28x28xf32>
    %242 = tpu.matmul %240, %241, %cst_143 {dimension_numbers = #tpu.dot_dimension_numbers<[1], [0], [0], [1], [0, 0, 1, 1], [], []>} : vector<28x15xf32>, vector<15x28xf32>, vector<28x28xf32> -> vector<28x28xf32>
    %243 = vector.extract_strided_slice %238 {offsets = [28, 0], sizes = [28, 15], strides = [1, 1]} : vector<56x15xf32> to vector<28x15xf32>
    %244 = vector.extract_strided_slice %239 {offsets = [0, 28], sizes = [15, 28], strides = [1, 1]} : vector<15x56xf32> to vector<15x28xf32>
    %cst_144 = arith.constant dense<0.000000e+00> : vector<28x28xf32>
    %245 = tpu.matmul %243, %244, %cst_144 {dimension_numbers = #tpu.dot_dimension_numbers<[1], [0], [0], [1], [0, 0, 1, 1], [], []>} : vector<28x15xf32>, vector<15x28xf32>, vector<28x28xf32> -> vector<28x28xf32>
    %246 = arith.addf %242, %245 : vector<28x28xf32>
    %c384_145 = arith.constant 384 : index
    %c0_146 = arith.constant 0 : index
    %247 = vector.load %arg4[%c384_145, %c0_146] : memref<416x1xf32, #tpu.memory_space<vmem>>, vector<28x1xf32>
    %248 = vector.broadcast %247 : vector<28x1xf32> to vector<28x28xf32>
    %249 = arith.addf %246, %248 : vector<28x28xf32>
    %250 = math.tanh %249 : vector<28x28xf32>
    %c1_147 = arith.constant 1 : index
    %c0_148 = arith.constant 0 : index
    %c0_149 = arith.constant 0 : index
    %251 = vector.load %arg5[%c1_147, %c0_148, %c0_149] : memref<2x28x28xf32, #tpu.memory_space<vmem>>, vector<1x28x28xf32>
    %252 = vector.shape_cast %251 : vector<1x28x28xf32> to vector<28x28xf32>
    %253 = vector.shape_cast %250 : vector<28x28xf32> to vector<1x28x28xf32>
    tpu.vector_store %arg5[%c1_147, %c0_148, %c0_149], %253 {strides = array<i32>} : memref<2x28x28xf32, #tpu.memory_space<vmem>>, vector<1x28x28xf32>,
    return
  }
  func.func @transform_0(%arg0: i32) -> (i32, i32, i32) {
    %c0_i32 = arith.constant 0 : i32
    %c0_i32_0 = arith.constant 0 : i32
    %c0_i32_1 = arith.constant 0 : i32
    return %arg0, %c0_i32, %c0_i32_0 : i32, i32, i32
  }
  func.func @transform_1(%arg0: i32) -> (i32, i32) {
    %c0_i32 = arith.constant 0 : i32
    %c0_i32_0 = arith.constant 0 : i32
    %c0_i32_1 = arith.constant 0 : i32
    return %c0_i32, %c0_i32_0 : i32, i32
  }
  func.func @transform_2(%arg0: i32) -> (i32, i32) {
    %c0_i32 = arith.constant 0 : i32
    %c0_i32_0 = arith.constant 0 : i32
    %c0_i32_1 = arith.constant 0 : i32
    return %c0_i32, %c0_i32_0 : i32, i32
  }
  func.func @transform_3(%arg0: i32) -> (i32, i32) {
    %c0_i32 = arith.constant 0 : i32
    %c0_i32_0 = arith.constant 0 : i32
    %c0_i32_1 = arith.constant 0 : i32
    return %c0_i32, %c0_i32_0 : i32, i32
  }
  func.func @transform_4(%arg0: i32) -> (i32, i32, i32) {
    %c0_i32 = arith.constant 0 : i32
    %c0_i32_0 = arith.constant 0 : i32
    %c0_i32_1 = arith.constant 0 : i32
    return %arg0, %c0_i32, %c0_i32_0 : i32, i32, i32
  }
}

</mosaic_0001>

<llo_original>
// kernel: _lambda_.1
$region0: #{_lambda_.1}
  #allocation0 [shape = 'u32[]', space=smem, size = 0x4, offset = 0x4, fixed_abs, tag = 'smem constant byte address 0x4 - core index']
  #allocation1 [shape = 'u32[144,128]{1,0:T(1,128)}', space=vmem, size = 0x12000, scoped, tag = 'internal scratch']
  %s0 = inlined_call_operand.vmem [shape: f32[2,28,28], index: 0, kind: input, shape index: {}]
  %s1 = inlined_call_operand.vmem [shape: f32[1640,160], index: 1, kind: input, shape index: {}]
  %s2 = inlined_call_operand.vmem [shape: f32[96,75], index: 2, kind: input, shape index: {}]
  %s3 = inlined_call_operand.vmem [shape: f32[416,1], index: 3, kind: input, shape index: {}]
  %s4 = inlined_call_operand.vmem [shape: f32[2,28,28], index: 4, kind: output, shape index: {}]
  %s5 = sld [smem:[#allocation0]]
  $region26: #{_lambda_.1} parent=0
    _
  %s7 = ssub.s32 1, %s5
  %s8 = scalar_select 0, %s7, %s5
  // Predicated region
  $region2: #{_lambda_.1} parent=0 // pred_check
    _
  $region3: #{_lambda_.1} parent=0 // pred_check_branch
    %10 = sbr.rel (0) target = $region5
  $region4: #{_lambda_.1} parent=0 // pred_region
    _
  $region5: #{_lambda_.1} parent=0 // pred_fallthru
    _
  // Predicated region
  $region6: #{_lambda_.1} parent=0 // pred_check
    _
  $region7: #{_lambda_.1} parent=0 // pred_check_branch
    %12 = sbr.rel (0) target = $region9
  $region8: #{_lambda_.1} parent=0 // pred_region
    _
  $region9: #{_lambda_.1} parent=0 // pred_fallthru
    _
  // Predicated region
  $region10: #{_lambda_.1} parent=0 // pred_check
    _
  $region11: #{_lambda_.1} parent=0 // pred_check_branch
    %14 = sbr.rel (0) target = $region13
  $region12: #{_lambda_.1} parent=0 // pred_region
    _
  $region13: #{_lambda_.1} parent=0 // pred_fallthru
    _
  // Predicated region
  $region14: #{_lambda_.1} parent=0 // pred_check
    _
  $region15: #{_lambda_.1} parent=0 // pred_check_branch
    %16 = sbr.rel (0) target = $region17
  $region16: #{_lambda_.1} parent=0 // pred_region
    _
  $region17: #{_lambda_.1} parent=0 // pred_fallthru
    _
  %v17 = vld [vmem:[%s0] sm:$0xff]
  %v18 = vld [vmem:[%s0 + $0x8] sm:$0xff]
  %v19 = vld [vmem:[%s0 + $0x10] sm:$0xff]
  %v20 = vld [vmem:[%s0 + $0x18] sm:$0xf]
  %v21 = vld [vmem:[%s2] sm:$0xff]
  %v22 = vld [vmem:[%s2 + $0x8] sm:$0xff]
  %v23 = vld [vmem:[%s2 + $0x10] sm:$0xff]
  %v24 = vld [vmem:[%s2 + $0x18] sm:$0xf]
  %vm25 = vcmask 228352
  %v27 = vsel %vm25, %v17, 0
  %v30 = vsel %vm25, %v18, 0
  %v33 = vsel %vm25, %v19, 0
  %v36 = vsel %vm25, %v20, 0
  %vm38 = vcmask 1043456
  %v40 = vsel %vm38, %v24, 0
  %42 = vmatprep.subr.mxu0 0.0
  %43 = vmatpush1.msra.mxu0 %v21
  %44 = vmatprep.subr.mxu0 0.0
  %45 = vmatpush1.msra.mxu0 %v22
  %46 = vmatprep.subr.mxu0 0.0
  %47 = vmatpush1.msra.mxu0 %v23
  %48 = vmatprep.subr.mxu0 0.0
  %49 = vmatpush1.msra.mxu0 %v40
  %50 = vmatprep.subr.mxu0 0.0
  %51 = vmatpush1.msra.mxu0 0.0
  %52 = vmatprep.subr.mxu0 0.0
  %53 = vmatpush1.msra.mxu0 0.0
  %54 = vmatprep.subr.mxu0 0.0
  %55 = vmatpush1.msra.mxu0 0.0
  %56 = vmatprep.subr.mxu0 0.0
  %57 = vmatpush1.msra.mxu0 0.0
  %58 = vmatprep.subr.mxu0 0.0
  %59 = vmatpush1.msra.mxu0 0.0
  %60 = vmatprep.subr.mxu0 0.0
  %61 = vmatpush1.msra.mxu0 0.0
  %62 = vmatprep.subr.mxu0 0.0
  %63 = vmatpush1.msra.mxu0 0.0
  %64 = vmatprep.subr.mxu0 0.0
  %65 = vmatpush1.msra.mxu0 0.0
  %66 = vmatprep.subr.mxu0 0.0
  %67 = vmatpush1.msra.mxu0 0.0
  %68 = vmatprep.subr.mxu0 0.0
  %69 = vmatpush1.msra.mxu0 0.0
  %70 = vmatprep.subr.mxu0 0.0
  %71 = vmatpush1.msra.mxu0 0.0
  %72 = vmatprep.subr.mxu0 0.0
  %73 = vmatpush1.msra.mxu0 0.0
  %74 = vmatprep.subr.mxu0 0.0
  %75 = vmatpush1.msra.mxu0 0.0
  %76 = vmatprep.subr.mxu0 0.0
  %77 = vmatpush1.msra.mxu0 0.0
  %78 = vmatprep.subr.mxu0 0.0
  %79 = vmatpush1.msra.mxu0 0.0
  %80 = vmatprep.subr.mxu0 0.0
  %81 = vmatpush1.msra.mxu0 0.0
  %82 = vmatprep.subr.mxu0 0.0
  %83 = vmatpush1.msra.mxu0 0.0
  %84 = vmatprep.subr.mxu0 0.0
  %85 = vmatpush1.msra.mxu0 0.0
  %86 = vmatprep.subr.mxu0 0.0
  %87 = vmatpush1.msra.mxu0 0.0
  %88 = vmatprep.subr.mxu0 0.0
  %89 = vmatpush1.msra.mxu0 0.0
  %90 = vmatprep.subr.mxu0 0.0
  %91 = vmatpush1.msra.mxu0 0.0
  %92 = vmatprep.subr.mxu0 0.0
  %93 = vmatpush1.msra.mxu0 0.0
  %94 = vmatprep.subr.mxu0 0.0
  %95 = vmatpush1.msra.mxu0 0.0
  %96 = vmatprep.subr.mxu0 0.0
  %97 = vmatpush1.msra.mxu0 0.0
  %98 = vmatprep.subr.mxu0 0.0
  %99 = vmatpush1.msra.mxu0 0.0
  %100 = vmatprep.subr.mxu0 0.0
  %101 = vmatpush1.msra.mxu0 0.0
  %102 = vmatprep.subr.mxu0 0.0
  %103 = vmatpush1.msra.mxu0 0.0
  %104 = vmatprep.subr.mxu0 0.0
  %105 = vmatpush1.msra.mxu0 0.0
  %106 = vmatprep.mubr.f32.mxu0 0.0
  %107 = vmatmul.mubr.f32.gmra.mrb[0].mxu0 %v27
  %v108 = vpop.f32.mrb[0].mxu0
  %v109 = vadd.f32 0.0, %v108
  %v110 = vpop.f32.mrb[0].mxu0
  %111 = vmatprep.mubr.f32.mxu0 0.0
  %112 = vmatmul.mubr.f32.gmra.mrb[0].mxu0 %v30
  %v113 = vpop.f32.mrb[0].mxu0
  %v114 = vadd.f32 0.0, %v113
  %v115 = vpop.f32.mrb[0].mxu0
  %116 = vmatprep.mubr.f32.mxu0 0.0
  %117 = vmatmul.mubr.f32.gmra.mrb[0].mxu0 %v33
  %v118 = vpop.f32.mrb[0].mxu0
  %v119 = vadd.f32 0.0, %v118
  %v120 = vpop.f32.mrb[0].mxu0
  %121 = vmatprep.mubr.f32.mxu0 0.0
  %122 = vmatmul.mubr.f32.gmra.mrb[0].mxu0 %v36
  %v123 = vpop.f32.mrb[0].mxu0
  %v124 = vadd.f32 0.0, %v123
  %v125 = vpop.f32.mrb[0].mxu0
  %126 = vdwg.mxu0
  %v127 = vld [vmem:[%s1] sm:$0xff]
  %v128 = vld [vmem:[%s1 + $0x10] sm:$0xff]
  %v129 = vld [vmem:[%s1 + $0x20] sm:$0xff]
  %v130 = vld [vmem:[%s1 + $0x30] sm:$0xff]
  %v131 = vld [vmem:[%s1 + $0x40] sm:$0xff]
  %v132 = vld [vmem:[%s1 + $0x50] sm:$0xff]
  %v133 = vld [vmem:[%s1 + $0x60] sm:$0xff]
  %v134 = vld [vmem:[%s1 + $0x70] sm:$0xff]
  %v135 = vld [vmem:[%s1 + $0x80] sm:$0xff]
  %v136 = vld [vmem:[%s1 + $0x90] sm:$0xff]
  %v137 = vld [vmem:[%s1 + $0xa0] sm:$0xff]
  %v138 = vld [vmem:[%s1 + $0xb0] sm:$0xff]
  %v139 = vld [vmem:[%s1 + $0xc0] sm:$0xff]
  %v140 = vld [vmem:[%s1 + $0xd0] sm:$0xff]
  %v141 = vld [vmem:[%s1 + $0xe0] sm:$0xff]
  %v142 = vld [vmem:[%s1 + $0xf0] sm:$0xff]
  %v143 = vld [vmem:[%s1 + $0x100] sm:$0xff]
  %v144 = vld [vmem:[%s1 + $0x110] sm:$0xff]
  %v145 = vld [vmem:[%s1 + $0x120] sm:$0xff]
  %v146 = vld [vmem:[%s1 + $0x130] sm:$0xff]
  %v147 = vld [vmem:[%s1 + $0x140] sm:$0xff]
  %v148 = vld [vmem:[%s1 + $0x150] sm:$0xff]
  %v149 = vld [vmem:[%s1 + $0x160] sm:$0xff]
  %v150 = vld [vmem:[%s1 + $0x170] sm:$0xff]
  %v151 = vld [vmem:[%s1 + $0x180] sm:$0xff]
  %v152 = vld [vmem:[%s1 + $0x190] sm:$0xff]
  %v153 = vld [vmem:[%s1 + $0x1a0] sm:$0xff]
  %v154 = vld [vmem:[%s1 + $0x1b0] sm:$0xff]
  %v155 = vld [vmem:[%s1 + $0x1c0] sm:$0xff]
  %v156 = vld [vmem:[%s1 + $0x1d0] sm:$0xff]
  %v157 = vld [vmem:[%s1 + $0x1e0] sm:$0xff]
  %v158 = vld [vmem:[%s1 + $0x1f0] sm:$0xff]
  %v159 = vld [vmem:[%s1 + $0x200] sm:$0xff]
  %v160 = vld [vmem:[%s1 + $0x210] sm:$0xff]
  %v161 = vld [vmem:[%s1 + $0x220] sm:$0xff]
  %v162 = vld [vmem:[%s1 + $0x230] sm:$0xff]
  %v163 = vld [vmem:[%s1 + $0x240] sm:$0xff]
  %v164 = vld [vmem:[%s1 + $0x250] sm:$0xff]
  %v165 = vld [vmem:[%s1 + $0x260] sm:$0xff]
  %v166 = vld [vmem:[%s1 + $0x270] sm:$0xff]
  %171 = vrot.lane.b32.xlu0 %v109, 118
  %v172 = vpop.permute.xlu0 %171
  %173 = vrot.lane.b32.xlu0 %v114, 118
  %v174 = vpop.permute.xlu0 %173
  %175 = vrot.lane.b32.xlu0 %v119, 118
  %v176 = vpop.permute.xlu0 %175
  %177 = vrot.lane.b32.xlu0 %v124, 118
  %v178 = vpop.permute.xlu0 %177
  %v183 = vsel %vm25, %v147, 0
  %v186 = vsel %vm25, %v148, 0
  %v189 = vsel %vm25, %v149, 0
  %v192 = vsel %vm25, %v150, 0
  %v195 = vsel %vm25, %v151, 0
  %v198 = vsel %vm25, %v152, 0
  %v201 = vsel %vm25, %v153, 0
  %v204 = vsel %vm25, %v154, 0
  %v207 = vsel %vm25, %v155, 0
  %v210 = vsel %vm25, %v156, 0
  %v213 = vsel %vm25, %v157, 0
  %v216 = vsel %vm25, %v158, 0
  %v219 = vsel %vm25, %v159, 0
  %v222 = vsel %vm25, %v160, 0
  %v225 = vsel %vm25, %v161, 0
  %v228 = vsel %vm25, %v162, 0
  %v231 = vsel %vm25, %v163, 0
  %v234 = vsel %vm25, %v164, 0
  %v237 = vsel %vm25, %v165, 0
  %v240 = vsel %vm25, %v166, 0
  %v242 = vsel %vm38, %v178, 0
  %244 = vmatprep.subr.mxu0 0.0
  %245 = vmatpush1.msra.mxu0 %v172
  %246 = vmatprep.subr.mxu0 0.0
  %247 = vmatpush1.msra.mxu0 %v174
  %248 = vmatprep.subr.mxu0 0.0
  %249 = vmatpush1.msra.mxu0 %v176
  %250 = vmatprep.subr.mxu0 0.0
  %251 = vmatpush1.msra.mxu0 %v242
  %252 = vmatprep.subr.mxu0 0.0
  %253 = vmatpush1.msra.mxu0 0.0
  %254 = vmatprep.subr.mxu0 0.0
  %255 = vmatpush1.msra.mxu0 0.0
  %256 = vmatprep.subr.mxu0 0.0
  %257 = vmatpush1.msra.mxu0 0.0
  %258 = vmatprep.subr.mxu0 0.0
  %259 = vmatpush1.msra.mxu0 0.0
  %260 = vmatprep.subr.mxu0 0.0
  %261 = vmatpush1.msra.mxu0 0.0
  %262 = vmatprep.subr.mxu0 0.0
  %263 = vmatpush1.msra.mxu0 0.0
  %264 = vmatprep.subr.mxu0 0.0
  %265 = vmatpush1.msra.mxu0 0.0
  %266 = vmatprep.subr.mxu0 0.0
  %267 = vmatpush1.msra.mxu0 0.0
  %268 = vmatprep.subr.mxu0 0.0
  %269 = vmatpush1.msra.mxu0 0.0
  %270 = vmatprep.subr.mxu0 0.0
  %271 = vmatpush1.msra.mxu0 0.0
  %272 = vmatprep.subr.mxu0 0.0
  %273 = vmatpush1.msra.mxu0 0.0
  %274 = vmatprep.subr.mxu0 0.0
  %275 = vmatpush1.msra.mxu0 0.0
  %276 = vmatprep.subr.mxu0 0.0
  %277 = vmatpush1.msra.mxu0 0.0
  %278 = vmatprep.subr.mxu0 0.0
  %279 = vmatpush1.msra.mxu0 0.0
  %280 = vmatprep.subr.mxu0 0.0
  %281 = vmatpush1.msra.mxu0 0.0
  %282 = vmatprep.subr.mxu0 0.0
  %283 = vmatpush1.msra.mxu0 0.0
  %284 = vmatprep.subr.mxu0 0.0
  %285 = vmatpush1.msra.mxu0 0.0
  %286 = vmatprep.subr.mxu0 0.0
  %287 = vmatpush1.msra.mxu0 0.0
  %288 = vmatprep.subr.mxu0 0.0
  %289 = vmatpush1.msra.mxu0 0.0
  %290 = vmatprep.subr.mxu0 0.0
  %291 = vmatpush1.msra.mxu0 0.0
  %292 = vmatprep.subr.mxu0 0.0
  %293 = vmatpush1.msra.mxu0 0.0
  %294 = vmatprep.subr.mxu0 0.0
  %295 = vmatpush1.msra.mxu0 0.0
  %296 = vmatprep.subr.mxu0 0.0
  %297 = vmatpush1.msra.mxu0 0.0
  %298 = vmatprep.subr.mxu0 0.0
  %299 = vmatpush1.msra.mxu0 0.0
  %300 = vmatprep.subr.mxu0 0.0
  %301 = vmatpush1.msra.mxu0 0.0
  %302 = vmatprep.subr.mxu0 0.0
  %303 = vmatpush1.msra.mxu0 0.0
  %304 = vmatprep.subr.mxu0 0.0
  %305 = vmatpush1.msra.mxu0 0.0
  %306 = vmatprep.subr.mxu0 0.0
  %307 = vmatpush1.msra.mxu0 0.0
  %308 = vmatprep.mubr.f32.mxu0 0.0
  %309 = vmatmul.mubr.f32.gmra.mrb[0].mxu0 %v183
  %v310 = vpop.f32.mrb[0].mxu0
  %v311 = vadd.f32 0.0, %v310
  %v312 = vpop.f32.mrb[0].mxu0
  %313 = vmatprep.mubr.f32.mxu0 0.0
  %314 = vmatmul.mubr.f32.gmra.mrb[0].mxu0 %v186
  %v315 = vpop.f32.mrb[0].mxu0
  %v316 = vadd.f32 0.0, %v315
  %v317 = vpop.f32.mrb[0].mxu0
  %318 = vmatprep.mubr.f32.mxu0 0.0
  %319 = vmatmul.mubr.f32.gmra.mrb[0].mxu0 %v189
  %v320 = vpop.f32.mrb[0].mxu0
  %v321 = vadd.f32 0.0, %v320
  %v322 = vpop.f32.mrb[0].mxu0
  %323 = vmatprep.mubr.f32.mxu0 0.0
  %324 = vmatmul.mubr.f32.gmra.mrb[0].mxu0 %v192
  %v325 = vpop.f32.mrb[0].mxu0
  %v326 = vadd.f32 0.0, %v325
  %v327 = vpop.f32.mrb[0].mxu0
  %328 = vmatprep.mubr.f32.mxu0 0.0
  %329 = vmatmul.mubr.f32.gmra.mrb[0].mxu0 %v195
  %v330 = vpop.f32.mrb[0].mxu0
  %v331 = vadd.f32 0.0, %v330
  %v332 = vpop.f32.mrb[0].mxu0
  %333 = vmatprep.mubr.f32.mxu0 0.0
  %334 = vmatmul.mubr.f32.gmra.mrb[0].mxu0 %v198
  %v335 = vpop.f32.mrb[0].mxu0
  %v336 = vadd.f32 0.0, %v335
  %v337 = vpop.f32.mrb[0].mxu0
  %338 = vmatprep.mubr.f32.mxu0 0.0
  %339 = vmatmul.mubr.f32.gmra.mrb[0].mxu0 %v201
  %v340 = vpop.f32.mrb[0].mxu0
  %v341 = vadd.f32 0.0, %v340
  %v342 = vpop.f32.mrb[0].mxu0
  %343 = vmatprep.mubr.f32.mxu0 0.0
  %344 = vmatmul.mubr.f32.gmra.mrb[0].mxu0 %v204
  %v345 = vpop.f32.mrb[0].mxu0
  %v346 = vadd.f32 0.0, %v345
  %v347 = vpop.f32.mrb[0].mxu0
  %348 = vmatprep.mubr.f32.mxu0 0.0
  %349 = vmatmul.mubr.f32.gmra.mrb[0].mxu0 %v207
  %v350 = vpop.f32.mrb[0].mxu0
  %v351 = vadd.f32 0.0, %v350
  %v352 = vpop.f32.mrb[0].mxu0
  %353 = vmatprep.mubr.f32.mxu0 0.0
  %354 = vmatmul.mubr.f32.gmra.mrb[0].mxu0 %v210
  %v355 = vpop.f32.mrb[0].mxu0
  %v356 = vadd.f32 0.0, %v355
  %v357 = vpop.f32.mrb[0].mxu0
  %358 = vmatprep.mubr.f32.mxu0 0.0
  %359 = vmatmul.mubr.f32.gmra.mrb[0].mxu0 %v213
  %v360 = vpop.f32.mrb[0].mxu0
  %v361 = vadd.f32 0.0, %v360
  %v362 = vpop.f32.mrb[0].mxu0
  %363 = vmatprep.mubr.f32.mxu0 0.0
  %364 = vmatmul.mubr.f32.gmra.mrb[0].mxu0 %v216
  %v365 = vpop.f32.mrb[0].mxu0
  %v366 = vadd.f32 0.0, %v365
  %v367 = vpop.f32.mrb[0].mxu0
  %368 = vmatprep.mubr.f32.mxu0 0.0
  %369 = vmatmul.mubr.f32.gmra.mrb[0].mxu0 %v219
  %v370 = vpop.f32.mrb[0].mxu0
  %v371 = vadd.f32 0.0, %v370
  %v372 = vpop.f32.mrb[0].mxu0
  %373 = vmatprep.mubr.f32.mxu0 0.0
  %374 = vmatmul.mubr.f32.gmra.mrb[0].mxu0 %v222
  %v375 = vpop.f32.mrb[0].mxu0
  %v376 = vadd.f32 0.0, %v375
  %v377 = vpop.f32.mrb[0].mxu0
  %378 = vmatprep.mubr.f32.mxu0 0.0
  %379 = vmatmul.mubr.f32.gmra.mrb[0].mxu0 %v225
  %v380 = vpop.f32.mrb[0].mxu0
  %v381 = vadd.f32 0.0, %v380
  %v382 = vpop.f32.mrb[0].mxu0
  %383 = vmatprep.mubr.f32.mxu0 0.0
  %384 = vmatmul.mubr.f32.gmra.mrb[0].mxu0 %v228
  %v385 = vpop.f32.mrb[0].mxu0
  %v386 = vadd.f32 0.0, %v385
  %v387 = vpop.f32.mrb[0].mxu0
  %388 = vmatprep.mubr.f32.mxu0 0.0
  %389 = vmatmul.mubr.f32.gmra.mrb[0].mxu0 %v231
  %v390 = vpop.f32.mrb[0].mxu0
  %v391 = vadd.f32 0.0, %v390
  %v392 = vpop.f32.mrb[0].mxu0
  %393 = vmatprep.mubr.f32.mxu0 0.0
  %394 = vmatmul.mubr.f32.gmra.mrb[0].mxu0 %v234
  %v395 = vpop.f32.mrb[0].mxu0
  %v396 = vadd.f32 0.0, %v395
  %v397 = vpop.f32.mrb[0].mxu0
  %398 = vmatprep.mubr.f32.mxu0 0.0
  %399 = vmatmul.mubr.f32.gmra.mrb[0].mxu0 %v237
  %v400 = vpop.f32.mrb[0].mxu0
  %v401 = vadd.f32 0.0, %v400
  %v402 = vpop.f32.mrb[0].mxu0
  %403 = vmatprep.mubr.f32.mxu0 0.0
  %404 = vmatmul.mubr.f32.gmra.mrb[0].mxu0 %v240
  %v405 = vpop.f32.mrb[0].mxu0
  %v406 = vadd.f32 0.0, %v405
  %v407 = vpop.f32.mrb[0].mxu0
  %408 = vdwg.mxu0
  %v410 = vsel %vm25, %v127, 0
  %v413 = vsel %vm25, %v128, 0
  %v416 = vsel %vm25, %v129, 0
  %v419 = vsel %vm25, %v130, 0
  %v422 = vsel %vm25, %v131, 0
  %v425 = vsel %vm25, %v132, 0
  %v428 = vsel %vm25, %v133, 0
  %v431 = vsel %vm25, %v134, 0
  %v434 = vsel %vm25, %v135, 0
  %v437 = vsel %vm25, %v136, 0
  %v440 = vsel %vm25, %v137, 0
  %v443 = vsel %vm25, %v138, 0
  %v446 = vsel %vm25, %v139, 0
  %v449 = vsel %vm25, %v140, 0
  %v452 = vsel %vm25, %v141, 0
  %v455 = vsel %vm25, %v142, 0
  %v458 = vsel %vm25, %v143, 0
  %v461 = vsel %vm25, %v144, 0
  %v464 = vsel %vm25, %v145, 0
  %v467 = vsel %vm25, %v146, 0
  %v469 = vsel %vm38, %v124, 0
  %471 = vmatprep.subr.mxu0 0.0
  %472 = vmatpush1.msra.mxu0 %v109
  %473 = vmatprep.subr.mxu0 0.0
  %474 = vmatpush1.msra.mxu0 %v114
  %475 = vmatprep.subr.mxu0 0.0
  %476 = vmatpush1.msra.mxu0 %v119
  %477 = vmatprep.subr.mxu0 0.0
  %478 = vmatpush1.msra.mxu0 %v469
  %479 = vmatprep.subr.mxu0 0.0
  %480 = vmatpush1.msra.mxu0 0.0
  %481 = vmatprep.subr.mxu0 0.0
  %482 = vmatpush1.msra.mxu0 0.0
  %483 = vmatprep.subr.mxu0 0.0
  %484 = vmatpush1.msra.mxu0 0.0
  %485 = vmatprep.subr.mxu0 0.0
  %486 = vmatpush1.msra.mxu0 0.0
  %487 = vmatprep.subr.mxu0 0.0
  %488 = vmatpush1.msra.mxu0 0.0
  %489 = vmatprep.subr.mxu0 0.0
  %490 = vmatpush1.msra.mxu0 0.0
  %491 = vmatprep.subr.mxu0 0.0
  %492 = vmatpush1.msra.mxu0 0.0
  %493 = vmatprep.subr.mxu0 0.0
  %494 = vmatpush1.msra.mxu0 0.0
  %495 = vmatprep.subr.mxu0 0.0
  %496 = vmatpush1.msra.mxu0 0.0
  %497 = vmatprep.subr.mxu0 0.0
  %498 = vmatpush1.msra.mxu0 0.0
  %499 = vmatprep.subr.mxu0 0.0
  %500 = vmatpush1.msra.mxu0 0.0
  %501 = vmatprep.subr.mxu0 0.0
  %502 = vmatpush1.msra.mxu0 0.0
  %503 = vmatprep.subr.mxu0 0.0
  %504 = vmatpush1.msra.mxu0 0.0
  %505 = vmatprep.subr.mxu0 0.0
  %506 = vmatpush1.msra.mxu0 0.0
  %507 = vmatprep.subr.mxu0 0.0
  %508 = vmatpush1.msra.mxu0 0.0
  %509 = vmatprep.subr.mxu0 0.0
  %510 = vmatpush1.msra.mxu0 0.0
  %511 = vmatprep.subr.mxu0 0.0
  %512 = vmatpush1.msra.mxu0 0.0
  %513 = vmatprep.subr.mxu0 0.0
  %514 = vmatpush1.msra.mxu0 0.0
  %515 = vmatprep.subr.mxu0 0.0
  %516 = vmatpush1.msra.mxu0 0.0
  %517 = vmatprep.subr.mxu0 0.0
  %518 = vmatpush1.msra.mxu0 0.0
  %519 = vmatprep.subr.mxu0 0.0
  %520 = vmatpush1.msra.mxu0 0.0
  %521 = vmatprep.subr.mxu0 0.0
  %522 = vmatpush1.msra.mxu0 0.0
  %523 = vmatprep.subr.mxu0 0.0
  %524 = vmatpush1.msra.mxu0 0.0
  %525 = vmatprep.subr.mxu0 0.0
  %526 = vmatpush1.msra.mxu0 0.0
  %527 = vmatprep.subr.mxu0 0.0
  %528 = vmatpush1.msra.mxu0 0.0
  %529 = vmatprep.subr.mxu0 0.0
  %530 = vmatpush1.msra.mxu0 0.0
  %531 = vmatprep.subr.mxu0 0.0
  %532 = vmatpush1.msra.mxu0 0.0
  %533 = vmatprep.subr.mxu0 0.0
  %534 = vmatpush1.msra.mxu0 0.0
  %535 = vmatprep.mubr.f32.mxu0 0.0
  %536 = vmatmul.mubr.f32.gmra.mrb[0].mxu0 %v410
  %v537 = vpop.f32.mrb[0].mxu0
  %v538 = vadd.f32 %v311, %v537
  %v539 = vpop.f32.mrb[0].mxu0
  %540 = vmatprep.mubr.f32.mxu0 0.0
  %541 = vmatmul.mubr.f32.gmra.mrb[0].mxu0 %v413
  %v542 = vpop.f32.mrb[0].mxu0
  %v543 = vadd.f32 %v316, %v542
  %v544 = vpop.f32.mrb[0].mxu0
  %545 = vmatprep.mubr.f32.mxu0 0.0
  %546 = vmatmul.mubr.f32.gmra.mrb[0].mxu0 %v416
  %v547 = vpop.f32.mrb[0].mxu0
  %v548 = vadd.f32 %v321, %v547
  %v549 = vpop.f32.mrb[0].mxu0
  %550 = vmatprep.mubr.f32.mxu0 0.0
  %551 = vmatmul.mubr.f32.gmra.mrb[0].mxu0 %v419
  %v552 = vpop.f32.mrb[0].mxu0
  %v553 = vadd.f32 %v326, %v552
  %v554 = vpop.f32.mrb[0].mxu0
  %555 = vmatprep.mubr.f32.mxu0 0.0
  %556 = vmatmul.mubr.f32.gmra.mrb[0].mxu0 %v422
  %v557 = vpop.f32.mrb[0].mxu0
  %v558 = vadd.f32 %v331, %v557
  %v559 = vpop.f32.mrb[0].mxu0
  %560 = vmatprep.mubr.f32.mxu0 0.0
  %561 = vmatmul.mubr.f32.gmra.mrb[0].mxu0 %v425
  %v562 = vpop.f32.mrb[0].mxu0
  %v563 = vadd.f32 %v336, %v562
  %v564 = vpop.f32.mrb[0].mxu0
  %565 = vmatprep.mubr.f32.mxu0 0.0
  %566 = vmatmul.mubr.f32.gmra.mrb[0].mxu0 %v428
  %v567 = vpop.f32.mrb[0].mxu0
  %v568 = vadd.f32 %v341, %v567
  %v569 = vpop.f32.mrb[0].mxu0
  %570 = vmatprep.mubr.f32.mxu0 0.0
  %571 = vmatmul.mubr.f32.gmra.mrb[0].mxu0 %v431
  %v572 = vpop.f32.mrb[0].mxu0
  %v573 = vadd.f32 %v346, %v572
  %v574 = vpop.f32.mrb[0].mxu0
  %575 = vmatprep.mubr.f32.mxu0 0.0
  %576 = vmatmul.mubr.f32.gmra.mrb[0].mxu0 %v434
  %v577 = vpop.f32.mrb[0].mxu0
  %v578 = vadd.f32 %v351, %v577
  %v579 = vpop.f32.mrb[0].mxu0
  %580 = vmatprep.mubr.f32.mxu0 0.0
  %581 = vmatmul.mubr.f32.gmra.mrb[0].mxu0 %v437
  %v582 = vpop.f32.mrb[0].mxu0
  %v583 = vadd.f32 %v356, %v582
  %v584 = vpop.f32.mrb[0].mxu0
  %585 = vmatprep.mubr.f32.mxu0 0.0
  %586 = vmatmul.mubr.f32.gmra.mrb[0].mxu0 %v440
  %v587 = vpop.f32.mrb[0].mxu0
  %v588 = vadd.f32 %v361, %v587
  %v589 = vpop.f32.mrb[0].mxu0
  %590 = vmatprep.mubr.f32.mxu0 0.0
  %591 = vmatmul.mubr.f32.gmra.mrb[0].mxu0 %v443
  %v592 = vpop.f32.mrb[0].mxu0
  %v593 = vadd.f32 %v366, %v592
  %v594 = vpop.f32.mrb[0].mxu0
  %595 = vmatprep.mubr.f32.mxu0 0.0
  %596 = vmatmul.mubr.f32.gmra.mrb[0].mxu0 %v446
  %v597 = vpop.f32.mrb[0].mxu0
  %v598 = vadd.f32 %v371, %v597
  %v599 = vpop.f32.mrb[0].mxu0
  %600 = vmatprep.mubr.f32.mxu0 0.0
  %601 = vmatmul.mubr.f32.gmra.mrb[0].mxu0 %v449
  %v602 = vpop.f32.mrb[0].mxu0
  %v603 = vadd.f32 %v376, %v602
  %v604 = vpop.f32.mrb[0].mxu0
  %605 = vmatprep.mubr.f32.mxu0 0.0
  %606 = vmatmul.mubr.f32.gmra.mrb[0].mxu0 %v452
  %v607 = vpop.f32.mrb[0].mxu0
  %v608 = vadd.f32 %v381, %v607
  %v609 = vpop.f32.mrb[0].mxu0
  %610 = vmatprep.mubr.f32.mxu0 0.0
  %611 = vmatmul.mubr.f32.gmra.mrb[0].mxu0 %v455
  %v612 = vpop.f32.mrb[0].mxu0
  %v613 = vadd.f32 %v386, %v612
  %v614 = vpop.f32.mrb[0].mxu0
  %615 = vmatprep.mubr.f32.mxu0 0.0
  %616 = vmatmul.mubr.f32.gmra.mrb[0].mxu0 %v458
  %v617 = vpop.f32.mrb[0].mxu0
  %v618 = vadd.f32 %v391, %v617
  %v619 = vpop.f32.mrb[0].mxu0
  %620 = vmatprep.mubr.f32.mxu0 0.0
  %621 = vmatmul.mubr.f32.gmra.mrb[0].mxu0 %v461
  %v622 = vpop.f32.mrb[0].mxu0
  %v623 = vadd.f32 %v396, %v622
  %v624 = vpop.f32.mrb[0].mxu0
  %625 = vmatprep.mubr.f32.mxu0 0.0
  %626 = vmatmul.mubr.f32.gmra.mrb[0].mxu0 %v464
  %v627 = vpop.f32.mrb[0].mxu0
  %v628 = vadd.f32 %v401, %v627
  %v629 = vpop.f32.mrb[0].mxu0
  %630 = vmatprep.mubr.f32.mxu0 0.0
  %631 = vmatmul.mubr.f32.gmra.mrb[0].mxu0 %v467
  %v632 = vpop.f32.mrb[0].mxu0
  %v633 = vadd.f32 %v406, %v632
  %v634 = vpop.f32.mrb[0].mxu0
  %635 = vdwg.mxu0
  %v636 = vld [vmem:[%s1 + $0x280] sm:$0xff]
  %v637 = vld [vmem:[%s1 + $0x290] sm:$0xff]
  %v638 = vld [vmem:[%s1 + $0x2a0] sm:$0xff]
  %v639 = vld [vmem:[%s1 + $0x2b0] sm:$0xff]
  %v640 = vld [vmem:[%s1 + $0x2c0] sm:$0xff]
  %v641 = vld [vmem:[%s1 + $0x2d0] sm:$0xff]
  %v642 = vld [vmem:[%s1 + $0x2e0] sm:$0xff]
  %v643 = vld [vmem:[%s1 + $0x2f0] sm:$0xff]
  %v644 = vld [vmem:[%s1 + $0x300] sm:$0xff]
  %v645 = vld [vmem:[%s1 + $0x310] sm:$0xff]
  %v646 = vld [vmem:[%s1 + $0x320] sm:$0xff]
  %v647 = vld [vmem:[%s1 + $0x330] sm:$0xff]
  %v648 = vld [vmem:[%s1 + $0x340] sm:$0xff]
  %v649 = vld [vmem:[%s1 + $0x350] sm:$0xff]
  %v650 = vld [vmem:[%s1 + $0x360] sm:$0xff]
  %v651 = vld [vmem:[%s1 + $0x370] sm:$0xff]
  %v652 = vld [vmem:[%s1 + $0x380] sm:$0xff]
  %v653 = vld [vmem:[%s1 + $0x390] sm:$0xff]
  %v654 = vld [vmem:[%s1 + $0x3a0] sm:$0xff]
  %v655 = vld [vmem:[%s1 + $0x3b0] sm:$0xff]
  %656 = vrot.lane.b32.xlu0 %v109, 108
  %v657 = vpop.permute.xlu0 %656
  %658 = vrot.lane.b32.xlu0 %v114, 108
  %v659 = vpop.permute.xlu0 %658
  %660 = vrot.lane.b32.xlu0 %v119, 108
  %v661 = vpop.permute.xlu0 %660
  %662 = vrot.lane.b32.xlu0 %v124, 108
  %v663 = vpop.permute.xlu0 %662
  %v668 = vsel %vm25, %v636, 0
  %v671 = vsel %vm25, %v637, 0
  %v674 = vsel %vm25, %v638, 0
  %v677 = vsel %vm25, %v639, 0
  %v680 = vsel %vm25, %v640, 0
  %v683 = vsel %vm25, %v641, 0
  %v686 = vsel %vm25, %v642, 0
  %v689 = vsel %vm25, %v643, 0
  %v692 = vsel %vm25, %v644, 0
  %v695 = vsel %vm25, %v645, 0
  %v698 = vsel %vm25, %v646, 0
  %v701 = vsel %vm25, %v647, 0
  %v704 = vsel %vm25, %v648, 0
  %v707 = vsel %vm25, %v649, 0
  %v710 = vsel %vm25, %v650, 0
  %v713 = vsel %vm25, %v651, 0
  %v716 = vsel %vm25, %v652, 0
  %v719 = vsel %vm25, %v653, 0
  %v722 = vsel %vm25, %v654, 0
  %v725 = vsel %vm25, %v655, 0
  %v727 = vsel %vm38, %v663, 0
  %729 = vmatprep.subr.mxu0 0.0
  %730 = vmatpush1.msra.mxu0 %v657
  %731 = vmatprep.subr.mxu0 0.0
  %732 = vmatpush1.msra.mxu0 %v659
  %733 = vmatprep.subr.mxu0 0.0
  %734 = vmatpush1.msra.mxu0 %v661
  %735 = vmatprep.subr.mxu0 0.0
  %736 = vmatpush1.msra.mxu0 %v727
  %737 = vmatprep.subr.mxu0 0.0
  %738 = vmatpush1.msra.mxu0 0.0
  %739 = vmatprep.subr.mxu0 0.0
  %740 = vmatpush1.msra.mxu0 0.0
  %741 = vmatprep.subr.mxu0 0.0
  %742 = vmatpush1.msra.mxu0 0.0
  %743 = vmatprep.subr.mxu0 0.0
  %744 = vmatpush1.msra.mxu0 0.0
  %745 = vmatprep.subr.mxu0 0.0
  %746 = vmatpush1.msra.mxu0 0.0
  %747 = vmatprep.subr.mxu0 0.0
  %748 = vmatpush1.msra.mxu0 0.0
  %749 = vmatprep.subr.mxu0 0.0
  %750 = vmatpush1.msra.mxu0 0.0
  %751 = vmatprep.subr.mxu0 0.0
  %752 = vmatpush1.msra.mxu0 0.0
  %753 = vmatprep.subr.mxu0 0.0
  %754 = vmatpush1.msra.mxu0 0.0
  %755 = vmatprep.subr.mxu0 0.0
  %756 = vmatpush1.msra.mxu0 0.0
  %757 = vmatprep.subr.mxu0 0.0
  %758 = vmatpush1.msra.mxu0 0.0
  %759 = vmatprep.subr.mxu0 0.0
  %760 = vmatpush1.msra.mxu0 0.0
  %761 = vmatprep.subr.mxu0 0.0
  %762 = vmatpush1.msra.mxu0 0.0
  %763 = vmatprep.subr.mxu0 0.0
  %764 = vmatpush1.msra.mxu0 0.0
  %765 = vmatprep.subr.mxu0 0.0
  %766 = vmatpush1.msra.mxu0 0.0
  %767 = vmatprep.subr.mxu0 0.0
  %768 = vmatpush1.msra.mxu0 0.0
  %769 = vmatprep.subr.mxu0 0.0
  %770 = vmatpush1.msra.mxu0 0.0
  %771 = vmatprep.subr.mxu0 0.0
  %772 = vmatpush1.msra.mxu0 0.0
  %773 = vmatprep.subr.mxu0 0.0
  %774 = vmatpush1.msra.mxu0 0.0
  %775 = vmatprep.subr.mxu0 0.0
  %776 = vmatpush1.msra.mxu0 0.0
  %777 = vmatprep.subr.mxu0 0.0
  %778 = vmatpush1.msra.mxu0 0.0
  %779 = vmatprep.subr.mxu0 0.0
  %780 = vmatpush1.msra.mxu0 0.0
  %781 = vmatprep.subr.mxu0 0.0
  %782 = vmatpush1.msra.mxu0 0.0
  %783 = vmatprep.subr.mxu0 0.0
  %784 = vmatpush1.msra.mxu0 0.0
  %785 = vmatprep.subr.mxu0 0.0
  %786 = vmatpush1.msra.mxu0 0.0
  %787 = vmatprep.subr.mxu0 0.0
  %788 = vmatpush1.msra.mxu0 0.0
  %789 = vmatprep.subr.mxu0 0.0
  %790 = vmatpush1.msra.mxu0 0.0
  %791 = vmatprep.subr.mxu0 0.0
  %792 = vmatpush1.msra.mxu0 0.0
  %793 = vmatprep.mubr.f32.mxu0 0.0
  %794 = vmatmul.mubr.f32.gmra.mrb[0].mxu0 %v668
  %v795 = vpop.f32.mrb[0].mxu0
  %v796 = vadd.f32 0.0, %v795
  %v797 = vpop.f32.mrb[0].mxu0
  %798 = vmatprep.mubr.f32.mxu0 0.0
  %799 = vmatmul.mubr.f32.gmra.mrb[0].mxu0 %v671
  %v800 = vpop.f32.mrb[0].mxu0
  %v801 = vadd.f32 0.0, %v800
  %v802 = vpop.f32.mrb[0].mxu0
  %803 = vmatprep.mubr.f32.mxu0 0.0
  %804 = vmatmul.mubr.f32.gmra.mrb[0].mxu0 %v674
  %v805 = vpop.f32.mrb[0].mxu0
  %v806 = vadd.f32 0.0, %v805
  %v807 = vpop.f32.mrb[0].mxu0
  %808 = vmatprep.mubr.f32.mxu0 0.0
  %809 = vmatmul.mubr.f32.gmra.mrb[0].mxu0 %v677
  %v810 = vpop.f32.mrb[0].mxu0
  %v811 = vadd.f32 0.0, %v810
  %v812 = vpop.f32.mrb[0].mxu0
  %813 = vmatprep.mubr.f32.mxu0 0.0
  %814 = vmatmul.mubr.f32.gmra.mrb[0].mxu0 %v680
  %v815 = vpop.f32.mrb[0].mxu0
  %v816 = vadd.f32 0.0, %v815
  %v817 = vpop.f32.mrb[0].mxu0
  %818 = vmatprep.mubr.f32.mxu0 0.0
  %819 = vmatmul.mubr.f32.gmra.mrb[0].mxu0 %v683
  %v820 = vpop.f32.mrb[0].mxu0
  %v821 = vadd.f32 0.0, %v820
  %v822 = vpop.f32.mrb[0].mxu0
  %823 = vmatprep.mubr.f32.mxu0 0.0
  %824 = vmatmul.mubr.f32.gmra.mrb[0].mxu0 %v686
  %v825 = vpop.f32.mrb[0].mxu0
  %v826 = vadd.f32 0.0, %v825
  %v827 = vpop.f32.mrb[0].mxu0
  %828 = vmatprep.mubr.f32.mxu0 0.0
  %829 = vmatmul.mubr.f32.gmra.mrb[0].mxu0 %v689
  %v830 = vpop.f32.mrb[0].mxu0
  %v831 = vadd.f32 0.0, %v830
  %v832 = vpop.f32.mrb[0].mxu0
  %833 = vmatprep.mubr.f32.mxu0 0.0
  %834 = vmatmul.mubr.f32.gmra.mrb[0].mxu0 %v692
  %v835 = vpop.f32.mrb[0].mxu0
  %v836 = vadd.f32 0.0, %v835
  %v837 = vpop.f32.mrb[0].mxu0
  %838 = vmatprep.mubr.f32.mxu0 0.0
  %839 = vmatmul.mubr.f32.gmra.mrb[0].mxu0 %v695
  %v840 = vpop.f32.mrb[0].mxu0
  %v841 = vadd.f32 0.0, %v840
  %v842 = vpop.f32.mrb[0].mxu0
  %843 = vmatprep.mubr.f32.mxu0 0.0
  %844 = vmatmul.mubr.f32.gmra.mrb[0].mxu0 %v698
  %v845 = vpop.f32.mrb[0].mxu0
  %v846 = vadd.f32 0.0, %v845
  %v847 = vpop.f32.mrb[0].mxu0
  %848 = vmatprep.mubr.f32.mxu0 0.0
  %849 = vmatmul.mubr.f32.gmra.mrb[0].mxu0 %v701
  %v850 = vpop.f32.mrb[0].mxu0
  %v851 = vadd.f32 0.0, %v850
  %v852 = vpop.f32.mrb[0].mxu0
  %853 = vmatprep.mubr.f32.mxu0 0.0
  %854 = vmatmul.mubr.f32.gmra.mrb[0].mxu0 %v704
  %v855 = vpop.f32.mrb[0].mxu0
  %v856 = vadd.f32 0.0, %v855
  %v857 = vpop.f32.mrb[0].mxu0
  %858 = vmatprep.mubr.f32.mxu0 0.0
  %859 = vmatmul.mubr.f32.gmra.mrb[0].mxu0 %v707
  %v860 = vpop.f32.mrb[0].mxu0
  %v861 = vadd.f32 0.0, %v860
  %v862 = vpop.f32.mrb[0].mxu0
  %863 = vmatprep.mubr.f32.mxu0 0.0
  %864 = vmatmul.mubr.f32.gmra.mrb[0].mxu0 %v710
  %v865 = vpop.f32.mrb[0].mxu0
  %v866 = vadd.f32 0.0, %v865
  %v867 = vpop.f32.mrb[0].mxu0
  %868 = vmatprep.mubr.f32.mxu0 0.0
  %869 = vmatmul.mubr.f32.gmra.mrb[0].mxu0 %v713
  %v870 = vpop.f32.mrb[0].mxu0
  %v871 = vadd.f32 0.0, %v870
  %v872 = vpop.f32.mrb[0].mxu0
  %873 = vmatprep.mubr.f32.mxu0 0.0
  %874 = vmatmul.mubr.f32.gmra.mrb[0].mxu0 %v716
  %v875 = vpop.f32.mrb[0].mxu0
  %v876 = vadd.f32 0.0, %v875
  %v877 = vpop.f32.mrb[0].mxu0
  %878 = vmatprep.mubr.f32.mxu0 0.0
  %879 = vmatmul.mubr.f32.gmra.mrb[0].mxu0 %v719
  %v880 = vpop.f32.mrb[0].mxu0
  %v881 = vadd.f32 0.0, %v880
  %v882 = vpop.f32.mrb[0].mxu0
  %883 = vmatprep.mubr.f32.mxu0 0.0
  %884 = vmatmul.mubr.f32.gmra.mrb[0].mxu0 %v722
  %v885 = vpop.f32.mrb[0].mxu0
  %v886 = vadd.f32 0.0, %v885
  %v887 = vpop.f32.mrb[0].mxu0
  %888 = vmatprep.mubr.f32.mxu0 0.0
  %889 = vmatmul.mubr.f32.gmra.mrb[0].mxu0 %v725
  %v890 = vpop.f32.mrb[0].mxu0
  %v891 = vadd.f32 0.0, %v890
  %v892 = vpop.f32.mrb[0].mxu0
  %893 = vdwg.mxu0
  %v894 = vadd.f32 %v538, %v796
  %v895 = vadd.f32 %v543, %v801
  %v896 = vadd.f32 %v548, %v806
  %v897 = vadd.f32 %v553, %v811
  %v898 = vadd.f32 %v558, %v816
  %v899 = vadd.f32 %v563, %v821
  %v900 = vadd.f32 %v568, %v826
  %v901 = vadd.f32 %v573, %v831
  %v902 = vadd.f32 %v578, %v836
  %v903 = vadd.f32 %v583, %v841
  %v904 = vadd.f32 %v588, %v846
  %v905 = vadd.f32 %v593, %v851
  %v906 = vadd.f32 %v598, %v856
  %v907 = vadd.f32 %v603, %v861
  %v908 = vadd.f32 %v608, %v866
  %v909 = vadd.f32 %v613, %v871
  %v910 = vadd.f32 %v618, %v876
  %v911 = vadd.f32 %v623, %v881
  %v912 = vadd.f32 %v628, %v886
  %v913 = vadd.f32 %v633, %v891
  %v914 = vld [vmem:[%s3] sm:$0xff]
  %v915 = vld [vmem:[%s3 + $0x8] sm:$0xff]
  %v916 = vld [vmem:[%s3 + $0x10] sm:$0xff]
  %v917 = vld [vmem:[%s3 + $0x18] sm:$0xff]
  %v918 = vld [vmem:[%s3 + $0x20] sm:$0xff]
  %v919 = vld [vmem:[%s3 + $0x28] sm:$0xff]
  %v920 = vld [vmem:[%s3 + $0x30] sm:$0xff]
  %v921 = vld [vmem:[%s3 + $0x38] sm:$0xff]
  %v922 = vld [vmem:[%s3 + $0x40] sm:$0xff]
  %v923 = vld [vmem:[%s3 + $0x48] sm:$0xff]
  %v924 = vld [vmem:[%s3 + $0x50] sm:$0xff]
  %v925 = vld [vmem:[%s3 + $0x58] sm:$0xff]
  %v926 = vld [vmem:[%s3 + $0x60] sm:$0xff]
  %v927 = vld [vmem:[%s3 + $0x68] sm:$0xff]
  %v928 = vld [vmem:[%s3 + $0x70] sm:$0xff]
  %v929 = vld [vmem:[%s3 + $0x78] sm:$0xff]
  %v930 = vld [vmem:[%s3 + $0x80] sm:$0xff]
  %v931 = vld [vmem:[%s3 + $0x88] sm:$0xff]
  %v932 = vld [vmem:[%s3 + $0x90] sm:$0xff]
  %v933 = vld [vmem:[%s3 + $0x98] sm:$0xff]
  %935 = vset.pattern.permute.xlu0 0
  %936 = vperm.xlu0 %935, %v914
  %v937 = vpop.permute.xlu0 %936
  %940 = vset.pattern.permute.xlu0 0
  %941 = vperm.xlu0 %940, %v915
  %v942 = vpop.permute.xlu0 %941
  %945 = vset.pattern.permute.xlu0 0
  %946 = vperm.xlu0 %945, %v916
  %v947 = vpop.permute.xlu0 %946
  %950 = vset.pattern.permute.xlu0 0
  %951 = vperm.xlu0 %950, %v917
  %v952 = vpop.permute.xlu0 %951
  %955 = vset.pattern.permute.xlu0 0
  %956 = vperm.xlu0 %955, %v918
  %v957 = vpop.permute.xlu0 %956
  %960 = vset.pattern.permute.xlu0 0
  %961 = vperm.xlu0 %960, %v919
  %v962 = vpop.permute.xlu0 %961
  %965 = vset.pattern.permute.xlu0 0
  %966 = vperm.xlu0 %965, %v920
  %v967 = vpop.permute.xlu0 %966
  %970 = vset.pattern.permute.xlu0 0
  %971 = vperm.xlu0 %970, %v921
  %v972 = vpop.permute.xlu0 %971
  %975 = vset.pattern.permute.xlu0 0
  %976 = vperm.xlu0 %975, %v922
  %v977 = vpop.permute.xlu0 %976
  %980 = vset.pattern.permute.xlu0 0
  %981 = vperm.xlu0 %980, %v923
  %v982 = vpop.permute.xlu0 %981
  %985 = vset.pattern.permute.xlu0 0
  %986 = vperm.xlu0 %985, %v924
  %v987 = vpop.permute.xlu0 %986
  %990 = vset.pattern.permute.xlu0 0
  %991 = vperm.xlu0 %990, %v925
  %v992 = vpop.permute.xlu0 %991
  %995 = vset.pattern.permute.xlu0 0
  %996 = vperm.xlu0 %995, %v926
  %v997 = vpop.permute.xlu0 %996
  %1000 = vset.pattern.permute.xlu0 0
  %1001 = vperm.xlu0 %1000, %v927
  %v1002 = vpop.permute.xlu0 %1001
  %1005 = vset.pattern.permute.xlu0 0
  %1006 = vperm.xlu0 %1005, %v928
  %v1007 = vpop.permute.xlu0 %1006
  %1010 = vset.pattern.permute.xlu0 0
  %1011 = vperm.xlu0 %1010, %v929
  %v1012 = vpop.permute.xlu0 %1011
  %1015 = vset.pattern.permute.xlu0 0
  %1016 = vperm.xlu0 %1015, %v930
  %v1017 = vpop.permute.xlu0 %1016
  %1020 = vset.pattern.permute.xlu0 0
  %1021 = vperm.xlu0 %1020, %v931
  %v1022 = vpop.permute.xlu0 %1021
  %1025 = vset.pattern.permute.xlu0 0
  %1026 = vperm.xlu0 %1025, %v932
  %v1027 = vpop.permute.xlu0 %1026
  %1030 = vset.pattern.permute.xlu0 0
  %1031 = vperm.xlu0 %1030, %v933
  %v1032 = vpop.permute.xlu0 %1031
  %v1034 = vadd.f32 %v894, %v937
  %v1035 = vadd.f32 %v895, %v942
  %v1036 = vadd.f32 %v896, %v947
  %v1037 = vadd.f32 %v897, %v952
  %v1038 = vadd.f32 %v898, %v957
  %v1039 = vadd.f32 %v899, %v962
  %v1040 = vadd.f32 %v900, %v967
  %v1041 = vadd.f32 %v901, %v972
  %v1042 = vadd.f32 %v902, %v977
  %v1043 = vadd.f32 %v903, %v982
  %v1044 = vadd.f32 %v904, %v987
  %v1045 = vadd.f32 %v905, %v992
  %v1046 = vadd.f32 %v906, %v997
  %v1047 = vadd.f32 %v907, %v1002
  %v1048 = vadd.f32 %v908, %v1007
  %v1049 = vadd.f32 %v909, %v1012
  %v1050 = vadd.f32 %v910, %v1017
  %v1051 = vadd.f32 %v911, %v1022
  %v1052 = vadd.f32 %v912, %v1027
  %v1053 = vadd.f32 %v913, %v1032
  %v1054 = vmax.f32 %v1034, 0.0
  %v1055 = vmax.f32 %v1035, 0.0
  %v1056 = vmax.f32 %v1036, 0.0
  %v1057 = vmax.f32 %v1037, 0.0
  %v1058 = vmax.f32 %v1038, 0.0
  %v1059 = vmax.f32 %v1039, 0.0
  %v1060 = vmax.f32 %v1040, 0.0
  %v1061 = vmax.f32 %v1041, 0.0
  %v1062 = vmax.f32 %v1042, 0.0
  %v1063 = vmax.f32 %v1043, 0.0
  %v1064 = vmax.f32 %v1044, 0.0
  %v1065 = vmax.f32 %v1045, 0.0
  %v1066 = vmax.f32 %v1046, 0.0
  %v1067 = vmax.f32 %v1047, 0.0
  %v1068 = vmax.f32 %v1048, 0.0
  %v1069 = vmax.f32 %v1049, 0.0
  %v1070 = vmax.f32 %v1050, 0.0
  %v1071 = vmax.f32 %v1051, 0.0
  %v1072 = vmax.f32 %v1052, 0.0
  %v1073 = vmax.f32 %v1053, 0.0
  %v1074 = vld [vmem:[%s2 + $0x20] sm:$0xff]
  %v1075 = vld [vmem:[%s2 + $0x28] sm:$0x3]
  %vm1076 = vcmask 80896
  %v1078 = vsel %vm1076, %v1054, 0
  %v1081 = vsel %vm1076, %v1055, 0
  %v1084 = vsel %vm1076, %v1056, 0
  %v1087 = vsel %vm1076, %v1057, 0
  %v1090 = vsel %vm1076, %v1058, 0
  %v1093 = vsel %vm1076, %v1059, 0
  %v1096 = vsel %vm1076, %v1060, 0
  %v1099 = vsel %vm1076, %v1061, 0
  %v1102 = vsel %vm1076, %v1062, 0
  %v1105 = vsel %vm1076, %v1063, 0
  %v1108 = vsel %vm1076, %v1064, 0
  %v1111 = vsel %vm1076, %v1065, 0
  %v1114 = vsel %vm1076, %v1066, 0
  %v1117 = vsel %vm1076, %v1067, 0
  %v1120 = vsel %vm1076, %v1068, 0
  %v1123 = vsel %vm1076, %v1069, 0
  %v1126 = vsel %vm1076, %v1070, 0
  %v1129 = vsel %vm1076, %v1071, 0
  %v1132 = vsel %vm1076, %v1072, 0
  %v1135 = vsel %vm1076, %v1073, 0
  %vm1137 = vcmask 1041408
  %v1139 = vsel %vm1137, %v1075, 0
  %1141 = vmatprep.subr.mxu0 0.0
  %1142 = vmatpush1.msra.mxu0 %v1074
  %1143 = vmatprep.subr.mxu0 0.0
  %1144 = vmatpush1.msra.mxu0 %v1139
  %1145 = vmatprep.subr.mxu0 0.0
  %1146 = vmatpush1.msra.mxu0 0.0
  %1147 = vmatprep.subr.mxu0 0.0
  %1148 = vmatpush1.msra.mxu0 0.0
  %1149 = vmatprep.subr.mxu0 0.0
  %1150 = vmatpush1.msra.mxu0 0.0
  %1151 = vmatprep.subr.mxu0 0.0
  %1152 = vmatpush1.msra.mxu0 0.0
  %1153 = vmatprep.subr.mxu0 0.0
  %1154 = vmatpush1.msra.mxu0 0.0
  %1155 = vmatprep.subr.mxu0 0.0
  %1156 = vmatpush1.msra.mxu0 0.0
  %1157 = vmatprep.subr.mxu0 0.0
  %1158 = vmatpush1.msra.mxu0 0.0
  %1159 = vmatprep.subr.mxu0 0.0
  %1160 = vmatpush1.msra.mxu0 0.0
  %1161 = vmatprep.subr.mxu0 0.0
  %1162 = vmatpush1.msra.mxu0 0.0
  %1163 = vmatprep.subr.mxu0 0.0
  %1164 = vmatpush1.msra.mxu0 0.0
  %1165 = vmatprep.subr.mxu0 0.0
  %1166 = vmatpush1.msra.mxu0 0.0
  %1167 = vmatprep.subr.mxu0 0.0
  %1168 = vmatpush1.msra.mxu0 0.0
  %1169 = vmatprep.subr.mxu0 0.0
  %1170 = vmatpush1.msra.mxu0 0.0
  %1171 = vmatprep.subr.mxu0 0.0
  %1172 = vmatpush1.msra.mxu0 0.0
  %1173 = vmatprep.subr.mxu0 0.0
  %1174 = vmatpush1.msra.mxu0 0.0
  %1175 = vmatprep.subr.mxu0 0.0
  %1176 = vmatpush1.msra.mxu0 0.0
  %1177 = vmatprep.subr.mxu0 0.0
  %1178 = vmatpush1.msra.mxu0 0.0
  %1179 = vmatprep.subr.mxu0 0.0
  %1180 = vmatpush1.msra.mxu0 0.0
  %1181 = vmatprep.subr.mxu0 0.0
  %1182 = vmatpush1.msra.mxu0 0.0
  %1183 = vmatprep.subr.mxu0 0.0
  %1184 = vmatpush1.msra.mxu0 0.0
  %1185 = vmatprep.subr.mxu0 0.0
  %1186 = vmatpush1.msra.mxu0 0.0
  %1187 = vmatprep.subr.mxu0 0.0
  %1188 = vmatpush1.msra.mxu0 0.0
  %1189 = vmatprep.subr.mxu0 0.0
  %1190 = vmatpush1.msra.mxu0 0.0
  %1191 = vmatprep.subr.mxu0 0.0
  %1192 = vmatpush1.msra.mxu0 0.0
  %1193 = vmatprep.subr.mxu0 0.0
  %1194 = vmatpush1.msra.mxu0 0.0
  %1195 = vmatprep.subr.mxu0 0.0
  %1196 = vmatpush1.msra.mxu0 0.0
  %1197 = vmatprep.subr.mxu0 0.0
  %1198 = vmatpush1.msra.mxu0 0.0
  %1199 = vmatprep.subr.mxu0 0.0
  %1200 = vmatpush1.msra.mxu0 0.0
  %1201 = vmatprep.subr.mxu0 0.0
  %1202 = vmatpush1.msra.mxu0 0.0
  %1203 = vmatprep.subr.mxu0 0.0
  %1204 = vmatpush1.msra.mxu0 0.0
  %1205 = vmatprep.mubr.f32.mxu0 0.0
  %1206 = vmatmul.mubr.f32.gmra.mrb[0].mxu0 %v1078
  %v1207 = vpop.f32.mrb[0].mxu0
  %v1208 = vadd.f32 0.0, %v1207
  %v1209 = vpop.f32.mrb[0].mxu0
  %1210 = vmatprep.mubr.f32.mxu0 0.0
  %1211 = vmatmul.mubr.f32.gmra.mrb[0].mxu0 %v1081
  %v1212 = vpop.f32.mrb[0].mxu0
  %v1213 = vadd.f32 0.0, %v1212
  %v1214 = vpop.f32.mrb[0].mxu0
  %1215 = vmatprep.mubr.f32.mxu0 0.0
  %1216 = vmatmul.mubr.f32.gmra.mrb[0].mxu0 %v1084
  %v1217 = vpop.f32.mrb[0].mxu0
  %v1218 = vadd.f32 0.0, %v1217
  %v1219 = vpop.f32.mrb[0].mxu0
  %1220 = vmatprep.mubr.f32.mxu0 0.0
  %1221 = vmatmul.mubr.f32.gmra.mrb[0].mxu0 %v1087
  %v1222 = vpop.f32.mrb[0].mxu0
  %v1223 = vadd.f32 0.0, %v1222
  %v1224 = vpop.f32.mrb[0].mxu0
  %1225 = vmatprep.mubr.f32.mxu0 0.0
  %1226 = vmatmul.mubr.f32.gmra.mrb[0].mxu0 %v1090
  %v1227 = vpop.f32.mrb[0].mxu0
  %v1228 = vadd.f32 0.0, %v1227
  %v1229 = vpop.f32.mrb[0].mxu0
  %1230 = vmatprep.mubr.f32.mxu0 0.0
  %1231 = vmatmul.mubr.f32.gmra.mrb[0].mxu0 %v1093
  %v1232 = vpop.f32.mrb[0].mxu0
  %v1233 = vadd.f32 0.0, %v1232
  %v1234 = vpop.f32.mrb[0].mxu0
  %1235 = vmatprep.mubr.f32.mxu0 0.0
  %1236 = vmatmul.mubr.f32.gmra.mrb[0].mxu0 %v1096
  %v1237 = vpop.f32.mrb[0].mxu0
  %v1238 = vadd.f32 0.0, %v1237
  %v1239 = vpop.f32.mrb[0].mxu0
  %1240 = vmatprep.mubr.f32.mxu0 0.0
  %1241 = vmatmul.mubr.f32.gmra.mrb[0].mxu0 %v1099
  %v1242 = vpop.f32.mrb[0].mxu0
  %v1243 = vadd.f32 0.0, %v1242
  %v1244 = vpop.f32.mrb[0].mxu0
  %1245 = vmatprep.mubr.f32.mxu0 0.0
  %1246 = vmatmul.mubr.f32.gmra.mrb[0].mxu0 %v1102
  %v1247 = vpop.f32.mrb[0].mxu0
  %v1248 = vadd.f32 0.0, %v1247
  %v1249 = vpop.f32.mrb[0].mxu0
  %1250 = vmatprep.mubr.f32.mxu0 0.0
  %1251 = vmatmul.mubr.f32.gmra.mrb[0].mxu0 %v1105
  %v1252 = vpop.f32.mrb[0].mxu0
  %v1253 = vadd.f32 0.0, %v1252
  %v1254 = vpop.f32.mrb[0].mxu0
  %1255 = vmatprep.mubr.f32.mxu0 0.0
  %1256 = vmatmul.mubr.f32.gmra.mrb[0].mxu0 %v1108
  %v1257 = vpop.f32.mrb[0].mxu0
  %v1258 = vadd.f32 0.0, %v1257
  %v1259 = vpop.f32.mrb[0].mxu0
  %1260 = vmatprep.mubr.f32.mxu0 0.0
  %1261 = vmatmul.mubr.f32.gmra.mrb[0].mxu0 %v1111
  %v1262 = vpop.f32.mrb[0].mxu0
  %v1263 = vadd.f32 0.0, %v1262
  %v1264 = vpop.f32.mrb[0].mxu0
  %1265 = vmatprep.mubr.f32.mxu0 0.0
  %1266 = vmatmul.mubr.f32.gmra.mrb[0].mxu0 %v1114
  %v1267 = vpop.f32.mrb[0].mxu0
  %v1268 = vadd.f32 0.0, %v1267
  %v1269 = vpop.f32.mrb[0].mxu0
  %1270 = vmatprep.mubr.f32.mxu0 0.0
  %1271 = vmatmul.mubr.f32.gmra.mrb[0].mxu0 %v1117
  %v1272 = vpop.f32.mrb[0].mxu0
  %v1273 = vadd.f32 0.0, %v1272
  %v1274 = vpop.f32.mrb[0].mxu0
  %1275 = vmatprep.mubr.f32.mxu0 0.0
  %1276 = vmatmul.mubr.f32.gmra.mrb[0].mxu0 %v1120
  %v1277 = vpop.f32.mrb[0].mxu0
  %v1278 = vadd.f32 0.0, %v1277
  %v1279 = vpop.f32.mrb[0].mxu0
  %1280 = vmatprep.mubr.f32.mxu0 0.0
  %1281 = vmatmul.mubr.f32.gmra.mrb[0].mxu0 %v1123
  %v1282 = vpop.f32.mrb[0].mxu0
  %v1283 = vadd.f32 0.0, %v1282
  %v1284 = vpop.f32.mrb[0].mxu0
  %1285 = vmatprep.mubr.f32.mxu0 0.0
  %1286 = vmatmul.mubr.f32.gmra.mrb[0].mxu0 %v1126
  %v1287 = vpop.f32.mrb[0].mxu0
  %v1288 = vadd.f32 0.0, %v1287
  %v1289 = vpop.f32.mrb[0].mxu0
  %1290 = vmatprep.mubr.f32.mxu0 0.0
  %1291 = vmatmul.mubr.f32.gmra.mrb[0].mxu0 %v1129
  %v1292 = vpop.f32.mrb[0].mxu0
  %v1293 = vadd.f32 0.0, %v1292
  %v1294 = vpop.f32.mrb[0].mxu0
  %1295 = vmatprep.mubr.f32.mxu0 0.0
  %1296 = vmatmul.mubr.f32.gmra.mrb[0].mxu0 %v1132
  %v1297 = vpop.f32.mrb[0].mxu0
  %v1298 = vadd.f32 0.0, %v1297
  %v1299 = vpop.f32.mrb[0].mxu0
  %1300 = vmatprep.mubr.f32.mxu0 0.0
  %1301 = vmatmul.mubr.f32.gmra.mrb[0].mxu0 %v1135
  %v1302 = vpop.f32.mrb[0].mxu0
  %v1303 = vadd.f32 0.0, %v1302
  %v1304 = vpop.f32.mrb[0].mxu0
  %1305 = vdwg.mxu0
  %v1306 = vld [vmem:[%s1 + $0x3c0] sm:$0xff]
  %v1307 = vld [vmem:[%s1 + $0x3c8] sm:$0xff]
  %v1308 = vld [vmem:[%s1 + $0x3d0] sm:$0xff]
  %v1309 = vld [vmem:[%s1 + $0x3d8] sm:$0xff]
  %v1310 = vld [vmem:[%s1 + $0x3e0] sm:$0xff]
  %v1311 = vld [vmem:[%s1 + $0x3e8] sm:$0xff]
  %v1312 = vld [vmem:[%s1 + $0x3f0] sm:$0xff]
  %v1313 = vld [vmem:[%s1 + $0x3f8] sm:$0xff]
  %v1314 = vld [vmem:[%s1 + $0x400] sm:$0xff]
  %v1315 = vld [vmem:[%s1 + $0x408] sm:$0xff]
  %v1316 = vld [vmem:[%s1 + $0x410] sm:$0xff]
  %v1317 = vld [vmem:[%s1 + $0x418] sm:$0xff]
  %v1318 = vld [vmem:[%s1 + $0x420] sm:$0xff]
  %v1319 = vld [vmem:[%s1 + $0x428] sm:$0xff]
  %v1320 = vld [vmem:[%s1 + $0x430] sm:$0xff]
  %v1321 = vld [vmem:[%s1 + $0x438] sm:$0xff]
  %v1322 = vld [vmem:[%s1 + $0x440] sm:$0xff]
  %v1323 = vld [vmem:[%s1 + $0x448] sm:$0xff]
  %v1324 = vld [vmem:[%s1 + $0x450] sm:$0xff]
  %v1325 = vld [vmem:[%s1 + $0x458] sm:$0xff]
  %vm1326 = vcmask 261120
  %v1328 = vsel %vm1326, %v1307, 0
  %v1331 = vsel %vm1326, %v1309, 0
  %v1334 = vsel %vm1326, %v1311, 0
  %v1337 = vsel %vm1326, %v1313, 0
  %v1340 = vsel %vm1326, %v1315, 0
  %v1343 = vsel %vm1326, %v1317, 0
  %v1346 = vsel %vm1326, %v1319, 0
  %v1349 = vsel %vm1326, %v1321, 0
  %v1352 = vsel %vm1326, %v1323, 0
  %v1355 = vsel %vm1326, %v1325, 0
  %1357 = vmatprep.subr.mxu0 0.0
  %1358 = vmatpush1.msra.mxu0 %v1208
  %1359 = vmatprep.subr.mxu0 0.0
  %1360 = vmatpush1.msra.mxu0 %v1213
  %1361 = vmatprep.subr.mxu0 0.0
  %1362 = vmatpush1.msra.mxu0 %v1218
  %1363 = vmatprep.subr.mxu0 0.0
  %1364 = vmatpush1.msra.mxu0 %v1223
  %1365 = vmatprep.subr.mxu0 0.0
  %1366 = vmatpush1.msra.mxu0 %v1228
  %1367 = vmatprep.subr.mxu0 0.0
  %1368 = vmatpush1.msra.mxu0 %v1233
  %1369 = vmatprep.subr.mxu0 0.0
  %1370 = vmatpush1.msra.mxu0 %v1238
  %1371 = vmatprep.subr.mxu0 0.0
  %1372 = vmatpush1.msra.mxu0 %v1243
  %1373 = vmatprep.subr.mxu0 0.0
  %1374 = vmatpush1.msra.mxu0 %v1248
  %1375 = vmatprep.subr.mxu0 0.0
  %1376 = vmatpush1.msra.mxu0 %v1253
  %1377 = vmatprep.subr.mxu0 0.0
  %1378 = vmatpush1.msra.mxu0 %v1258
  %1379 = vmatprep.subr.mxu0 0.0
  %1380 = vmatpush1.msra.mxu0 %v1263
  %1381 = vmatprep.subr.mxu0 0.0
  %1382 = vmatpush1.msra.mxu0 %v1268
  %1383 = vmatprep.subr.mxu0 0.0
  %1384 = vmatpush1.msra.mxu0 %v1273
  %1385 = vmatprep.subr.mxu0 0.0
  %1386 = vmatpush1.msra.mxu0 %v1278
  %1387 = vmatprep.subr.mxu0 0.0
  %1388 = vmatpush1.msra.mxu0 %v1283
  %1389 = vmatprep.subr.mxu0 0.0
  %1390 = vmatpush1.msra.mxu0 %v1288
  %1391 = vmatprep.subr.mxu0 0.0
  %1392 = vmatpush1.msra.mxu0 %v1293
  %1393 = vmatprep.subr.mxu0 0.0
  %1394 = vmatpush1.msra.mxu0 %v1298
  %1395 = vmatprep.subr.mxu0 0.0
  %1396 = vmatpush1.msra.mxu0 %v1303
  %1397 = vmatprep.subr.mxu0 0.0
  %1398 = vmatpush1.msra.mxu0 0.0
  %1399 = vmatprep.subr.mxu0 0.0
  %1400 = vmatpush1.msra.mxu0 0.0
  %1401 = vmatprep.subr.mxu0 0.0
  %1402 = vmatpush1.msra.mxu0 0.0
  %1403 = vmatprep.subr.mxu0 0.0
  %1404 = vmatpush1.msra.mxu0 0.0
  %1405 = vmatprep.subr.mxu0 0.0
  %1406 = vmatpush1.msra.mxu0 0.0
  %1407 = vmatprep.subr.mxu0 0.0
  %1408 = vmatpush1.msra.mxu0 0.0
  %1409 = vmatprep.subr.mxu0 0.0
  %1410 = vmatpush1.msra.mxu0 0.0
  %1411 = vmatprep.subr.mxu0 0.0
  %1412 = vmatpush1.msra.mxu0 0.0
  %1413 = vmatprep.subr.mxu0 0.0
  %1414 = vmatpush1.msra.mxu0 0.0
  %1415 = vmatprep.subr.mxu0 0.0
  %1416 = vmatpush1.msra.mxu0 0.0
  %1417 = vmatprep.subr.mxu0 0.0
  %1418 = vmatpush1.msra.mxu0 0.0
  %1419 = vmatprep.subr.mxu0 0.0
  %1420 = vmatpush1.msra.mxu0 0.0
  %1421 = vmatprep.mubr.f32.mxu0 %v1328
  %1422 = vmatmul.mubr.f32.gmra.mrb[0].mxu0 %v1306
  %v1423 = vpop.f32.mrb[0].mxu0
  %v1424 = vadd.f32 0.0, %v1423
  %v1425 = vpop.f32.mrb[0].mxu0
  %1426 = vmatprep.mubr.f32.mxu0 %v1331
  %1427 = vmatmul.mubr.f32.gmra.mrb[0].mxu0 %v1308
  %v1428 = vpop.f32.mrb[0].mxu0
  %v1429 = vadd.f32 0.0, %v1428
  %v1430 = vpop.f32.mrb[0].mxu0
  %1431 = vmatprep.mubr.f32.mxu0 %v1334
  %1432 = vmatmul.mubr.f32.gmra.mrb[0].mxu0 %v1310
  %v1433 = vpop.f32.mrb[0].mxu0
  %v1434 = vadd.f32 0.0, %v1433
  %v1435 = vpop.f32.mrb[0].mxu0
  %1436 = vmatprep.mubr.f32.mxu0 %v1337
  %1437 = vmatmul.mubr.f32.gmra.mrb[0].mxu0 %v1312
  %v1438 = vpop.f32.mrb[0].mxu0
  %v1439 = vadd.f32 0.0, %v1438
  %v1440 = vpop.f32.mrb[0].mxu0
  %1441 = vmatprep.mubr.f32.mxu0 %v1340
  %1442 = vmatmul.mubr.f32.gmra.mrb[0].mxu0 %v1314
  %v1443 = vpop.f32.mrb[0].mxu0
  %v1444 = vadd.f32 0.0, %v1443
  %v1445 = vpop.f32.mrb[0].mxu0
  %1446 = vmatprep.mubr.f32.mxu0 %v1343
  %1447 = vmatmul.mubr.f32.gmra.mrb[0].mxu0 %v1316
  %v1448 = vpop.f32.mrb[0].mxu0
  %v1449 = vadd.f32 0.0, %v1448
  %v1450 = vpop.f32.mrb[0].mxu0
  %1451 = vmatprep.mubr.f32.mxu0 %v1346
  %1452 = vmatmul.mubr.f32.gmra.mrb[0].mxu0 %v1318
  %v1453 = vpop.f32.mrb[0].mxu0
  %v1454 = vadd.f32 0.0, %v1453
  %v1455 = vpop.f32.mrb[0].mxu0
  %1456 = vmatprep.mubr.f32.mxu0 %v1349
  %1457 = vmatmul.mubr.f32.gmra.mrb[0].mxu0 %v1320
  %v1458 = vpop.f32.mrb[0].mxu0
  %v1459 = vadd.f32 0.0, %v1458
  %v1460 = vpop.f32.mrb[0].mxu0
  %1461 = vmatprep.mubr.f32.mxu0 %v1352
  %1462 = vmatmul.mubr.f32.gmra.mrb[0].mxu0 %v1322
  %v1463 = vpop.f32.mrb[0].mxu0
  %v1464 = vadd.f32 0.0, %v1463
  %v1465 = vpop.f32.mrb[0].mxu0
  %1466 = vmatprep.mubr.f32.mxu0 %v1355
  %1467 = vmatmul.mubr.f32.gmra.mrb[0].mxu0 %v1324
  %v1468 = vpop.f32.mrb[0].mxu0
  %v1469 = vadd.f32 0.0, %v1468
  %v1470 = vpop.f32.mrb[0].mxu0
  %1471 = vdwg.mxu0
  %1482 = vrot.lane.b32.xlu0 %v1424, 123
  %v1483 = vpop.permute.xlu0 %1482
  %1484 = vrot.lane.b32.xlu0 %v1429, 123
  %v1485 = vpop.permute.xlu0 %1484
  %1486 = vrot.lane.b32.xlu0 %v1434, 123
  %v1487 = vpop.permute.xlu0 %1486
  %1488 = vrot.lane.b32.xlu0 %v1439, 123
  %v1489 = vpop.permute.xlu0 %1488
  %1490 = vrot.lane.b32.xlu0 %v1444, 123
  %v1491 = vpop.permute.xlu0 %1490
  %1492 = vrot.lane.b32.xlu0 %v1449, 123
  %v1493 = vpop.permute.xlu0 %1492
  %1494 = vrot.lane.b32.xlu0 %v1454, 123
  %v1495 = vpop.permute.xlu0 %1494
  %1496 = vrot.lane.b32.xlu0 %v1459, 123
  %v1497 = vpop.permute.xlu0 %1496
  %1498 = vrot.lane.b32.xlu0 %v1464, 123
  %v1499 = vpop.permute.xlu0 %1498
  %1500 = vrot.lane.b32.xlu0 %v1469, 123
  %v1501 = vpop.permute.xlu0 %1500
  %v1512 = vmax.f32 %v1424, %v1483
  %v1513 = vmax.f32 %v1429, %v1485
  %v1514 = vmax.f32 %v1434, %v1487
  %v1515 = vmax.f32 %v1439, %v1489
  %v1516 = vmax.f32 %v1444, %v1491
  %v1517 = vmax.f32 %v1449, %v1493
  %v1518 = vmax.f32 %v1454, %v1495
  %v1519 = vmax.f32 %v1459, %v1497
  %v1520 = vmax.f32 %v1464, %v1499
  %v1521 = vmax.f32 %v1469, %v1501
  %v1522 = vld [vmem:[%s1 + $0x460] sm:$0xff]
  %v1523 = vld [vmem:[%s1 + $0x468] sm:$0xff]
  %v1524 = vld [vmem:[%s1 + $0x470] sm:$0xff]
  %v1525 = vld [vmem:[%s1 + $0x478] sm:$0xff]
  %v1526 = vld [vmem:[%s1 + $0x480] sm:$0xff]
  %v1527 = vld [vmem:[%s1 + $0x488] sm:$0xff]
  %v1528 = vld [vmem:[%s1 + $0x490] sm:$0xff]
  %v1529 = vld [vmem:[%s1 + $0x498] sm:$0xff]
  %v1530 = vld [vmem:[%s1 + $0x4a0] sm:$0xff]
  %v1531 = vld [vmem:[%s1 + $0x4a8] sm:$0xff]
  %v1532 = vld [vmem:[%s1 + $0x4b0] sm:$0xff]
  %v1533 = vld [vmem:[%s1 + $0x4b8] sm:$0xff]
  %v1534 = vld [vmem:[%s1 + $0x4c0] sm:$0xff]
  %v1535 = vld [vmem:[%s1 + $0x4c8] sm:$0xff]
  %v1536 = vld [vmem:[%s1 + $0x4d0] sm:$0xff]
  %v1537 = vld [vmem:[%s1 + $0x4d8] sm:$0xff]
  %v1538 = vld [vmem:[%s1 + $0x4e0] sm:$0xff]
  %v1539 = vld [vmem:[%s1 + $0x4e8] sm:$0xff]
  %v1540 = vld [vmem:[%s1 + $0x4f0] sm:$0xff]
  %v1541 = vld [vmem:[%s1 + $0x4f8] sm:$0xff]
  %v1543 = vsel %vm1326, %v1523, 0
  %v1546 = vsel %vm1326, %v1525, 0
  %v1549 = vsel %vm1326, %v1527, 0
  %v1552 = vsel %vm1326, %v1529, 0
  %v1555 = vsel %vm1326, %v1531, 0
  %v1558 = vsel %vm1326, %v1533, 0
  %v1561 = vsel %vm1326, %v1535, 0
  %v1564 = vsel %vm1326, %v1537, 0
  %v1567 = vsel %vm1326, %v1539, 0
  %v1570 = vsel %vm1326, %v1541, 0
  %1572 = vmatprep.subr.mxu0 0.0
  %1573 = vmatpush1.msra.mxu0 %v1208
  %1574 = vmatprep.subr.mxu0 0.0
  %1575 = vmatpush1.msra.mxu0 %v1213
  %1576 = vmatprep.subr.mxu0 0.0
  %1577 = vmatpush1.msra.mxu0 %v1218
  %1578 = vmatprep.subr.mxu0 0.0
  %1579 = vmatpush1.msra.mxu0 %v1223
  %1580 = vmatprep.subr.mxu0 0.0
  %1581 = vmatpush1.msra.mxu0 %v1228
  %1582 = vmatprep.subr.mxu0 0.0
  %1583 = vmatpush1.msra.mxu0 %v1233
  %1584 = vmatprep.subr.mxu0 0.0
  %1585 = vmatpush1.msra.mxu0 %v1238
  %1586 = vmatprep.subr.mxu0 0.0
  %1587 = vmatpush1.msra.mxu0 %v1243
  %1588 = vmatprep.subr.mxu0 0.0
  %1589 = vmatpush1.msra.mxu0 %v1248
  %1590 = vmatprep.subr.mxu0 0.0
  %1591 = vmatpush1.msra.mxu0 %v1253
  %1592 = vmatprep.subr.mxu0 0.0
  %1593 = vmatpush1.msra.mxu0 %v1258
  %1594 = vmatprep.subr.mxu0 0.0
  %1595 = vmatpush1.msra.mxu0 %v1263
  %1596 = vmatprep.subr.mxu0 0.0
  %1597 = vmatpush1.msra.mxu0 %v1268
  %1598 = vmatprep.subr.mxu0 0.0
  %1599 = vmatpush1.msra.mxu0 %v1273
  %1600 = vmatprep.subr.mxu0 0.0
  %1601 = vmatpush1.msra.mxu0 %v1278
  %1602 = vmatprep.subr.mxu0 0.0
  %1603 = vmatpush1.msra.mxu0 %v1283
  %1604 = vmatprep.subr.mxu0 0.0
  %1605 = vmatpush1.msra.mxu0 %v1288
  %1606 = vmatprep.subr.mxu0 0.0
  %1607 = vmatpush1.msra.mxu0 %v1293
  %1608 = vmatprep.subr.mxu0 0.0
  %1609 = vmatpush1.msra.mxu0 %v1298
  %1610 = vmatprep.subr.mxu0 0.0
  %1611 = vmatpush1.msra.mxu0 %v1303
  %1612 = vmatprep.subr.mxu0 0.0
  %1613 = vmatpush1.msra.mxu0 0.0
  %1614 = vmatprep.subr.mxu0 0.0
  %1615 = vmatpush1.msra.mxu0 0.0
  %1616 = vmatprep.subr.mxu0 0.0
  %1617 = vmatpush1.msra.mxu0 0.0
  %1618 = vmatprep.subr.mxu0 0.0
  %1619 = vmatpush1.msra.mxu0 0.0
  %1620 = vmatprep.subr.mxu0 0.0
  %1621 = vmatpush1.msra.mxu0 0.0
  %1622 = vmatprep.subr.mxu0 0.0
  %1623 = vmatpush1.msra.mxu0 0.0
  %1624 = vmatprep.subr.mxu0 0.0
  %1625 = vmatpush1.msra.mxu0 0.0
  %1626 = vmatprep.subr.mxu0 0.0
  %1627 = vmatpush1.msra.mxu0 0.0
  %1628 = vmatprep.subr.mxu0 0.0
  %1629 = vmatpush1.msra.mxu0 0.0
  %1630 = vmatprep.subr.mxu0 0.0
  %1631 = vmatpush1.msra.mxu0 0.0
  %1632 = vmatprep.subr.mxu0 0.0
  %1633 = vmatpush1.msra.mxu0 0.0
  %1634 = vmatprep.subr.mxu0 0.0
  %1635 = vmatpush1.msra.mxu0 0.0
  %1636 = vmatprep.mubr.f32.mxu0 %v1543
  %1637 = vmatmul.mubr.f32.gmra.mrb[0].mxu0 %v1522
  %v1638 = vpop.f32.mrb[0].mxu0
  %v1639 = vadd.f32 0.0, %v1638
  %v1640 = vpop.f32.mrb[0].mxu0
  %1641 = vmatprep.mubr.f32.mxu0 %v1546
  %1642 = vmatmul.mubr.f32.gmra.mrb[0].mxu0 %v1524
  %v1643 = vpop.f32.mrb[0].mxu0
  %v1644 = vadd.f32 0.0, %v1643
  %v1645 = vpop.f32.mrb[0].mxu0
  %1646 = vmatprep.mubr.f32.mxu0 %v1549
  %1647 = vmatmul.mubr.f32.gmra.mrb[0].mxu0 %v1526
  %v1648 = vpop.f32.mrb[0].mxu0
  %v1649 = vadd.f32 0.0, %v1648
  %v1650 = vpop.f32.mrb[0].mxu0
  %1651 = vmatprep.mubr.f32.mxu0 %v1552
  %1652 = vmatmul.mubr.f32.gmra.mrb[0].mxu0 %v1528
  %v1653 = vpop.f32.mrb[0].mxu0
  %v1654 = vadd.f32 0.0, %v1653
  %v1655 = vpop.f32.mrb[0].mxu0
  %1656 = vmatprep.mubr.f32.mxu0 %v1555
  %1657 = vmatmul.mubr.f32.gmra.mrb[0].mxu0 %v1530
  %v1658 = vpop.f32.mrb[0].mxu0
  %v1659 = vadd.f32 0.0, %v1658
  %v1660 = vpop.f32.mrb[0].mxu0
  %1661 = vmatprep.mubr.f32.mxu0 %v1558
  %1662 = vmatmul.mubr.f32.gmra.mrb[0].mxu0 %v1532
  %v1663 = vpop.f32.mrb[0].mxu0
  %v1664 = vadd.f32 0.0, %v1663
  %v1665 = vpop.f32.mrb[0].mxu0
  %1666 = vmatprep.mubr.f32.mxu0 %v1561
  %1667 = vmatmul.mubr.f32.gmra.mrb[0].mxu0 %v1534
  %v1668 = vpop.f32.mrb[0].mxu0
  %v1669 = vadd.f32 0.0, %v1668
  %v1670 = vpop.f32.mrb[0].mxu0
  %1671 = vmatprep.mubr.f32.mxu0 %v1564
  %1672 = vmatmul.mubr.f32.gmra.mrb[0].mxu0 %v1536
  %v1673 = vpop.f32.mrb[0].mxu0
  %v1674 = vadd.f32 0.0, %v1673
  %v1675 = vpop.f32.mrb[0].mxu0
  %1676 = vmatprep.mubr.f32.mxu0 %v1567
  %1677 = vmatmul.mubr.f32.gmra.mrb[0].mxu0 %v1538
  %v1678 = vpop.f32.mrb[0].mxu0
  %v1679 = vadd.f32 0.0, %v1678
  %v1680 = vpop.f32.mrb[0].mxu0
  %1681 = vmatprep.mubr.f32.mxu0 %v1570
  %1682 = vmatmul.mubr.f32.gmra.mrb[0].mxu0 %v1540
  %v1683 = vpop.f32.mrb[0].mxu0
  %v1684 = vadd.f32 0.0, %v1683
  %v1685 = vpop.f32.mrb[0].mxu0
  %1686 = vdwg.mxu0
  %v1687 = vmax.f32 %v1512, %v1639
  %v1688 = vmax.f32 %v1513, %v1644
  %v1689 = vmax.f32 %v1514, %v1649
  %v1690 = vmax.f32 %v1515, %v1654
  %v1691 = vmax.f32 %v1516, %v1659
  %v1692 = vmax.f32 %v1517, %v1664
  %v1693 = vmax.f32 %v1518, %v1669
  %v1694 = vmax.f32 %v1519, %v1674
  %v1695 = vmax.f32 %v1520, %v1679
  %v1696 = vmax.f32 %v1521, %v1684
  %1707 = vrot.lane.b32.xlu0 %v1639, 123
  %v1708 = vpop.permute.xlu0 %1707
  %1709 = vrot.lane.b32.xlu0 %v1644, 123
  %v1710 = vpop.permute.xlu0 %1709
  %1711 = vrot.lane.b32.xlu0 %v1649, 123
  %v1712 = vpop.permute.xlu0 %1711
  %1713 = vrot.lane.b32.xlu0 %v1654, 123
  %v1714 = vpop.permute.xlu0 %1713
  %1715 = vrot.lane.b32.xlu0 %v1659, 123
  %v1716 = vpop.permute.xlu0 %1715
  %1717 = vrot.lane.b32.xlu0 %v1664, 123
  %v1718 = vpop.permute.xlu0 %1717
  %1719 = vrot.lane.b32.xlu0 %v1669, 123
  %v1720 = vpop.permute.xlu0 %1719
  %1721 = vrot.lane.b32.xlu0 %v1674, 123
  %v1722 = vpop.permute.xlu0 %1721
  %1723 = vrot.lane.b32.xlu0 %v1679, 123
  %v1724 = vpop.permute.xlu0 %1723
  %1725 = vrot.lane.b32.xlu0 %v1684, 123
  %v1726 = vpop.permute.xlu0 %1725
  %v1737 = vmax.f32 %v1687, %v1708
  %v1738 = vmax.f32 %v1688, %v1710
  %v1739 = vmax.f32 %v1689, %v1712
  %v1740 = vmax.f32 %v1690, %v1714
  %v1741 = vmax.f32 %v1691, %v1716
  %v1742 = vmax.f32 %v1692, %v1718
  %v1743 = vmax.f32 %v1693, %v1720
  %v1744 = vmax.f32 %v1694, %v1722
  %v1745 = vmax.f32 %v1695, %v1724
  %v1746 = vmax.f32 %v1696, %v1726
  %v1747 = vld [vmem:[%s2 + $0x30] sm:$0x1f]
  %vm1748 = vcmask 39936
  %v1750 = vsel %vm1748, %v1737, 0
  %v1753 = vsel %vm1748, %v1738, 0
  %v1756 = vsel %vm1748, %v1739, 0
  %v1759 = vsel %vm1748, %v1740, 0
  %v1762 = vsel %vm1748, %v1741, 0
  %v1765 = vsel %vm1748, %v1742, 0
  %v1768 = vsel %vm1748, %v1743, 0
  %v1771 = vsel %vm1748, %v1744, 0
  %v1774 = vsel %vm1748, %v1745, 0
  %v1777 = vsel %vm1748, %v1746, 0
  %vm1779 = vcmask 1044480
  %v1781 = vsel %vm1779, %v1747, 0
  %1783 = vmatprep.subr.mxu0 0.0
  %1784 = vmatpush1.msra.mxu0 %v1781
  %1785 = vmatprep.subr.mxu0 0.0
  %1786 = vmatpush1.msra.mxu0 0.0
  %1787 = vmatprep.subr.mxu0 0.0
  %1788 = vmatpush1.msra.mxu0 0.0
  %1789 = vmatprep.subr.mxu0 0.0
  %1790 = vmatpush1.msra.mxu0 0.0
  %1791 = vmatprep.subr.mxu0 0.0
  %1792 = vmatpush1.msra.mxu0 0.0
  %1793 = vmatprep.subr.mxu0 0.0
  %1794 = vmatpush1.msra.mxu0 0.0
  %1795 = vmatprep.subr.mxu0 0.0
  %1796 = vmatpush1.msra.mxu0 0.0
  %1797 = vmatprep.subr.mxu0 0.0
  %1798 = vmatpush1.msra.mxu0 0.0
  %1799 = vmatprep.subr.mxu0 0.0
  %1800 = vmatpush1.msra.mxu0 0.0
  %1801 = vmatprep.subr.mxu0 0.0
  %1802 = vmatpush1.msra.mxu0 0.0
  %1803 = vmatprep.subr.mxu0 0.0
  %1804 = vmatpush1.msra.mxu0 0.0
  %1805 = vmatprep.subr.mxu0 0.0
  %1806 = vmatpush1.msra.mxu0 0.0
  %1807 = vmatprep.subr.mxu0 0.0
  %1808 = vmatpush1.msra.mxu0 0.0
  %1809 = vmatprep.subr.mxu0 0.0
  %1810 = vmatpush1.msra.mxu0 0.0
  %1811 = vmatprep.subr.mxu0 0.0
  %1812 = vmatpush1.msra.mxu0 0.0
  %1813 = vmatprep.subr.mxu0 0.0
  %1814 = vmatpush1.msra.mxu0 0.0
  %1815 = vmatprep.subr.mxu0 0.0
  %1816 = vmatpush1.msra.mxu0 0.0
  %1817 = vmatprep.subr.mxu0 0.0
  %1818 = vmatpush1.msra.mxu0 0.0
  %1819 = vmatprep.subr.mxu0 0.0
  %1820 = vmatpush1.msra.mxu0 0.0
  %1821 = vmatprep.subr.mxu0 0.0
  %1822 = vmatpush1.msra.mxu0 0.0
  %1823 = vmatprep.subr.mxu0 0.0
  %1824 = vmatpush1.msra.mxu0 0.0
  %1825 = vmatprep.subr.mxu0 0.0
  %1826 = vmatpush1.msra.mxu0 0.0
  %1827 = vmatprep.subr.mxu0 0.0
  %1828 = vmatpush1.msra.mxu0 0.0
  %1829 = vmatprep.subr.mxu0 0.0
  %1830 = vmatpush1.msra.mxu0 0.0
  %1831 = vmatprep.subr.mxu0 0.0
  %1832 = vmatpush1.msra.mxu0 0.0
  %1833 = vmatprep.subr.mxu0 0.0
  %1834 = vmatpush1.msra.mxu0 0.0
  %1835 = vmatprep.subr.mxu0 0.0
  %1836 = vmatpush1.msra.mxu0 0.0
  %1837 = vmatprep.subr.mxu0 0.0
  %1838 = vmatpush1.msra.mxu0 0.0
  %1839 = vmatprep.subr.mxu0 0.0
  %1840 = vmatpush1.msra.mxu0 0.0
  %1841 = vmatprep.subr.mxu0 0.0
  %1842 = vmatpush1.msra.mxu0 0.0
  %1843 = vmatprep.subr.mxu0 0.0
  %1844 = vmatpush1.msra.mxu0 0.0
  %1845 = vmatprep.subr.mxu0 0.0
  %1846 = vmatpush1.msra.mxu0 0.0
  %1847 = vmatprep.mubr.f32.mxu0 0.0
  %1848 = vmatmul.mubr.f32.gmra.mrb[0].mxu0 %v1750
  %v1849 = vpop.f32.mrb[0].mxu0
  %v1850 = vadd.f32 0.0, %v1849
  %v1851 = vpop.f32.mrb[0].mxu0
  %1852 = vmatprep.mubr.f32.mxu0 0.0
  %1853 = vmatmul.mubr.f32.gmra.mrb[0].mxu0 %v1753
  %v1854 = vpop.f32.mrb[0].mxu0
  %v1855 = vadd.f32 0.0, %v1854
  %v1856 = vpop.f32.mrb[0].mxu0
  %1857 = vmatprep.mubr.f32.mxu0 0.0
  %1858 = vmatmul.mubr.f32.gmra.mrb[0].mxu0 %v1756
  %v1859 = vpop.f32.mrb[0].mxu0
  %v1860 = vadd.f32 0.0, %v1859
  %v1861 = vpop.f32.mrb[0].mxu0
  %1862 = vmatprep.mubr.f32.mxu0 0.0
  %1863 = vmatmul.mubr.f32.gmra.mrb[0].mxu0 %v1759
  %v1864 = vpop.f32.mrb[0].mxu0
  %v1865 = vadd.f32 0.0, %v1864
  %v1866 = vpop.f32.mrb[0].mxu0
  %1867 = vmatprep.mubr.f32.mxu0 0.0
  %1868 = vmatmul.mubr.f32.gmra.mrb[0].mxu0 %v1762
  %v1869 = vpop.f32.mrb[0].mxu0
  %v1870 = vadd.f32 0.0, %v1869
  %v1871 = vpop.f32.mrb[0].mxu0
  %1872 = vmatprep.mubr.f32.mxu0 0.0
  %1873 = vmatmul.mubr.f32.gmra.mrb[0].mxu0 %v1765
  %v1874 = vpop.f32.mrb[0].mxu0
  %v1875 = vadd.f32 0.0, %v1874
  %v1876 = vpop.f32.mrb[0].mxu0
  %1877 = vmatprep.mubr.f32.mxu0 0.0
  %1878 = vmatmul.mubr.f32.gmra.mrb[0].mxu0 %v1768
  %v1879 = vpop.f32.mrb[0].mxu0
  %v1880 = vadd.f32 0.0, %v1879
  %v1881 = vpop.f32.mrb[0].mxu0
  %1882 = vmatprep.mubr.f32.mxu0 0.0
  %1883 = vmatmul.mubr.f32.gmra.mrb[0].mxu0 %v1771
  %v1884 = vpop.f32.mrb[0].mxu0
  %v1885 = vadd.f32 0.0, %v1884
  %v1886 = vpop.f32.mrb[0].mxu0
  %1887 = vmatprep.mubr.f32.mxu0 0.0
  %1888 = vmatmul.mubr.f32.gmra.mrb[0].mxu0 %v1774
  %v1889 = vpop.f32.mrb[0].mxu0
  %v1890 = vadd.f32 0.0, %v1889
  %v1891 = vpop.f32.mrb[0].mxu0
  %1892 = vmatprep.mubr.f32.mxu0 0.0
  %1893 = vmatmul.mubr.f32.gmra.mrb[0].mxu0 %v1777
  %v1894 = vpop.f32.mrb[0].mxu0
  %v1895 = vadd.f32 0.0, %v1894
  %v1896 = vpop.f32.mrb[0].mxu0
  %1897 = vdwg.mxu0
  %v1898 = vld [vmem:[%s1 + $0x500] sm:$0xff]
  %v1899 = vld [vmem:[%s1 + $0x510] sm:$0xff]
  %v1900 = vld [vmem:[%s1 + $0x520] sm:$0xff]
  %v1901 = vld [vmem:[%s1 + $0x530] sm:$0xff]
  %v1902 = vld [vmem:[%s1 + $0x540] sm:$0xff]
  %v1903 = vld [vmem:[%s1 + $0x550] sm:$0xff]
  %1914 = vrot.lane.b32.xlu0 %v1850, 125
  %v1915 = vpop.permute.xlu0 %1914
  %1916 = vrot.lane.b32.xlu0 %v1855, 125
  %v1917 = vpop.permute.xlu0 %1916
  %1918 = vrot.lane.b32.xlu0 %v1860, 125
  %v1919 = vpop.permute.xlu0 %1918
  %1920 = vrot.lane.b32.xlu0 %v1865, 125
  %v1921 = vpop.permute.xlu0 %1920
  %1922 = vrot.lane.b32.xlu0 %v1870, 125
  %v1923 = vpop.permute.xlu0 %1922
  %1924 = vrot.lane.b32.xlu0 %v1875, 125
  %v1925 = vpop.permute.xlu0 %1924
  %1926 = vrot.lane.b32.xlu0 %v1880, 125
  %v1927 = vpop.permute.xlu0 %1926
  %1928 = vrot.lane.b32.xlu0 %v1885, 125
  %v1929 = vpop.permute.xlu0 %1928
  %1930 = vrot.lane.b32.xlu0 %v1890, 125
  %v1931 = vpop.permute.xlu0 %1930
  %1932 = vrot.lane.b32.xlu0 %v1895, 125
  %v1933 = vpop.permute.xlu0 %1932
  %vm1944 = vcmask 654336
  %v1946 = vsel %vm1944, %v1901, 0
  %v1949 = vsel %vm1944, %v1902, 0
  %v1952 = vsel %vm1944, %v1903, 0
  %1954 = vmatprep.subr.mxu0 0.0
  %1955 = vmatpush1.msra.mxu0 %v1915
  %1956 = vmatprep.subr.mxu0 0.0
  %1957 = vmatpush1.msra.mxu0 %v1917
  %1958 = vmatprep.subr.mxu0 0.0
  %1959 = vmatpush1.msra.mxu0 %v1919
  %1960 = vmatprep.subr.mxu0 0.0
  %1961 = vmatpush1.msra.mxu0 %v1921
  %1962 = vmatprep.subr.mxu0 0.0
  %1963 = vmatpush1.msra.mxu0 %v1923
  %1964 = vmatprep.subr.mxu0 0.0
  %1965 = vmatpush1.msra.mxu0 %v1925
  %1966 = vmatprep.subr.mxu0 0.0
  %1967 = vmatpush1.msra.mxu0 %v1927
  %1968 = vmatprep.subr.mxu0 0.0
  %1969 = vmatpush1.msra.mxu0 %v1929
  %1970 = vmatprep.subr.mxu0 0.0
  %1971 = vmatpush1.msra.mxu0 %v1931
  %1972 = vmatprep.subr.mxu0 0.0
  %1973 = vmatpush1.msra.mxu0 %v1933
  %1974 = vmatprep.subr.mxu0 0.0
  %1975 = vmatpush1.msra.mxu0 0.0
  %1976 = vmatprep.subr.mxu0 0.0
  %1977 = vmatpush1.msra.mxu0 0.0
  %1978 = vmatprep.subr.mxu0 0.0
  %1979 = vmatpush1.msra.mxu0 0.0
  %1980 = vmatprep.subr.mxu0 0.0
  %1981 = vmatpush1.msra.mxu0 0.0
  %1982 = vmatprep.subr.mxu0 0.0
  %1983 = vmatpush1.msra.mxu0 0.0
  %1984 = vmatprep.subr.mxu0 0.0
  %1985 = vmatpush1.msra.mxu0 0.0
  %1986 = vmatprep.subr.mxu0 0.0
  %1987 = vmatpush1.msra.mxu0 0.0
  %1988 = vmatprep.subr.mxu0 0.0
  %1989 = vmatpush1.msra.mxu0 0.0
  %1990 = vmatprep.subr.mxu0 0.0
  %1991 = vmatpush1.msra.mxu0 0.0
  %1992 = vmatprep.subr.mxu0 0.0
  %1993 = vmatpush1.msra.mxu0 0.0
  %1994 = vmatprep.subr.mxu0 0.0
  %1995 = vmatpush1.msra.mxu0 0.0
  %1996 = vmatprep.subr.mxu0 0.0
  %1997 = vmatpush1.msra.mxu0 0.0
  %1998 = vmatprep.subr.mxu0 0.0
  %1999 = vmatpush1.msra.mxu0 0.0
  %2000 = vmatprep.subr.mxu0 0.0
  %2001 = vmatpush1.msra.mxu0 0.0
  %2002 = vmatprep.subr.mxu0 0.0
  %2003 = vmatpush1.msra.mxu0 0.0
  %2004 = vmatprep.subr.mxu0 0.0
  %2005 = vmatpush1.msra.mxu0 0.0
  %2006 = vmatprep.subr.mxu0 0.0
  %2007 = vmatpush1.msra.mxu0 0.0
  %2008 = vmatprep.subr.mxu0 0.0
  %2009 = vmatpush1.msra.mxu0 0.0
  %2010 = vmatprep.subr.mxu0 0.0
  %2011 = vmatpush1.msra.mxu0 0.0
  %2012 = vmatprep.subr.mxu0 0.0
  %2013 = vmatpush1.msra.mxu0 0.0
  %2014 = vmatprep.subr.mxu0 0.0
  %2015 = vmatpush1.msra.mxu0 0.0
  %2016 = vmatprep.subr.mxu0 0.0
  %2017 = vmatpush1.msra.mxu0 0.0
  %2018 = vmatprep.mubr.f32.mxu0 0.0
  %2019 = vmatmul.mubr.f32.gmra.mrb[0].mxu0 %v1946
  %v2020 = vpop.f32.mrb[0].mxu0
  %v2021 = vadd.f32 0.0, %v2020
  %v2022 = vpop.f32.mrb[0].mxu0
  %2023 = vmatprep.mubr.f32.mxu0 0.0
  %2024 = vmatmul.mubr.f32.gmra.mrb[0].mxu0 %v1949
  %v2025 = vpop.f32.mrb[0].mxu0
  %v2026 = vadd.f32 0.0, %v2025
  %v2027 = vpop.f32.mrb[0].mxu0
  %2028 = vmatprep.mubr.f32.mxu0 0.0
  %2029 = vmatmul.mubr.f32.gmra.mrb[0].mxu0 %v1952
  %v2030 = vpop.f32.mrb[0].mxu0
  %v2031 = vadd.f32 0.0, %v2030
  %v2032 = vpop.f32.mrb[0].mxu0
  %2033 = vdwg.mxu0
  %v2035 = vsel %vm1944, %v1898, 0
  %v2038 = vsel %vm1944, %v1899, 0
  %v2041 = vsel %vm1944, %v1900, 0
  %2043 = vmatprep.subr.mxu0 0.0
  %2044 = vmatpush1.msra.mxu0 %v1850
  %2045 = vmatprep.subr.mxu0 0.0
  %2046 = vmatpush1.msra.mxu0 %v1855
  %2047 = vmatprep.subr.mxu0 0.0
  %2048 = vmatpush1.msra.mxu0 %v1860
  %2049 = vmatprep.subr.mxu0 0.0
  %2050 = vmatpush1.msra.mxu0 %v1865
  %2051 = vmatprep.subr.mxu0 0.0
  %2052 = vmatpush1.msra.mxu0 %v1870
  %2053 = vmatprep.subr.mxu0 0.0
  %2054 = vmatpush1.msra.mxu0 %v1875
  %2055 = vmatprep.subr.mxu0 0.0
  %2056 = vmatpush1.msra.mxu0 %v1880
  %2057 = vmatprep.subr.mxu0 0.0
  %2058 = vmatpush1.msra.mxu0 %v1885
  %2059 = vmatprep.subr.mxu0 0.0
  %2060 = vmatpush1.msra.mxu0 %v1890
  %2061 = vmatprep.subr.mxu0 0.0
  %2062 = vmatpush1.msra.mxu0 %v1895
  %2063 = vmatprep.subr.mxu0 0.0
  %2064 = vmatpush1.msra.mxu0 0.0
  %2065 = vmatprep.subr.mxu0 0.0
  %2066 = vmatpush1.msra.mxu0 0.0
  %2067 = vmatprep.subr.mxu0 0.0
  %2068 = vmatpush1.msra.mxu0 0.0
  %2069 = vmatprep.subr.mxu0 0.0
  %2070 = vmatpush1.msra.mxu0 0.0
  %2071 = vmatprep.subr.mxu0 0.0
  %2072 = vmatpush1.msra.mxu0 0.0
  %2073 = vmatprep.subr.mxu0 0.0
  %2074 = vmatpush1.msra.mxu0 0.0
  %2075 = vmatprep.subr.mxu0 0.0
  %2076 = vmatpush1.msra.mxu0 0.0
  %2077 = vmatprep.subr.mxu0 0.0
  %2078 = vmatpush1.msra.mxu0 0.0
  %2079 = vmatprep.subr.mxu0 0.0
  %2080 = vmatpush1.msra.mxu0 0.0
  %2081 = vmatprep.subr.mxu0 0.0
  %2082 = vmatpush1.msra.mxu0 0.0
  %2083 = vmatprep.subr.mxu0 0.0
  %2084 = vmatpush1.msra.mxu0 0.0
  %2085 = vmatprep.subr.mxu0 0.0
  %2086 = vmatpush1.msra.mxu0 0.0
  %2087 = vmatprep.subr.mxu0 0.0
  %2088 = vmatpush1.msra.mxu0 0.0
  %2089 = vmatprep.subr.mxu0 0.0
  %2090 = vmatpush1.msra.mxu0 0.0
  %2091 = vmatprep.subr.mxu0 0.0
  %2092 = vmatpush1.msra.mxu0 0.0
  %2093 = vmatprep.subr.mxu0 0.0
  %2094 = vmatpush1.msra.mxu0 0.0
  %2095 = vmatprep.subr.mxu0 0.0
  %2096 = vmatpush1.msra.mxu0 0.0
  %2097 = vmatprep.subr.mxu0 0.0
  %2098 = vmatpush1.msra.mxu0 0.0
  %2099 = vmatprep.subr.mxu0 0.0
  %2100 = vmatpush1.msra.mxu0 0.0
  %2101 = vmatprep.subr.mxu0 0.0
  %2102 = vmatpush1.msra.mxu0 0.0
  %2103 = vmatprep.subr.mxu0 0.0
  %2104 = vmatpush1.msra.mxu0 0.0
  %2105 = vmatprep.subr.mxu0 0.0
  %2106 = vmatpush1.msra.mxu0 0.0
  %2107 = vmatprep.mubr.f32.mxu0 0.0
  %2108 = vmatmul.mubr.f32.gmra.mrb[0].mxu0 %v2035
  %v2109 = vpop.f32.mrb[0].mxu0
  %v2110 = vadd.f32 %v2021, %v2109
  %v2111 = vpop.f32.mrb[0].mxu0
  %2112 = vmatprep.mubr.f32.mxu0 0.0
  %2113 = vmatmul.mubr.f32.gmra.mrb[0].mxu0 %v2038
  %v2114 = vpop.f32.mrb[0].mxu0
  %v2115 = vadd.f32 %v2026, %v2114
  %v2116 = vpop.f32.mrb[0].mxu0
  %2117 = vmatprep.mubr.f32.mxu0 0.0
  %2118 = vmatmul.mubr.f32.gmra.mrb[0].mxu0 %v2041
  %v2119 = vpop.f32.mrb[0].mxu0
  %v2120 = vadd.f32 %v2031, %v2119
  %v2121 = vpop.f32.mrb[0].mxu0
  %2122 = vdwg.mxu0
  %v2123 = vld [vmem:[%s1 + $0x560] sm:$0xff]
  %v2124 = vld [vmem:[%s1 + $0x570] sm:$0xff]
  %v2125 = vld [vmem:[%s1 + $0x580] sm:$0xff]
  %2126 = vrot.lane.b32.xlu0 %v1850, 122
  %v2127 = vpop.permute.xlu0 %2126
  %2128 = vrot.lane.b32.xlu0 %v1855, 122
  %v2129 = vpop.permute.xlu0 %2128
  %2130 = vrot.lane.b32.xlu0 %v1860, 122
  %v2131 = vpop.permute.xlu0 %2130
  %2132 = vrot.lane.b32.xlu0 %v1865, 122
  %v2133 = vpop.permute.xlu0 %2132
  %2134 = vrot.lane.b32.xlu0 %v1870, 122
  %v2135 = vpop.permute.xlu0 %2134
  %2136 = vrot.lane.b32.xlu0 %v1875, 122
  %v2137 = vpop.permute.xlu0 %2136
  %2138 = vrot.lane.b32.xlu0 %v1880, 122
  %v2139 = vpop.permute.xlu0 %2138
  %2140 = vrot.lane.b32.xlu0 %v1885, 122
  %v2141 = vpop.permute.xlu0 %2140
  %2142 = vrot.lane.b32.xlu0 %v1890, 122
  %v2143 = vpop.permute.xlu0 %2142
  %2144 = vrot.lane.b32.xlu0 %v1895, 122
  %v2145 = vpop.permute.xlu0 %2144
  %v2157 = vsel %vm1944, %v2123, 0
  %v2160 = vsel %vm1944, %v2124, 0
  %v2163 = vsel %vm1944, %v2125, 0
  %2165 = vmatprep.subr.mxu0 0.0
  %2166 = vmatpush1.msra.mxu0 %v2127
  %2167 = vmatprep.subr.mxu0 0.0
  %2168 = vmatpush1.msra.mxu0 %v2129
  %2169 = vmatprep.subr.mxu0 0.0
  %2170 = vmatpush1.msra.mxu0 %v2131
  %2171 = vmatprep.subr.mxu0 0.0
  %2172 = vmatpush1.msra.mxu0 %v2133
  %2173 = vmatprep.subr.mxu0 0.0
  %2174 = vmatpush1.msra.mxu0 %v2135
  %2175 = vmatprep.subr.mxu0 0.0
  %2176 = vmatpush1.msra.mxu0 %v2137
  %2177 = vmatprep.subr.mxu0 0.0
  %2178 = vmatpush1.msra.mxu0 %v2139
  %2179 = vmatprep.subr.mxu0 0.0
  %2180 = vmatpush1.msra.mxu0 %v2141
  %2181 = vmatprep.subr.mxu0 0.0
  %2182 = vmatpush1.msra.mxu0 %v2143
  %2183 = vmatprep.subr.mxu0 0.0
  %2184 = vmatpush1.msra.mxu0 %v2145
  %2185 = vmatprep.subr.mxu0 0.0
  %2186 = vmatpush1.msra.mxu0 0.0
  %2187 = vmatprep.subr.mxu0 0.0
  %2188 = vmatpush1.msra.mxu0 0.0
  %2189 = vmatprep.subr.mxu0 0.0
  %2190 = vmatpush1.msra.mxu0 0.0
  %2191 = vmatprep.subr.mxu0 0.0
  %2192 = vmatpush1.msra.mxu0 0.0
  %2193 = vmatprep.subr.mxu0 0.0
  %2194 = vmatpush1.msra.mxu0 0.0
  %2195 = vmatprep.subr.mxu0 0.0
  %2196 = vmatpush1.msra.mxu0 0.0
  %2197 = vmatprep.subr.mxu0 0.0
  %2198 = vmatpush1.msra.mxu0 0.0
  %2199 = vmatprep.subr.mxu0 0.0
  %2200 = vmatpush1.msra.mxu0 0.0
  %2201 = vmatprep.subr.mxu0 0.0
  %2202 = vmatpush1.msra.mxu0 0.0
  %2203 = vmatprep.subr.mxu0 0.0
  %2204 = vmatpush1.msra.mxu0 0.0
  %2205 = vmatprep.subr.mxu0 0.0
  %2206 = vmatpush1.msra.mxu0 0.0
  %2207 = vmatprep.subr.mxu0 0.0
  %2208 = vmatpush1.msra.mxu0 0.0
  %2209 = vmatprep.subr.mxu0 0.0
  %2210 = vmatpush1.msra.mxu0 0.0
  %2211 = vmatprep.subr.mxu0 0.0
  %2212 = vmatpush1.msra.mxu0 0.0
  %2213 = vmatprep.subr.mxu0 0.0
  %2214 = vmatpush1.msra.mxu0 0.0
  %2215 = vmatprep.subr.mxu0 0.0
  %2216 = vmatpush1.msra.mxu0 0.0
  %2217 = vmatprep.subr.mxu0 0.0
  %2218 = vmatpush1.msra.mxu0 0.0
  %2219 = vmatprep.subr.mxu0 0.0
  %2220 = vmatpush1.msra.mxu0 0.0
  %2221 = vmatprep.subr.mxu0 0.0
  %2222 = vmatpush1.msra.mxu0 0.0
  %2223 = vmatprep.subr.mxu0 0.0
  %2224 = vmatpush1.msra.mxu0 0.0
  %2225 = vmatprep.subr.mxu0 0.0
  %2226 = vmatpush1.msra.mxu0 0.0
  %2227 = vmatprep.subr.mxu0 0.0
  %2228 = vmatpush1.msra.mxu0 0.0
  %2229 = vmatprep.mubr.f32.mxu0 0.0
  %2230 = vmatmul.mubr.f32.gmra.mrb[0].mxu0 %v2157
  %v2231 = vpop.f32.mrb[0].mxu0
  %v2232 = vadd.f32 0.0, %v2231
  %v2233 = vpop.f32.mrb[0].mxu0
  %2234 = vmatprep.mubr.f32.mxu0 0.0
  %2235 = vmatmul.mubr.f32.gmra.mrb[0].mxu0 %v2160
  %v2236 = vpop.f32.mrb[0].mxu0
  %v2237 = vadd.f32 0.0, %v2236
  %v2238 = vpop.f32.mrb[0].mxu0
  %2239 = vmatprep.mubr.f32.mxu0 0.0
  %2240 = vmatmul.mubr.f32.gmra.mrb[0].mxu0 %v2163
  %v2241 = vpop.f32.mrb[0].mxu0
  %v2242 = vadd.f32 0.0, %v2241
  %v2243 = vpop.f32.mrb[0].mxu0
  %2244 = vdwg.mxu0
  %v2245 = vadd.f32 %v2110, %v2232
  %v2246 = vadd.f32 %v2115, %v2237
  %v2247 = vadd.f32 %v2120, %v2242
  %v2248 = vld [vmem:[%s3 + $0xa0] sm:$0xff]
  %v2249 = vld [vmem:[%s3 + $0xa8] sm:$0xff]
  %v2250 = vld [vmem:[%s3 + $0xb0] sm:$0xff]
  %2252 = vset.pattern.permute.xlu0 0
  %2253 = vperm.xlu0 %2252, %v2248
  %v2254 = vpop.permute.xlu0 %2253
  %2257 = vset.pattern.permute.xlu0 0
  %2258 = vperm.xlu0 %2257, %v2249
  %v2259 = vpop.permute.xlu0 %2258
  %2262 = vset.pattern.permute.xlu0 0
  %2263 = vperm.xlu0 %2262, %v2250
  %v2264 = vpop.permute.xlu0 %2263
  %v2266 = vadd.f32 %v2245, %v2254
  %v2267 = vadd.f32 %v2246, %v2259
  %v2268 = vadd.f32 %v2247, %v2264
  %v2269 = vmax.f32 %v2266, 0.0
  %v2270 = vmax.f32 %v2267, 0.0
  %v2271 = vmax.f32 %v2268, 0.0
  %v2272 = vld [vmem:[%s2 + $0x38] sm:$0x7]
  %vm2273 = vcmask 23552
  %v2275 = vsel %vm2273, %v2269, 0
  %v2278 = vsel %vm2273, %v2270, 0
  %v2281 = vsel %vm2273, %v2271, 0
  %vm2283 = vcmask 1042432
  %v2285 = vsel %vm2283, %v2272, 0
  %2287 = vmatprep.subr.mxu0 0.0
  %2288 = vmatpush1.msra.mxu0 %v2285
  %2289 = vmatprep.subr.mxu0 0.0
  %2290 = vmatpush1.msra.mxu0 0.0
  %2291 = vmatprep.subr.mxu0 0.0
  %2292 = vmatpush1.msra.mxu0 0.0
  %2293 = vmatprep.subr.mxu0 0.0
  %2294 = vmatpush1.msra.mxu0 0.0
  %2295 = vmatprep.subr.mxu0 0.0
  %2296 = vmatpush1.msra.mxu0 0.0
  %2297 = vmatprep.subr.mxu0 0.0
  %2298 = vmatpush1.msra.mxu0 0.0
  %2299 = vmatprep.subr.mxu0 0.0
  %2300 = vmatpush1.msra.mxu0 0.0
  %2301 = vmatprep.subr.mxu0 0.0
  %2302 = vmatpush1.msra.mxu0 0.0
  %2303 = vmatprep.subr.mxu0 0.0
  %2304 = vmatpush1.msra.mxu0 0.0
  %2305 = vmatprep.subr.mxu0 0.0
  %2306 = vmatpush1.msra.mxu0 0.0
  %2307 = vmatprep.subr.mxu0 0.0
  %2308 = vmatpush1.msra.mxu0 0.0
  %2309 = vmatprep.subr.mxu0 0.0
  %2310 = vmatpush1.msra.mxu0 0.0
  %2311 = vmatprep.subr.mxu0 0.0
  %2312 = vmatpush1.msra.mxu0 0.0
  %2313 = vmatprep.subr.mxu0 0.0
  %2314 = vmatpush1.msra.mxu0 0.0
  %2315 = vmatprep.subr.mxu0 0.0
  %2316 = vmatpush1.msra.mxu0 0.0
  %2317 = vmatprep.subr.mxu0 0.0
  %2318 = vmatpush1.msra.mxu0 0.0
  %2319 = vmatprep.subr.mxu0 0.0
  %2320 = vmatpush1.msra.mxu0 0.0
  %2321 = vmatprep.subr.mxu0 0.0
  %2322 = vmatpush1.msra.mxu0 0.0
  %2323 = vmatprep.subr.mxu0 0.0
  %2324 = vmatpush1.msra.mxu0 0.0
  %2325 = vmatprep.subr.mxu0 0.0
  %2326 = vmatpush1.msra.mxu0 0.0
  %2327 = vmatprep.subr.mxu0 0.0
  %2328 = vmatpush1.msra.mxu0 0.0
  %2329 = vmatprep.subr.mxu0 0.0
  %2330 = vmatpush1.msra.mxu0 0.0
  %2331 = vmatprep.subr.mxu0 0.0
  %2332 = vmatpush1.msra.mxu0 0.0
  %2333 = vmatprep.subr.mxu0 0.0
  %2334 = vmatpush1.msra.mxu0 0.0
  %2335 = vmatprep.subr.mxu0 0.0
  %2336 = vmatpush1.msra.mxu0 0.0
  %2337 = vmatprep.subr.mxu0 0.0
  %2338 = vmatpush1.msra.mxu0 0.0
  %2339 = vmatprep.subr.mxu0 0.0
  %2340 = vmatpush1.msra.mxu0 0.0
  %2341 = vmatprep.subr.mxu0 0.0
  %2342 = vmatpush1.msra.mxu0 0.0
  %2343 = vmatprep.subr.mxu0 0.0
  %2344 = vmatpush1.msra.mxu0 0.0
  %2345 = vmatprep.subr.mxu0 0.0
  %2346 = vmatpush1.msra.mxu0 0.0
  %2347 = vmatprep.subr.mxu0 0.0
  %2348 = vmatpush1.msra.mxu0 0.0
  %2349 = vmatprep.subr.mxu0 0.0
  %2350 = vmatpush1.msra.mxu0 0.0
  %2351 = vmatprep.mubr.f32.mxu0 0.0
  %2352 = vmatmul.mubr.f32.gmra.mrb[0].mxu0 %v2275
  %v2353 = vpop.f32.mrb[0].mxu0
  %v2354 = vadd.f32 0.0, %v2353
  %v2355 = vpop.f32.mrb[0].mxu0
  %2356 = vmatprep.mubr.f32.mxu0 0.0
  %2357 = vmatmul.mubr.f32.gmra.mrb[0].mxu0 %v2278
  %v2358 = vpop.f32.mrb[0].mxu0
  %v2359 = vadd.f32 0.0, %v2358
  %v2360 = vpop.f32.mrb[0].mxu0
  %2361 = vmatprep.mubr.f32.mxu0 0.0
  %2362 = vmatmul.mubr.f32.gmra.mrb[0].mxu0 %v2281
  %v2363 = vpop.f32.mrb[0].mxu0
  %v2364 = vadd.f32 0.0, %v2363
  %v2365 = vpop.f32.mrb[0].mxu0
  %2366 = vdwg.mxu0
  %v2367 = vld [vmem:[%s1 + $0x590] sm:$0xff]
  %v2368 = vld [vmem:[%s1 + $0x5a0] sm:$0xff]
  %vm2369 = vcmask 195584
  %v2371 = vsel %vm2369, %v2367, 0
  %v2374 = vsel %vm2369, %v2368, 0
  %2376 = vmatprep.subr.mxu0 0.0
  %2377 = vmatpush1.msra.mxu0 %v2354
  %2378 = vmatprep.subr.mxu0 0.0
  %2379 = vmatpush1.msra.mxu0 %v2359
  %2380 = vmatprep.subr.mxu0 0.0
  %2381 = vmatpush1.msra.mxu0 %v2364
  %2382 = vmatprep.subr.mxu0 0.0
  %2383 = vmatpush1.msra.mxu0 0.0
  %2384 = vmatprep.subr.mxu0 0.0
  %2385 = vmatpush1.msra.mxu0 0.0
  %2386 = vmatprep.subr.mxu0 0.0
  %2387 = vmatpush1.msra.mxu0 0.0
  %2388 = vmatprep.subr.mxu0 0.0
  %2389 = vmatpush1.msra.mxu0 0.0
  %2390 = vmatprep.subr.mxu0 0.0
  %2391 = vmatpush1.msra.mxu0 0.0
  %2392 = vmatprep.subr.mxu0 0.0
  %2393 = vmatpush1.msra.mxu0 0.0
  %2394 = vmatprep.subr.mxu0 0.0
  %2395 = vmatpush1.msra.mxu0 0.0
  %2396 = vmatprep.subr.mxu0 0.0
  %2397 = vmatpush1.msra.mxu0 0.0
  %2398 = vmatprep.subr.mxu0 0.0
  %2399 = vmatpush1.msra.mxu0 0.0
  %2400 = vmatprep.subr.mxu0 0.0
  %2401 = vmatpush1.msra.mxu0 0.0
  %2402 = vmatprep.subr.mxu0 0.0
  %2403 = vmatpush1.msra.mxu0 0.0
  %2404 = vmatprep.subr.mxu0 0.0
  %2405 = vmatpush1.msra.mxu0 0.0
  %2406 = vmatprep.subr.mxu0 0.0
  %2407 = vmatpush1.msra.mxu0 0.0
  %2408 = vmatprep.subr.mxu0 0.0
  %2409 = vmatpush1.msra.mxu0 0.0
  %2410 = vmatprep.subr.mxu0 0.0
  %2411 = vmatpush1.msra.mxu0 0.0
  %2412 = vmatprep.subr.mxu0 0.0
  %2413 = vmatpush1.msra.mxu0 0.0
  %2414 = vmatprep.subr.mxu0 0.0
  %2415 = vmatpush1.msra.mxu0 0.0
  %2416 = vmatprep.subr.mxu0 0.0
  %2417 = vmatpush1.msra.mxu0 0.0
  %2418 = vmatprep.subr.mxu0 0.0
  %2419 = vmatpush1.msra.mxu0 0.0
  %2420 = vmatprep.subr.mxu0 0.0
  %2421 = vmatpush1.msra.mxu0 0.0
  %2422 = vmatprep.subr.mxu0 0.0
  %2423 = vmatpush1.msra.mxu0 0.0
  %2424 = vmatprep.subr.mxu0 0.0
  %2425 = vmatpush1.msra.mxu0 0.0
  %2426 = vmatprep.subr.mxu0 0.0
  %2427 = vmatpush1.msra.mxu0 0.0
  %2428 = vmatprep.subr.mxu0 0.0
  %2429 = vmatpush1.msra.mxu0 0.0
  %2430 = vmatprep.subr.mxu0 0.0
  %2431 = vmatpush1.msra.mxu0 0.0
  %2432 = vmatprep.subr.mxu0 0.0
  %2433 = vmatpush1.msra.mxu0 0.0
  %2434 = vmatprep.subr.mxu0 0.0
  %2435 = vmatpush1.msra.mxu0 0.0
  %2436 = vmatprep.subr.mxu0 0.0
  %2437 = vmatpush1.msra.mxu0 0.0
  %2438 = vmatprep.subr.mxu0 0.0
  %2439 = vmatpush1.msra.mxu0 0.0
  %2440 = vmatprep.mubr.f32.mxu0 0.0
  %2441 = vmatmul.mubr.f32.gmra.mrb[0].mxu0 %v2371
  %v2442 = vpop.f32.mrb[0].mxu0
  %v2443 = vadd.f32 0.0, %v2442
  %v2444 = vpop.f32.mrb[0].mxu0
  %2445 = vmatprep.mubr.f32.mxu0 0.0
  %2446 = vmatmul.mubr.f32.gmra.mrb[0].mxu0 %v2374
  %v2447 = vpop.f32.mrb[0].mxu0
  %v2448 = vadd.f32 0.0, %v2447
  %v2449 = vpop.f32.mrb[0].mxu0
  %2450 = vdwg.mxu0
  %2453 = vrot.lane.b32.xlu0 %v2443, 126
  %v2454 = vpop.permute.xlu0 %2453
  %2455 = vrot.lane.b32.xlu0 %v2448, 126
  %v2456 = vpop.permute.xlu0 %2455
  %v2459 = vmax.f32 %v2443, %v2454
  %v2460 = vmax.f32 %v2448, %v2456
  %v2461 = vld [vmem:[%s1 + $0x5b0] sm:$0xff]
  %v2462 = vld [vmem:[%s1 + $0x5c0] sm:$0xff]
  %v2464 = vsel %vm2369, %v2461, 0
  %v2467 = vsel %vm2369, %v2462, 0
  %2469 = vmatprep.subr.mxu0 0.0
  %2470 = vmatpush1.msra.mxu0 %v2354
  %2471 = vmatprep.subr.mxu0 0.0
  %2472 = vmatpush1.msra.mxu0 %v2359
  %2473 = vmatprep.subr.mxu0 0.0
  %2474 = vmatpush1.msra.mxu0 %v2364
  %2475 = vmatprep.subr.mxu0 0.0
  %2476 = vmatpush1.msra.mxu0 0.0
  %2477 = vmatprep.subr.mxu0 0.0
  %2478 = vmatpush1.msra.mxu0 0.0
  %2479 = vmatprep.subr.mxu0 0.0
  %2480 = vmatpush1.msra.mxu0 0.0
  %2481 = vmatprep.subr.mxu0 0.0
  %2482 = vmatpush1.msra.mxu0 0.0
  %2483 = vmatprep.subr.mxu0 0.0
  %2484 = vmatpush1.msra.mxu0 0.0
  %2485 = vmatprep.subr.mxu0 0.0
  %2486 = vmatpush1.msra.mxu0 0.0
  %2487 = vmatprep.subr.mxu0 0.0
  %2488 = vmatpush1.msra.mxu0 0.0
  %2489 = vmatprep.subr.mxu0 0.0
  %2490 = vmatpush1.msra.mxu0 0.0
  %2491 = vmatprep.subr.mxu0 0.0
  %2492 = vmatpush1.msra.mxu0 0.0
  %2493 = vmatprep.subr.mxu0 0.0
  %2494 = vmatpush1.msra.mxu0 0.0
  %2495 = vmatprep.subr.mxu0 0.0
  %2496 = vmatpush1.msra.mxu0 0.0
  %2497 = vmatprep.subr.mxu0 0.0
  %2498 = vmatpush1.msra.mxu0 0.0
  %2499 = vmatprep.subr.mxu0 0.0
  %2500 = vmatpush1.msra.mxu0 0.0
  %2501 = vmatprep.subr.mxu0 0.0
  %2502 = vmatpush1.msra.mxu0 0.0
  %2503 = vmatprep.subr.mxu0 0.0
  %2504 = vmatpush1.msra.mxu0 0.0
  %2505 = vmatprep.subr.mxu0 0.0
  %2506 = vmatpush1.msra.mxu0 0.0
  %2507 = vmatprep.subr.mxu0 0.0
  %2508 = vmatpush1.msra.mxu0 0.0
  %2509 = vmatprep.subr.mxu0 0.0
  %2510 = vmatpush1.msra.mxu0 0.0
  %2511 = vmatprep.subr.mxu0 0.0
  %2512 = vmatpush1.msra.mxu0 0.0
  %2513 = vmatprep.subr.mxu0 0.0
  %2514 = vmatpush1.msra.mxu0 0.0
  %2515 = vmatprep.subr.mxu0 0.0
  %2516 = vmatpush1.msra.mxu0 0.0
  %2517 = vmatprep.subr.mxu0 0.0
  %2518 = vmatpush1.msra.mxu0 0.0
  %2519 = vmatprep.subr.mxu0 0.0
  %2520 = vmatpush1.msra.mxu0 0.0
  %2521 = vmatprep.subr.mxu0 0.0
  %2522 = vmatpush1.msra.mxu0 0.0
  %2523 = vmatprep.subr.mxu0 0.0
  %2524 = vmatpush1.msra.mxu0 0.0
  %2525 = vmatprep.subr.mxu0 0.0
  %2526 = vmatpush1.msra.mxu0 0.0
  %2527 = vmatprep.subr.mxu0 0.0
  %2528 = vmatpush1.msra.mxu0 0.0
  %2529 = vmatprep.subr.mxu0 0.0
  %2530 = vmatpush1.msra.mxu0 0.0
  %2531 = vmatprep.subr.mxu0 0.0
  %2532 = vmatpush1.msra.mxu0 0.0
  %2533 = vmatprep.mubr.f32.mxu0 0.0
  %2534 = vmatmul.mubr.f32.gmra.mrb[0].mxu0 %v2464
  %v2535 = vpop.f32.mrb[0].mxu0
  %v2536 = vadd.f32 0.0, %v2535
  %v2537 = vpop.f32.mrb[0].mxu0
  %2538 = vmatprep.mubr.f32.mxu0 0.0
  %2539 = vmatmul.mubr.f32.gmra.mrb[0].mxu0 %v2467
  %v2540 = vpop.f32.mrb[0].mxu0
  %v2541 = vadd.f32 0.0, %v2540
  %v2542 = vpop.f32.mrb[0].mxu0
  %2543 = vdwg.mxu0
  %v2544 = vmax.f32 %v2459, %v2536
  %v2545 = vmax.f32 %v2460, %v2541
  %2548 = vrot.lane.b32.xlu0 %v2536, 126
  %v2549 = vpop.permute.xlu0 %2548
  %2550 = vrot.lane.b32.xlu0 %v2541, 126
  %v2551 = vpop.permute.xlu0 %2550
  %v2554 = vmax.f32 %v2544, %v2549
  %v2555 = vmax.f32 %v2545, %v2551
  %v2556 = vld [vmem:[%s1 + $0x5d0] sm:$0xff]
  %v2557 = vld [vmem:[%s1 + $0x5e0] sm:$0xff]
  %v2558 = vld [vmem:[%s1 + $0x5f0] sm:$0xff]
  %v2559 = vld [vmem:[%s1 + $0x600] sm:$0xff]
  %v2560 = vld [vmem:[%s1 + $0x610] sm:$0xff]
  %v2561 = vld [vmem:[%s1 + $0x620] sm:$0xff]
  %v2562 = vld [vmem:[%s1 + $0x630] sm:$0xff]
  %v2563 = vld [vmem:[%s1 + $0x640] sm:$0xff]
  %v2564 = vld [vmem:[%s1 + $0x650] sm:$0xff]
  %v2565 = vld [vmem:[%s1 + $0x660] sm:$0xff]
  %v2566 = vld [vmem:[%s1 + $0x670] sm:$0xff]
  %v2567 = vld [vmem:[%s1 + $0x680] sm:$0xff]
  %v2568 = vld [vmem:[%s1 + $0x690] sm:$0xff]
  %v2569 = vld [vmem:[%s1 + $0x6a0] sm:$0xff]
  %v2570 = vld [vmem:[%s1 + $0x6b0] sm:$0xff]
  %v2571 = vld [vmem:[%s1 + $0x6c0] sm:$0xff]
  %v2572 = vld [vmem:[%s1 + $0x6d0] sm:$0xff]
  %v2573 = vld [vmem:[%s1 + $0x6e0] sm:$0xff]
  %v2574 = vld [vmem:[%s1 + $0x6f0] sm:$0xff]
  %v2575 = vld [vmem:[%s1 + $0x700] sm:$0xff]
  %v2576 = vld [vmem:[%s1 + $0x710] sm:$0xff]
  %v2577 = vld [vmem:[%s1 + $0x720] sm:$0xff]
  %v2578 = vld [vmem:[%s1 + $0x730] sm:$0xff]
  %v2579 = vld [vmem:[%s1 + $0x740] sm:$0xff]
  %v2580 = vld [vmem:[%s1 + $0x750] sm:$0xff]
  %v2581 = vld [vmem:[%s1 + $0x760] sm:$0xff]
  %v2582 = vld [vmem:[%s1 + $0x770] sm:$0xff]
  %v2583 = vld [vmem:[%s1 + $0x780] sm:$0xff]
  %v2584 = vld [vmem:[%s1 + $0x790] sm:$0xff]
  %v2585 = vld [vmem:[%s1 + $0x7a0] sm:$0xff]
  %vm2586 = vcmask 130048
  %v2588 = vsel %vm2586, %v2556, 0
  %v2591 = vsel %vm2586, %v2557, 0
  %v2594 = vsel %vm2586, %v2558, 0
  %v2597 = vsel %vm2586, %v2559, 0
  %v2600 = vsel %vm2586, %v2560, 0
  %v2603 = vsel %vm2586, %v2561, 0
  %v2606 = vsel %vm2586, %v2562, 0
  %v2609 = vsel %vm2586, %v2563, 0
  %v2612 = vsel %vm2586, %v2564, 0
  %v2615 = vsel %vm2586, %v2565, 0
  %v2618 = vsel %vm2586, %v2566, 0
  %v2621 = vsel %vm2586, %v2567, 0
  %v2624 = vsel %vm2586, %v2568, 0
  %v2627 = vsel %vm2586, %v2569, 0
  %v2630 = vsel %vm2586, %v2570, 0
  %v2633 = vsel %vm2586, %v2571, 0
  %v2636 = vsel %vm2586, %v2572, 0
  %v2639 = vsel %vm2586, %v2573, 0
  %v2642 = vsel %vm2586, %v2574, 0
  %v2645 = vsel %vm2586, %v2575, 0
  %v2648 = vsel %vm2586, %v2576, 0
  %v2651 = vsel %vm2586, %v2577, 0
  %v2654 = vsel %vm2586, %v2578, 0
  %v2657 = vsel %vm2586, %v2579, 0
  %v2660 = vsel %vm2586, %v2580, 0
  %v2663 = vsel %vm2586, %v2581, 0
  %v2666 = vsel %vm2586, %v2582, 0
  %v2669 = vsel %vm2586, %v2583, 0
  %v2672 = vsel %vm2586, %v2584, 0
  %v2675 = vsel %vm2586, %v2585, 0
  %2677 = vmatprep.subr.mxu0 0.0
  %2678 = vmatpush1.msra.mxu0 %v2554
  %2679 = vmatprep.subr.mxu0 0.0
  %2680 = vmatpush1.msra.mxu0 %v2555
  %2681 = vmatprep.subr.mxu0 0.0
  %2682 = vmatpush1.msra.mxu0 0.0
  %2683 = vmatprep.subr.mxu0 0.0
  %2684 = vmatpush1.msra.mxu0 0.0
  %2685 = vmatprep.subr.mxu0 0.0
  %2686 = vmatpush1.msra.mxu0 0.0
  %2687 = vmatprep.subr.mxu0 0.0
  %2688 = vmatpush1.msra.mxu0 0.0
  %2689 = vmatprep.subr.mxu0 0.0
  %2690 = vmatpush1.msra.mxu0 0.0
  %2691 = vmatprep.subr.mxu0 0.0
  %2692 = vmatpush1.msra.mxu0 0.0
  %2693 = vmatprep.subr.mxu0 0.0
  %2694 = vmatpush1.msra.mxu0 0.0
  %2695 = vmatprep.subr.mxu0 0.0
  %2696 = vmatpush1.msra.mxu0 0.0
  %2697 = vmatprep.subr.mxu0 0.0
  %2698 = vmatpush1.msra.mxu0 0.0
  %2699 = vmatprep.subr.mxu0 0.0
  %2700 = vmatpush1.msra.mxu0 0.0
  %2701 = vmatprep.subr.mxu0 0.0
  %2702 = vmatpush1.msra.mxu0 0.0
  %2703 = vmatprep.subr.mxu0 0.0
  %2704 = vmatpush1.msra.mxu0 0.0
  %2705 = vmatprep.subr.mxu0 0.0
  %2706 = vmatpush1.msra.mxu0 0.0
  %2707 = vmatprep.subr.mxu0 0.0
  %2708 = vmatpush1.msra.mxu0 0.0
  %2709 = vmatprep.subr.mxu0 0.0
  %2710 = vmatpush1.msra.mxu0 0.0
  %2711 = vmatprep.subr.mxu0 0.0
  %2712 = vmatpush1.msra.mxu0 0.0
  %2713 = vmatprep.subr.mxu0 0.0
  %2714 = vmatpush1.msra.mxu0 0.0
  %2715 = vmatprep.subr.mxu0 0.0
  %2716 = vmatpush1.msra.mxu0 0.0
  %2717 = vmatprep.subr.mxu0 0.0
  %2718 = vmatpush1.msra.mxu0 0.0
  %2719 = vmatprep.subr.mxu0 0.0
  %2720 = vmatpush1.msra.mxu0 0.0
  %2721 = vmatprep.subr.mxu0 0.0
  %2722 = vmatpush1.msra.mxu0 0.0
  %2723 = vmatprep.subr.mxu0 0.0
  %2724 = vmatpush1.msra.mxu0 0.0
  %2725 = vmatprep.subr.mxu0 0.0
  %2726 = vmatpush1.msra.mxu0 0.0
  %2727 = vmatprep.subr.mxu0 0.0
  %2728 = vmatpush1.msra.mxu0 0.0
  %2729 = vmatprep.subr.mxu0 0.0
  %2730 = vmatpush1.msra.mxu0 0.0
  %2731 = vmatprep.subr.mxu0 0.0
  %2732 = vmatpush1.msra.mxu0 0.0
  %2733 = vmatprep.subr.mxu0 0.0
  %2734 = vmatpush1.msra.mxu0 0.0
  %2735 = vmatprep.subr.mxu0 0.0
  %2736 = vmatpush1.msra.mxu0 0.0
  %2737 = vmatprep.subr.mxu0 0.0
  %2738 = vmatpush1.msra.mxu0 0.0
  %2739 = vmatprep.subr.mxu0 0.0
  %2740 = vmatpush1.msra.mxu0 0.0
  %2741 = vmatprep.mubr.f32.mxu0 0.0
  %2742 = vmatmul.mubr.f32.gmra.mrb[0].mxu0 %v2588
  %v2743 = vpop.f32.mrb[0].mxu0
  %v2744 = vadd.f32 0.0, %v2743
  %v2745 = vpop.f32.mrb[0].mxu0
  %2746 = vmatprep.mubr.f32.mxu0 0.0
  %2747 = vmatmul.mubr.f32.gmra.mrb[0].mxu0 %v2591
  %v2748 = vpop.f32.mrb[0].mxu0
  %v2749 = vadd.f32 0.0, %v2748
  %v2750 = vpop.f32.mrb[0].mxu0
  %2751 = vmatprep.mubr.f32.mxu0 0.0
  %2752 = vmatmul.mubr.f32.gmra.mrb[0].mxu0 %v2594
  %v2753 = vpop.f32.mrb[0].mxu0
  %v2754 = vadd.f32 0.0, %v2753
  %v2755 = vpop.f32.mrb[0].mxu0
  %2756 = vmatprep.mubr.f32.mxu0 0.0
  %2757 = vmatmul.mubr.f32.gmra.mrb[0].mxu0 %v2597
  %v2758 = vpop.f32.mrb[0].mxu0
  %v2759 = vadd.f32 0.0, %v2758
  %v2760 = vpop.f32.mrb[0].mxu0
  %2761 = vmatprep.mubr.f32.mxu0 0.0
  %2762 = vmatmul.mubr.f32.gmra.mrb[0].mxu0 %v2600
  %v2763 = vpop.f32.mrb[0].mxu0
  %v2764 = vadd.f32 0.0, %v2763
  %v2765 = vpop.f32.mrb[0].mxu0
  %2766 = vmatprep.mubr.f32.mxu0 0.0
  %2767 = vmatmul.mubr.f32.gmra.mrb[0].mxu0 %v2603
  %v2768 = vpop.f32.mrb[0].mxu0
  %v2769 = vadd.f32 0.0, %v2768
  %v2770 = vpop.f32.mrb[0].mxu0
  %2771 = vmatprep.mubr.f32.mxu0 0.0
  %2772 = vmatmul.mubr.f32.gmra.mrb[0].mxu0 %v2606
  %v2773 = vpop.f32.mrb[0].mxu0
  %v2774 = vadd.f32 0.0, %v2773
  %v2775 = vpop.f32.mrb[0].mxu0
  %2776 = vmatprep.mubr.f32.mxu0 0.0
  %2777 = vmatmul.mubr.f32.gmra.mrb[0].mxu0 %v2609
  %v2778 = vpop.f32.mrb[0].mxu0
  %v2779 = vadd.f32 0.0, %v2778
  %v2780 = vpop.f32.mrb[0].mxu0
  %2781 = vmatprep.mubr.f32.mxu0 0.0
  %2782 = vmatmul.mubr.f32.gmra.mrb[0].mxu0 %v2612
  %v2783 = vpop.f32.mrb[0].mxu0
  %v2784 = vadd.f32 0.0, %v2783
  %v2785 = vpop.f32.mrb[0].mxu0
  %2786 = vmatprep.mubr.f32.mxu0 0.0
  %2787 = vmatmul.mubr.f32.gmra.mrb[0].mxu0 %v2615
  %v2788 = vpop.f32.mrb[0].mxu0
  %v2789 = vadd.f32 0.0, %v2788
  %v2790 = vpop.f32.mrb[0].mxu0
  %2791 = vmatprep.mubr.f32.mxu0 0.0
  %2792 = vmatmul.mubr.f32.gmra.mrb[0].mxu0 %v2618
  %v2793 = vpop.f32.mrb[0].mxu0
  %v2794 = vadd.f32 0.0, %v2793
  %v2795 = vpop.f32.mrb[0].mxu0
  %2796 = vmatprep.mubr.f32.mxu0 0.0
  %2797 = vmatmul.mubr.f32.gmra.mrb[0].mxu0 %v2621
  %v2798 = vpop.f32.mrb[0].mxu0
  %v2799 = vadd.f32 0.0, %v2798
  %v2800 = vpop.f32.mrb[0].mxu0
  %2801 = vmatprep.mubr.f32.mxu0 0.0
  %2802 = vmatmul.mubr.f32.gmra.mrb[0].mxu0 %v2624
  %v2803 = vpop.f32.mrb[0].mxu0
  %v2804 = vadd.f32 0.0, %v2803
  %v2805 = vpop.f32.mrb[0].mxu0
  %2806 = vmatprep.mubr.f32.mxu0 0.0
  %2807 = vmatmul.mubr.f32.gmra.mrb[0].mxu0 %v2627
  %v2808 = vpop.f32.mrb[0].mxu0
  %v2809 = vadd.f32 0.0, %v2808
  %v2810 = vpop.f32.mrb[0].mxu0
  %2811 = vmatprep.mubr.f32.mxu0 0.0
  %2812 = vmatmul.mubr.f32.gmra.mrb[0].mxu0 %v2630
  %v2813 = vpop.f32.mrb[0].mxu0
  %v2814 = vadd.f32 0.0, %v2813
  %v2815 = vpop.f32.mrb[0].mxu0
  %2816 = vmatprep.mubr.f32.mxu0 0.0
  %2817 = vmatmul.mubr.f32.gmra.mrb[0].mxu0 %v2633
  %v2818 = vpop.f32.mrb[0].mxu0
  %v2819 = vadd.f32 0.0, %v2818
  %v2820 = vpop.f32.mrb[0].mxu0
  %2821 = vmatprep.mubr.f32.mxu0 0.0
  %2822 = vmatmul.mubr.f32.gmra.mrb[0].mxu0 %v2636
  %v2823 = vpop.f32.mrb[0].mxu0
  %v2824 = vadd.f32 0.0, %v2823
  %v2825 = vpop.f32.mrb[0].mxu0
  %2826 = vmatprep.mubr.f32.mxu0 0.0
  %2827 = vmatmul.mubr.f32.gmra.mrb[0].mxu0 %v2639
  %v2828 = vpop.f32.mrb[0].mxu0
  %v2829 = vadd.f32 0.0, %v2828
  %v2830 = vpop.f32.mrb[0].mxu0
  %2831 = vmatprep.mubr.f32.mxu0 0.0
  %2832 = vmatmul.mubr.f32.gmra.mrb[0].mxu0 %v2642
  %v2833 = vpop.f32.mrb[0].mxu0
  %v2834 = vadd.f32 0.0, %v2833
  %v2835 = vpop.f32.mrb[0].mxu0
  %2836 = vmatprep.mubr.f32.mxu0 0.0
  %2837 = vmatmul.mubr.f32.gmra.mrb[0].mxu0 %v2645
  %v2838 = vpop.f32.mrb[0].mxu0
  %v2839 = vadd.f32 0.0, %v2838
  %v2840 = vpop.f32.mrb[0].mxu0
  %2841 = vmatprep.mubr.f32.mxu0 0.0
  %2842 = vmatmul.mubr.f32.gmra.mrb[0].mxu0 %v2648
  %v2843 = vpop.f32.mrb[0].mxu0
  %v2844 = vadd.f32 0.0, %v2843
  %v2845 = vpop.f32.mrb[0].mxu0
  %2846 = vmatprep.mubr.f32.mxu0 0.0
  %2847 = vmatmul.mubr.f32.gmra.mrb[0].mxu0 %v2651
  %v2848 = vpop.f32.mrb[0].mxu0
  %v2849 = vadd.f32 0.0, %v2848
  %v2850 = vpop.f32.mrb[0].mxu0
  %2851 = vmatprep.mubr.f32.mxu0 0.0
  %2852 = vmatmul.mubr.f32.gmra.mrb[0].mxu0 %v2654
  %v2853 = vpop.f32.mrb[0].mxu0
  %v2854 = vadd.f32 0.0, %v2853
  %v2855 = vpop.f32.mrb[0].mxu0
  %2856 = vmatprep.mubr.f32.mxu0 0.0
  %2857 = vmatmul.mubr.f32.gmra.mrb[0].mxu0 %v2657
  %v2858 = vpop.f32.mrb[0].mxu0
  %v2859 = vadd.f32 0.0, %v2858
  %v2860 = vpop.f32.mrb[0].mxu0
  %2861 = vmatprep.mubr.f32.mxu0 0.0
  %2862 = vmatmul.mubr.f32.gmra.mrb[0].mxu0 %v2660
  %v2863 = vpop.f32.mrb[0].mxu0
  %v2864 = vadd.f32 0.0, %v2863
  %v2865 = vpop.f32.mrb[0].mxu0
  %2866 = vmatprep.mubr.f32.mxu0 0.0
  %2867 = vmatmul.mubr.f32.gmra.mrb[0].mxu0 %v2663
  %v2868 = vpop.f32.mrb[0].mxu0
  %v2869 = vadd.f32 0.0, %v2868
  %v2870 = vpop.f32.mrb[0].mxu0
  %2871 = vmatprep.mubr.f32.mxu0 0.0
  %2872 = vmatmul.mubr.f32.gmra.mrb[0].mxu0 %v2666
  %v2873 = vpop.f32.mrb[0].mxu0
  %v2874 = vadd.f32 0.0, %v2873
  %v2875 = vpop.f32.mrb[0].mxu0
  %2876 = vmatprep.mubr.f32.mxu0 0.0
  %2877 = vmatmul.mubr.f32.gmra.mrb[0].mxu0 %v2669
  %v2878 = vpop.f32.mrb[0].mxu0
  %v2879 = vadd.f32 0.0, %v2878
  %v2880 = vpop.f32.mrb[0].mxu0
  %2881 = vmatprep.mubr.f32.mxu0 0.0
  %2882 = vmatmul.mubr.f32.gmra.mrb[0].mxu0 %v2672
  %v2883 = vpop.f32.mrb[0].mxu0
  %v2884 = vadd.f32 0.0, %v2883
  %v2885 = vpop.f32.mrb[0].mxu0
  %2886 = vmatprep.mubr.f32.mxu0 0.0
  %2887 = vmatmul.mubr.f32.gmra.mrb[0].mxu0 %v2675
  %v2888 = vpop.f32.mrb[0].mxu0
  %v2889 = vadd.f32 0.0, %v2888
  %v2890 = vpop.f32.mrb[0].mxu0
  %2891 = vdwg.mxu0
  %v2892 = vld [vmem:[%s2 + $0x40] sm:$0x3]
  %2894 = vrot.lane.b32.xlu0 %v2892, 123
  %v2895 = vpop.permute.xlu0 %2894
  %vm2896 = vcmask 15360
  %v2898 = vsel %vm2896, %v2794, 0
  %v2901 = vsel %vm2896, %v2799, 0
  %v2904 = vsel %vm2896, %v2804, 0
  %v2907 = vsel %vm2896, %v2809, 0
  %v2910 = vsel %vm2896, %v2814, 0
  %v2913 = vsel %vm2896, %v2819, 0
  %v2916 = vsel %vm2896, %v2824, 0
  %v2919 = vsel %vm2896, %v2829, 0
  %v2922 = vsel %vm2896, %v2834, 0
  %v2925 = vsel %vm2896, %v2839, 0
  %v2927 = vsel %vm1137, %v2895, 0
  %2929 = vmatprep.subr.mxu0 0.0
  %2930 = vmatpush1.msra.mxu0 %v2927
  %2931 = vmatprep.subr.mxu0 0.0
  %2932 = vmatpush1.msra.mxu0 0.0
  %2933 = vmatprep.subr.mxu0 0.0
  %2934 = vmatpush1.msra.mxu0 0.0
  %2935 = vmatprep.subr.mxu0 0.0
  %2936 = vmatpush1.msra.mxu0 0.0
  %2937 = vmatprep.subr.mxu0 0.0
  %2938 = vmatpush1.msra.mxu0 0.0
  %2939 = vmatprep.subr.mxu0 0.0
  %2940 = vmatpush1.msra.mxu0 0.0
  %2941 = vmatprep.subr.mxu0 0.0
  %2942 = vmatpush1.msra.mxu0 0.0
  %2943 = vmatprep.subr.mxu0 0.0
  %2944 = vmatpush1.msra.mxu0 0.0
  %2945 = vmatprep.subr.mxu0 0.0
  %2946 = vmatpush1.msra.mxu0 0.0
  %2947 = vmatprep.subr.mxu0 0.0
  %2948 = vmatpush1.msra.mxu0 0.0
  %2949 = vmatprep.subr.mxu0 0.0
  %2950 = vmatpush1.msra.mxu0 0.0
  %2951 = vmatprep.subr.mxu0 0.0
  %2952 = vmatpush1.msra.mxu0 0.0
  %2953 = vmatprep.subr.mxu0 0.0
  %2954 = vmatpush1.msra.mxu0 0.0
  %2955 = vmatprep.subr.mxu0 0.0
  %2956 = vmatpush1.msra.mxu0 0.0
  %2957 = vmatprep.subr.mxu0 0.0
  %2958 = vmatpush1.msra.mxu0 0.0
  %2959 = vmatprep.subr.mxu0 0.0
  %2960 = vmatpush1.msra.mxu0 0.0
  %2961 = vmatprep.subr.mxu0 0.0
  %2962 = vmatpush1.msra.mxu0 0.0
  %2963 = vmatprep.subr.mxu0 0.0
  %2964 = vmatpush1.msra.mxu0 0.0
  %2965 = vmatprep.subr.mxu0 0.0
  %2966 = vmatpush1.msra.mxu0 0.0
  %2967 = vmatprep.subr.mxu0 0.0
  %2968 = vmatpush1.msra.mxu0 0.0
  %2969 = vmatprep.subr.mxu0 0.0
  %2970 = vmatpush1.msra.mxu0 0.0
  %2971 = vmatprep.subr.mxu0 0.0
  %2972 = vmatpush1.msra.mxu0 0.0
  %2973 = vmatprep.subr.mxu0 0.0
  %2974 = vmatpush1.msra.mxu0 0.0
  %2975 = vmatprep.subr.mxu0 0.0
  %2976 = vmatpush1.msra.mxu0 0.0
  %2977 = vmatprep.subr.mxu0 0.0
  %2978 = vmatpush1.msra.mxu0 0.0
  %2979 = vmatprep.subr.mxu0 0.0
  %2980 = vmatpush1.msra.mxu0 0.0
  %2981 = vmatprep.subr.mxu0 0.0
  %2982 = vmatpush1.msra.mxu0 0.0
  %2983 = vmatprep.subr.mxu0 0.0
  %2984 = vmatpush1.msra.mxu0 0.0
  %2985 = vmatprep.subr.mxu0 0.0
  %2986 = vmatpush1.msra.mxu0 0.0
  %2987 = vmatprep.subr.mxu0 0.0
  %2988 = vmatpush1.msra.mxu0 0.0
  %2989 = vmatprep.subr.mxu0 0.0
  %2990 = vmatpush1.msra.mxu0 0.0
  %2991 = vmatprep.subr.mxu0 0.0
  %2992 = vmatpush1.msra.mxu0 0.0
  %2993 = vmatprep.mubr.f32.mxu0 0.0
  %2994 = vmatmul.mubr.f32.gmra.mrb[0].mxu0 %v2898
  %v2995 = vpop.f32.mrb[0].mxu0
  %v2996 = vadd.f32 0.0, %v2995
  %v2997 = vpop.f32.mrb[0].mxu0
  %2998 = vmatprep.mubr.f32.mxu0 0.0
  %2999 = vmatmul.mubr.f32.gmra.mrb[0].mxu0 %v2901
  %v3000 = vpop.f32.mrb[0].mxu0
  %v3001 = vadd.f32 0.0, %v3000
  %v3002 = vpop.f32.mrb[0].mxu0
  %3003 = vmatprep.mubr.f32.mxu0 0.0
  %3004 = vmatmul.mubr.f32.gmra.mrb[0].mxu0 %v2904
  %v3005 = vpop.f32.mrb[0].mxu0
  %v3006 = vadd.f32 0.0, %v3005
  %v3007 = vpop.f32.mrb[0].mxu0
  %3008 = vmatprep.mubr.f32.mxu0 0.0
  %3009 = vmatmul.mubr.f32.gmra.mrb[0].mxu0 %v2907
  %v3010 = vpop.f32.mrb[0].mxu0
  %v3011 = vadd.f32 0.0, %v3010
  %v3012 = vpop.f32.mrb[0].mxu0
  %3013 = vmatprep.mubr.f32.mxu0 0.0
  %3014 = vmatmul.mubr.f32.gmra.mrb[0].mxu0 %v2910
  %v3015 = vpop.f32.mrb[0].mxu0
  %v3016 = vadd.f32 0.0, %v3015
  %v3017 = vpop.f32.mrb[0].mxu0
  %3018 = vmatprep.mubr.f32.mxu0 0.0
  %3019 = vmatmul.mubr.f32.gmra.mrb[0].mxu0 %v2913
  %v3020 = vpop.f32.mrb[0].mxu0
  %v3021 = vadd.f32 0.0, %v3020
  %v3022 = vpop.f32.mrb[0].mxu0
  %3023 = vmatprep.mubr.f32.mxu0 0.0
  %3024 = vmatmul.mubr.f32.gmra.mrb[0].mxu0 %v2916
  %v3025 = vpop.f32.mrb[0].mxu0
  %v3026 = vadd.f32 0.0, %v3025
  %v3027 = vpop.f32.mrb[0].mxu0
  %3028 = vmatprep.mubr.f32.mxu0 0.0
  %3029 = vmatmul.mubr.f32.gmra.mrb[0].mxu0 %v2919
  %v3030 = vpop.f32.mrb[0].mxu0
  %v3031 = vadd.f32 0.0, %v3030
  %v3032 = vpop.f32.mrb[0].mxu0
  %3033 = vmatprep.mubr.f32.mxu0 0.0
  %3034 = vmatmul.mubr.f32.gmra.mrb[0].mxu0 %v2922
  %v3035 = vpop.f32.mrb[0].mxu0
  %v3036 = vadd.f32 0.0, %v3035
  %v3037 = vpop.f32.mrb[0].mxu0
  %3038 = vmatprep.mubr.f32.mxu0 0.0
  %3039 = vmatmul.mubr.f32.gmra.mrb[0].mxu0 %v2925
  %v3040 = vpop.f32.mrb[0].mxu0
  %v3041 = vadd.f32 0.0, %v3040
  %v3042 = vpop.f32.mrb[0].mxu0
  %3043 = vdwg.mxu0
  %v3045 = vsel %vm2896, %v2744, 0
  %v3048 = vsel %vm2896, %v2749, 0
  %v3051 = vsel %vm2896, %v2754, 0
  %v3054 = vsel %vm2896, %v2759, 0
  %v3057 = vsel %vm2896, %v2764, 0
  %v3060 = vsel %vm2896, %v2769, 0
  %v3063 = vsel %vm2896, %v2774, 0
  %v3066 = vsel %vm2896, %v2779, 0
  %v3069 = vsel %vm2896, %v2784, 0
  %v3072 = vsel %vm2896, %v2789, 0
  %v3074 = vsel %vm1137, %v2892, 0
  %3076 = vmatprep.subr.mxu0 0.0
  %3077 = vmatpush1.msra.mxu0 %v3074
  %3078 = vmatprep.subr.mxu0 0.0
  %3079 = vmatpush1.msra.mxu0 0.0
  %3080 = vmatprep.subr.mxu0 0.0
  %3081 = vmatpush1.msra.mxu0 0.0
  %3082 = vmatprep.subr.mxu0 0.0
  %3083 = vmatpush1.msra.mxu0 0.0
  %3084 = vmatprep.subr.mxu0 0.0
  %3085 = vmatpush1.msra.mxu0 0.0
  %3086 = vmatprep.subr.mxu0 0.0
  %3087 = vmatpush1.msra.mxu0 0.0
  %3088 = vmatprep.subr.mxu0 0.0
  %3089 = vmatpush1.msra.mxu0 0.0
  %3090 = vmatprep.subr.mxu0 0.0
  %3091 = vmatpush1.msra.mxu0 0.0
  %3092 = vmatprep.subr.mxu0 0.0
  %3093 = vmatpush1.msra.mxu0 0.0
  %3094 = vmatprep.subr.mxu0 0.0
  %3095 = vmatpush1.msra.mxu0 0.0
  %3096 = vmatprep.subr.mxu0 0.0
  %3097 = vmatpush1.msra.mxu0 0.0
  %3098 = vmatprep.subr.mxu0 0.0
  %3099 = vmatpush1.msra.mxu0 0.0
  %3100 = vmatprep.subr.mxu0 0.0
  %3101 = vmatpush1.msra.mxu0 0.0
  %3102 = vmatprep.subr.mxu0 0.0
  %3103 = vmatpush1.msra.mxu0 0.0
  %3104 = vmatprep.subr.mxu0 0.0
  %3105 = vmatpush1.msra.mxu0 0.0
  %3106 = vmatprep.subr.mxu0 0.0
  %3107 = vmatpush1.msra.mxu0 0.0
  %3108 = vmatprep.subr.mxu0 0.0
  %3109 = vmatpush1.msra.mxu0 0.0
  %3110 = vmatprep.subr.mxu0 0.0
  %3111 = vmatpush1.msra.mxu0 0.0
  %3112 = vmatprep.subr.mxu0 0.0
  %3113 = vmatpush1.msra.mxu0 0.0
  %3114 = vmatprep.subr.mxu0 0.0
  %3115 = vmatpush1.msra.mxu0 0.0
  %3116 = vmatprep.subr.mxu0 0.0
  %3117 = vmatpush1.msra.mxu0 0.0
  %3118 = vmatprep.subr.mxu0 0.0
  %3119 = vmatpush1.msra.mxu0 0.0
  %3120 = vmatprep.subr.mxu0 0.0
  %3121 = vmatpush1.msra.mxu0 0.0
  %3122 = vmatprep.subr.mxu0 0.0
  %3123 = vmatpush1.msra.mxu0 0.0
  %3124 = vmatprep.subr.mxu0 0.0
  %3125 = vmatpush1.msra.mxu0 0.0
  %3126 = vmatprep.subr.mxu0 0.0
  %3127 = vmatpush1.msra.mxu0 0.0
  %3128 = vmatprep.subr.mxu0 0.0
  %3129 = vmatpush1.msra.mxu0 0.0
  %3130 = vmatprep.subr.mxu0 0.0
  %3131 = vmatpush1.msra.mxu0 0.0
  %3132 = vmatprep.subr.mxu0 0.0
  %3133 = vmatpush1.msra.mxu0 0.0
  %3134 = vmatprep.subr.mxu0 0.0
  %3135 = vmatpush1.msra.mxu0 0.0
  %3136 = vmatprep.subr.mxu0 0.0
  %3137 = vmatpush1.msra.mxu0 0.0
  %3138 = vmatprep.subr.mxu0 0.0
  %3139 = vmatpush1.msra.mxu0 0.0
  %3140 = vmatprep.mubr.f32.mxu0 0.0
  %3141 = vmatmul.mubr.f32.gmra.mrb[0].mxu0 %v3045
  %v3142 = vpop.f32.mrb[0].mxu0
  %v3143 = vadd.f32 %v2996, %v3142
  %v3144 = vpop.f32.mrb[0].mxu0
  %3145 = vmatprep.mubr.f32.mxu0 0.0
  %3146 = vmatmul.mubr.f32.gmra.mrb[0].mxu0 %v3048
  %v3147 = vpop.f32.mrb[0].mxu0
  %v3148 = vadd.f32 %v3001, %v3147
  %v3149 = vpop.f32.mrb[0].mxu0
  %3150 = vmatprep.mubr.f32.mxu0 0.0
  %3151 = vmatmul.mubr.f32.gmra.mrb[0].mxu0 %v3051
  %v3152 = vpop.f32.mrb[0].mxu0
  %v3153 = vadd.f32 %v3006, %v3152
  %v3154 = vpop.f32.mrb[0].mxu0
  %3155 = vmatprep.mubr.f32.mxu0 0.0
  %3156 = vmatmul.mubr.f32.gmra.mrb[0].mxu0 %v3054
  %v3157 = vpop.f32.mrb[0].mxu0
  %v3158 = vadd.f32 %v3011, %v3157
  %v3159 = vpop.f32.mrb[0].mxu0
  %3160 = vmatprep.mubr.f32.mxu0 0.0
  %3161 = vmatmul.mubr.f32.gmra.mrb[0].mxu0 %v3057
  %v3162 = vpop.f32.mrb[0].mxu0
  %v3163 = vadd.f32 %v3016, %v3162
  %v3164 = vpop.f32.mrb[0].mxu0
  %3165 = vmatprep.mubr.f32.mxu0 0.0
  %3166 = vmatmul.mubr.f32.gmra.mrb[0].mxu0 %v3060
  %v3167 = vpop.f32.mrb[0].mxu0
  %v3168 = vadd.f32 %v3021, %v3167
  %v3169 = vpop.f32.mrb[0].mxu0
  %3170 = vmatprep.mubr.f32.mxu0 0.0
  %3171 = vmatmul.mubr.f32.gmra.mrb[0].mxu0 %v3063
  %v3172 = vpop.f32.mrb[0].mxu0
  %v3173 = vadd.f32 %v3026, %v3172
  %v3174 = vpop.f32.mrb[0].mxu0
  %3175 = vmatprep.mubr.f32.mxu0 0.0
  %3176 = vmatmul.mubr.f32.gmra.mrb[0].mxu0 %v3066
  %v3177 = vpop.f32.mrb[0].mxu0
  %v3178 = vadd.f32 %v3031, %v3177
  %v3179 = vpop.f32.mrb[0].mxu0
  %3180 = vmatprep.mubr.f32.mxu0 0.0
  %3181 = vmatmul.mubr.f32.gmra.mrb[0].mxu0 %v3069
  %v3182 = vpop.f32.mrb[0].mxu0
  %v3183 = vadd.f32 %v3036, %v3182
  %v3184 = vpop.f32.mrb[0].mxu0
  %3185 = vmatprep.mubr.f32.mxu0 0.0
  %3186 = vmatmul.mubr.f32.gmra.mrb[0].mxu0 %v3072
  %v3187 = vpop.f32.mrb[0].mxu0
  %v3188 = vadd.f32 %v3041, %v3187
  %v3189 = vpop.f32.mrb[0].mxu0
  %3190 = vdwg.mxu0
  %3191 = vrot.lane.b32.xlu0 %v2892, 118
  %v3192 = vpop.permute.xlu0 %3191
  %v3194 = vsel %vm2896, %v2844, 0
  %v3197 = vsel %vm2896, %v2849, 0
  %v3200 = vsel %vm2896, %v2854, 0
  %v3203 = vsel %vm2896, %v2859, 0
  %v3206 = vsel %vm2896, %v2864, 0
  %v3209 = vsel %vm2896, %v2869, 0
  %v3212 = vsel %vm2896, %v2874, 0
  %v3215 = vsel %vm2896, %v2879, 0
  %v3218 = vsel %vm2896, %v2884, 0
  %v3221 = vsel %vm2896, %v2889, 0
  %v3223 = vsel %vm1137, %v3192, 0
  %3225 = vmatprep.subr.mxu0 0.0
  %3226 = vmatpush1.msra.mxu0 %v3223
  %3227 = vmatprep.subr.mxu0 0.0
  %3228 = vmatpush1.msra.mxu0 0.0
  %3229 = vmatprep.subr.mxu0 0.0
  %3230 = vmatpush1.msra.mxu0 0.0
  %3231 = vmatprep.subr.mxu0 0.0
  %3232 = vmatpush1.msra.mxu0 0.0
  %3233 = vmatprep.subr.mxu0 0.0
  %3234 = vmatpush1.msra.mxu0 0.0
  %3235 = vmatprep.subr.mxu0 0.0
  %3236 = vmatpush1.msra.mxu0 0.0
  %3237 = vmatprep.subr.mxu0 0.0
  %3238 = vmatpush1.msra.mxu0 0.0
  %3239 = vmatprep.subr.mxu0 0.0
  %3240 = vmatpush1.msra.mxu0 0.0
  %3241 = vmatprep.subr.mxu0 0.0
  %3242 = vmatpush1.msra.mxu0 0.0
  %3243 = vmatprep.subr.mxu0 0.0
  %3244 = vmatpush1.msra.mxu0 0.0
  %3245 = vmatprep.subr.mxu0 0.0
  %3246 = vmatpush1.msra.mxu0 0.0
  %3247 = vmatprep.subr.mxu0 0.0
  %3248 = vmatpush1.msra.mxu0 0.0
  %3249 = vmatprep.subr.mxu0 0.0
  %3250 = vmatpush1.msra.mxu0 0.0
  %3251 = vmatprep.subr.mxu0 0.0
  %3252 = vmatpush1.msra.mxu0 0.0
  %3253 = vmatprep.subr.mxu0 0.0
  %3254 = vmatpush1.msra.mxu0 0.0
  %3255 = vmatprep.subr.mxu0 0.0
  %3256 = vmatpush1.msra.mxu0 0.0
  %3257 = vmatprep.subr.mxu0 0.0
  %3258 = vmatpush1.msra.mxu0 0.0
  %3259 = vmatprep.subr.mxu0 0.0
  %3260 = vmatpush1.msra.mxu0 0.0
  %3261 = vmatprep.subr.mxu0 0.0
  %3262 = vmatpush1.msra.mxu0 0.0
  %3263 = vmatprep.subr.mxu0 0.0
  %3264 = vmatpush1.msra.mxu0 0.0
  %3265 = vmatprep.subr.mxu0 0.0
  %3266 = vmatpush1.msra.mxu0 0.0
  %3267 = vmatprep.subr.mxu0 0.0
  %3268 = vmatpush1.msra.mxu0 0.0
  %3269 = vmatprep.subr.mxu0 0.0
  %3270 = vmatpush1.msra.mxu0 0.0
  %3271 = vmatprep.subr.mxu0 0.0
  %3272 = vmatpush1.msra.mxu0 0.0
  %3273 = vmatprep.subr.mxu0 0.0
  %3274 = vmatpush1.msra.mxu0 0.0
  %3275 = vmatprep.subr.mxu0 0.0
  %3276 = vmatpush1.msra.mxu0 0.0
  %3277 = vmatprep.subr.mxu0 0.0
  %3278 = vmatpush1.msra.mxu0 0.0
  %3279 = vmatprep.subr.mxu0 0.0
  %3280 = vmatpush1.msra.mxu0 0.0
  %3281 = vmatprep.subr.mxu0 0.0
  %3282 = vmatpush1.msra.mxu0 0.0
  %3283 = vmatprep.subr.mxu0 0.0
  %3284 = vmatpush1.msra.mxu0 0.0
  %3285 = vmatprep.subr.mxu0 0.0
  %3286 = vmatpush1.msra.mxu0 0.0
  %3287 = vmatprep.subr.mxu0 0.0
  %3288 = vmatpush1.msra.mxu0 0.0
  %3289 = vmatprep.mubr.f32.mxu0 0.0
  %3290 = vmatmul.mubr.f32.gmra.mrb[0].mxu0 %v3194
  %v3291 = vpop.f32.mrb[0].mxu0
  %v3292 = vadd.f32 0.0, %v3291
  %v3293 = vpop.f32.mrb[0].mxu0
  %3294 = vmatprep.mubr.f32.mxu0 0.0
  %3295 = vmatmul.mubr.f32.gmra.mrb[0].mxu0 %v3197
  %v3296 = vpop.f32.mrb[0].mxu0
  %v3297 = vadd.f32 0.0, %v3296
  %v3298 = vpop.f32.mrb[0].mxu0
  %3299 = vmatprep.mubr.f32.mxu0 0.0
  %3300 = vmatmul.mubr.f32.gmra.mrb[0].mxu0 %v3200
  %v3301 = vpop.f32.mrb[0].mxu0
  %v3302 = vadd.f32 0.0, %v3301
  %v3303 = vpop.f32.mrb[0].mxu0
  %3304 = vmatprep.mubr.f32.mxu0 0.0
  %3305 = vmatmul.mubr.f32.gmra.mrb[0].mxu0 %v3203
  %v3306 = vpop.f32.mrb[0].mxu0
  %v3307 = vadd.f32 0.0, %v3306
  %v3308 = vpop.f32.mrb[0].mxu0
  %3309 = vmatprep.mubr.f32.mxu0 0.0
  %3310 = vmatmul.mubr.f32.gmra.mrb[0].mxu0 %v3206
  %v3311 = vpop.f32.mrb[0].mxu0
  %v3312 = vadd.f32 0.0, %v3311
  %v3313 = vpop.f32.mrb[0].mxu0
  %3314 = vmatprep.mubr.f32.mxu0 0.0
  %3315 = vmatmul.mubr.f32.gmra.mrb[0].mxu0 %v3209
  %v3316 = vpop.f32.mrb[0].mxu0
  %v3317 = vadd.f32 0.0, %v3316
  %v3318 = vpop.f32.mrb[0].mxu0
  %3319 = vmatprep.mubr.f32.mxu0 0.0
  %3320 = vmatmul.mubr.f32.gmra.mrb[0].mxu0 %v3212
  %v3321 = vpop.f32.mrb[0].mxu0
  %v3322 = vadd.f32 0.0, %v3321
  %v3323 = vpop.f32.mrb[0].mxu0
  %3324 = vmatprep.mubr.f32.mxu0 0.0
  %3325 = vmatmul.mubr.f32.gmra.mrb[0].mxu0 %v3215
  %v3326 = vpop.f32.mrb[0].mxu0
  %v3327 = vadd.f32 0.0, %v3326
  %v3328 = vpop.f32.mrb[0].mxu0
  %3329 = vmatprep.mubr.f32.mxu0 0.0
  %3330 = vmatmul.mubr.f32.gmra.mrb[0].mxu0 %v3218
  %v3331 = vpop.f32.mrb[0].mxu0
  %v3332 = vadd.f32 0.0, %v3331
  %v3333 = vpop.f32.mrb[0].mxu0
  %3334 = vmatprep.mubr.f32.mxu0 0.0
  %3335 = vmatmul.mubr.f32.gmra.mrb[0].mxu0 %v3221
  %v3336 = vpop.f32.mrb[0].mxu0
  %v3337 = vadd.f32 0.0, %v3336
  %v3338 = vpop.f32.mrb[0].mxu0
  %3339 = vdwg.mxu0
  %v3340 = vadd.f32 %v3143, %v3292
  %v3341 = vadd.f32 %v3148, %v3297
  %v3342 = vadd.f32 %v3153, %v3302
  %v3343 = vadd.f32 %v3158, %v3307
  %v3344 = vadd.f32 %v3163, %v3312
  %v3345 = vadd.f32 %v3168, %v3317
  %v3346 = vadd.f32 %v3173, %v3322
  %v3347 = vadd.f32 %v3178, %v3327
  %v3348 = vadd.f32 %v3183, %v3332
  %v3349 = vadd.f32 %v3188, %v3337
  %v3350 = vld [vmem:[%s3 + $0xb8] sm:$0xff]
  %v3351 = vld [vmem:[%s3 + $0xc0] sm:$0xff]
  %v3352 = vld [vmem:[%s3 + $0xc8] sm:$0xff]
  %v3353 = vld [vmem:[%s3 + $0xd0] sm:$0xff]
  %v3354 = vld [vmem:[%s3 + $0xd8] sm:$0xff]
  %v3355 = vld [vmem:[%s3 + $0xe0] sm:$0xff]
  %v3356 = vld [vmem:[%s3 + $0xe8] sm:$0xff]
  %v3357 = vld [vmem:[%s3 + $0xf0] sm:$0xff]
  %v3358 = vld [vmem:[%s3 + $0xf8] sm:$0xff]
  %v3359 = vld [vmem:[%s3 + $0x100] sm:$0xff]
  %3361 = vset.pattern.permute.xlu0 0
  %3362 = vperm.xlu0 %3361, %v3350
  %v3363 = vpop.permute.xlu0 %3362
  %3366 = vset.pattern.permute.xlu0 0
  %3367 = vperm.xlu0 %3366, %v3351
  %v3368 = vpop.permute.xlu0 %3367
  %3371 = vset.pattern.permute.xlu0 0
  %3372 = vperm.xlu0 %3371, %v3352
  %v3373 = vpop.permute.xlu0 %3372
  %3376 = vset.pattern.permute.xlu0 0
  %3377 = vperm.xlu0 %3376, %v3353
  %v3378 = vpop.permute.xlu0 %3377
  %3381 = vset.pattern.permute.xlu0 0
  %3382 = vperm.xlu0 %3381, %v3354
  %v3383 = vpop.permute.xlu0 %3382
  %3386 = vset.pattern.permute.xlu0 0
  %3387 = vperm.xlu0 %3386, %v3355
  %v3388 = vpop.permute.xlu0 %3387
  %3391 = vset.pattern.permute.xlu0 0
  %3392 = vperm.xlu0 %3391, %v3356
  %v3393 = vpop.permute.xlu0 %3392
  %3396 = vset.pattern.permute.xlu0 0
  %3397 = vperm.xlu0 %3396, %v3357
  %v3398 = vpop.permute.xlu0 %3397
  %3401 = vset.pattern.permute.xlu0 0
  %3402 = vperm.xlu0 %3401, %v3358
  %v3403 = vpop.permute.xlu0 %3402
  %3406 = vset.pattern.permute.xlu0 0
  %3407 = vperm.xlu0 %3406, %v3359
  %v3408 = vpop.permute.xlu0 %3407
  %v3410 = vadd.f32 %v3340, %v3363
  %v3411 = vadd.f32 %v3341, %v3368
  %v3412 = vadd.f32 %v3342, %v3373
  %v3413 = vadd.f32 %v3343, %v3378
  %v3414 = vadd.f32 %v3344, %v3383
  %v3415 = vadd.f32 %v3345, %v3388
  %v3416 = vadd.f32 %v3346, %v3393
  %v3417 = vadd.f32 %v3347, %v3398
  %v3418 = vadd.f32 %v3348, %v3403
  %v3419 = vadd.f32 %v3349, %v3408
  %v3420 = vmax.f32 %v3410, 0.0
  %v3421 = vmax.f32 %v3411, 0.0
  %v3422 = vmax.f32 %v3412, 0.0
  %v3423 = vmax.f32 %v3413, 0.0
  %v3424 = vmax.f32 %v3414, 0.0
  %v3425 = vmax.f32 %v3415, 0.0
  %v3426 = vmax.f32 %v3416, 0.0
  %v3427 = vmax.f32 %v3417, 0.0
  %v3428 = vmax.f32 %v3418, 0.0
  %v3429 = vmax.f32 %v3419, 0.0
  %v3430 = vld [vmem:[%s1 + $0x7b0] sm:$0xff]
  %v3431 = vld [vmem:[%s1 + $0x7c0] sm:$0xff]
  %v3432 = vld [vmem:[%s1 + $0x7d0] sm:$0xff]
  %v3433 = vld [vmem:[%s1 + $0x7e0] sm:$0xff]
  %v3434 = vld [vmem:[%s1 + $0x7f0] sm:$0xff]
  %v3435 = vld [vmem:[%s1 + $0x800] sm:$0xff]
  %v3436 = vld [vmem:[%s1 + $0x810] sm:$0xff]
  %v3437 = vld [vmem:[%s1 + $0x820] sm:$0xff]
  %v3438 = vld [vmem:[%s1 + $0x830] sm:$0xff]
  %v3439 = vld [vmem:[%s1 + $0x840] sm:$0xff]
  %v3440 = vld [vmem:[%s1 + $0x850] sm:$0xff]
  %v3441 = vld [vmem:[%s1 + $0x860] sm:$0xff]
  %v3442 = vld [vmem:[%s1 + $0x870] sm:$0xff]
  %v3443 = vld [vmem:[%s1 + $0x880] sm:$0xff]
  %v3444 = vld [vmem:[%s1 + $0x890] sm:$0xff]
  %v3445 = vld [vmem:[%s1 + $0x8a0] sm:$0xff]
  %v3446 = vld [vmem:[%s1 + $0x8b0] sm:$0xff]
  %v3447 = vld [vmem:[%s1 + $0x8c0] sm:$0xff]
  %v3448 = vld [vmem:[%s1 + $0x8d0] sm:$0xff]
  %v3449 = vld [vmem:[%s1 + $0x8e0] sm:$0xff]
  %v3450 = vld [vmem:[%s1 + $0x8f0] sm:$0xff]
  %v3451 = vld [vmem:[%s1 + $0x900] sm:$0xff]
  %v3452 = vld [vmem:[%s1 + $0x910] sm:$0xff]
  %v3453 = vld [vmem:[%s1 + $0x920] sm:$0xff]
  %v3454 = vld [vmem:[%s1 + $0x930] sm:$0xff]
  %v3455 = vld [vmem:[%s1 + $0x940] sm:$0xff]
  %v3456 = vld [vmem:[%s1 + $0x950] sm:$0xff]
  %v3457 = vld [vmem:[%s1 + $0x960] sm:$0xff]
  %v3458 = vld [vmem:[%s1 + $0x970] sm:$0xff]
  %v3459 = vld [vmem:[%s1 + $0x980] sm:$0xff]
  %v3460 = vld [vmem:[%s1 + $0x990] sm:$0xff]
  %v3461 = vld [vmem:[%s1 + $0x9a0] sm:$0xff]
  %v3462 = vld [vmem:[%s1 + $0x9b0] sm:$0xff]
  %v3463 = vld [vmem:[%s1 + $0x9c0] sm:$0xff]
  %v3464 = vld [vmem:[%s1 + $0x9d0] sm:$0xff]
  %v3465 = vld [vmem:[%s1 + $0x9e0] sm:$0xff]
  %v3466 = vld [vmem:[%s1 + $0x9f0] sm:$0xff]
  %v3467 = vld [vmem:[%s1 + $0xa00] sm:$0xff]
  %v3468 = vld [vmem:[%s1 + $0xa10] sm:$0xff]
  %v3469 = vld [vmem:[%s1 + $0xa20] sm:$0xff]
  %v3470 = vld [vmem:[%s1 + $0xa30] sm:$0xff]
  %v3471 = vld [vmem:[%s1 + $0xa40] sm:$0xff]
  %v3472 = vld [vmem:[%s1 + $0xa50] sm:$0xff]
  %v3473 = vld [vmem:[%s1 + $0xa60] sm:$0xff]
  %v3474 = vld [vmem:[%s1 + $0xa70] sm:$0xff]
  %v3475 = vld [vmem:[%s1 + $0xa80] sm:$0xff]
  %v3476 = vld [vmem:[%s1 + $0xa90] sm:$0xff]
  %v3477 = vld [vmem:[%s1 + $0xaa0] sm:$0xff]
  %v3478 = vld [vmem:[%s1 + $0xab0] sm:$0xff]
  %v3479 = vld [vmem:[%s1 + $0xac0] sm:$0xff]
  %v3480 = vld [vmem:[%s1 + $0xad0] sm:$0xff]
  %v3481 = vld [vmem:[%s1 + $0xae0] sm:$0xff]
  %v3482 = vld [vmem:[%s1 + $0xaf0] sm:$0xff]
  %v3483 = vld [vmem:[%s1 + $0xb00] sm:$0xff]
  %v3484 = vld [vmem:[%s1 + $0xb10] sm:$0xff]
  %v3485 = vld [vmem:[%s1 + $0xb20] sm:$0xff]
  %v3486 = vld [vmem:[%s1 + $0xb30] sm:$0xff]
  %v3487 = vld [vmem:[%s1 + $0xb40] sm:$0xff]
  %v3488 = vld [vmem:[%s1 + $0xb50] sm:$0xff]
  %v3489 = vld [vmem:[%s1 + $0xb60] sm:$0xff]
  %v3490 = vld [vmem:[%s1 + $0xb70] sm:$0xff]
  %v3491 = vld [vmem:[%s1 + $0xb80] sm:$0xff]
  %v3492 = vld [vmem:[%s1 + $0xb90] sm:$0xff]
  %v3493 = vld [vmem:[%s1 + $0xba0] sm:$0xff]
  %v3494 = vld [vmem:[%s1 + $0xbb0] sm:$0xff]
  %v3495 = vld [vmem:[%s1 + $0xbc0] sm:$0xff]
  %v3496 = vld [vmem:[%s1 + $0xbd0] sm:$0xff]
  %v3497 = vld [vmem:[%s1 + $0xbe0] sm:$0xff]
  %v3498 = vld [vmem:[%s1 + $0xbf0] sm:$0xff]
  %v3499 = vld [vmem:[%s1 + $0xc00] sm:$0xff]
  %v3500 = vld [vmem:[%s1 + $0xc10] sm:$0xff]
  %v3501 = vld [vmem:[%s1 + $0xc20] sm:$0xff]
  %v3502 = vld [vmem:[%s1 + $0xc30] sm:$0xff]
  %v3503 = vld [vmem:[%s1 + $0xc40] sm:$0xff]
  %v3504 = vld [vmem:[%s1 + $0xc50] sm:$0xff]
  %v3506 = vsel %vm1944, %v3430, 0
  %v3509 = vsel %vm1944, %v3431, 0
  %v3512 = vsel %vm1944, %v3432, 0
  %v3515 = vsel %vm1944, %v3433, 0
  %v3518 = vsel %vm1944, %v3434, 0
  %v3521 = vsel %vm1944, %v3435, 0
  %v3524 = vsel %vm1944, %v3436, 0
  %v3527 = vsel %vm1944, %v3437, 0
  %v3530 = vsel %vm1944, %v3438, 0
  %v3533 = vsel %vm1944, %v3439, 0
  %v3536 = vsel %vm1944, %v3440, 0
  %v3539 = vsel %vm1944, %v3441, 0
  %v3542 = vsel %vm1944, %v3442, 0
  %v3545 = vsel %vm1944, %v3443, 0
  %v3548 = vsel %vm1944, %v3444, 0
  %v3551 = vsel %vm1944, %v3445, 0
  %v3554 = vsel %vm1944, %v3446, 0
  %v3557 = vsel %vm1944, %v3447, 0
  %v3560 = vsel %vm1944, %v3448, 0
  %v3563 = vsel %vm1944, %v3449, 0
  %v3566 = vsel %vm1944, %v3450, 0
  %v3569 = vsel %vm1944, %v3451, 0
  %v3572 = vsel %vm1944, %v3452, 0
  %v3575 = vsel %vm1944, %v3453, 0
  %v3578 = vsel %vm1944, %v3454, 0
  %v3581 = vsel %vm1944, %v3455, 0
  %v3584 = vsel %vm1944, %v3456, 0
  %v3587 = vsel %vm1944, %v3457, 0
  %v3590 = vsel %vm1944, %v3458, 0
  %v3593 = vsel %vm1944, %v3459, 0
  %v3596 = vsel %vm1944, %v3460, 0
  %v3599 = vsel %vm1944, %v3461, 0
  %v3602 = vsel %vm1944, %v3462, 0
  %v3605 = vsel %vm1944, %v3463, 0
  %v3608 = vsel %vm1944, %v3464, 0
  %v3611 = vsel %vm1944, %v3465, 0
  %v3614 = vsel %vm1944, %v3466, 0
  %v3617 = vsel %vm1944, %v3467, 0
  %v3620 = vsel %vm1944, %v3468, 0
  %v3623 = vsel %vm1944, %v3469, 0
  %v3626 = vsel %vm1944, %v3470, 0
  %v3629 = vsel %vm1944, %v3471, 0
  %v3632 = vsel %vm1944, %v3472, 0
  %v3635 = vsel %vm1944, %v3473, 0
  %v3638 = vsel %vm1944, %v3474, 0
  %v3641 = vsel %vm1944, %v3475, 0
  %v3644 = vsel %vm1944, %v3476, 0
  %v3647 = vsel %vm1944, %v3477, 0
  %v3650 = vsel %vm1944, %v3478, 0
  %v3653 = vsel %vm1944, %v3479, 0
  %v3656 = vsel %vm1944, %v3480, 0
  %v3659 = vsel %vm1944, %v3481, 0
  %v3662 = vsel %vm1944, %v3482, 0
  %v3665 = vsel %vm1944, %v3483, 0
  %v3668 = vsel %vm1944, %v3484, 0
  %v3671 = vsel %vm1944, %v3485, 0
  %v3674 = vsel %vm1944, %v3486, 0
  %v3677 = vsel %vm1944, %v3487, 0
  %v3680 = vsel %vm1944, %v3488, 0
  %v3683 = vsel %vm1944, %v3489, 0
  %v3686 = vsel %vm1944, %v3490, 0
  %v3689 = vsel %vm1944, %v3491, 0
  %v3692 = vsel %vm1944, %v3492, 0
  %v3695 = vsel %vm1944, %v3493, 0
  %v3698 = vsel %vm1944, %v3494, 0
  %v3701 = vsel %vm1944, %v3495, 0
  %v3704 = vsel %vm1944, %v3496, 0
  %v3707 = vsel %vm1944, %v3497, 0
  %v3710 = vsel %vm1944, %v3498, 0
  %v3713 = vsel %vm1944, %v3499, 0
  %v3716 = vsel %vm1944, %v3500, 0
  %v3719 = vsel %vm1944, %v3501, 0
  %v3722 = vsel %vm1944, %v3502, 0
  %v3725 = vsel %vm1944, %v3503, 0
  %v3728 = vsel %vm1944, %v3504, 0
  %3730 = vmatprep.subr.mxu0 0.0
  %3731 = vmatpush1.msra.mxu0 %v3420
  %3732 = vmatprep.subr.mxu0 0.0
  %3733 = vmatpush1.msra.mxu0 %v3421
  %3734 = vmatprep.subr.mxu0 0.0
  %3735 = vmatpush1.msra.mxu0 %v3422
  %3736 = vmatprep.subr.mxu0 0.0
  %3737 = vmatpush1.msra.mxu0 %v3423
  %3738 = vmatprep.subr.mxu0 0.0
  %3739 = vmatpush1.msra.mxu0 %v3424
  %3740 = vmatprep.subr.mxu0 0.0
  %3741 = vmatpush1.msra.mxu0 %v3425
  %3742 = vmatprep.subr.mxu0 0.0
  %3743 = vmatpush1.msra.mxu0 %v3426
  %3744 = vmatprep.subr.mxu0 0.0
  %3745 = vmatpush1.msra.mxu0 %v3427
  %3746 = vmatprep.subr.mxu0 0.0
  %3747 = vmatpush1.msra.mxu0 %v3428
  %3748 = vmatprep.subr.mxu0 0.0
  %3749 = vmatpush1.msra.mxu0 %v3429
  %3750 = vmatprep.subr.mxu0 0.0
  %3751 = vmatpush1.msra.mxu0 0.0
  %3752 = vmatprep.subr.mxu0 0.0
  %3753 = vmatpush1.msra.mxu0 0.0
  %3754 = vmatprep.subr.mxu0 0.0
  %3755 = vmatpush1.msra.mxu0 0.0
  %3756 = vmatprep.subr.mxu0 0.0
  %3757 = vmatpush1.msra.mxu0 0.0
  %3758 = vmatprep.subr.mxu0 0.0
  %3759 = vmatpush1.msra.mxu0 0.0
  %3760 = vmatprep.subr.mxu0 0.0
  %3761 = vmatpush1.msra.mxu0 0.0
  %3762 = vmatprep.subr.mxu0 0.0
  %3763 = vmatpush1.msra.mxu0 0.0
  %3764 = vmatprep.subr.mxu0 0.0
  %3765 = vmatpush1.msra.mxu0 0.0
  %3766 = vmatprep.subr.mxu0 0.0
  %3767 = vmatpush1.msra.mxu0 0.0
  %3768 = vmatprep.subr.mxu0 0.0
  %3769 = vmatpush1.msra.mxu0 0.0
  %3770 = vmatprep.subr.mxu0 0.0
  %3771 = vmatpush1.msra.mxu0 0.0
  %3772 = vmatprep.subr.mxu0 0.0
  %3773 = vmatpush1.msra.mxu0 0.0
  %3774 = vmatprep.subr.mxu0 0.0
  %3775 = vmatpush1.msra.mxu0 0.0
  %3776 = vmatprep.subr.mxu0 0.0
  %3777 = vmatpush1.msra.mxu0 0.0
  %3778 = vmatprep.subr.mxu0 0.0
  %3779 = vmatpush1.msra.mxu0 0.0
  %3780 = vmatprep.subr.mxu0 0.0
  %3781 = vmatpush1.msra.mxu0 0.0
  %3782 = vmatprep.subr.mxu0 0.0
  %3783 = vmatpush1.msra.mxu0 0.0
  %3784 = vmatprep.subr.mxu0 0.0
  %3785 = vmatpush1.msra.mxu0 0.0
  %3786 = vmatprep.subr.mxu0 0.0
  %3787 = vmatpush1.msra.mxu0 0.0
  %3788 = vmatprep.subr.mxu0 0.0
  %3789 = vmatpush1.msra.mxu0 0.0
  %3790 = vmatprep.subr.mxu0 0.0
  %3791 = vmatpush1.msra.mxu0 0.0
  %3792 = vmatprep.subr.mxu0 0.0
  %3793 = vmatpush1.msra.mxu0 0.0
  %3794 = vmatprep.mubr.f32.mxu0 0.0
  %3795 = vmatmul.mubr.f32.gmra.mrb[0].mxu0 %v3506
  %v3796 = vpop.f32.mrb[0].mxu0
  %v3797 = vadd.f32 0.0, %v3796
  %v3798 = vpop.f32.mrb[0].mxu0
  %3799 = vmatprep.mubr.f32.mxu0 0.0
  %3800 = vmatmul.mubr.f32.gmra.mrb[0].mxu0 %v3509
  %v3801 = vpop.f32.mrb[0].mxu0
  %v3802 = vadd.f32 0.0, %v3801
  %v3803 = vpop.f32.mrb[0].mxu0
  %3804 = vmatprep.mubr.f32.mxu0 0.0
  %3805 = vmatmul.mubr.f32.gmra.mrb[0].mxu0 %v3512
  %v3806 = vpop.f32.mrb[0].mxu0
  %v3807 = vadd.f32 0.0, %v3806
  %v3808 = vpop.f32.mrb[0].mxu0
  %3809 = vmatprep.mubr.f32.mxu0 0.0
  %3810 = vmatmul.mubr.f32.gmra.mrb[0].mxu0 %v3515
  %v3811 = vpop.f32.mrb[0].mxu0
  %v3812 = vadd.f32 0.0, %v3811
  %v3813 = vpop.f32.mrb[0].mxu0
  %3814 = vmatprep.mubr.f32.mxu0 0.0
  %3815 = vmatmul.mubr.f32.gmra.mrb[0].mxu0 %v3518
  %v3816 = vpop.f32.mrb[0].mxu0
  %v3817 = vadd.f32 0.0, %v3816
  %v3818 = vpop.f32.mrb[0].mxu0
  %3819 = vmatprep.mubr.f32.mxu0 0.0
  %3820 = vmatmul.mubr.f32.gmra.mrb[0].mxu0 %v3521
  %v3821 = vpop.f32.mrb[0].mxu0
  %v3822 = vadd.f32 0.0, %v3821
  %v3823 = vpop.f32.mrb[0].mxu0
  %3824 = vmatprep.mubr.f32.mxu0 0.0
  %3825 = vmatmul.mubr.f32.gmra.mrb[0].mxu0 %v3524
  %v3826 = vpop.f32.mrb[0].mxu0
  %v3827 = vadd.f32 0.0, %v3826
  %v3828 = vpop.f32.mrb[0].mxu0
  %3829 = vmatprep.mubr.f32.mxu0 0.0
  %3830 = vmatmul.mubr.f32.gmra.mrb[0].mxu0 %v3527
  %v3831 = vpop.f32.mrb[0].mxu0
  %v3832 = vadd.f32 0.0, %v3831
  %v3833 = vpop.f32.mrb[0].mxu0
  %3834 = vmatprep.mubr.f32.mxu0 0.0
  %3835 = vmatmul.mubr.f32.gmra.mrb[0].mxu0 %v3530
  %v3836 = vpop.f32.mrb[0].mxu0
  %v3837 = vadd.f32 0.0, %v3836
  %v3838 = vpop.f32.mrb[0].mxu0
  %3839 = vmatprep.mubr.f32.mxu0 0.0
  %3840 = vmatmul.mubr.f32.gmra.mrb[0].mxu0 %v3533
  %v3841 = vpop.f32.mrb[0].mxu0
  %v3842 = vadd.f32 0.0, %v3841
  %v3843 = vpop.f32.mrb[0].mxu0
  %3844 = vmatprep.mubr.f32.mxu0 0.0
  %3845 = vmatmul.mubr.f32.gmra.mrb[0].mxu0 %v3536
  %v3846 = vpop.f32.mrb[0].mxu0
  %v3847 = vadd.f32 0.0, %v3846
  %v3848 = vpop.f32.mrb[0].mxu0
  %3849 = vmatprep.mubr.f32.mxu0 0.0
  %3850 = vmatmul.mubr.f32.gmra.mrb[0].mxu0 %v3539
  %v3851 = vpop.f32.mrb[0].mxu0
  %v3852 = vadd.f32 0.0, %v3851
  %v3853 = vpop.f32.mrb[0].mxu0
  %3854 = vmatprep.mubr.f32.mxu0 0.0
  %3855 = vmatmul.mubr.f32.gmra.mrb[0].mxu0 %v3542
  %v3856 = vpop.f32.mrb[0].mxu0
  %v3857 = vadd.f32 0.0, %v3856
  %v3858 = vpop.f32.mrb[0].mxu0
  %3859 = vmatprep.mubr.f32.mxu0 0.0
  %3860 = vmatmul.mubr.f32.gmra.mrb[0].mxu0 %v3545
  %v3861 = vpop.f32.mrb[0].mxu0
  %v3862 = vadd.f32 0.0, %v3861
  %v3863 = vpop.f32.mrb[0].mxu0
  %3864 = vmatprep.mubr.f32.mxu0 0.0
  %3865 = vmatmul.mubr.f32.gmra.mrb[0].mxu0 %v3548
  %v3866 = vpop.f32.mrb[0].mxu0
  %v3867 = vadd.f32 0.0, %v3866
  %v3868 = vpop.f32.mrb[0].mxu0
  %3869 = vmatprep.mubr.f32.mxu0 0.0
  %3870 = vmatmul.mubr.f32.gmra.mrb[0].mxu0 %v3551
  %v3871 = vpop.f32.mrb[0].mxu0
  %v3872 = vadd.f32 0.0, %v3871
  %v3873 = vpop.f32.mrb[0].mxu0
  %3874 = vmatprep.mubr.f32.mxu0 0.0
  %3875 = vmatmul.mubr.f32.gmra.mrb[0].mxu0 %v3554
  %v3876 = vpop.f32.mrb[0].mxu0
  %v3877 = vadd.f32 0.0, %v3876
  %v3878 = vpop.f32.mrb[0].mxu0
  %3879 = vmatprep.mubr.f32.mxu0 0.0
  %3880 = vmatmul.mubr.f32.gmra.mrb[0].mxu0 %v3557
  %v3881 = vpop.f32.mrb[0].mxu0
  %v3882 = vadd.f32 0.0, %v3881
  %v3883 = vpop.f32.mrb[0].mxu0
  %3884 = vmatprep.mubr.f32.mxu0 0.0
  %3885 = vmatmul.mubr.f32.gmra.mrb[0].mxu0 %v3560
  %v3886 = vpop.f32.mrb[0].mxu0
  %v3887 = vadd.f32 0.0, %v3886
  %v3888 = vpop.f32.mrb[0].mxu0
  %3889 = vmatprep.mubr.f32.mxu0 0.0
  %3890 = vmatmul.mubr.f32.gmra.mrb[0].mxu0 %v3563
  %v3891 = vpop.f32.mrb[0].mxu0
  %v3892 = vadd.f32 0.0, %v3891
  %v3893 = vpop.f32.mrb[0].mxu0
  %3894 = vmatprep.mubr.f32.mxu0 0.0
  %3895 = vmatmul.mubr.f32.gmra.mrb[0].mxu0 %v3566
  %v3896 = vpop.f32.mrb[0].mxu0
  %v3897 = vadd.f32 0.0, %v3896
  %v3898 = vpop.f32.mrb[0].mxu0
  %3899 = vmatprep.mubr.f32.mxu0 0.0
  %3900 = vmatmul.mubr.f32.gmra.mrb[0].mxu0 %v3569
  %v3901 = vpop.f32.mrb[0].mxu0
  %v3902 = vadd.f32 0.0, %v3901
  %v3903 = vpop.f32.mrb[0].mxu0
  %3904 = vmatprep.mubr.f32.mxu0 0.0
  %3905 = vmatmul.mubr.f32.gmra.mrb[0].mxu0 %v3572
  %v3906 = vpop.f32.mrb[0].mxu0
  %v3907 = vadd.f32 0.0, %v3906
  %v3908 = vpop.f32.mrb[0].mxu0
  %3909 = vmatprep.mubr.f32.mxu0 0.0
  %3910 = vmatmul.mubr.f32.gmra.mrb[0].mxu0 %v3575
  %v3911 = vpop.f32.mrb[0].mxu0
  %v3912 = vadd.f32 0.0, %v3911
  %v3913 = vpop.f32.mrb[0].mxu0
  %3914 = vmatprep.mubr.f32.mxu0 0.0
  %3915 = vmatmul.mubr.f32.gmra.mrb[0].mxu0 %v3578
  %v3916 = vpop.f32.mrb[0].mxu0
  %v3917 = vadd.f32 0.0, %v3916
  %v3918 = vpop.f32.mrb[0].mxu0
  %3919 = vmatprep.mubr.f32.mxu0 0.0
  %3920 = vmatmul.mubr.f32.gmra.mrb[0].mxu0 %v3581
  %v3921 = vpop.f32.mrb[0].mxu0
  %v3922 = vadd.f32 0.0, %v3921
  %v3923 = vpop.f32.mrb[0].mxu0
  %3924 = vmatprep.mubr.f32.mxu0 0.0
  %3925 = vmatmul.mubr.f32.gmra.mrb[0].mxu0 %v3584
  %v3926 = vpop.f32.mrb[0].mxu0
  %v3927 = vadd.f32 0.0, %v3926
  %v3928 = vpop.f32.mrb[0].mxu0
  %3929 = vmatprep.mubr.f32.mxu0 0.0
  %3930 = vmatmul.mubr.f32.gmra.mrb[0].mxu0 %v3587
  %v3931 = vpop.f32.mrb[0].mxu0
  %v3932 = vadd.f32 0.0, %v3931
  %v3933 = vpop.f32.mrb[0].mxu0
  %3934 = vmatprep.mubr.f32.mxu0 0.0
  %3935 = vmatmul.mubr.f32.gmra.mrb[0].mxu0 %v3590
  %v3936 = vpop.f32.mrb[0].mxu0
  %v3937 = vadd.f32 0.0, %v3936
  %v3938 = vpop.f32.mrb[0].mxu0
  %3939 = vmatprep.mubr.f32.mxu0 0.0
  %3940 = vmatmul.mubr.f32.gmra.mrb[0].mxu0 %v3593
  %v3941 = vpop.f32.mrb[0].mxu0
  %v3942 = vadd.f32 0.0, %v3941
  %v3943 = vpop.f32.mrb[0].mxu0
  %3944 = vmatprep.mubr.f32.mxu0 0.0
  %3945 = vmatmul.mubr.f32.gmra.mrb[0].mxu0 %v3596
  %v3946 = vpop.f32.mrb[0].mxu0
  %v3947 = vadd.f32 0.0, %v3946
  %v3948 = vpop.f32.mrb[0].mxu0
  %3949 = vmatprep.mubr.f32.mxu0 0.0
  %3950 = vmatmul.mubr.f32.gmra.mrb[0].mxu0 %v3599
  %v3951 = vpop.f32.mrb[0].mxu0
  %v3952 = vadd.f32 0.0, %v3951
  %v3953 = vpop.f32.mrb[0].mxu0
  %3954 = vmatprep.mubr.f32.mxu0 0.0
  %3955 = vmatmul.mubr.f32.gmra.mrb[0].mxu0 %v3602
  %v3956 = vpop.f32.mrb[0].mxu0
  %v3957 = vadd.f32 0.0, %v3956
  %v3958 = vpop.f32.mrb[0].mxu0
  %3959 = vmatprep.mubr.f32.mxu0 0.0
  %3960 = vmatmul.mubr.f32.gmra.mrb[0].mxu0 %v3605
  %v3961 = vpop.f32.mrb[0].mxu0
  %v3962 = vadd.f32 0.0, %v3961
  %v3963 = vpop.f32.mrb[0].mxu0
  %3964 = vmatprep.mubr.f32.mxu0 0.0
  %3965 = vmatmul.mubr.f32.gmra.mrb[0].mxu0 %v3608
  %v3966 = vpop.f32.mrb[0].mxu0
  %v3967 = vadd.f32 0.0, %v3966
  %v3968 = vpop.f32.mrb[0].mxu0
  %3969 = vmatprep.mubr.f32.mxu0 0.0
  %3970 = vmatmul.mubr.f32.gmra.mrb[0].mxu0 %v3611
  %v3971 = vpop.f32.mrb[0].mxu0
  %v3972 = vadd.f32 0.0, %v3971
  %v3973 = vpop.f32.mrb[0].mxu0
  %3974 = vmatprep.mubr.f32.mxu0 0.0
  %3975 = vmatmul.mubr.f32.gmra.mrb[0].mxu0 %v3614
  %v3976 = vpop.f32.mrb[0].mxu0
  %v3977 = vadd.f32 0.0, %v3976
  %v3978 = vpop.f32.mrb[0].mxu0
  %3979 = vmatprep.mubr.f32.mxu0 0.0
  %3980 = vmatmul.mubr.f32.gmra.mrb[0].mxu0 %v3617
  %v3981 = vpop.f32.mrb[0].mxu0
  %v3982 = vadd.f32 0.0, %v3981
  %v3983 = vpop.f32.mrb[0].mxu0
  %3984 = vmatprep.mubr.f32.mxu0 0.0
  %3985 = vmatmul.mubr.f32.gmra.mrb[0].mxu0 %v3620
  %v3986 = vpop.f32.mrb[0].mxu0
  %v3987 = vadd.f32 0.0, %v3986
  %v3988 = vpop.f32.mrb[0].mxu0
  %3989 = vmatprep.mubr.f32.mxu0 0.0
  %3990 = vmatmul.mubr.f32.gmra.mrb[0].mxu0 %v3623
  %v3991 = vpop.f32.mrb[0].mxu0
  %v3992 = vadd.f32 0.0, %v3991
  %v3993 = vpop.f32.mrb[0].mxu0
  %3994 = vmatprep.mubr.f32.mxu0 0.0
  %3995 = vmatmul.mubr.f32.gmra.mrb[0].mxu0 %v3626
  %v3996 = vpop.f32.mrb[0].mxu0
  %v3997 = vadd.f32 0.0, %v3996
  %v3998 = vpop.f32.mrb[0].mxu0
  %3999 = vmatprep.mubr.f32.mxu0 0.0
  %4000 = vmatmul.mubr.f32.gmra.mrb[0].mxu0 %v3629
  %v4001 = vpop.f32.mrb[0].mxu0
  %v4002 = vadd.f32 0.0, %v4001
  %v4003 = vpop.f32.mrb[0].mxu0
  %4004 = vmatprep.mubr.f32.mxu0 0.0
  %4005 = vmatmul.mubr.f32.gmra.mrb[0].mxu0 %v3632
  %v4006 = vpop.f32.mrb[0].mxu0
  %v4007 = vadd.f32 0.0, %v4006
  %v4008 = vpop.f32.mrb[0].mxu0
  %4009 = vmatprep.mubr.f32.mxu0 0.0
  %4010 = vmatmul.mubr.f32.gmra.mrb[0].mxu0 %v3635
  %v4011 = vpop.f32.mrb[0].mxu0
  %v4012 = vadd.f32 0.0, %v4011
  %v4013 = vpop.f32.mrb[0].mxu0
  %4014 = vmatprep.mubr.f32.mxu0 0.0
  %4015 = vmatmul.mubr.f32.gmra.mrb[0].mxu0 %v3638
  %v4016 = vpop.f32.mrb[0].mxu0
  %v4017 = vadd.f32 0.0, %v4016
  %v4018 = vpop.f32.mrb[0].mxu0
  %4019 = vmatprep.mubr.f32.mxu0 0.0
  %4020 = vmatmul.mubr.f32.gmra.mrb[0].mxu0 %v3641
  %v4021 = vpop.f32.mrb[0].mxu0
  %v4022 = vadd.f32 0.0, %v4021
  %v4023 = vpop.f32.mrb[0].mxu0
  %4024 = vmatprep.mubr.f32.mxu0 0.0
  %4025 = vmatmul.mubr.f32.gmra.mrb[0].mxu0 %v3644
  %v4026 = vpop.f32.mrb[0].mxu0
  %v4027 = vadd.f32 0.0, %v4026
  %v4028 = vpop.f32.mrb[0].mxu0
  %4029 = vmatprep.mubr.f32.mxu0 0.0
  %4030 = vmatmul.mubr.f32.gmra.mrb[0].mxu0 %v3647
  %v4031 = vpop.f32.mrb[0].mxu0
  %v4032 = vadd.f32 0.0, %v4031
  %v4033 = vpop.f32.mrb[0].mxu0
  %4034 = vmatprep.mubr.f32.mxu0 0.0
  %4035 = vmatmul.mubr.f32.gmra.mrb[0].mxu0 %v3650
  %v4036 = vpop.f32.mrb[0].mxu0
  %v4037 = vadd.f32 0.0, %v4036
  %v4038 = vpop.f32.mrb[0].mxu0
  %4039 = vmatprep.mubr.f32.mxu0 0.0
  %4040 = vmatmul.mubr.f32.gmra.mrb[0].mxu0 %v3653
  %v4041 = vpop.f32.mrb[0].mxu0
  %v4042 = vadd.f32 0.0, %v4041
  %v4043 = vpop.f32.mrb[0].mxu0
  %4044 = vmatprep.mubr.f32.mxu0 0.0
  %4045 = vmatmul.mubr.f32.gmra.mrb[0].mxu0 %v3656
  %v4046 = vpop.f32.mrb[0].mxu0
  %v4047 = vadd.f32 0.0, %v4046
  %v4048 = vpop.f32.mrb[0].mxu0
  %4049 = vmatprep.mubr.f32.mxu0 0.0
  %4050 = vmatmul.mubr.f32.gmra.mrb[0].mxu0 %v3659
  %v4051 = vpop.f32.mrb[0].mxu0
  %v4052 = vadd.f32 0.0, %v4051
  %v4053 = vpop.f32.mrb[0].mxu0
  %4054 = vmatprep.mubr.f32.mxu0 0.0
  %4055 = vmatmul.mubr.f32.gmra.mrb[0].mxu0 %v3662
  %v4056 = vpop.f32.mrb[0].mxu0
  %v4057 = vadd.f32 0.0, %v4056
  %v4058 = vpop.f32.mrb[0].mxu0
  %4059 = vmatprep.mubr.f32.mxu0 0.0
  %4060 = vmatmul.mubr.f32.gmra.mrb[0].mxu0 %v3665
  %v4061 = vpop.f32.mrb[0].mxu0
  %v4062 = vadd.f32 0.0, %v4061
  %v4063 = vpop.f32.mrb[0].mxu0
  %4064 = vmatprep.mubr.f32.mxu0 0.0
  %4065 = vmatmul.mubr.f32.gmra.mrb[0].mxu0 %v3668
  %v4066 = vpop.f32.mrb[0].mxu0
  %v4067 = vadd.f32 0.0, %v4066
  %v4068 = vpop.f32.mrb[0].mxu0
  %4069 = vmatprep.mubr.f32.mxu0 0.0
  %4070 = vmatmul.mubr.f32.gmra.mrb[0].mxu0 %v3671
  %v4071 = vpop.f32.mrb[0].mxu0
  %v4072 = vadd.f32 0.0, %v4071
  %v4073 = vpop.f32.mrb[0].mxu0
  %4074 = vmatprep.mubr.f32.mxu0 0.0
  %4075 = vmatmul.mubr.f32.gmra.mrb[0].mxu0 %v3674
  %v4076 = vpop.f32.mrb[0].mxu0
  %v4077 = vadd.f32 0.0, %v4076
  %v4078 = vpop.f32.mrb[0].mxu0
  %4079 = vmatprep.mubr.f32.mxu0 0.0
  %4080 = vmatmul.mubr.f32.gmra.mrb[0].mxu0 %v3677
  %v4081 = vpop.f32.mrb[0].mxu0
  %v4082 = vadd.f32 0.0, %v4081
  %v4083 = vpop.f32.mrb[0].mxu0
  %4084 = vmatprep.mubr.f32.mxu0 0.0
  %4085 = vmatmul.mubr.f32.gmra.mrb[0].mxu0 %v3680
  %v4086 = vpop.f32.mrb[0].mxu0
  %v4087 = vadd.f32 0.0, %v4086
  %v4088 = vpop.f32.mrb[0].mxu0
  %4089 = vmatprep.mubr.f32.mxu0 0.0
  %4090 = vmatmul.mubr.f32.gmra.mrb[0].mxu0 %v3683
  %v4091 = vpop.f32.mrb[0].mxu0
  %v4092 = vadd.f32 0.0, %v4091
  %v4093 = vpop.f32.mrb[0].mxu0
  %4094 = vmatprep.mubr.f32.mxu0 0.0
  %4095 = vmatmul.mubr.f32.gmra.mrb[0].mxu0 %v3686
  %v4096 = vpop.f32.mrb[0].mxu0
  %v4097 = vadd.f32 0.0, %v4096
  %v4098 = vpop.f32.mrb[0].mxu0
  %4099 = vmatprep.mubr.f32.mxu0 0.0
  %4100 = vmatmul.mubr.f32.gmra.mrb[0].mxu0 %v3689
  %v4101 = vpop.f32.mrb[0].mxu0
  %v4102 = vadd.f32 0.0, %v4101
  %v4103 = vpop.f32.mrb[0].mxu0
  %4104 = vmatprep.mubr.f32.mxu0 0.0
  %4105 = vmatmul.mubr.f32.gmra.mrb[0].mxu0 %v3692
  %v4106 = vpop.f32.mrb[0].mxu0
  %v4107 = vadd.f32 0.0, %v4106
  %v4108 = vpop.f32.mrb[0].mxu0
  %4109 = vmatprep.mubr.f32.mxu0 0.0
  %4110 = vmatmul.mubr.f32.gmra.mrb[0].mxu0 %v3695
  %v4111 = vpop.f32.mrb[0].mxu0
  %v4112 = vadd.f32 0.0, %v4111
  %v4113 = vpop.f32.mrb[0].mxu0
  %4114 = vmatprep.mubr.f32.mxu0 0.0
  %4115 = vmatmul.mubr.f32.gmra.mrb[0].mxu0 %v3698
  %v4116 = vpop.f32.mrb[0].mxu0
  %v4117 = vadd.f32 0.0, %v4116
  %v4118 = vpop.f32.mrb[0].mxu0
  %4119 = vmatprep.mubr.f32.mxu0 0.0
  %4120 = vmatmul.mubr.f32.gmra.mrb[0].mxu0 %v3701
  %v4121 = vpop.f32.mrb[0].mxu0
  %v4122 = vadd.f32 0.0, %v4121
  %v4123 = vpop.f32.mrb[0].mxu0
  %4124 = vmatprep.mubr.f32.mxu0 0.0
  %4125 = vmatmul.mubr.f32.gmra.mrb[0].mxu0 %v3704
  %v4126 = vpop.f32.mrb[0].mxu0
  %v4127 = vadd.f32 0.0, %v4126
  %v4128 = vpop.f32.mrb[0].mxu0
  %4129 = vmatprep.mubr.f32.mxu0 0.0
  %4130 = vmatmul.mubr.f32.gmra.mrb[0].mxu0 %v3707
  %v4131 = vpop.f32.mrb[0].mxu0
  %v4132 = vadd.f32 0.0, %v4131
  %v4133 = vpop.f32.mrb[0].mxu0
  %4134 = vmatprep.mubr.f32.mxu0 0.0
  %4135 = vmatmul.mubr.f32.gmra.mrb[0].mxu0 %v3710
  %v4136 = vpop.f32.mrb[0].mxu0
  %v4137 = vadd.f32 0.0, %v4136
  %v4138 = vpop.f32.mrb[0].mxu0
  %4139 = vmatprep.mubr.f32.mxu0 0.0
  %4140 = vmatmul.mubr.f32.gmra.mrb[0].mxu0 %v3713
  %v4141 = vpop.f32.mrb[0].mxu0
  %v4142 = vadd.f32 0.0, %v4141
  %v4143 = vpop.f32.mrb[0].mxu0
  %4144 = vmatprep.mubr.f32.mxu0 0.0
  %4145 = vmatmul.mubr.f32.gmra.mrb[0].mxu0 %v3716
  %v4146 = vpop.f32.mrb[0].mxu0
  %v4147 = vadd.f32 0.0, %v4146
  %v4148 = vpop.f32.mrb[0].mxu0
  %4149 = vmatprep.mubr.f32.mxu0 0.0
  %4150 = vmatmul.mubr.f32.gmra.mrb[0].mxu0 %v3719
  %v4151 = vpop.f32.mrb[0].mxu0
  %v4152 = vadd.f32 0.0, %v4151
  %v4153 = vpop.f32.mrb[0].mxu0
  %4154 = vmatprep.mubr.f32.mxu0 0.0
  %4155 = vmatmul.mubr.f32.gmra.mrb[0].mxu0 %v3722
  %v4156 = vpop.f32.mrb[0].mxu0
  %v4157 = vadd.f32 0.0, %v4156
  %v4158 = vpop.f32.mrb[0].mxu0
  %4159 = vmatprep.mubr.f32.mxu0 0.0
  %4160 = vmatmul.mubr.f32.gmra.mrb[0].mxu0 %v3725
  %v4161 = vpop.f32.mrb[0].mxu0
  %v4162 = vadd.f32 0.0, %v4161
  %v4163 = vpop.f32.mrb[0].mxu0
  %4164 = vmatprep.mubr.f32.mxu0 0.0
  %4165 = vmatmul.mubr.f32.gmra.mrb[0].mxu0 %v3728
  %v4166 = vpop.f32.mrb[0].mxu0
  %v4167 = vadd.f32 0.0, %v4166
  %v4168 = vpop.f32.mrb[0].mxu0
  %4169 = vdwg.mxu0
  %v4170 = vld [vmem:[%s2 + $0x48] sm:$0x1f]
  %4172 = vrot.lane.b32.xlu0 %v4170, 113
  %v4173 = vpop.permute.xlu0 %4172
  %v4175 = vsel %vm1748, %v3872, 0
  %v4178 = vsel %vm1748, %v3877, 0
  %v4181 = vsel %vm1748, %v3882, 0
  %v4184 = vsel %vm1748, %v3887, 0
  %v4187 = vsel %vm1748, %v3892, 0
  %v4190 = vsel %vm1748, %v3897, 0
  %v4193 = vsel %vm1748, %v3902, 0
  %v4196 = vsel %vm1748, %v3907, 0
  %v4199 = vsel %vm1748, %v3912, 0
  %v4202 = vsel %vm1748, %v3917, 0
  %v4205 = vsel %vm1748, %v3922, 0
  %v4208 = vsel %vm1748, %v3927, 0
  %v4211 = vsel %vm1748, %v3932, 0
  %v4214 = vsel %vm1748, %v3937, 0
  %v4217 = vsel %vm1748, %v3942, 0
  %v4219 = vsel %vm1779, %v4173, 0
  %4221 = vmatprep.subr.mxu0 0.0
  %4222 = vmatpush1.msra.mxu0 %v4219
  %4223 = vmatprep.subr.mxu0 0.0
  %4224 = vmatpush1.msra.mxu0 0.0
  %4225 = vmatprep.subr.mxu0 0.0
  %4226 = vmatpush1.msra.mxu0 0.0
  %4227 = vmatprep.subr.mxu0 0.0
  %4228 = vmatpush1.msra.mxu0 0.0
  %4229 = vmatprep.subr.mxu0 0.0
  %4230 = vmatpush1.msra.mxu0 0.0
  %4231 = vmatprep.subr.mxu0 0.0
  %4232 = vmatpush1.msra.mxu0 0.0
  %4233 = vmatprep.subr.mxu0 0.0
  %4234 = vmatpush1.msra.mxu0 0.0
  %4235 = vmatprep.subr.mxu0 0.0
  %4236 = vmatpush1.msra.mxu0 0.0
  %4237 = vmatprep.subr.mxu0 0.0
  %4238 = vmatpush1.msra.mxu0 0.0
  %4239 = vmatprep.subr.mxu0 0.0
  %4240 = vmatpush1.msra.mxu0 0.0
  %4241 = vmatprep.subr.mxu0 0.0
  %4242 = vmatpush1.msra.mxu0 0.0
  %4243 = vmatprep.subr.mxu0 0.0
  %4244 = vmatpush1.msra.mxu0 0.0
  %4245 = vmatprep.subr.mxu0 0.0
  %4246 = vmatpush1.msra.mxu0 0.0
  %4247 = vmatprep.subr.mxu0 0.0
  %4248 = vmatpush1.msra.mxu0 0.0
  %4249 = vmatprep.subr.mxu0 0.0
  %4250 = vmatpush1.msra.mxu0 0.0
  %4251 = vmatprep.subr.mxu0 0.0
  %4252 = vmatpush1.msra.mxu0 0.0
  %4253 = vmatprep.subr.mxu0 0.0
  %4254 = vmatpush1.msra.mxu0 0.0
  %4255 = vmatprep.subr.mxu0 0.0
  %4256 = vmatpush1.msra.mxu0 0.0
  %4257 = vmatprep.subr.mxu0 0.0
  %4258 = vmatpush1.msra.mxu0 0.0
  %4259 = vmatprep.subr.mxu0 0.0
  %4260 = vmatpush1.msra.mxu0 0.0
  %4261 = vmatprep.subr.mxu0 0.0
  %4262 = vmatpush1.msra.mxu0 0.0
  %4263 = vmatprep.subr.mxu0 0.0
  %4264 = vmatpush1.msra.mxu0 0.0
  %4265 = vmatprep.subr.mxu0 0.0
  %4266 = vmatpush1.msra.mxu0 0.0
  %4267 = vmatprep.subr.mxu0 0.0
  %4268 = vmatpush1.msra.mxu0 0.0
  %4269 = vmatprep.subr.mxu0 0.0
  %4270 = vmatpush1.msra.mxu0 0.0
  %4271 = vmatprep.subr.mxu0 0.0
  %4272 = vmatpush1.msra.mxu0 0.0
  %4273 = vmatprep.subr.mxu0 0.0
  %4274 = vmatpush1.msra.mxu0 0.0
  %4275 = vmatprep.subr.mxu0 0.0
  %4276 = vmatpush1.msra.mxu0 0.0
  %4277 = vmatprep.subr.mxu0 0.0
  %4278 = vmatpush1.msra.mxu0 0.0
  %4279 = vmatprep.subr.mxu0 0.0
  %4280 = vmatpush1.msra.mxu0 0.0
  %4281 = vmatprep.subr.mxu0 0.0
  %4282 = vmatpush1.msra.mxu0 0.0
  %4283 = vmatprep.subr.mxu0 0.0
  %4284 = vmatpush1.msra.mxu0 0.0
  %4285 = vmatprep.mubr.f32.mxu0 0.0
  %4286 = vmatmul.mubr.f32.gmra.mrb[0].mxu0 %v4175
  %v4287 = vpop.f32.mrb[0].mxu0
  %v4288 = vadd.f32 0.0, %v4287
  %v4289 = vpop.f32.mrb[0].mxu0
  %4290 = vmatprep.mubr.f32.mxu0 0.0
  %4291 = vmatmul.mubr.f32.gmra.mrb[0].mxu0 %v4178
  %v4292 = vpop.f32.mrb[0].mxu0
  %v4293 = vadd.f32 0.0, %v4292
  %v4294 = vpop.f32.mrb[0].mxu0
  %4295 = vmatprep.mubr.f32.mxu0 0.0
  %4296 = vmatmul.mubr.f32.gmra.mrb[0].mxu0 %v4181
  %v4297 = vpop.f32.mrb[0].mxu0
  %v4298 = vadd.f32 0.0, %v4297
  %v4299 = vpop.f32.mrb[0].mxu0
  %4300 = vmatprep.mubr.f32.mxu0 0.0
  %4301 = vmatmul.mubr.f32.gmra.mrb[0].mxu0 %v4184
  %v4302 = vpop.f32.mrb[0].mxu0
  %v4303 = vadd.f32 0.0, %v4302
  %v4304 = vpop.f32.mrb[0].mxu0
  %4305 = vmatprep.mubr.f32.mxu0 0.0
  %4306 = vmatmul.mubr.f32.gmra.mrb[0].mxu0 %v4187
  %v4307 = vpop.f32.mrb[0].mxu0
  %v4308 = vadd.f32 0.0, %v4307
  %v4309 = vpop.f32.mrb[0].mxu0
  %4310 = vmatprep.mubr.f32.mxu0 0.0
  %4311 = vmatmul.mubr.f32.gmra.mrb[0].mxu0 %v4190
  %v4312 = vpop.f32.mrb[0].mxu0
  %v4313 = vadd.f32 0.0, %v4312
  %v4314 = vpop.f32.mrb[0].mxu0
  %4315 = vmatprep.mubr.f32.mxu0 0.0
  %4316 = vmatmul.mubr.f32.gmra.mrb[0].mxu0 %v4193
  %v4317 = vpop.f32.mrb[0].mxu0
  %v4318 = vadd.f32 0.0, %v4317
  %v4319 = vpop.f32.mrb[0].mxu0
  %4320 = vmatprep.mubr.f32.mxu0 0.0
  %4321 = vmatmul.mubr.f32.gmra.mrb[0].mxu0 %v4196
  %v4322 = vpop.f32.mrb[0].mxu0
  %v4323 = vadd.f32 0.0, %v4322
  %v4324 = vpop.f32.mrb[0].mxu0
  %4325 = vmatprep.mubr.f32.mxu0 0.0
  %4326 = vmatmul.mubr.f32.gmra.mrb[0].mxu0 %v4199
  %v4327 = vpop.f32.mrb[0].mxu0
  %v4328 = vadd.f32 0.0, %v4327
  %v4329 = vpop.f32.mrb[0].mxu0
  %4330 = vmatprep.mubr.f32.mxu0 0.0
  %4331 = vmatmul.mubr.f32.gmra.mrb[0].mxu0 %v4202
  %v4332 = vpop.f32.mrb[0].mxu0
  %v4333 = vadd.f32 0.0, %v4332
  %v4334 = vpop.f32.mrb[0].mxu0
  %4335 = vmatprep.mubr.f32.mxu0 0.0
  %4336 = vmatmul.mubr.f32.gmra.mrb[0].mxu0 %v4205
  %v4337 = vpop.f32.mrb[0].mxu0
  %v4338 = vadd.f32 0.0, %v4337
  %v4339 = vpop.f32.mrb[0].mxu0
  %4340 = vmatprep.mubr.f32.mxu0 0.0
  %4341 = vmatmul.mubr.f32.gmra.mrb[0].mxu0 %v4208
  %v4342 = vpop.f32.mrb[0].mxu0
  %v4343 = vadd.f32 0.0, %v4342
  %v4344 = vpop.f32.mrb[0].mxu0
  %4345 = vmatprep.mubr.f32.mxu0 0.0
  %4346 = vmatmul.mubr.f32.gmra.mrb[0].mxu0 %v4211
  %v4347 = vpop.f32.mrb[0].mxu0
  %v4348 = vadd.f32 0.0, %v4347
  %v4349 = vpop.f32.mrb[0].mxu0
  %4350 = vmatprep.mubr.f32.mxu0 0.0
  %4351 = vmatmul.mubr.f32.gmra.mrb[0].mxu0 %v4214
  %v4352 = vpop.f32.mrb[0].mxu0
  %v4353 = vadd.f32 0.0, %v4352
  %v4354 = vpop.f32.mrb[0].mxu0
  %4355 = vmatprep.mubr.f32.mxu0 0.0
  %4356 = vmatmul.mubr.f32.gmra.mrb[0].mxu0 %v4217
  %v4357 = vpop.f32.mrb[0].mxu0
  %v4358 = vadd.f32 0.0, %v4357
  %v4359 = vpop.f32.mrb[0].mxu0
  %4360 = vdwg.mxu0
  %v4362 = vsel %vm1748, %v3797, 0
  %v4365 = vsel %vm1748, %v3802, 0
  %v4368 = vsel %vm1748, %v3807, 0
  %v4371 = vsel %vm1748, %v3812, 0
  %v4374 = vsel %vm1748, %v3817, 0
  %v4377 = vsel %vm1748, %v3822, 0
  %v4380 = vsel %vm1748, %v3827, 0
  %v4383 = vsel %vm1748, %v3832, 0
  %v4386 = vsel %vm1748, %v3837, 0
  %v4389 = vsel %vm1748, %v3842, 0
  %v4392 = vsel %vm1748, %v3847, 0
  %v4395 = vsel %vm1748, %v3852, 0
  %v4398 = vsel %vm1748, %v3857, 0
  %v4401 = vsel %vm1748, %v3862, 0
  %v4404 = vsel %vm1748, %v3867, 0
  %v4406 = vsel %vm1779, %v4170, 0
  %4408 = vmatprep.subr.mxu0 0.0
  %4409 = vmatpush1.msra.mxu0 %v4406
  %4410 = vmatprep.subr.mxu0 0.0
  %4411 = vmatpush1.msra.mxu0 0.0
  %4412 = vmatprep.subr.mxu0 0.0
  %4413 = vmatpush1.msra.mxu0 0.0
  %4414 = vmatprep.subr.mxu0 0.0
  %4415 = vmatpush1.msra.mxu0 0.0
  %4416 = vmatprep.subr.mxu0 0.0
  %4417 = vmatpush1.msra.mxu0 0.0
  %4418 = vmatprep.subr.mxu0 0.0
  %4419 = vmatpush1.msra.mxu0 0.0
  %4420 = vmatprep.subr.mxu0 0.0
  %4421 = vmatpush1.msra.mxu0 0.0
  %4422 = vmatprep.subr.mxu0 0.0
  %4423 = vmatpush1.msra.mxu0 0.0
  %4424 = vmatprep.subr.mxu0 0.0
  %4425 = vmatpush1.msra.mxu0 0.0
  %4426 = vmatprep.subr.mxu0 0.0
  %4427 = vmatpush1.msra.mxu0 0.0
  %4428 = vmatprep.subr.mxu0 0.0
  %4429 = vmatpush1.msra.mxu0 0.0
  %4430 = vmatprep.subr.mxu0 0.0
  %4431 = vmatpush1.msra.mxu0 0.0
  %4432 = vmatprep.subr.mxu0 0.0
  %4433 = vmatpush1.msra.mxu0 0.0
  %4434 = vmatprep.subr.mxu0 0.0
  %4435 = vmatpush1.msra.mxu0 0.0
  %4436 = vmatprep.subr.mxu0 0.0
  %4437 = vmatpush1.msra.mxu0 0.0
  %4438 = vmatprep.subr.mxu0 0.0
  %4439 = vmatpush1.msra.mxu0 0.0
  %4440 = vmatprep.subr.mxu0 0.0
  %4441 = vmatpush1.msra.mxu0 0.0
  %4442 = vmatprep.subr.mxu0 0.0
  %4443 = vmatpush1.msra.mxu0 0.0
  %4444 = vmatprep.subr.mxu0 0.0
  %4445 = vmatpush1.msra.mxu0 0.0
  %4446 = vmatprep.subr.mxu0 0.0
  %4447 = vmatpush1.msra.mxu0 0.0
  %4448 = vmatprep.subr.mxu0 0.0
  %4449 = vmatpush1.msra.mxu0 0.0
  %4450 = vmatprep.subr.mxu0 0.0
  %4451 = vmatpush1.msra.mxu0 0.0
  %4452 = vmatprep.subr.mxu0 0.0
  %4453 = vmatpush1.msra.mxu0 0.0
  %4454 = vmatprep.subr.mxu0 0.0
  %4455 = vmatpush1.msra.mxu0 0.0
  %4456 = vmatprep.subr.mxu0 0.0
  %4457 = vmatpush1.msra.mxu0 0.0
  %4458 = vmatprep.subr.mxu0 0.0
  %4459 = vmatpush1.msra.mxu0 0.0
  %4460 = vmatprep.subr.mxu0 0.0
  %4461 = vmatpush1.msra.mxu0 0.0
  %4462 = vmatprep.subr.mxu0 0.0
  %4463 = vmatpush1.msra.mxu0 0.0
  %4464 = vmatprep.subr.mxu0 0.0
  %4465 = vmatpush1.msra.mxu0 0.0
  %4466 = vmatprep.subr.mxu0 0.0
  %4467 = vmatpush1.msra.mxu0 0.0
  %4468 = vmatprep.subr.mxu0 0.0
  %4469 = vmatpush1.msra.mxu0 0.0
  %4470 = vmatprep.subr.mxu0 0.0
  %4471 = vmatpush1.msra.mxu0 0.0
  %4472 = vmatprep.mubr.f32.mxu0 0.0
  %4473 = vmatmul.mubr.f32.gmra.mrb[0].mxu0 %v4362
  %v4474 = vpop.f32.mrb[0].mxu0
  %v4475 = vadd.f32 %v4288, %v4474
  %v4476 = vpop.f32.mrb[0].mxu0
  %4477 = vmatprep.mubr.f32.mxu0 0.0
  %4478 = vmatmul.mubr.f32.gmra.mrb[0].mxu0 %v4365
  %v4479 = vpop.f32.mrb[0].mxu0
  %v4480 = vadd.f32 %v4293, %v4479
  %v4481 = vpop.f32.mrb[0].mxu0
  %4482 = vmatprep.mubr.f32.mxu0 0.0
  %4483 = vmatmul.mubr.f32.gmra.mrb[0].mxu0 %v4368
  %v4484 = vpop.f32.mrb[0].mxu0
  %v4485 = vadd.f32 %v4298, %v4484
  %v4486 = vpop.f32.mrb[0].mxu0
  %4487 = vmatprep.mubr.f32.mxu0 0.0
  %4488 = vmatmul.mubr.f32.gmra.mrb[0].mxu0 %v4371
  %v4489 = vpop.f32.mrb[0].mxu0
  %v4490 = vadd.f32 %v4303, %v4489
  %v4491 = vpop.f32.mrb[0].mxu0
  %4492 = vmatprep.mubr.f32.mxu0 0.0
  %4493 = vmatmul.mubr.f32.gmra.mrb[0].mxu0 %v4374
  %v4494 = vpop.f32.mrb[0].mxu0
  %v4495 = vadd.f32 %v4308, %v4494
  %v4496 = vpop.f32.mrb[0].mxu0
  %4497 = vmatprep.mubr.f32.mxu0 0.0
  %4498 = vmatmul.mubr.f32.gmra.mrb[0].mxu0 %v4377
  %v4499 = vpop.f32.mrb[0].mxu0
  %v4500 = vadd.f32 %v4313, %v4499
  %v4501 = vpop.f32.mrb[0].mxu0
  %4502 = vmatprep.mubr.f32.mxu0 0.0
  %4503 = vmatmul.mubr.f32.gmra.mrb[0].mxu0 %v4380
  %v4504 = vpop.f32.mrb[0].mxu0
  %v4505 = vadd.f32 %v4318, %v4504
  %v4506 = vpop.f32.mrb[0].mxu0
  %4507 = vmatprep.mubr.f32.mxu0 0.0
  %4508 = vmatmul.mubr.f32.gmra.mrb[0].mxu0 %v4383
  %v4509 = vpop.f32.mrb[0].mxu0
  %v4510 = vadd.f32 %v4323, %v4509
  %v4511 = vpop.f32.mrb[0].mxu0
  %4512 = vmatprep.mubr.f32.mxu0 0.0
  %4513 = vmatmul.mubr.f32.gmra.mrb[0].mxu0 %v4386
  %v4514 = vpop.f32.mrb[0].mxu0
  %v4515 = vadd.f32 %v4328, %v4514
  %v4516 = vpop.f32.mrb[0].mxu0
  %4517 = vmatprep.mubr.f32.mxu0 0.0
  %4518 = vmatmul.mubr.f32.gmra.mrb[0].mxu0 %v4389
  %v4519 = vpop.f32.mrb[0].mxu0
  %v4520 = vadd.f32 %v4333, %v4519
  %v4521 = vpop.f32.mrb[0].mxu0
  %4522 = vmatprep.mubr.f32.mxu0 0.0
  %4523 = vmatmul.mubr.f32.gmra.mrb[0].mxu0 %v4392
  %v4524 = vpop.f32.mrb[0].mxu0
  %v4525 = vadd.f32 %v4338, %v4524
  %v4526 = vpop.f32.mrb[0].mxu0
  %4527 = vmatprep.mubr.f32.mxu0 0.0
  %4528 = vmatmul.mubr.f32.gmra.mrb[0].mxu0 %v4395
  %v4529 = vpop.f32.mrb[0].mxu0
  %v4530 = vadd.f32 %v4343, %v4529
  %v4531 = vpop.f32.mrb[0].mxu0
  %4532 = vmatprep.mubr.f32.mxu0 0.0
  %4533 = vmatmul.mubr.f32.gmra.mrb[0].mxu0 %v4398
  %v4534 = vpop.f32.mrb[0].mxu0
  %v4535 = vadd.f32 %v4348, %v4534
  %v4536 = vpop.f32.mrb[0].mxu0
  %4537 = vmatprep.mubr.f32.mxu0 0.0
  %4538 = vmatmul.mubr.f32.gmra.mrb[0].mxu0 %v4401
  %v4539 = vpop.f32.mrb[0].mxu0
  %v4540 = vadd.f32 %v4353, %v4539
  %v4541 = vpop.f32.mrb[0].mxu0
  %4542 = vmatprep.mubr.f32.mxu0 0.0
  %4543 = vmatmul.mubr.f32.gmra.mrb[0].mxu0 %v4404
  %v4544 = vpop.f32.mrb[0].mxu0
  %v4545 = vadd.f32 %v4358, %v4544
  %v4546 = vpop.f32.mrb[0].mxu0
  %4547 = vdwg.mxu0
  %4548 = vrot.lane.b32.xlu0 %v4170, 98
  %v4549 = vpop.permute.xlu0 %4548
  %v4551 = vsel %vm1748, %v3947, 0
  %v4554 = vsel %vm1748, %v3952, 0
  %v4557 = vsel %vm1748, %v3957, 0
  %v4560 = vsel %vm1748, %v3962, 0
  %v4563 = vsel %vm1748, %v3967, 0
  %v4566 = vsel %vm1748, %v3972, 0
  %v4569 = vsel %vm1748, %v3977, 0
  %v4572 = vsel %vm1748, %v3982, 0
  %v4575 = vsel %vm1748, %v3987, 0
  %v4578 = vsel %vm1748, %v3992, 0
  %v4581 = vsel %vm1748, %v3997, 0
  %v4584 = vsel %vm1748, %v4002, 0
  %v4587 = vsel %vm1748, %v4007, 0
  %v4590 = vsel %vm1748, %v4012, 0
  %v4593 = vsel %vm1748, %v4017, 0
  %v4595 = vsel %vm1779, %v4549, 0
  %4597 = vmatprep.subr.mxu0 0.0
  %4598 = vmatpush1.msra.mxu0 %v4595
  %4599 = vmatprep.subr.mxu0 0.0
  %4600 = vmatpush1.msra.mxu0 0.0
  %4601 = vmatprep.subr.mxu0 0.0
  %4602 = vmatpush1.msra.mxu0 0.0
  %4603 = vmatprep.subr.mxu0 0.0
  %4604 = vmatpush1.msra.mxu0 0.0
  %4605 = vmatprep.subr.mxu0 0.0
  %4606 = vmatpush1.msra.mxu0 0.0
  %4607 = vmatprep.subr.mxu0 0.0
  %4608 = vmatpush1.msra.mxu0 0.0
  %4609 = vmatprep.subr.mxu0 0.0
  %4610 = vmatpush1.msra.mxu0 0.0
  %4611 = vmatprep.subr.mxu0 0.0
  %4612 = vmatpush1.msra.mxu0 0.0
  %4613 = vmatprep.subr.mxu0 0.0
  %4614 = vmatpush1.msra.mxu0 0.0
  %4615 = vmatprep.subr.mxu0 0.0
  %4616 = vmatpush1.msra.mxu0 0.0
  %4617 = vmatprep.subr.mxu0 0.0
  %4618 = vmatpush1.msra.mxu0 0.0
  %4619 = vmatprep.subr.mxu0 0.0
  %4620 = vmatpush1.msra.mxu0 0.0
  %4621 = vmatprep.subr.mxu0 0.0
  %4622 = vmatpush1.msra.mxu0 0.0
  %4623 = vmatprep.subr.mxu0 0.0
  %4624 = vmatpush1.msra.mxu0 0.0
  %4625 = vmatprep.subr.mxu0 0.0
  %4626 = vmatpush1.msra.mxu0 0.0
  %4627 = vmatprep.subr.mxu0 0.0
  %4628 = vmatpush1.msra.mxu0 0.0
  %4629 = vmatprep.subr.mxu0 0.0
  %4630 = vmatpush1.msra.mxu0 0.0
  %4631 = vmatprep.subr.mxu0 0.0
  %4632 = vmatpush1.msra.mxu0 0.0
  %4633 = vmatprep.subr.mxu0 0.0
  %4634 = vmatpush1.msra.mxu0 0.0
  %4635 = vmatprep.subr.mxu0 0.0
  %4636 = vmatpush1.msra.mxu0 0.0
  %4637 = vmatprep.subr.mxu0 0.0
  %4638 = vmatpush1.msra.mxu0 0.0
  %4639 = vmatprep.subr.mxu0 0.0
  %4640 = vmatpush1.msra.mxu0 0.0
  %4641 = vmatprep.subr.mxu0 0.0
  %4642 = vmatpush1.msra.mxu0 0.0
  %4643 = vmatprep.subr.mxu0 0.0
  %4644 = vmatpush1.msra.mxu0 0.0
  %4645 = vmatprep.subr.mxu0 0.0
  %4646 = vmatpush1.msra.mxu0 0.0
  %4647 = vmatprep.subr.mxu0 0.0
  %4648 = vmatpush1.msra.mxu0 0.0
  %4649 = vmatprep.subr.mxu0 0.0
  %4650 = vmatpush1.msra.mxu0 0.0
  %4651 = vmatprep.subr.mxu0 0.0
  %4652 = vmatpush1.msra.mxu0 0.0
  %4653 = vmatprep.subr.mxu0 0.0
  %4654 = vmatpush1.msra.mxu0 0.0
  %4655 = vmatprep.subr.mxu0 0.0
  %4656 = vmatpush1.msra.mxu0 0.0
  %4657 = vmatprep.subr.mxu0 0.0
  %4658 = vmatpush1.msra.mxu0 0.0
  %4659 = vmatprep.subr.mxu0 0.0
  %4660 = vmatpush1.msra.mxu0 0.0
  %4661 = vmatprep.mubr.f32.mxu0 0.0
  %4662 = vmatmul.mubr.f32.gmra.mrb[0].mxu0 %v4551
  %v4663 = vpop.f32.mrb[0].mxu0
  %v4664 = vadd.f32 0.0, %v4663
  %v4665 = vpop.f32.mrb[0].mxu0
  %4666 = vmatprep.mubr.f32.mxu0 0.0
  %4667 = vmatmul.mubr.f32.gmra.mrb[0].mxu0 %v4554
  %v4668 = vpop.f32.mrb[0].mxu0
  %v4669 = vadd.f32 0.0, %v4668
  %v4670 = vpop.f32.mrb[0].mxu0
  %4671 = vmatprep.mubr.f32.mxu0 0.0
  %4672 = vmatmul.mubr.f32.gmra.mrb[0].mxu0 %v4557
  %v4673 = vpop.f32.mrb[0].mxu0
  %v4674 = vadd.f32 0.0, %v4673
  %v4675 = vpop.f32.mrb[0].mxu0
  %4676 = vmatprep.mubr.f32.mxu0 0.0
  %4677 = vmatmul.mubr.f32.gmra.mrb[0].mxu0 %v4560
  %v4678 = vpop.f32.mrb[0].mxu0
  %v4679 = vadd.f32 0.0, %v4678
  %v4680 = vpop.f32.mrb[0].mxu0
  %4681 = vmatprep.mubr.f32.mxu0 0.0
  %4682 = vmatmul.mubr.f32.gmra.mrb[0].mxu0 %v4563
  %v4683 = vpop.f32.mrb[0].mxu0
  %v4684 = vadd.f32 0.0, %v4683
  %v4685 = vpop.f32.mrb[0].mxu0
  %4686 = vmatprep.mubr.f32.mxu0 0.0
  %4687 = vmatmul.mubr.f32.gmra.mrb[0].mxu0 %v4566
  %v4688 = vpop.f32.mrb[0].mxu0
  %v4689 = vadd.f32 0.0, %v4688
  %v4690 = vpop.f32.mrb[0].mxu0
  %4691 = vmatprep.mubr.f32.mxu0 0.0
  %4692 = vmatmul.mubr.f32.gmra.mrb[0].mxu0 %v4569
  %v4693 = vpop.f32.mrb[0].mxu0
  %v4694 = vadd.f32 0.0, %v4693
  %v4695 = vpop.f32.mrb[0].mxu0
  %4696 = vmatprep.mubr.f32.mxu0 0.0
  %4697 = vmatmul.mubr.f32.gmra.mrb[0].mxu0 %v4572
  %v4698 = vpop.f32.mrb[0].mxu0
  %v4699 = vadd.f32 0.0, %v4698
  %v4700 = vpop.f32.mrb[0].mxu0
  %4701 = vmatprep.mubr.f32.mxu0 0.0
  %4702 = vmatmul.mubr.f32.gmra.mrb[0].mxu0 %v4575
  %v4703 = vpop.f32.mrb[0].mxu0
  %v4704 = vadd.f32 0.0, %v4703
  %v4705 = vpop.f32.mrb[0].mxu0
  %4706 = vmatprep.mubr.f32.mxu0 0.0
  %4707 = vmatmul.mubr.f32.gmra.mrb[0].mxu0 %v4578
  %v4708 = vpop.f32.mrb[0].mxu0
  %v4709 = vadd.f32 0.0, %v4708
  %v4710 = vpop.f32.mrb[0].mxu0
  %4711 = vmatprep.mubr.f32.mxu0 0.0
  %4712 = vmatmul.mubr.f32.gmra.mrb[0].mxu0 %v4581
  %v4713 = vpop.f32.mrb[0].mxu0
  %v4714 = vadd.f32 0.0, %v4713
  %v4715 = vpop.f32.mrb[0].mxu0
  %4716 = vmatprep.mubr.f32.mxu0 0.0
  %4717 = vmatmul.mubr.f32.gmra.mrb[0].mxu0 %v4584
  %v4718 = vpop.f32.mrb[0].mxu0
  %v4719 = vadd.f32 0.0, %v4718
  %v4720 = vpop.f32.mrb[0].mxu0
  %4721 = vmatprep.mubr.f32.mxu0 0.0
  %4722 = vmatmul.mubr.f32.gmra.mrb[0].mxu0 %v4587
  %v4723 = vpop.f32.mrb[0].mxu0
  %v4724 = vadd.f32 0.0, %v4723
  %v4725 = vpop.f32.mrb[0].mxu0
  %4726 = vmatprep.mubr.f32.mxu0 0.0
  %4727 = vmatmul.mubr.f32.gmra.mrb[0].mxu0 %v4590
  %v4728 = vpop.f32.mrb[0].mxu0
  %v4729 = vadd.f32 0.0, %v4728
  %v4730 = vpop.f32.mrb[0].mxu0
  %4731 = vmatprep.mubr.f32.mxu0 0.0
  %4732 = vmatmul.mubr.f32.gmra.mrb[0].mxu0 %v4593
  %v4733 = vpop.f32.mrb[0].mxu0
  %v4734 = vadd.f32 0.0, %v4733
  %v4735 = vpop.f32.mrb[0].mxu0
  %4736 = vdwg.mxu0
  %v4737 = vadd.f32 %v4475, %v4664
  %v4738 = vadd.f32 %v4480, %v4669
  %v4739 = vadd.f32 %v4485, %v4674
  %v4740 = vadd.f32 %v4490, %v4679
  %v4741 = vadd.f32 %v4495, %v4684
  %v4742 = vadd.f32 %v4500, %v4689
  %v4743 = vadd.f32 %v4505, %v4694
  %v4744 = vadd.f32 %v4510, %v4699
  %v4745 = vadd.f32 %v4515, %v4704
  %v4746 = vadd.f32 %v4520, %v4709
  %v4747 = vadd.f32 %v4525, %v4714
  %v4748 = vadd.f32 %v4530, %v4719
  %v4749 = vadd.f32 %v4535, %v4724
  %v4750 = vadd.f32 %v4540, %v4729
  %v4751 = vadd.f32 %v4545, %v4734
  %4752 = vrot.lane.b32.xlu0 %v4170, 83
  %v4753 = vpop.permute.xlu0 %4752
  %v4755 = vsel %vm1748, %v4022, 0
  %v4758 = vsel %vm1748, %v4027, 0
  %v4761 = vsel %vm1748, %v4032, 0
  %v4764 = vsel %vm1748, %v4037, 0
  %v4767 = vsel %vm1748, %v4042, 0
  %v4770 = vsel %vm1748, %v4047, 0
  %v4773 = vsel %vm1748, %v4052, 0
  %v4776 = vsel %vm1748, %v4057, 0
  %v4779 = vsel %vm1748, %v4062, 0
  %v4782 = vsel %vm1748, %v4067, 0
  %v4785 = vsel %vm1748, %v4072, 0
  %v4788 = vsel %vm1748, %v4077, 0
  %v4791 = vsel %vm1748, %v4082, 0
  %v4794 = vsel %vm1748, %v4087, 0
  %v4797 = vsel %vm1748, %v4092, 0
  %v4799 = vsel %vm1779, %v4753, 0
  %4801 = vmatprep.subr.mxu0 0.0
  %4802 = vmatpush1.msra.mxu0 %v4799
  %4803 = vmatprep.subr.mxu0 0.0
  %4804 = vmatpush1.msra.mxu0 0.0
  %4805 = vmatprep.subr.mxu0 0.0
  %4806 = vmatpush1.msra.mxu0 0.0
  %4807 = vmatprep.subr.mxu0 0.0
  %4808 = vmatpush1.msra.mxu0 0.0
  %4809 = vmatprep.subr.mxu0 0.0
  %4810 = vmatpush1.msra.mxu0 0.0
  %4811 = vmatprep.subr.mxu0 0.0
  %4812 = vmatpush1.msra.mxu0 0.0
  %4813 = vmatprep.subr.mxu0 0.0
  %4814 = vmatpush1.msra.mxu0 0.0
  %4815 = vmatprep.subr.mxu0 0.0
  %4816 = vmatpush1.msra.mxu0 0.0
  %4817 = vmatprep.subr.mxu0 0.0
  %4818 = vmatpush1.msra.mxu0 0.0
  %4819 = vmatprep.subr.mxu0 0.0
  %4820 = vmatpush1.msra.mxu0 0.0
  %4821 = vmatprep.subr.mxu0 0.0
  %4822 = vmatpush1.msra.mxu0 0.0
  %4823 = vmatprep.subr.mxu0 0.0
  %4824 = vmatpush1.msra.mxu0 0.0
  %4825 = vmatprep.subr.mxu0 0.0
  %4826 = vmatpush1.msra.mxu0 0.0
  %4827 = vmatprep.subr.mxu0 0.0
  %4828 = vmatpush1.msra.mxu0 0.0
  %4829 = vmatprep.subr.mxu0 0.0
  %4830 = vmatpush1.msra.mxu0 0.0
  %4831 = vmatprep.subr.mxu0 0.0
  %4832 = vmatpush1.msra.mxu0 0.0
  %4833 = vmatprep.subr.mxu0 0.0
  %4834 = vmatpush1.msra.mxu0 0.0
  %4835 = vmatprep.subr.mxu0 0.0
  %4836 = vmatpush1.msra.mxu0 0.0
  %4837 = vmatprep.subr.mxu0 0.0
  %4838 = vmatpush1.msra.mxu0 0.0
  %4839 = vmatprep.subr.mxu0 0.0
  %4840 = vmatpush1.msra.mxu0 0.0
  %4841 = vmatprep.subr.mxu0 0.0
  %4842 = vmatpush1.msra.mxu0 0.0
  %4843 = vmatprep.subr.mxu0 0.0
  %4844 = vmatpush1.msra.mxu0 0.0
  %4845 = vmatprep.subr.mxu0 0.0
  %4846 = vmatpush1.msra.mxu0 0.0
  %4847 = vmatprep.subr.mxu0 0.0
  %4848 = vmatpush1.msra.mxu0 0.0
  %4849 = vmatprep.subr.mxu0 0.0
  %4850 = vmatpush1.msra.mxu0 0.0
  %4851 = vmatprep.subr.mxu0 0.0
  %4852 = vmatpush1.msra.mxu0 0.0
  %4853 = vmatprep.subr.mxu0 0.0
  %4854 = vmatpush1.msra.mxu0 0.0
  %4855 = vmatprep.subr.mxu0 0.0
  %4856 = vmatpush1.msra.mxu0 0.0
  %4857 = vmatprep.subr.mxu0 0.0
  %4858 = vmatpush1.msra.mxu0 0.0
  %4859 = vmatprep.subr.mxu0 0.0
  %4860 = vmatpush1.msra.mxu0 0.0
  %4861 = vmatprep.subr.mxu0 0.0
  %4862 = vmatpush1.msra.mxu0 0.0
  %4863 = vmatprep.subr.mxu0 0.0
  %4864 = vmatpush1.msra.mxu0 0.0
  %4865 = vmatprep.mubr.f32.mxu0 0.0
  %4866 = vmatmul.mubr.f32.gmra.mrb[0].mxu0 %v4755
  %v4867 = vpop.f32.mrb[0].mxu0
  %v4868 = vadd.f32 0.0, %v4867
  %v4869 = vpop.f32.mrb[0].mxu0
  %4870 = vmatprep.mubr.f32.mxu0 0.0
  %4871 = vmatmul.mubr.f32.gmra.mrb[0].mxu0 %v4758
  %v4872 = vpop.f32.mrb[0].mxu0
  %v4873 = vadd.f32 0.0, %v4872
  %v4874 = vpop.f32.mrb[0].mxu0
  %4875 = vmatprep.mubr.f32.mxu0 0.0
  %4876 = vmatmul.mubr.f32.gmra.mrb[0].mxu0 %v4761
  %v4877 = vpop.f32.mrb[0].mxu0
  %v4878 = vadd.f32 0.0, %v4877
  %v4879 = vpop.f32.mrb[0].mxu0
  %4880 = vmatprep.mubr.f32.mxu0 0.0
  %4881 = vmatmul.mubr.f32.gmra.mrb[0].mxu0 %v4764
  %v4882 = vpop.f32.mrb[0].mxu0
  %v4883 = vadd.f32 0.0, %v4882
  %v4884 = vpop.f32.mrb[0].mxu0
  %4885 = vmatprep.mubr.f32.mxu0 0.0
  %4886 = vmatmul.mubr.f32.gmra.mrb[0].mxu0 %v4767
  %v4887 = vpop.f32.mrb[0].mxu0
  %v4888 = vadd.f32 0.0, %v4887
  %v4889 = vpop.f32.mrb[0].mxu0
  %4890 = vmatprep.mubr.f32.mxu0 0.0
  %4891 = vmatmul.mubr.f32.gmra.mrb[0].mxu0 %v4770
  %v4892 = vpop.f32.mrb[0].mxu0
  %v4893 = vadd.f32 0.0, %v4892
  %v4894 = vpop.f32.mrb[0].mxu0
  %4895 = vmatprep.mubr.f32.mxu0 0.0
  %4896 = vmatmul.mubr.f32.gmra.mrb[0].mxu0 %v4773
  %v4897 = vpop.f32.mrb[0].mxu0
  %v4898 = vadd.f32 0.0, %v4897
  %v4899 = vpop.f32.mrb[0].mxu0
  %4900 = vmatprep.mubr.f32.mxu0 0.0
  %4901 = vmatmul.mubr.f32.gmra.mrb[0].mxu0 %v4776
  %v4902 = vpop.f32.mrb[0].mxu0
  %v4903 = vadd.f32 0.0, %v4902
  %v4904 = vpop.f32.mrb[0].mxu0
  %4905 = vmatprep.mubr.f32.mxu0 0.0
  %4906 = vmatmul.mubr.f32.gmra.mrb[0].mxu0 %v4779
  %v4907 = vpop.f32.mrb[0].mxu0
  %v4908 = vadd.f32 0.0, %v4907
  %v4909 = vpop.f32.mrb[0].mxu0
  %4910 = vmatprep.mubr.f32.mxu0 0.0
  %4911 = vmatmul.mubr.f32.gmra.mrb[0].mxu0 %v4782
  %v4912 = vpop.f32.mrb[0].mxu0
  %v4913 = vadd.f32 0.0, %v4912
  %v4914 = vpop.f32.mrb[0].mxu0
  %4915 = vmatprep.mubr.f32.mxu0 0.0
  %4916 = vmatmul.mubr.f32.gmra.mrb[0].mxu0 %v4785
  %v4917 = vpop.f32.mrb[0].mxu0
  %v4918 = vadd.f32 0.0, %v4917
  %v4919 = vpop.f32.mrb[0].mxu0
  %4920 = vmatprep.mubr.f32.mxu0 0.0
  %4921 = vmatmul.mubr.f32.gmra.mrb[0].mxu0 %v4788
  %v4922 = vpop.f32.mrb[0].mxu0
  %v4923 = vadd.f32 0.0, %v4922
  %v4924 = vpop.f32.mrb[0].mxu0
  %4925 = vmatprep.mubr.f32.mxu0 0.0
  %4926 = vmatmul.mubr.f32.gmra.mrb[0].mxu0 %v4791
  %v4927 = vpop.f32.mrb[0].mxu0
  %v4928 = vadd.f32 0.0, %v4927
  %v4929 = vpop.f32.mrb[0].mxu0
  %4930 = vmatprep.mubr.f32.mxu0 0.0
  %4931 = vmatmul.mubr.f32.gmra.mrb[0].mxu0 %v4794
  %v4932 = vpop.f32.mrb[0].mxu0
  %v4933 = vadd.f32 0.0, %v4932
  %v4934 = vpop.f32.mrb[0].mxu0
  %4935 = vmatprep.mubr.f32.mxu0 0.0
  %4936 = vmatmul.mubr.f32.gmra.mrb[0].mxu0 %v4797
  %v4937 = vpop.f32.mrb[0].mxu0
  %v4938 = vadd.f32 0.0, %v4937
  %v4939 = vpop.f32.mrb[0].mxu0
  %4940 = vdwg.mxu0
  %v4941 = vadd.f32 %v4737, %v4868
  %v4942 = vadd.f32 %v4738, %v4873
  %v4943 = vadd.f32 %v4739, %v4878
  %v4944 = vadd.f32 %v4740, %v4883
  %v4945 = vadd.f32 %v4741, %v4888
  %v4946 = vadd.f32 %v4742, %v4893
  %v4947 = vadd.f32 %v4743, %v4898
  %v4948 = vadd.f32 %v4744, %v4903
  %v4949 = vadd.f32 %v4745, %v4908
  %v4950 = vadd.f32 %v4746, %v4913
  %v4951 = vadd.f32 %v4747, %v4918
  %v4952 = vadd.f32 %v4748, %v4923
  %v4953 = vadd.f32 %v4749, %v4928
  %v4954 = vadd.f32 %v4750, %v4933
  %v4955 = vadd.f32 %v4751, %v4938
  %4956 = vrot.lane.b32.xlu0 %v4170, 68
  %v4957 = vpop.permute.xlu0 %4956
  %v4959 = vsel %vm1748, %v4097, 0
  %v4962 = vsel %vm1748, %v4102, 0
  %v4965 = vsel %vm1748, %v4107, 0
  %v4968 = vsel %vm1748, %v4112, 0
  %v4971 = vsel %vm1748, %v4117, 0
  %v4974 = vsel %vm1748, %v4122, 0
  %v4977 = vsel %vm1748, %v4127, 0
  %v4980 = vsel %vm1748, %v4132, 0
  %v4983 = vsel %vm1748, %v4137, 0
  %v4986 = vsel %vm1748, %v4142, 0
  %v4989 = vsel %vm1748, %v4147, 0
  %v4992 = vsel %vm1748, %v4152, 0
  %v4995 = vsel %vm1748, %v4157, 0
  %v4998 = vsel %vm1748, %v4162, 0
  %v5001 = vsel %vm1748, %v4167, 0
  %v5003 = vsel %vm1779, %v4957, 0
  %5005 = vmatprep.subr.mxu0 0.0
  %5006 = vmatpush1.msra.mxu0 %v5003
  %5007 = vmatprep.subr.mxu0 0.0
  %5008 = vmatpush1.msra.mxu0 0.0
  %5009 = vmatprep.subr.mxu0 0.0
  %5010 = vmatpush1.msra.mxu0 0.0
  %5011 = vmatprep.subr.mxu0 0.0
  %5012 = vmatpush1.msra.mxu0 0.0
  %5013 = vmatprep.subr.mxu0 0.0
  %5014 = vmatpush1.msra.mxu0 0.0
  %5015 = vmatprep.subr.mxu0 0.0
  %5016 = vmatpush1.msra.mxu0 0.0
  %5017 = vmatprep.subr.mxu0 0.0
  %5018 = vmatpush1.msra.mxu0 0.0
  %5019 = vmatprep.subr.mxu0 0.0
  %5020 = vmatpush1.msra.mxu0 0.0
  %5021 = vmatprep.subr.mxu0 0.0
  %5022 = vmatpush1.msra.mxu0 0.0
  %5023 = vmatprep.subr.mxu0 0.0
  %5024 = vmatpush1.msra.mxu0 0.0
  %5025 = vmatprep.subr.mxu0 0.0
  %5026 = vmatpush1.msra.mxu0 0.0
  %5027 = vmatprep.subr.mxu0 0.0
  %5028 = vmatpush1.msra.mxu0 0.0
  %5029 = vmatprep.subr.mxu0 0.0
  %5030 = vmatpush1.msra.mxu0 0.0
  %5031 = vmatprep.subr.mxu0 0.0
  %5032 = vmatpush1.msra.mxu0 0.0
  %5033 = vmatprep.subr.mxu0 0.0
  %5034 = vmatpush1.msra.mxu0 0.0
  %5035 = vmatprep.subr.mxu0 0.0
  %5036 = vmatpush1.msra.mxu0 0.0
  %5037 = vmatprep.subr.mxu0 0.0
  %5038 = vmatpush1.msra.mxu0 0.0
  %5039 = vmatprep.subr.mxu0 0.0
  %5040 = vmatpush1.msra.mxu0 0.0
  %5041 = vmatprep.subr.mxu0 0.0
  %5042 = vmatpush1.msra.mxu0 0.0
  %5043 = vmatprep.subr.mxu0 0.0
  %5044 = vmatpush1.msra.mxu0 0.0
  %5045 = vmatprep.subr.mxu0 0.0
  %5046 = vmatpush1.msra.mxu0 0.0
  %5047 = vmatprep.subr.mxu0 0.0
  %5048 = vmatpush1.msra.mxu0 0.0
  %5049 = vmatprep.subr.mxu0 0.0
  %5050 = vmatpush1.msra.mxu0 0.0
  %5051 = vmatprep.subr.mxu0 0.0
  %5052 = vmatpush1.msra.mxu0 0.0
  %5053 = vmatprep.subr.mxu0 0.0
  %5054 = vmatpush1.msra.mxu0 0.0
  %5055 = vmatprep.subr.mxu0 0.0
  %5056 = vmatpush1.msra.mxu0 0.0
  %5057 = vmatprep.subr.mxu0 0.0
  %5058 = vmatpush1.msra.mxu0 0.0
  %5059 = vmatprep.subr.mxu0 0.0
  %5060 = vmatpush1.msra.mxu0 0.0
  %5061 = vmatprep.subr.mxu0 0.0
  %5062 = vmatpush1.msra.mxu0 0.0
  %5063 = vmatprep.subr.mxu0 0.0
  %5064 = vmatpush1.msra.mxu0 0.0
  %5065 = vmatprep.subr.mxu0 0.0
  %5066 = vmatpush1.msra.mxu0 0.0
  %5067 = vmatprep.subr.mxu0 0.0
  %5068 = vmatpush1.msra.mxu0 0.0
  %5069 = vmatprep.mubr.f32.mxu0 0.0
  %5070 = vmatmul.mubr.f32.gmra.mrb[0].mxu0 %v4959
  %v5071 = vpop.f32.mrb[0].mxu0
  %v5072 = vadd.f32 0.0, %v5071
  %v5073 = vpop.f32.mrb[0].mxu0
  %5074 = vmatprep.mubr.f32.mxu0 0.0
  %5075 = vmatmul.mubr.f32.gmra.mrb[0].mxu0 %v4962
  %v5076 = vpop.f32.mrb[0].mxu0
  %v5077 = vadd.f32 0.0, %v5076
  %v5078 = vpop.f32.mrb[0].mxu0
  %5079 = vmatprep.mubr.f32.mxu0 0.0
  %5080 = vmatmul.mubr.f32.gmra.mrb[0].mxu0 %v4965
  %v5081 = vpop.f32.mrb[0].mxu0
  %v5082 = vadd.f32 0.0, %v5081
  %v5083 = vpop.f32.mrb[0].mxu0
  %5084 = vmatprep.mubr.f32.mxu0 0.0
  %5085 = vmatmul.mubr.f32.gmra.mrb[0].mxu0 %v4968
  %v5086 = vpop.f32.mrb[0].mxu0
  %v5087 = vadd.f32 0.0, %v5086
  %v5088 = vpop.f32.mrb[0].mxu0
  %5089 = vmatprep.mubr.f32.mxu0 0.0
  %5090 = vmatmul.mubr.f32.gmra.mrb[0].mxu0 %v4971
  %v5091 = vpop.f32.mrb[0].mxu0
  %v5092 = vadd.f32 0.0, %v5091
  %v5093 = vpop.f32.mrb[0].mxu0
  %5094 = vmatprep.mubr.f32.mxu0 0.0
  %5095 = vmatmul.mubr.f32.gmra.mrb[0].mxu0 %v4974
  %v5096 = vpop.f32.mrb[0].mxu0
  %v5097 = vadd.f32 0.0, %v5096
  %v5098 = vpop.f32.mrb[0].mxu0
  %5099 = vmatprep.mubr.f32.mxu0 0.0
  %5100 = vmatmul.mubr.f32.gmra.mrb[0].mxu0 %v4977
  %v5101 = vpop.f32.mrb[0].mxu0
  %v5102 = vadd.f32 0.0, %v5101
  %v5103 = vpop.f32.mrb[0].mxu0
  %5104 = vmatprep.mubr.f32.mxu0 0.0
  %5105 = vmatmul.mubr.f32.gmra.mrb[0].mxu0 %v4980
  %v5106 = vpop.f32.mrb[0].mxu0
  %v5107 = vadd.f32 0.0, %v5106
  %v5108 = vpop.f32.mrb[0].mxu0
  %5109 = vmatprep.mubr.f32.mxu0 0.0
  %5110 = vmatmul.mubr.f32.gmra.mrb[0].mxu0 %v4983
  %v5111 = vpop.f32.mrb[0].mxu0
  %v5112 = vadd.f32 0.0, %v5111
  %v5113 = vpop.f32.mrb[0].mxu0
  %5114 = vmatprep.mubr.f32.mxu0 0.0
  %5115 = vmatmul.mubr.f32.gmra.mrb[0].mxu0 %v4986
  %v5116 = vpop.f32.mrb[0].mxu0
  %v5117 = vadd.f32 0.0, %v5116
  %v5118 = vpop.f32.mrb[0].mxu0
  %5119 = vmatprep.mubr.f32.mxu0 0.0
  %5120 = vmatmul.mubr.f32.gmra.mrb[0].mxu0 %v4989
  %v5121 = vpop.f32.mrb[0].mxu0
  %v5122 = vadd.f32 0.0, %v5121
  %v5123 = vpop.f32.mrb[0].mxu0
  %5124 = vmatprep.mubr.f32.mxu0 0.0
  %5125 = vmatmul.mubr.f32.gmra.mrb[0].mxu0 %v4992
  %v5126 = vpop.f32.mrb[0].mxu0
  %v5127 = vadd.f32 0.0, %v5126
  %v5128 = vpop.f32.mrb[0].mxu0
  %5129 = vmatprep.mubr.f32.mxu0 0.0
  %5130 = vmatmul.mubr.f32.gmra.mrb[0].mxu0 %v4995
  %v5131 = vpop.f32.mrb[0].mxu0
  %v5132 = vadd.f32 0.0, %v5131
  %v5133 = vpop.f32.mrb[0].mxu0
  %5134 = vmatprep.mubr.f32.mxu0 0.0
  %5135 = vmatmul.mubr.f32.gmra.mrb[0].mxu0 %v4998
  %v5136 = vpop.f32.mrb[0].mxu0
  %v5137 = vadd.f32 0.0, %v5136
  %v5138 = vpop.f32.mrb[0].mxu0
  %5139 = vmatprep.mubr.f32.mxu0 0.0
  %5140 = vmatmul.mubr.f32.gmra.mrb[0].mxu0 %v5001
  %v5141 = vpop.f32.mrb[0].mxu0
  %v5142 = vadd.f32 0.0, %v5141
  %v5143 = vpop.f32.mrb[0].mxu0
  %5144 = vdwg.mxu0
  %v5145 = vadd.f32 %v4941, %v5072
  %v5146 = vadd.f32 %v4942, %v5077
  %v5147 = vadd.f32 %v4943, %v5082
  %v5148 = vadd.f32 %v4944, %v5087
  %v5149 = vadd.f32 %v4945, %v5092
  %v5150 = vadd.f32 %v4946, %v5097
  %v5151 = vadd.f32 %v4947, %v5102
  %v5152 = vadd.f32 %v4948, %v5107
  %v5153 = vadd.f32 %v4949, %v5112
  %v5154 = vadd.f32 %v4950, %v5117
  %v5155 = vadd.f32 %v4951, %v5122
  %v5156 = vadd.f32 %v4952, %v5127
  %v5157 = vadd.f32 %v4953, %v5132
  %v5158 = vadd.f32 %v4954, %v5137
  %v5159 = vadd.f32 %v4955, %v5142
  %v5160 = vld [vmem:[%s3 + $0x108] sm:$0xff]
  %v5161 = vld [vmem:[%s3 + $0x110] sm:$0xff]
  %v5162 = vld [vmem:[%s3 + $0x118] sm:$0xff]
  %v5163 = vld [vmem:[%s3 + $0x120] sm:$0xff]
  %v5164 = vld [vmem:[%s3 + $0x128] sm:$0xff]
  %v5165 = vld [vmem:[%s3 + $0x130] sm:$0xff]
  %v5166 = vld [vmem:[%s3 + $0x138] sm:$0xff]
  %v5167 = vld [vmem:[%s3 + $0x140] sm:$0xff]
  %v5168 = vld [vmem:[%s3 + $0x148] sm:$0xff]
  %v5169 = vld [vmem:[%s3 + $0x150] sm:$0xff]
  %v5170 = vld [vmem:[%s3 + $0x158] sm:$0xff]
  %v5171 = vld [vmem:[%s3 + $0x160] sm:$0xff]
  %v5172 = vld [vmem:[%s3 + $0x168] sm:$0xff]
  %v5173 = vld [vmem:[%s3 + $0x170] sm:$0xff]
  %v5174 = vld [vmem:[%s3 + $0x178] sm:$0xff]
  %5176 = vset.pattern.permute.xlu0 0
  %5177 = vperm.xlu0 %5176, %v5160
  %v5178 = vpop.permute.xlu0 %5177
  %5181 = vset.pattern.permute.xlu0 0
  %5182 = vperm.xlu0 %5181, %v5161
  %v5183 = vpop.permute.xlu0 %5182
  %5186 = vset.pattern.permute.xlu0 0
  %5187 = vperm.xlu0 %5186, %v5162
  %v5188 = vpop.permute.xlu0 %5187
  %5191 = vset.pattern.permute.xlu0 0
  %5192 = vperm.xlu0 %5191, %v5163
  %v5193 = vpop.permute.xlu0 %5192
  %5196 = vset.pattern.permute.xlu0 0
  %5197 = vperm.xlu0 %5196, %v5164
  %v5198 = vpop.permute.xlu0 %5197
  %5201 = vset.pattern.permute.xlu0 0
  %5202 = vperm.xlu0 %5201, %v5165
  %v5203 = vpop.permute.xlu0 %5202
  %5206 = vset.pattern.permute.xlu0 0
  %5207 = vperm.xlu0 %5206, %v5166
  %v5208 = vpop.permute.xlu0 %5207
  %5211 = vset.pattern.permute.xlu0 0
  %5212 = vperm.xlu0 %5211, %v5167
  %v5213 = vpop.permute.xlu0 %5212
  %5216 = vset.pattern.permute.xlu0 0
  %5217 = vperm.xlu0 %5216, %v5168
  %v5218 = vpop.permute.xlu0 %5217
  %5221 = vset.pattern.permute.xlu0 0
  %5222 = vperm.xlu0 %5221, %v5169
  %v5223 = vpop.permute.xlu0 %5222
  %5226 = vset.pattern.permute.xlu0 0
  %5227 = vperm.xlu0 %5226, %v5170
  %v5228 = vpop.permute.xlu0 %5227
  %5231 = vset.pattern.permute.xlu0 0
  %5232 = vperm.xlu0 %5231, %v5171
  %v5233 = vpop.permute.xlu0 %5232
  %5236 = vset.pattern.permute.xlu0 0
  %5237 = vperm.xlu0 %5236, %v5172
  %v5238 = vpop.permute.xlu0 %5237
  %5241 = vset.pattern.permute.xlu0 0
  %5242 = vperm.xlu0 %5241, %v5173
  %v5243 = vpop.permute.xlu0 %5242
  %5246 = vset.pattern.permute.xlu0 0
  %5247 = vperm.xlu0 %5246, %v5174
  %v5248 = vpop.permute.xlu0 %5247
  %v5250 = vadd.f32 %v5145, %v5178
  %v5251 = vadd.f32 %v5146, %v5183
  %v5252 = vadd.f32 %v5147, %v5188
  %v5253 = vadd.f32 %v5148, %v5193
  %v5254 = vadd.f32 %v5149, %v5198
  %v5255 = vadd.f32 %v5150, %v5203
  %v5256 = vadd.f32 %v5151, %v5208
  %v5257 = vadd.f32 %v5152, %v5213
  %v5258 = vadd.f32 %v5153, %v5218
  %v5259 = vadd.f32 %v5154, %v5223
  %v5260 = vadd.f32 %v5155, %v5228
  %v5261 = vadd.f32 %v5156, %v5233
  %v5262 = vadd.f32 %v5157, %v5238
  %v5263 = vadd.f32 %v5158, %v5243
  %v5264 = vadd.f32 %v5159, %v5248
  %v5265 = vmax.f32 %v5250, 0.0
  %v5266 = vmax.f32 %v5251, 0.0
  %v5267 = vmax.f32 %v5252, 0.0
  %v5268 = vmax.f32 %v5253, 0.0
  %v5269 = vmax.f32 %v5254, 0.0
  %v5270 = vmax.f32 %v5255, 0.0
  %v5271 = vmax.f32 %v5256, 0.0
  %v5272 = vmax.f32 %v5257, 0.0
  %v5273 = vmax.f32 %v5258, 0.0
  %v5274 = vmax.f32 %v5259, 0.0
  %v5275 = vmax.f32 %v5260, 0.0
  %v5276 = vmax.f32 %v5261, 0.0
  %v5277 = vmax.f32 %v5262, 0.0
  %v5278 = vmax.f32 %v5263, 0.0
  %v5279 = vmax.f32 %v5264, 0.0
  %v5280 = vld [vmem:[%s1 + $0xc60] sm:$0xff]
  %v5281 = vld [vmem:[%s1 + $0xc70] sm:$0xff]
  %v5282 = vld [vmem:[%s1 + $0xc80] sm:$0xff]
  %v5283 = vld [vmem:[%s1 + $0xc90] sm:$0xff]
  %v5284 = vld [vmem:[%s1 + $0xca0] sm:$0xff]
  %v5285 = vld [vmem:[%s1 + $0xcb0] sm:$0xff]
  %v5286 = vld [vmem:[%s1 + $0xcc0] sm:$0xff]
  %vm5287 = vcmask 982016
  %v5289 = vsel %vm5287, %v5280, 0
  %v5292 = vsel %vm5287, %v5281, 0
  %v5295 = vsel %vm5287, %v5282, 0
  %v5298 = vsel %vm5287, %v5283, 0
  %v5301 = vsel %vm5287, %v5284, 0
  %v5304 = vsel %vm5287, %v5285, 0
  %v5307 = vsel %vm5287, %v5286, 0
  %5309 = vmatprep.subr.mxu0 0.0
  %5310 = vmatpush1.msra.mxu0 %v5265
  %5311 = vmatprep.subr.mxu0 0.0
  %5312 = vmatpush1.msra.mxu0 %v5266
  %5313 = vmatprep.subr.mxu0 0.0
  %5314 = vmatpush1.msra.mxu0 %v5267
  %5315 = vmatprep.subr.mxu0 0.0
  %5316 = vmatpush1.msra.mxu0 %v5268
  %5317 = vmatprep.subr.mxu0 0.0
  %5318 = vmatpush1.msra.mxu0 %v5269
  %5319 = vmatprep.subr.mxu0 0.0
  %5320 = vmatpush1.msra.mxu0 %v5270
  %5321 = vmatprep.subr.mxu0 0.0
  %5322 = vmatpush1.msra.mxu0 %v5271
  %5323 = vmatprep.subr.mxu0 0.0
  %5324 = vmatpush1.msra.mxu0 %v5272
  %5325 = vmatprep.subr.mxu0 0.0
  %5326 = vmatpush1.msra.mxu0 %v5273
  %5327 = vmatprep.subr.mxu0 0.0
  %5328 = vmatpush1.msra.mxu0 %v5274
  %5329 = vmatprep.subr.mxu0 0.0
  %5330 = vmatpush1.msra.mxu0 %v5275
  %5331 = vmatprep.subr.mxu0 0.0
  %5332 = vmatpush1.msra.mxu0 %v5276
  %5333 = vmatprep.subr.mxu0 0.0
  %5334 = vmatpush1.msra.mxu0 %v5277
  %5335 = vmatprep.subr.mxu0 0.0
  %5336 = vmatpush1.msra.mxu0 %v5278
  %5337 = vmatprep.subr.mxu0 0.0
  %5338 = vmatpush1.msra.mxu0 %v5279
  %5339 = vmatprep.subr.mxu0 0.0
  %5340 = vmatpush1.msra.mxu0 0.0
  %5341 = vmatprep.subr.mxu0 0.0
  %5342 = vmatpush1.msra.mxu0 0.0
  %5343 = vmatprep.subr.mxu0 0.0
  %5344 = vmatpush1.msra.mxu0 0.0
  %5345 = vmatprep.subr.mxu0 0.0
  %5346 = vmatpush1.msra.mxu0 0.0
  %5347 = vmatprep.subr.mxu0 0.0
  %5348 = vmatpush1.msra.mxu0 0.0
  %5349 = vmatprep.subr.mxu0 0.0
  %5350 = vmatpush1.msra.mxu0 0.0
  %5351 = vmatprep.subr.mxu0 0.0
  %5352 = vmatpush1.msra.mxu0 0.0
  %5353 = vmatprep.subr.mxu0 0.0
  %5354 = vmatpush1.msra.mxu0 0.0
  %5355 = vmatprep.subr.mxu0 0.0
  %5356 = vmatpush1.msra.mxu0 0.0
  %5357 = vmatprep.subr.mxu0 0.0
  %5358 = vmatpush1.msra.mxu0 0.0
  %5359 = vmatprep.subr.mxu0 0.0
  %5360 = vmatpush1.msra.mxu0 0.0
  %5361 = vmatprep.subr.mxu0 0.0
  %5362 = vmatpush1.msra.mxu0 0.0
  %5363 = vmatprep.subr.mxu0 0.0
  %5364 = vmatpush1.msra.mxu0 0.0
  %5365 = vmatprep.subr.mxu0 0.0
  %5366 = vmatpush1.msra.mxu0 0.0
  %5367 = vmatprep.subr.mxu0 0.0
  %5368 = vmatpush1.msra.mxu0 0.0
  %5369 = vmatprep.subr.mxu0 0.0
  %5370 = vmatpush1.msra.mxu0 0.0
  %5371 = vmatprep.subr.mxu0 0.0
  %5372 = vmatpush1.msra.mxu0 0.0
  %5373 = vmatprep.mubr.f32.mxu0 0.0
  %5374 = vmatmul.mubr.f32.gmra.mrb[0].mxu0 %v5289
  %v5375 = vpop.f32.mrb[0].mxu0
  %v5376 = vadd.f32 0.0, %v5375
  %v5377 = vpop.f32.mrb[0].mxu0
  %5378 = vmatprep.mubr.f32.mxu0 0.0
  %5379 = vmatmul.mubr.f32.gmra.mrb[0].mxu0 %v5292
  %v5380 = vpop.f32.mrb[0].mxu0
  %v5381 = vadd.f32 0.0, %v5380
  %v5382 = vpop.f32.mrb[0].mxu0
  %5383 = vmatprep.mubr.f32.mxu0 0.0
  %5384 = vmatmul.mubr.f32.gmra.mrb[0].mxu0 %v5295
  %v5385 = vpop.f32.mrb[0].mxu0
  %v5386 = vadd.f32 0.0, %v5385
  %v5387 = vpop.f32.mrb[0].mxu0
  %5388 = vmatprep.mubr.f32.mxu0 0.0
  %5389 = vmatmul.mubr.f32.gmra.mrb[0].mxu0 %v5298
  %v5390 = vpop.f32.mrb[0].mxu0
  %v5391 = vadd.f32 0.0, %v5390
  %v5392 = vpop.f32.mrb[0].mxu0
  %5393 = vmatprep.mubr.f32.mxu0 0.0
  %5394 = vmatmul.mubr.f32.gmra.mrb[0].mxu0 %v5301
  %v5395 = vpop.f32.mrb[0].mxu0
  %v5396 = vadd.f32 0.0, %v5395
  %v5397 = vpop.f32.mrb[0].mxu0
  %5398 = vmatprep.mubr.f32.mxu0 0.0
  %5399 = vmatmul.mubr.f32.gmra.mrb[0].mxu0 %v5304
  %v5400 = vpop.f32.mrb[0].mxu0
  %v5401 = vadd.f32 0.0, %v5400
  %v5402 = vpop.f32.mrb[0].mxu0
  %5403 = vmatprep.mubr.f32.mxu0 0.0
  %5404 = vmatmul.mubr.f32.gmra.mrb[0].mxu0 %v5307
  %v5405 = vpop.f32.mrb[0].mxu0
  %v5406 = vadd.f32 0.0, %v5405
  %v5407 = vpop.f32.mrb[0].mxu0
  %5408 = vdwg.mxu0
  %v5409 = vld [vmem:[%s2 + $0x50] sm:$0xff]
  %v5410 = vld [vmem:[%s2 + $0x58] sm:$0x7f]
  %v5415 = vrot.slane %v5391, 4
  %v5416 = vrot.slane %v5396, 4
  %v5417 = vsel %vm38, %v5415, %v5416
  %v5418 = vrot.slane %v5401, 4
  %v5419 = vsel %vm38, %v5416, %v5418
  %v5420 = vrot.slane %v5406, 4
  %v5421 = vsel %vm38, %v5418, %v5420
  %5424 = vrot.lane.b32.xlu0 %v5409, 100
  %v5425 = vpop.permute.xlu0 %5424
  %5426 = vrot.lane.b32.xlu0 %v5410, 100
  %v5427 = vpop.permute.xlu0 %5426
  %vm5429 = vcmask 121856
  %v5430 = vsel %vm5429, %v5417, 0
  %v5432 = vsel %vm5429, %v5419, 0
  %v5434 = vsel %vm5429, %v5421, 0
  %v5436 = vsel %vm5429, %v5420, 0
  %vm5438 = vcmask 1046528
  %v5439 = vsel %vm5438, %v5427, 0
  %5441 = vmatprep.subr.mxu0 0.0
  %5442 = vmatpush1.msra.mxu0 %v5425
  %5443 = vmatprep.subr.mxu0 0.0
  %5444 = vmatpush1.msra.mxu0 %v5439
  %5445 = vmatprep.subr.mxu0 0.0
  %5446 = vmatpush1.msra.mxu0 0.0
  %5447 = vmatprep.subr.mxu0 0.0
  %5448 = vmatpush1.msra.mxu0 0.0
  %5449 = vmatprep.subr.mxu0 0.0
  %5450 = vmatpush1.msra.mxu0 0.0
  %5451 = vmatprep.subr.mxu0 0.0
  %5452 = vmatpush1.msra.mxu0 0.0
  %5453 = vmatprep.subr.mxu0 0.0
  %5454 = vmatpush1.msra.mxu0 0.0
  %5455 = vmatprep.subr.mxu0 0.0
  %5456 = vmatpush1.msra.mxu0 0.0
  %5457 = vmatprep.subr.mxu0 0.0
  %5458 = vmatpush1.msra.mxu0 0.0
  %5459 = vmatprep.subr.mxu0 0.0
  %5460 = vmatpush1.msra.mxu0 0.0
  %5461 = vmatprep.subr.mxu0 0.0
  %5462 = vmatpush1.msra.mxu0 0.0
  %5463 = vmatprep.subr.mxu0 0.0
  %5464 = vmatpush1.msra.mxu0 0.0
  %5465 = vmatprep.subr.mxu0 0.0
  %5466 = vmatpush1.msra.mxu0 0.0
  %5467 = vmatprep.subr.mxu0 0.0
  %5468 = vmatpush1.msra.mxu0 0.0
  %5469 = vmatprep.subr.mxu0 0.0
  %5470 = vmatpush1.msra.mxu0 0.0
  %5471 = vmatprep.subr.mxu0 0.0
  %5472 = vmatpush1.msra.mxu0 0.0
  %5473 = vmatprep.subr.mxu0 0.0
  %5474 = vmatpush1.msra.mxu0 0.0
  %5475 = vmatprep.subr.mxu0 0.0
  %5476 = vmatpush1.msra.mxu0 0.0
  %5477 = vmatprep.subr.mxu0 0.0
  %5478 = vmatpush1.msra.mxu0 0.0
  %5479 = vmatprep.subr.mxu0 0.0
  %5480 = vmatpush1.msra.mxu0 0.0
  %5481 = vmatprep.subr.mxu0 0.0
  %5482 = vmatpush1.msra.mxu0 0.0
  %5483 = vmatprep.subr.mxu0 0.0
  %5484 = vmatpush1.msra.mxu0 0.0
  %5485 = vmatprep.subr.mxu0 0.0
  %5486 = vmatpush1.msra.mxu0 0.0
  %5487 = vmatprep.subr.mxu0 0.0
  %5488 = vmatpush1.msra.mxu0 0.0
  %5489 = vmatprep.subr.mxu0 0.0
  %5490 = vmatpush1.msra.mxu0 0.0
  %5491 = vmatprep.subr.mxu0 0.0
  %5492 = vmatpush1.msra.mxu0 0.0
  %5493 = vmatprep.subr.mxu0 0.0
  %5494 = vmatpush1.msra.mxu0 0.0
  %5495 = vmatprep.subr.mxu0 0.0
  %5496 = vmatpush1.msra.mxu0 0.0
  %5497 = vmatprep.subr.mxu0 0.0
  %5498 = vmatpush1.msra.mxu0 0.0
  %5499 = vmatprep.subr.mxu0 0.0
  %5500 = vmatpush1.msra.mxu0 0.0
  %5501 = vmatprep.subr.mxu0 0.0
  %5502 = vmatpush1.msra.mxu0 0.0
  %5503 = vmatprep.subr.mxu0 0.0
  %5504 = vmatpush1.msra.mxu0 0.0
  %5505 = vmatprep.mubr.f32.mxu0 0.0
  %5506 = vmatmul.mubr.f32.gmra.mrb[0].mxu0 %v5430
  %v5507 = vpop.f32.mrb[0].mxu0
  %v5508 = vadd.f32 0.0, %v5507
  %v5509 = vpop.f32.mrb[0].mxu0
  %5510 = vmatprep.mubr.f32.mxu0 0.0
  %5511 = vmatmul.mubr.f32.gmra.mrb[0].mxu0 %v5432
  %v5512 = vpop.f32.mrb[0].mxu0
  %v5513 = vadd.f32 0.0, %v5512
  %v5514 = vpop.f32.mrb[0].mxu0
  %5515 = vmatprep.mubr.f32.mxu0 0.0
  %5516 = vmatmul.mubr.f32.gmra.mrb[0].mxu0 %v5434
  %v5517 = vpop.f32.mrb[0].mxu0
  %v5518 = vadd.f32 0.0, %v5517
  %v5519 = vpop.f32.mrb[0].mxu0
  %5520 = vmatprep.mubr.f32.mxu0 0.0
  %5521 = vmatmul.mubr.f32.gmra.mrb[0].mxu0 %v5436
  %v5522 = vpop.f32.mrb[0].mxu0
  %v5523 = vadd.f32 0.0, %v5522
  %v5524 = vpop.f32.mrb[0].mxu0
  %5525 = vdwg.mxu0
  %v5527 = vsel %vm5429, %v5376, 0
  %v5530 = vsel %vm5429, %v5381, 0
  %v5533 = vsel %vm5429, %v5386, 0
  %v5535 = vsel %vm5429, %v5391, 0
  %v5537 = vsel %vm5438, %v5410, 0
  %5539 = vmatprep.subr.mxu0 0.0
  %5540 = vmatpush1.msra.mxu0 %v5409
  %5541 = vmatprep.subr.mxu0 0.0
  %5542 = vmatpush1.msra.mxu0 %v5537
  %5543 = vmatprep.subr.mxu0 0.0
  %5544 = vmatpush1.msra.mxu0 0.0
  %5545 = vmatprep.subr.mxu0 0.0
  %5546 = vmatpush1.msra.mxu0 0.0
  %5547 = vmatprep.subr.mxu0 0.0
  %5548 = vmatpush1.msra.mxu0 0.0
  %5549 = vmatprep.subr.mxu0 0.0
  %5550 = vmatpush1.msra.mxu0 0.0
  %5551 = vmatprep.subr.mxu0 0.0
  %5552 = vmatpush1.msra.mxu0 0.0
  %5553 = vmatprep.subr.mxu0 0.0
  %5554 = vmatpush1.msra.mxu0 0.0
  %5555 = vmatprep.subr.mxu0 0.0
  %5556 = vmatpush1.msra.mxu0 0.0
  %5557 = vmatprep.subr.mxu0 0.0
  %5558 = vmatpush1.msra.mxu0 0.0
  %5559 = vmatprep.subr.mxu0 0.0
  %5560 = vmatpush1.msra.mxu0 0.0
  %5561 = vmatprep.subr.mxu0 0.0
  %5562 = vmatpush1.msra.mxu0 0.0
  %5563 = vmatprep.subr.mxu0 0.0
  %5564 = vmatpush1.msra.mxu0 0.0
  %5565 = vmatprep.subr.mxu0 0.0
  %5566 = vmatpush1.msra.mxu0 0.0
  %5567 = vmatprep.subr.mxu0 0.0
  %5568 = vmatpush1.msra.mxu0 0.0
  %5569 = vmatprep.subr.mxu0 0.0
  %5570 = vmatpush1.msra.mxu0 0.0
  %5571 = vmatprep.subr.mxu0 0.0
  %5572 = vmatpush1.msra.mxu0 0.0
  %5573 = vmatprep.subr.mxu0 0.0
  %5574 = vmatpush1.msra.mxu0 0.0
  %5575 = vmatprep.subr.mxu0 0.0
  %5576 = vmatpush1.msra.mxu0 0.0
  %5577 = vmatprep.subr.mxu0 0.0
  %5578 = vmatpush1.msra.mxu0 0.0
  %5579 = vmatprep.subr.mxu0 0.0
  %5580 = vmatpush1.msra.mxu0 0.0
  %5581 = vmatprep.subr.mxu0 0.0
  %5582 = vmatpush1.msra.mxu0 0.0
  %5583 = vmatprep.subr.mxu0 0.0
  %5584 = vmatpush1.msra.mxu0 0.0
  %5585 = vmatprep.subr.mxu0 0.0
  %5586 = vmatpush1.msra.mxu0 0.0
  %5587 = vmatprep.subr.mxu0 0.0
  %5588 = vmatpush1.msra.mxu0 0.0
  %5589 = vmatprep.subr.mxu0 0.0
  %5590 = vmatpush1.msra.mxu0 0.0
  %5591 = vmatprep.subr.mxu0 0.0
  %5592 = vmatpush1.msra.mxu0 0.0
  %5593 = vmatprep.subr.mxu0 0.0
  %5594 = vmatpush1.msra.mxu0 0.0
  %5595 = vmatprep.subr.mxu0 0.0
  %5596 = vmatpush1.msra.mxu0 0.0
  %5597 = vmatprep.subr.mxu0 0.0
  %5598 = vmatpush1.msra.mxu0 0.0
  %5599 = vmatprep.subr.mxu0 0.0
  %5600 = vmatpush1.msra.mxu0 0.0
  %5601 = vmatprep.subr.mxu0 0.0
  %5602 = vmatpush1.msra.mxu0 0.0
  %5603 = vmatprep.mubr.f32.mxu0 0.0
  %5604 = vmatmul.mubr.f32.gmra.mrb[0].mxu0 %v5527
  %v5605 = vpop.f32.mrb[0].mxu0
  %v5606 = vadd.f32 %v5508, %v5605
  %v5607 = vpop.f32.mrb[0].mxu0
  %5608 = vmatprep.mubr.f32.mxu0 0.0
  %5609 = vmatmul.mubr.f32.gmra.mrb[0].mxu0 %v5530
  %v5610 = vpop.f32.mrb[0].mxu0
  %v5611 = vadd.f32 %v5513, %v5610
  %v5612 = vpop.f32.mrb[0].mxu0
  %5613 = vmatprep.mubr.f32.mxu0 0.0
  %5614 = vmatmul.mubr.f32.gmra.mrb[0].mxu0 %v5533
  %v5615 = vpop.f32.mrb[0].mxu0
  %v5616 = vadd.f32 %v5518, %v5615
  %v5617 = vpop.f32.mrb[0].mxu0
  %5618 = vmatprep.mubr.f32.mxu0 0.0
  %5619 = vmatmul.mubr.f32.gmra.mrb[0].mxu0 %v5535
  %v5620 = vpop.f32.mrb[0].mxu0
  %v5621 = vadd.f32 %v5523, %v5620
  %v5622 = vpop.f32.mrb[0].mxu0
  %5623 = vdwg.mxu0
  %v5624 = vld [vmem:[%s3 + $0x180] sm:$0xff]
  %v5625 = vld [vmem:[%s3 + $0x188] sm:$0xff]
  %v5626 = vld [vmem:[%s3 + $0x190] sm:$0xff]
  %v5627 = vld [vmem:[%s3 + $0x198] sm:$0xf]
  %5629 = vset.pattern.permute.xlu0 0
  %5630 = vperm.xlu0 %5629, %v5624
  %v5631 = vpop.permute.xlu0 %5630
  %5634 = vset.pattern.permute.xlu0 0
  %5635 = vperm.xlu0 %5634, %v5625
  %v5636 = vpop.permute.xlu0 %5635
  %5639 = vset.pattern.permute.xlu0 0
  %5640 = vperm.xlu0 %5639, %v5626
  %v5641 = vpop.permute.xlu0 %5640
  %5644 = vset.pattern.permute.xlu0 0
  %5645 = vperm.xlu0 %5644, %v5627
  %v5646 = vpop.permute.xlu0 %5645
  %v5648 = vadd.f32 %v5606, %v5631
  %v5649 = vadd.f32 %v5611, %v5636
  %v5650 = vadd.f32 %v5616, %v5641
  %v5651 = vadd.f32 %v5621, %v5646
  %v5652 = vtanh.pop %v5648
  %v5653 = vtanh.pop %v5649
  %v5654 = vtanh.pop %v5650
  %v5655 = vtanh.pop %v5651
  %5656 = vst.msk [vmem:[%s4] sm:$0xff] %vm25, %v5652
  %5657 = vst.msk [vmem:[%s4 + $0x8] sm:$0xff] %vm25, %v5653
  %5658 = vst.msk [vmem:[%s4 + $0x10] sm:$0xff] %vm25, %v5654
  %vm5659 = vcmask 224256
  %5660 = vst.msk [vmem:[%s4 + $0x18] sm:$0xf] %vm5659, %v5655
  %s5661 = scalar_lea.vmem %s0, 32
  %v5662 = vld [vmem:[%s5661] sm:$0xff]
  %v5663 = vld [vmem:[%s5661 + $0x8] sm:$0xff]
  %v5664 = vld [vmem:[%s5661 + $0x10] sm:$0xff]
  %v5665 = vld [vmem:[%s5661 + $0x18] sm:$0xf]
  %v5666 = vld [vmem:[%s2] sm:$0xff]
  %v5667 = vld [vmem:[%s2 + $0x8] sm:$0xff]
  %v5668 = vld [vmem:[%s2 + $0x10] sm:$0xff]
  %v5669 = vld [vmem:[%s2 + $0x18] sm:$0xf]
  %v5671 = vsel %vm25, %v5662, 0
  %v5674 = vsel %vm25, %v5663, 0
  %v5677 = vsel %vm25, %v5664, 0
  %v5680 = vsel %vm25, %v5665, 0
  %v5683 = vsel %vm38, %v5669, 0
  %5685 = vmatprep.subr.mxu0 0.0
  %5686 = vmatpush1.msra.mxu0 %v5666
  %5687 = vmatprep.subr.mxu0 0.0
  %5688 = vmatpush1.msra.mxu0 %v5667
  %5689 = vmatprep.subr.mxu0 0.0
  %5690 = vmatpush1.msra.mxu0 %v5668
  %5691 = vmatprep.subr.mxu0 0.0
  %5692 = vmatpush1.msra.mxu0 %v5683
  %5693 = vmatprep.subr.mxu0 0.0
  %5694 = vmatpush1.msra.mxu0 0.0
  %5695 = vmatprep.subr.mxu0 0.0
  %5696 = vmatpush1.msra.mxu0 0.0
  %5697 = vmatprep.subr.mxu0 0.0
  %5698 = vmatpush1.msra.mxu0 0.0
  %5699 = vmatprep.subr.mxu0 0.0
  %5700 = vmatpush1.msra.mxu0 0.0
  %5701 = vmatprep.subr.mxu0 0.0
  %5702 = vmatpush1.msra.mxu0 0.0
  %5703 = vmatprep.subr.mxu0 0.0
  %5704 = vmatpush1.msra.mxu0 0.0
  %5705 = vmatprep.subr.mxu0 0.0
  %5706 = vmatpush1.msra.mxu0 0.0
  %5707 = vmatprep.subr.mxu0 0.0
  %5708 = vmatpush1.msra.mxu0 0.0
  %5709 = vmatprep.subr.mxu0 0.0
  %5710 = vmatpush1.msra.mxu0 0.0
  %5711 = vmatprep.subr.mxu0 0.0
  %5712 = vmatpush1.msra.mxu0 0.0
  %5713 = vmatprep.subr.mxu0 0.0
  %5714 = vmatpush1.msra.mxu0 0.0
  %5715 = vmatprep.subr.mxu0 0.0
  %5716 = vmatpush1.msra.mxu0 0.0
  %5717 = vmatprep.subr.mxu0 0.0
  %5718 = vmatpush1.msra.mxu0 0.0
  %5719 = vmatprep.subr.mxu0 0.0
  %5720 = vmatpush1.msra.mxu0 0.0
  %5721 = vmatprep.subr.mxu0 0.0
  %5722 = vmatpush1.msra.mxu0 0.0
  %5723 = vmatprep.subr.mxu0 0.0
  %5724 = vmatpush1.msra.mxu0 0.0
  %5725 = vmatprep.subr.mxu0 0.0
  %5726 = vmatpush1.msra.mxu0 0.0
  %5727 = vmatprep.subr.mxu0 0.0
  %5728 = vmatpush1.msra.mxu0 0.0
  %5729 = vmatprep.subr.mxu0 0.0
  %5730 = vmatpush1.msra.mxu0 0.0
  %5731 = vmatprep.subr.mxu0 0.0
  %5732 = vmatpush1.msra.mxu0 0.0
  %5733 = vmatprep.subr.mxu0 0.0
  %5734 = vmatpush1.msra.mxu0 0.0
  %5735 = vmatprep.subr.mxu0 0.0
  %5736 = vmatpush1.msra.mxu0 0.0
  %5737 = vmatprep.subr.mxu0 0.0
  %5738 = vmatpush1.msra.mxu0 0.0
  %5739 = vmatprep.subr.mxu0 0.0
  %5740 = vmatpush1.msra.mxu0 0.0
  %5741 = vmatprep.subr.mxu0 0.0
  %5742 = vmatpush1.msra.mxu0 0.0
  %5743 = vmatprep.subr.mxu0 0.0
  %5744 = vmatpush1.msra.mxu0 0.0
  %5745 = vmatprep.subr.mxu0 0.0
  %5746 = vmatpush1.msra.mxu0 0.0
  %5747 = vmatprep.subr.mxu0 0.0
  %5748 = vmatpush1.msra.mxu0 0.0
  %5749 = vmatprep.mubr.f32.mxu0 0.0
  %5750 = vmatmul.mubr.f32.gmra.mrb[0].mxu0 %v5671
  %v5751 = vpop.f32.mrb[0].mxu0
  %v5752 = vadd.f32 0.0, %v5751
  %v5753 = vpop.f32.mrb[0].mxu0
  %5754 = vmatprep.mubr.f32.mxu0 0.0
  %5755 = vmatmul.mubr.f32.gmra.mrb[0].mxu0 %v5674
  %v5756 = vpop.f32.mrb[0].mxu0
  %v5757 = vadd.f32 0.0, %v5756
  %v5758 = vpop.f32.mrb[0].mxu0
  %5759 = vmatprep.mubr.f32.mxu0 0.0
  %5760 = vmatmul.mubr.f32.gmra.mrb[0].mxu0 %v5677
  %v5761 = vpop.f32.mrb[0].mxu0
  %v5762 = vadd.f32 0.0, %v5761
  %v5763 = vpop.f32.mrb[0].mxu0
  %5764 = vmatprep.mubr.f32.mxu0 0.0
  %5765 = vmatmul.mubr.f32.gmra.mrb[0].mxu0 %v5680
  %v5766 = vpop.f32.mrb[0].mxu0
  %v5767 = vadd.f32 0.0, %v5766
  %v5768 = vpop.f32.mrb[0].mxu0
  %5769 = vdwg.mxu0
  %v5770 = vld [vmem:[%s1] sm:$0xff]
  %v5771 = vld [vmem:[%s1 + $0x10] sm:$0xff]
  %v5772 = vld [vmem:[%s1 + $0x20] sm:$0xff]
  %v5773 = vld [vmem:[%s1 + $0x30] sm:$0xff]
  %v5774 = vld [vmem:[%s1 + $0x40] sm:$0xff]
  %v5775 = vld [vmem:[%s1 + $0x50] sm:$0xff]
  %v5776 = vld [vmem:[%s1 + $0x60] sm:$0xff]
  %v5777 = vld [vmem:[%s1 + $0x70] sm:$0xff]
  %v5778 = vld [vmem:[%s1 + $0x80] sm:$0xff]
  %v5779 = vld [vmem:[%s1 + $0x90] sm:$0xff]
  %v5780 = vld [vmem:[%s1 + $0xa0] sm:$0xff]
  %v5781 = vld [vmem:[%s1 + $0xb0] sm:$0xff]
  %v5782 = vld [vmem:[%s1 + $0xc0] sm:$0xff]
  %v5783 = vld [vmem:[%s1 + $0xd0] sm:$0xff]
  %v5784 = vld [vmem:[%s1 + $0xe0] sm:$0xff]
  %v5785 = vld [vmem:[%s1 + $0xf0] sm:$0xff]
  %v5786 = vld [vmem:[%s1 + $0x100] sm:$0xff]
  %v5787 = vld [vmem:[%s1 + $0x110] sm:$0xff]
  %v5788 = vld [vmem:[%s1 + $0x120] sm:$0xff]
  %v5789 = vld [vmem:[%s1 + $0x130] sm:$0xff]
  %v5790 = vld [vmem:[%s1 + $0x140] sm:$0xff]
  %v5791 = vld [vmem:[%s1 + $0x150] sm:$0xff]
  %v5792 = vld [vmem:[%s1 + $0x160] sm:$0xff]
  %v5793 = vld [vmem:[%s1 + $0x170] sm:$0xff]
  %v5794 = vld [vmem:[%s1 + $0x180] sm:$0xff]
  %v5795 = vld [vmem:[%s1 + $0x190] sm:$0xff]
  %v5796 = vld [vmem:[%s1 + $0x1a0] sm:$0xff]
  %v5797 = vld [vmem:[%s1 + $0x1b0] sm:$0xff]
  %v5798 = vld [vmem:[%s1 + $0x1c0] sm:$0xff]
  %v5799 = vld [vmem:[%s1 + $0x1d0] sm:$0xff]
  %v5800 = vld [vmem:[%s1 + $0x1e0] sm:$0xff]
  %v5801 = vld [vmem:[%s1 + $0x1f0] sm:$0xff]
  %v5802 = vld [vmem:[%s1 + $0x200] sm:$0xff]
  %v5803 = vld [vmem:[%s1 + $0x210] sm:$0xff]
  %v5804 = vld [vmem:[%s1 + $0x220] sm:$0xff]
  %v5805 = vld [vmem:[%s1 + $0x230] sm:$0xff]
  %v5806 = vld [vmem:[%s1 + $0x240] sm:$0xff]
  %v5807 = vld [vmem:[%s1 + $0x250] sm:$0xff]
  %v5808 = vld [vmem:[%s1 + $0x260] sm:$0xff]
  %v5809 = vld [vmem:[%s1 + $0x270] sm:$0xff]
  %5814 = vrot.lane.b32.xlu0 %v5752, 118
  %v5815 = vpop.permute.xlu0 %5814
  %5816 = vrot.lane.b32.xlu0 %v5757, 118
  %v5817 = vpop.permute.xlu0 %5816
  %5818 = vrot.lane.b32.xlu0 %v5762, 118
  %v5819 = vpop.permute.xlu0 %5818
  %5820 = vrot.lane.b32.xlu0 %v5767, 118
  %v5821 = vpop.permute.xlu0 %5820
  %v5826 = vsel %vm25, %v5790, 0
  %v5829 = vsel %vm25, %v5791, 0
  %v5832 = vsel %vm25, %v5792, 0
  %v5835 = vsel %vm25, %v5793, 0
  %v5838 = vsel %vm25, %v5794, 0
  %v5841 = vsel %vm25, %v5795, 0
  %v5844 = vsel %vm25, %v5796, 0
  %v5847 = vsel %vm25, %v5797, 0
  %v5850 = vsel %vm25, %v5798, 0
  %v5853 = vsel %vm25, %v5799, 0
  %v5856 = vsel %vm25, %v5800, 0
  %v5859 = vsel %vm25, %v5801, 0
  %v5862 = vsel %vm25, %v5802, 0
  %v5865 = vsel %vm25, %v5803, 0
  %v5868 = vsel %vm25, %v5804, 0
  %v5871 = vsel %vm25, %v5805, 0
  %v5874 = vsel %vm25, %v5806, 0
  %v5877 = vsel %vm25, %v5807, 0
  %v5880 = vsel %vm25, %v5808, 0
  %v5883 = vsel %vm25, %v5809, 0
  %v5885 = vsel %vm38, %v5821, 0
  %5887 = vmatprep.subr.mxu0 0.0
  %5888 = vmatpush1.msra.mxu0 %v5815
  %5889 = vmatprep.subr.mxu0 0.0
  %5890 = vmatpush1.msra.mxu0 %v5817
  %5891 = vmatprep.subr.mxu0 0.0
  %5892 = vmatpush1.msra.mxu0 %v5819
  %5893 = vmatprep.subr.mxu0 0.0
  %5894 = vmatpush1.msra.mxu0 %v5885
  %5895 = vmatprep.subr.mxu0 0.0
  %5896 = vmatpush1.msra.mxu0 0.0
  %5897 = vmatprep.subr.mxu0 0.0
  %5898 = vmatpush1.msra.mxu0 0.0
  %5899 = vmatprep.subr.mxu0 0.0
  %5900 = vmatpush1.msra.mxu0 0.0
  %5901 = vmatprep.subr.mxu0 0.0
  %5902 = vmatpush1.msra.mxu0 0.0
  %5903 = vmatprep.subr.mxu0 0.0
  %5904 = vmatpush1.msra.mxu0 0.0
  %5905 = vmatprep.subr.mxu0 0.0
  %5906 = vmatpush1.msra.mxu0 0.0
  %5907 = vmatprep.subr.mxu0 0.0
  %5908 = vmatpush1.msra.mxu0 0.0
  %5909 = vmatprep.subr.mxu0 0.0
  %5910 = vmatpush1.msra.mxu0 0.0
  %5911 = vmatprep.subr.mxu0 0.0
  %5912 = vmatpush1.msra.mxu0 0.0
  %5913 = vmatprep.subr.mxu0 0.0
  %5914 = vmatpush1.msra.mxu0 0.0
  %5915 = vmatprep.subr.mxu0 0.0
  %5916 = vmatpush1.msra.mxu0 0.0
  %5917 = vmatprep.subr.mxu0 0.0
  %5918 = vmatpush1.msra.mxu0 0.0
  %5919 = vmatprep.subr.mxu0 0.0
  %5920 = vmatpush1.msra.mxu0 0.0
  %5921 = vmatprep.subr.mxu0 0.0
  %5922 = vmatpush1.msra.mxu0 0.0
  %5923 = vmatprep.subr.mxu0 0.0
  %5924 = vmatpush1.msra.mxu0 0.0
  %5925 = vmatprep.subr.mxu0 0.0
  %5926 = vmatpush1.msra.mxu0 0.0
  %5927 = vmatprep.subr.mxu0 0.0
  %5928 = vmatpush1.msra.mxu0 0.0
  %5929 = vmatprep.subr.mxu0 0.0
  %5930 = vmatpush1.msra.mxu0 0.0
  %5931 = vmatprep.subr.mxu0 0.0
  %5932 = vmatpush1.msra.mxu0 0.0
  %5933 = vmatprep.subr.mxu0 0.0
  %5934 = vmatpush1.msra.mxu0 0.0
  %5935 = vmatprep.subr.mxu0 0.0
  %5936 = vmatpush1.msra.mxu0 0.0
  %5937 = vmatprep.subr.mxu0 0.0
  %5938 = vmatpush1.msra.mxu0 0.0
  %5939 = vmatprep.subr.mxu0 0.0
  %5940 = vmatpush1.msra.mxu0 0.0
  %5941 = vmatprep.subr.mxu0 0.0
  %5942 = vmatpush1.msra.mxu0 0.0
  %5943 = vmatprep.subr.mxu0 0.0
  %5944 = vmatpush1.msra.mxu0 0.0
  %5945 = vmatprep.subr.mxu0 0.0
  %5946 = vmatpush1.msra.mxu0 0.0
  %5947 = vmatprep.subr.mxu0 0.0
  %5948 = vmatpush1.msra.mxu0 0.0
  %5949 = vmatprep.subr.mxu0 0.0
  %5950 = vmatpush1.msra.mxu0 0.0
  %5951 = vmatprep.mubr.f32.mxu0 0.0
  %5952 = vmatmul.mubr.f32.gmra.mrb[0].mxu0 %v5826
  %v5953 = vpop.f32.mrb[0].mxu0
  %v5954 = vadd.f32 0.0, %v5953
  %v5955 = vpop.f32.mrb[0].mxu0
  %5956 = vmatprep.mubr.f32.mxu0 0.0
  %5957 = vmatmul.mubr.f32.gmra.mrb[0].mxu0 %v5829
  %v5958 = vpop.f32.mrb[0].mxu0
  %v5959 = vadd.f32 0.0, %v5958
  %v5960 = vpop.f32.mrb[0].mxu0
  %5961 = vmatprep.mubr.f32.mxu0 0.0
  %5962 = vmatmul.mubr.f32.gmra.mrb[0].mxu0 %v5832
  %v5963 = vpop.f32.mrb[0].mxu0
  %v5964 = vadd.f32 0.0, %v5963
  %v5965 = vpop.f32.mrb[0].mxu0
  %5966 = vmatprep.mubr.f32.mxu0 0.0
  %5967 = vmatmul.mubr.f32.gmra.mrb[0].mxu0 %v5835
  %v5968 = vpop.f32.mrb[0].mxu0
  %v5969 = vadd.f32 0.0, %v5968
  %v5970 = vpop.f32.mrb[0].mxu0
  %5971 = vmatprep.mubr.f32.mxu0 0.0
  %5972 = vmatmul.mubr.f32.gmra.mrb[0].mxu0 %v5838
  %v5973 = vpop.f32.mrb[0].mxu0
  %v5974 = vadd.f32 0.0, %v5973
  %v5975 = vpop.f32.mrb[0].mxu0
  %5976 = vmatprep.mubr.f32.mxu0 0.0
  %5977 = vmatmul.mubr.f32.gmra.mrb[0].mxu0 %v5841
  %v5978 = vpop.f32.mrb[0].mxu0
  %v5979 = vadd.f32 0.0, %v5978
  %v5980 = vpop.f32.mrb[0].mxu0
  %5981 = vmatprep.mubr.f32.mxu0 0.0
  %5982 = vmatmul.mubr.f32.gmra.mrb[0].mxu0 %v5844
  %v5983 = vpop.f32.mrb[0].mxu0
  %v5984 = vadd.f32 0.0, %v5983
  %v5985 = vpop.f32.mrb[0].mxu0
  %5986 = vmatprep.mubr.f32.mxu0 0.0
  %5987 = vmatmul.mubr.f32.gmra.mrb[0].mxu0 %v5847
  %v5988 = vpop.f32.mrb[0].mxu0
  %v5989 = vadd.f32 0.0, %v5988
  %v5990 = vpop.f32.mrb[0].mxu0
  %5991 = vmatprep.mubr.f32.mxu0 0.0
  %5992 = vmatmul.mubr.f32.gmra.mrb[0].mxu0 %v5850
  %v5993 = vpop.f32.mrb[0].mxu0
  %v5994 = vadd.f32 0.0, %v5993
  %v5995 = vpop.f32.mrb[0].mxu0
  %5996 = vmatprep.mubr.f32.mxu0 0.0
  %5997 = vmatmul.mubr.f32.gmra.mrb[0].mxu0 %v5853
  %v5998 = vpop.f32.mrb[0].mxu0
  %v5999 = vadd.f32 0.0, %v5998
  %v6000 = vpop.f32.mrb[0].mxu0
  %6001 = vmatprep.mubr.f32.mxu0 0.0
  %6002 = vmatmul.mubr.f32.gmra.mrb[0].mxu0 %v5856
  %v6003 = vpop.f32.mrb[0].mxu0
  %v6004 = vadd.f32 0.0, %v6003
  %v6005 = vpop.f32.mrb[0].mxu0
  %6006 = vmatprep.mubr.f32.mxu0 0.0
  %6007 = vmatmul.mubr.f32.gmra.mrb[0].mxu0 %v5859
  %v6008 = vpop.f32.mrb[0].mxu0
  %v6009 = vadd.f32 0.0, %v6008
  %v6010 = vpop.f32.mrb[0].mxu0
  %6011 = vmatprep.mubr.f32.mxu0 0.0
  %6012 = vmatmul.mubr.f32.gmra.mrb[0].mxu0 %v5862
  %v6013 = vpop.f32.mrb[0].mxu0
  %v6014 = vadd.f32 0.0, %v6013
  %v6015 = vpop.f32.mrb[0].mxu0
  %6016 = vmatprep.mubr.f32.mxu0 0.0
  %6017 = vmatmul.mubr.f32.gmra.mrb[0].mxu0 %v5865
  %v6018 = vpop.f32.mrb[0].mxu0
  %v6019 = vadd.f32 0.0, %v6018
  %v6020 = vpop.f32.mrb[0].mxu0
  %6021 = vmatprep.mubr.f32.mxu0 0.0
  %6022 = vmatmul.mubr.f32.gmra.mrb[0].mxu0 %v5868
  %v6023 = vpop.f32.mrb[0].mxu0
  %v6024 = vadd.f32 0.0, %v6023
  %v6025 = vpop.f32.mrb[0].mxu0
  %6026 = vmatprep.mubr.f32.mxu0 0.0
  %6027 = vmatmul.mubr.f32.gmra.mrb[0].mxu0 %v5871
  %v6028 = vpop.f32.mrb[0].mxu0
  %v6029 = vadd.f32 0.0, %v6028
  %v6030 = vpop.f32.mrb[0].mxu0
  %6031 = vmatprep.mubr.f32.mxu0 0.0
  %6032 = vmatmul.mubr.f32.gmra.mrb[0].mxu0 %v5874
  %v6033 = vpop.f32.mrb[0].mxu0
  %v6034 = vadd.f32 0.0, %v6033
  %v6035 = vpop.f32.mrb[0].mxu0
  %6036 = vmatprep.mubr.f32.mxu0 0.0
  %6037 = vmatmul.mubr.f32.gmra.mrb[0].mxu0 %v5877
  %v6038 = vpop.f32.mrb[0].mxu0
  %v6039 = vadd.f32 0.0, %v6038
  %v6040 = vpop.f32.mrb[0].mxu0
  %6041 = vmatprep.mubr.f32.mxu0 0.0
  %6042 = vmatmul.mubr.f32.gmra.mrb[0].mxu0 %v5880
  %v6043 = vpop.f32.mrb[0].mxu0
  %v6044 = vadd.f32 0.0, %v6043
  %v6045 = vpop.f32.mrb[0].mxu0
  %6046 = vmatprep.mubr.f32.mxu0 0.0
  %6047 = vmatmul.mubr.f32.gmra.mrb[0].mxu0 %v5883
  %v6048 = vpop.f32.mrb[0].mxu0
  %v6049 = vadd.f32 0.0, %v6048
  %v6050 = vpop.f32.mrb[0].mxu0
  %6051 = vdwg.mxu0
  %v6053 = vsel %vm25, %v5770, 0
  %v6056 = vsel %vm25, %v5771, 0
  %v6059 = vsel %vm25, %v5772, 0
  %v6062 = vsel %vm25, %v5773, 0
  %v6065 = vsel %vm25, %v5774, 0
  %v6068 = vsel %vm25, %v5775, 0
  %v6071 = vsel %vm25, %v5776, 0
  %v6074 = vsel %vm25, %v5777, 0
  %v6077 = vsel %vm25, %v5778, 0
  %v6080 = vsel %vm25, %v5779, 0
  %v6083 = vsel %vm25, %v5780, 0
  %v6086 = vsel %vm25, %v5781, 0
  %v6089 = vsel %vm25, %v5782, 0
  %v6092 = vsel %vm25, %v5783, 0
  %v6095 = vsel %vm25, %v5784, 0
  %v6098 = vsel %vm25, %v5785, 0
  %v6101 = vsel %vm25, %v5786, 0
  %v6104 = vsel %vm25, %v5787, 0
  %v6107 = vsel %vm25, %v5788, 0
  %v6110 = vsel %vm25, %v5789, 0
  %v6112 = vsel %vm38, %v5767, 0
  %6114 = vmatprep.subr.mxu0 0.0
  %6115 = vmatpush1.msra.mxu0 %v5752
  %6116 = vmatprep.subr.mxu0 0.0
  %6117 = vmatpush1.msra.mxu0 %v5757
  %6118 = vmatprep.subr.mxu0 0.0
  %6119 = vmatpush1.msra.mxu0 %v5762
  %6120 = vmatprep.subr.mxu0 0.0
  %6121 = vmatpush1.msra.mxu0 %v6112
  %6122 = vmatprep.subr.mxu0 0.0
  %6123 = vmatpush1.msra.mxu0 0.0
  %6124 = vmatprep.subr.mxu0 0.0
  %6125 = vmatpush1.msra.mxu0 0.0
  %6126 = vmatprep.subr.mxu0 0.0
  %6127 = vmatpush1.msra.mxu0 0.0
  %6128 = vmatprep.subr.mxu0 0.0
  %6129 = vmatpush1.msra.mxu0 0.0
  %6130 = vmatprep.subr.mxu0 0.0
  %6131 = vmatpush1.msra.mxu0 0.0
  %6132 = vmatprep.subr.mxu0 0.0
  %6133 = vmatpush1.msra.mxu0 0.0
  %6134 = vmatprep.subr.mxu0 0.0
  %6135 = vmatpush1.msra.mxu0 0.0
  %6136 = vmatprep.subr.mxu0 0.0
  %6137 = vmatpush1.msra.mxu0 0.0
  %6138 = vmatprep.subr.mxu0 0.0
  %6139 = vmatpush1.msra.mxu0 0.0
  %6140 = vmatprep.subr.mxu0 0.0
  %6141 = vmatpush1.msra.mxu0 0.0
  %6142 = vmatprep.subr.mxu0 0.0
  %6143 = vmatpush1.msra.mxu0 0.0
  %6144 = vmatprep.subr.mxu0 0.0
  %6145 = vmatpush1.msra.mxu0 0.0
  %6146 = vmatprep.subr.mxu0 0.0
  %6147 = vmatpush1.msra.mxu0 0.0
  %6148 = vmatprep.subr.mxu0 0.0
  %6149 = vmatpush1.msra.mxu0 0.0
  %6150 = vmatprep.subr.mxu0 0.0
  %6151 = vmatpush1.msra.mxu0 0.0
  %6152 = vmatprep.subr.mxu0 0.0
  %6153 = vmatpush1.msra.mxu0 0.0
  %6154 = vmatprep.subr.mxu0 0.0
  %6155 = vmatpush1.msra.mxu0 0.0
  %6156 = vmatprep.subr.mxu0 0.0
  %6157 = vmatpush1.msra.mxu0 0.0
  %6158 = vmatprep.subr.mxu0 0.0
  %6159 = vmatpush1.msra.mxu0 0.0
  %6160 = vmatprep.subr.mxu0 0.0
  %6161 = vmatpush1.msra.mxu0 0.0
  %6162 = vmatprep.subr.mxu0 0.0
  %6163 = vmatpush1.msra.mxu0 0.0
  %6164 = vmatprep.subr.mxu0 0.0
  %6165 = vmatpush1.msra.mxu0 0.0
  %6166 = vmatprep.subr.mxu0 0.0
  %6167 = vmatpush1.msra.mxu0 0.0
  %6168 = vmatprep.subr.mxu0 0.0
  %6169 = vmatpush1.msra.mxu0 0.0
  %6170 = vmatprep.subr.mxu0 0.0
  %6171 = vmatpush1.msra.mxu0 0.0
  %6172 = vmatprep.subr.mxu0 0.0
  %6173 = vmatpush1.msra.mxu0 0.0
  %6174 = vmatprep.subr.mxu0 0.0
  %6175 = vmatpush1.msra.mxu0 0.0
  %6176 = vmatprep.subr.mxu0 0.0
  %6177 = vmatpush1.msra.mxu0 0.0
  %6178 = vmatprep.mubr.f32.mxu0 0.0
  %6179 = vmatmul.mubr.f32.gmra.mrb[0].mxu0 %v6053
  %v6180 = vpop.f32.mrb[0].mxu0
  %v6181 = vadd.f32 %v5954, %v6180
  %v6182 = vpop.f32.mrb[0].mxu0
  %6183 = vmatprep.mubr.f32.mxu0 0.0
  %6184 = vmatmul.mubr.f32.gmra.mrb[0].mxu0 %v6056
  %v6185 = vpop.f32.mrb[0].mxu0
  %v6186 = vadd.f32 %v5959, %v6185
  %v6187 = vpop.f32.mrb[0].mxu0
  %6188 = vmatprep.mubr.f32.mxu0 0.0
  %6189 = vmatmul.mubr.f32.gmra.mrb[0].mxu0 %v6059
  %v6190 = vpop.f32.mrb[0].mxu0
  %v6191 = vadd.f32 %v5964, %v6190
  %v6192 = vpop.f32.mrb[0].mxu0
  %6193 = vmatprep.mubr.f32.mxu0 0.0
  %6194 = vmatmul.mubr.f32.gmra.mrb[0].mxu0 %v6062
  %v6195 = vpop.f32.mrb[0].mxu0
  %v6196 = vadd.f32 %v5969, %v6195
  %v6197 = vpop.f32.mrb[0].mxu0
  %6198 = vmatprep.mubr.f32.mxu0 0.0
  %6199 = vmatmul.mubr.f32.gmra.mrb[0].mxu0 %v6065
  %v6200 = vpop.f32.mrb[0].mxu0
  %v6201 = vadd.f32 %v5974, %v6200
  %v6202 = vpop.f32.mrb[0].mxu0
  %6203 = vmatprep.mubr.f32.mxu0 0.0
  %6204 = vmatmul.mubr.f32.gmra.mrb[0].mxu0 %v6068
  %v6205 = vpop.f32.mrb[0].mxu0
  %v6206 = vadd.f32 %v5979, %v6205
  %v6207 = vpop.f32.mrb[0].mxu0
  %6208 = vmatprep.mubr.f32.mxu0 0.0
  %6209 = vmatmul.mubr.f32.gmra.mrb[0].mxu0 %v6071
  %v6210 = vpop.f32.mrb[0].mxu0
  %v6211 = vadd.f32 %v5984, %v6210
  %v6212 = vpop.f32.mrb[0].mxu0
  %6213 = vmatprep.mubr.f32.mxu0 0.0
  %6214 = vmatmul.mubr.f32.gmra.mrb[0].mxu0 %v6074
  %v6215 = vpop.f32.mrb[0].mxu0
  %v6216 = vadd.f32 %v5989, %v6215
  %v6217 = vpop.f32.mrb[0].mxu0
  %6218 = vmatprep.mubr.f32.mxu0 0.0
  %6219 = vmatmul.mubr.f32.gmra.mrb[0].mxu0 %v6077
  %v6220 = vpop.f32.mrb[0].mxu0
  %v6221 = vadd.f32 %v5994, %v6220
  %v6222 = vpop.f32.mrb[0].mxu0
  %6223 = vmatprep.mubr.f32.mxu0 0.0
  %6224 = vmatmul.mubr.f32.gmra.mrb[0].mxu0 %v6080
  %v6225 = vpop.f32.mrb[0].mxu0
  %v6226 = vadd.f32 %v5999, %v6225
  %v6227 = vpop.f32.mrb[0].mxu0
  %6228 = vmatprep.mubr.f32.mxu0 0.0
  %6229 = vmatmul.mubr.f32.gmra.mrb[0].mxu0 %v6083
  %v6230 = vpop.f32.mrb[0].mxu0
  %v6231 = vadd.f32 %v6004, %v6230
  %v6232 = vpop.f32.mrb[0].mxu0
  %6233 = vmatprep.mubr.f32.mxu0 0.0
  %6234 = vmatmul.mubr.f32.gmra.mrb[0].mxu0 %v6086
  %v6235 = vpop.f32.mrb[0].mxu0
  %v6236 = vadd.f32 %v6009, %v6235
  %v6237 = vpop.f32.mrb[0].mxu0
  %6238 = vmatprep.mubr.f32.mxu0 0.0
  %6239 = vmatmul.mubr.f32.gmra.mrb[0].mxu0 %v6089
  %v6240 = vpop.f32.mrb[0].mxu0
  %v6241 = vadd.f32 %v6014, %v6240
  %v6242 = vpop.f32.mrb[0].mxu0
  %6243 = vmatprep.mubr.f32.mxu0 0.0
  %6244 = vmatmul.mubr.f32.gmra.mrb[0].mxu0 %v6092
  %v6245 = vpop.f32.mrb[0].mxu0
  %v6246 = vadd.f32 %v6019, %v6245
  %v6247 = vpop.f32.mrb[0].mxu0
  %6248 = vmatprep.mubr.f32.mxu0 0.0
  %6249 = vmatmul.mubr.f32.gmra.mrb[0].mxu0 %v6095
  %v6250 = vpop.f32.mrb[0].mxu0
  %v6251 = vadd.f32 %v6024, %v6250
  %v6252 = vpop.f32.mrb[0].mxu0
  %6253 = vmatprep.mubr.f32.mxu0 0.0
  %6254 = vmatmul.mubr.f32.gmra.mrb[0].mxu0 %v6098
  %v6255 = vpop.f32.mrb[0].mxu0
  %v6256 = vadd.f32 %v6029, %v6255
  %v6257 = vpop.f32.mrb[0].mxu0
  %6258 = vmatprep.mubr.f32.mxu0 0.0
  %6259 = vmatmul.mubr.f32.gmra.mrb[0].mxu0 %v6101
  %v6260 = vpop.f32.mrb[0].mxu0
  %v6261 = vadd.f32 %v6034, %v6260
  %v6262 = vpop.f32.mrb[0].mxu0
  %6263 = vmatprep.mubr.f32.mxu0 0.0
  %6264 = vmatmul.mubr.f32.gmra.mrb[0].mxu0 %v6104
  %v6265 = vpop.f32.mrb[0].mxu0
  %v6266 = vadd.f32 %v6039, %v6265
  %v6267 = vpop.f32.mrb[0].mxu0
  %6268 = vmatprep.mubr.f32.mxu0 0.0
  %6269 = vmatmul.mubr.f32.gmra.mrb[0].mxu0 %v6107
  %v6270 = vpop.f32.mrb[0].mxu0
  %v6271 = vadd.f32 %v6044, %v6270
  %v6272 = vpop.f32.mrb[0].mxu0
  %6273 = vmatprep.mubr.f32.mxu0 0.0
  %6274 = vmatmul.mubr.f32.gmra.mrb[0].mxu0 %v6110
  %v6275 = vpop.f32.mrb[0].mxu0
  %v6276 = vadd.f32 %v6049, %v6275
  %v6277 = vpop.f32.mrb[0].mxu0
  %6278 = vdwg.mxu0
  %v6279 = vld [vmem:[%s1 + $0x280] sm:$0xff]
  %v6280 = vld [vmem:[%s1 + $0x290] sm:$0xff]
  %v6281 = vld [vmem:[%s1 + $0x2a0] sm:$0xff]
  %v6282 = vld [vmem:[%s1 + $0x2b0] sm:$0xff]
  %v6283 = vld [vmem:[%s1 + $0x2c0] sm:$0xff]
  %v6284 = vld [vmem:[%s1 + $0x2d0] sm:$0xff]
  %v6285 = vld [vmem:[%s1 + $0x2e0] sm:$0xff]
  %v6286 = vld [vmem:[%s1 + $0x2f0] sm:$0xff]
  %v6287 = vld [vmem:[%s1 + $0x300] sm:$0xff]
  %v6288 = vld [vmem:[%s1 + $0x310] sm:$0xff]
  %v6289 = vld [vmem:[%s1 + $0x320] sm:$0xff]
  %v6290 = vld [vmem:[%s1 + $0x330] sm:$0xff]
  %v6291 = vld [vmem:[%s1 + $0x340] sm:$0xff]
  %v6292 = vld [vmem:[%s1 + $0x350] sm:$0xff]
  %v6293 = vld [vmem:[%s1 + $0x360] sm:$0xff]
  %v6294 = vld [vmem:[%s1 + $0x370] sm:$0xff]
  %v6295 = vld [vmem:[%s1 + $0x380] sm:$0xff]
  %v6296 = vld [vmem:[%s1 + $0x390] sm:$0xff]
  %v6297 = vld [vmem:[%s1 + $0x3a0] sm:$0xff]
  %v6298 = vld [vmem:[%s1 + $0x3b0] sm:$0xff]
  %6299 = vrot.lane.b32.xlu0 %v5752, 108
  %v6300 = vpop.permute.xlu0 %6299
  %6301 = vrot.lane.b32.xlu0 %v5757, 108
  %v6302 = vpop.permute.xlu0 %6301
  %6303 = vrot.lane.b32.xlu0 %v5762, 108
  %v6304 = vpop.permute.xlu0 %6303
  %6305 = vrot.lane.b32.xlu0 %v5767, 108
  %v6306 = vpop.permute.xlu0 %6305
  %v6311 = vsel %vm25, %v6279, 0
  %v6314 = vsel %vm25, %v6280, 0
  %v6317 = vsel %vm25, %v6281, 0
  %v6320 = vsel %vm25, %v6282, 0
  %v6323 = vsel %vm25, %v6283, 0
  %v6326 = vsel %vm25, %v6284, 0
  %v6329 = vsel %vm25, %v6285, 0
  %v6332 = vsel %vm25, %v6286, 0
  %v6335 = vsel %vm25, %v6287, 0
  %v6338 = vsel %vm25, %v6288, 0
  %v6341 = vsel %vm25, %v6289, 0
  %v6344 = vsel %vm25, %v6290, 0
  %v6347 = vsel %vm25, %v6291, 0
  %v6350 = vsel %vm25, %v6292, 0
  %v6353 = vsel %vm25, %v6293, 0
  %v6356 = vsel %vm25, %v6294, 0
  %v6359 = vsel %vm25, %v6295, 0
  %v6362 = vsel %vm25, %v6296, 0
  %v6365 = vsel %vm25, %v6297, 0
  %v6368 = vsel %vm25, %v6298, 0
  %v6370 = vsel %vm38, %v6306, 0
  %6372 = vmatprep.subr.mxu0 0.0
  %6373 = vmatpush1.msra.mxu0 %v6300
  %6374 = vmatprep.subr.mxu0 0.0
  %6375 = vmatpush1.msra.mxu0 %v6302
  %6376 = vmatprep.subr.mxu0 0.0
  %6377 = vmatpush1.msra.mxu0 %v6304
  %6378 = vmatprep.subr.mxu0 0.0
  %6379 = vmatpush1.msra.mxu0 %v6370
  %6380 = vmatprep.subr.mxu0 0.0
  %6381 = vmatpush1.msra.mxu0 0.0
  %6382 = vmatprep.subr.mxu0 0.0
  %6383 = vmatpush1.msra.mxu0 0.0
  %6384 = vmatprep.subr.mxu0 0.0
  %6385 = vmatpush1.msra.mxu0 0.0
  %6386 = vmatprep.subr.mxu0 0.0
  %6387 = vmatpush1.msra.mxu0 0.0
  %6388 = vmatprep.subr.mxu0 0.0
  %6389 = vmatpush1.msra.mxu0 0.0
  %6390 = vmatprep.subr.mxu0 0.0
  %6391 = vmatpush1.msra.mxu0 0.0
  %6392 = vmatprep.subr.mxu0 0.0
  %6393 = vmatpush1.msra.mxu0 0.0
  %6394 = vmatprep.subr.mxu0 0.0
  %6395 = vmatpush1.msra.mxu0 0.0
  %6396 = vmatprep.subr.mxu0 0.0
  %6397 = vmatpush1.msra.mxu0 0.0
  %6398 = vmatprep.subr.mxu0 0.0
  %6399 = vmatpush1.msra.mxu0 0.0
  %6400 = vmatprep.subr.mxu0 0.0
  %6401 = vmatpush1.msra.mxu0 0.0
  %6402 = vmatprep.subr.mxu0 0.0
  %6403 = vmatpush1.msra.mxu0 0.0
  %6404 = vmatprep.subr.mxu0 0.0
  %6405 = vmatpush1.msra.mxu0 0.0
  %6406 = vmatprep.subr.mxu0 0.0
  %6407 = vmatpush1.msra.mxu0 0.0
  %6408 = vmatprep.subr.mxu0 0.0
  %6409 = vmatpush1.msra.mxu0 0.0
  %6410 = vmatprep.subr.mxu0 0.0
  %6411 = vmatpush1.msra.mxu0 0.0
  %6412 = vmatprep.subr.mxu0 0.0
  %6413 = vmatpush1.msra.mxu0 0.0
  %6414 = vmatprep.subr.mxu0 0.0
  %6415 = vmatpush1.msra.mxu0 0.0
  %6416 = vmatprep.subr.mxu0 0.0
  %6417 = vmatpush1.msra.mxu0 0.0
  %6418 = vmatprep.subr.mxu0 0.0
  %6419 = vmatpush1.msra.mxu0 0.0
  %6420 = vmatprep.subr.mxu0 0.0
  %6421 = vmatpush1.msra.mxu0 0.0
  %6422 = vmatprep.subr.mxu0 0.0
  %6423 = vmatpush1.msra.mxu0 0.0
  %6424 = vmatprep.subr.mxu0 0.0
  %6425 = vmatpush1.msra.mxu0 0.0
  %6426 = vmatprep.subr.mxu0 0.0
  %6427 = vmatpush1.msra.mxu0 0.0
  %6428 = vmatprep.subr.mxu0 0.0
  %6429 = vmatpush1.msra.mxu0 0.0
  %6430 = vmatprep.subr.mxu0 0.0
  %6431 = vmatpush1.msra.mxu0 0.0
  %6432 = vmatprep.subr.mxu0 0.0
  %6433 = vmatpush1.msra.mxu0 0.0
  %6434 = vmatprep.subr.mxu0 0.0
  %6435 = vmatpush1.msra.mxu0 0.0
  %6436 = vmatprep.mubr.f32.mxu0 0.0
  %6437 = vmatmul.mubr.f32.gmra.mrb[0].mxu0 %v6311
  %v6438 = vpop.f32.mrb[0].mxu0
  %v6439 = vadd.f32 0.0, %v6438
  %v6440 = vpop.f32.mrb[0].mxu0
  %6441 = vmatprep.mubr.f32.mxu0 0.0
  %6442 = vmatmul.mubr.f32.gmra.mrb[0].mxu0 %v6314
  %v6443 = vpop.f32.mrb[0].mxu0
  %v6444 = vadd.f32 0.0, %v6443
  %v6445 = vpop.f32.mrb[0].mxu0
  %6446 = vmatprep.mubr.f32.mxu0 0.0
  %6447 = vmatmul.mubr.f32.gmra.mrb[0].mxu0 %v6317
  %v6448 = vpop.f32.mrb[0].mxu0
  %v6449 = vadd.f32 0.0, %v6448
  %v6450 = vpop.f32.mrb[0].mxu0
  %6451 = vmatprep.mubr.f32.mxu0 0.0
  %6452 = vmatmul.mubr.f32.gmra.mrb[0].mxu0 %v6320
  %v6453 = vpop.f32.mrb[0].mxu0
  %v6454 = vadd.f32 0.0, %v6453
  %v6455 = vpop.f32.mrb[0].mxu0
  %6456 = vmatprep.mubr.f32.mxu0 0.0
  %6457 = vmatmul.mubr.f32.gmra.mrb[0].mxu0 %v6323
  %v6458 = vpop.f32.mrb[0].mxu0
  %v6459 = vadd.f32 0.0, %v6458
  %v6460 = vpop.f32.mrb[0].mxu0
  %6461 = vmatprep.mubr.f32.mxu0 0.0
  %6462 = vmatmul.mubr.f32.gmra.mrb[0].mxu0 %v6326
  %v6463 = vpop.f32.mrb[0].mxu0
  %v6464 = vadd.f32 0.0, %v6463
  %v6465 = vpop.f32.mrb[0].mxu0
  %6466 = vmatprep.mubr.f32.mxu0 0.0
  %6467 = vmatmul.mubr.f32.gmra.mrb[0].mxu0 %v6329
  %v6468 = vpop.f32.mrb[0].mxu0
  %v6469 = vadd.f32 0.0, %v6468
  %v6470 = vpop.f32.mrb[0].mxu0
  %6471 = vmatprep.mubr.f32.mxu0 0.0
  %6472 = vmatmul.mubr.f32.gmra.mrb[0].mxu0 %v6332
  %v6473 = vpop.f32.mrb[0].mxu0
  %v6474 = vadd.f32 0.0, %v6473
  %v6475 = vpop.f32.mrb[0].mxu0
  %6476 = vmatprep.mubr.f32.mxu0 0.0
  %6477 = vmatmul.mubr.f32.gmra.mrb[0].mxu0 %v6335
  %v6478 = vpop.f32.mrb[0].mxu0
  %v6479 = vadd.f32 0.0, %v6478
  %v6480 = vpop.f32.mrb[0].mxu0
  %6481 = vmatprep.mubr.f32.mxu0 0.0
  %6482 = vmatmul.mubr.f32.gmra.mrb[0].mxu0 %v6338
  %v6483 = vpop.f32.mrb[0].mxu0
  %v6484 = vadd.f32 0.0, %v6483
  %v6485 = vpop.f32.mrb[0].mxu0
  %6486 = vmatprep.mubr.f32.mxu0 0.0
  %6487 = vmatmul.mubr.f32.gmra.mrb[0].mxu0 %v6341
  %v6488 = vpop.f32.mrb[0].mxu0
  %v6489 = vadd.f32 0.0, %v6488
  %v6490 = vpop.f32.mrb[0].mxu0
  %6491 = vmatprep.mubr.f32.mxu0 0.0
  %6492 = vmatmul.mubr.f32.gmra.mrb[0].mxu0 %v6344
  %v6493 = vpop.f32.mrb[0].mxu0
  %v6494 = vadd.f32 0.0, %v6493
  %v6495 = vpop.f32.mrb[0].mxu0
  %6496 = vmatprep.mubr.f32.mxu0 0.0
  %6497 = vmatmul.mubr.f32.gmra.mrb[0].mxu0 %v6347
  %v6498 = vpop.f32.mrb[0].mxu0
  %v6499 = vadd.f32 0.0, %v6498
  %v6500 = vpop.f32.mrb[0].mxu0
  %6501 = vmatprep.mubr.f32.mxu0 0.0
  %6502 = vmatmul.mubr.f32.gmra.mrb[0].mxu0 %v6350
  %v6503 = vpop.f32.mrb[0].mxu0
  %v6504 = vadd.f32 0.0, %v6503
  %v6505 = vpop.f32.mrb[0].mxu0
  %6506 = vmatprep.mubr.f32.mxu0 0.0
  %6507 = vmatmul.mubr.f32.gmra.mrb[0].mxu0 %v6353
  %v6508 = vpop.f32.mrb[0].mxu0
  %v6509 = vadd.f32 0.0, %v6508
  %v6510 = vpop.f32.mrb[0].mxu0
  %6511 = vmatprep.mubr.f32.mxu0 0.0
  %6512 = vmatmul.mubr.f32.gmra.mrb[0].mxu0 %v6356
  %v6513 = vpop.f32.mrb[0].mxu0
  %v6514 = vadd.f32 0.0, %v6513
  %v6515 = vpop.f32.mrb[0].mxu0
  %6516 = vmatprep.mubr.f32.mxu0 0.0
  %6517 = vmatmul.mubr.f32.gmra.mrb[0].mxu0 %v6359
  %v6518 = vpop.f32.mrb[0].mxu0
  %v6519 = vadd.f32 0.0, %v6518
  %v6520 = vpop.f32.mrb[0].mxu0
  %6521 = vmatprep.mubr.f32.mxu0 0.0
  %6522 = vmatmul.mubr.f32.gmra.mrb[0].mxu0 %v6362
  %v6523 = vpop.f32.mrb[0].mxu0
  %v6524 = vadd.f32 0.0, %v6523
  %v6525 = vpop.f32.mrb[0].mxu0
  %6526 = vmatprep.mubr.f32.mxu0 0.0
  %6527 = vmatmul.mubr.f32.gmra.mrb[0].mxu0 %v6365
  %v6528 = vpop.f32.mrb[0].mxu0
  %v6529 = vadd.f32 0.0, %v6528
  %v6530 = vpop.f32.mrb[0].mxu0
  %6531 = vmatprep.mubr.f32.mxu0 0.0
  %6532 = vmatmul.mubr.f32.gmra.mrb[0].mxu0 %v6368
  %v6533 = vpop.f32.mrb[0].mxu0
  %v6534 = vadd.f32 0.0, %v6533
  %v6535 = vpop.f32.mrb[0].mxu0
  %6536 = vdwg.mxu0
  %v6537 = vadd.f32 %v6181, %v6439
  %v6538 = vadd.f32 %v6186, %v6444
  %v6539 = vadd.f32 %v6191, %v6449
  %v6540 = vadd.f32 %v6196, %v6454
  %v6541 = vadd.f32 %v6201, %v6459
  %v6542 = vadd.f32 %v6206, %v6464
  %v6543 = vadd.f32 %v6211, %v6469
  %v6544 = vadd.f32 %v6216, %v6474
  %v6545 = vadd.f32 %v6221, %v6479
  %v6546 = vadd.f32 %v6226, %v6484
  %v6547 = vadd.f32 %v6231, %v6489
  %v6548 = vadd.f32 %v6236, %v6494
  %v6549 = vadd.f32 %v6241, %v6499
  %v6550 = vadd.f32 %v6246, %v6504
  %v6551 = vadd.f32 %v6251, %v6509
  %v6552 = vadd.f32 %v6256, %v6514
  %v6553 = vadd.f32 %v6261, %v6519
  %v6554 = vadd.f32 %v6266, %v6524
  %v6555 = vadd.f32 %v6271, %v6529
  %v6556 = vadd.f32 %v6276, %v6534
  %v6557 = vld [vmem:[%s3] sm:$0xff]
  %v6558 = vld [vmem:[%s3 + $0x8] sm:$0xff]
  %v6559 = vld [vmem:[%s3 + $0x10] sm:$0xff]
  %v6560 = vld [vmem:[%s3 + $0x18] sm:$0xff]
  %v6561 = vld [vmem:[%s3 + $0x20] sm:$0xff]
  %v6562 = vld [vmem:[%s3 + $0x28] sm:$0xff]
  %v6563 = vld [vmem:[%s3 + $0x30] sm:$0xff]
  %v6564 = vld [vmem:[%s3 + $0x38] sm:$0xff]
  %v6565 = vld [vmem:[%s3 + $0x40] sm:$0xff]
  %v6566 = vld [vmem:[%s3 + $0x48] sm:$0xff]
  %v6567 = vld [vmem:[%s3 + $0x50] sm:$0xff]
  %v6568 = vld [vmem:[%s3 + $0x58] sm:$0xff]
  %v6569 = vld [vmem:[%s3 + $0x60] sm:$0xff]
  %v6570 = vld [vmem:[%s3 + $0x68] sm:$0xff]
  %v6571 = vld [vmem:[%s3 + $0x70] sm:$0xff]
  %v6572 = vld [vmem:[%s3 + $0x78] sm:$0xff]
  %v6573 = vld [vmem:[%s3 + $0x80] sm:$0xff]
  %v6574 = vld [vmem:[%s3 + $0x88] sm:$0xff]
  %v6575 = vld [vmem:[%s3 + $0x90] sm:$0xff]
  %v6576 = vld [vmem:[%s3 + $0x98] sm:$0xff]
  %6578 = vset.pattern.permute.xlu0 0
  %6579 = vperm.xlu0 %6578, %v6557
  %v6580 = vpop.permute.xlu0 %6579
  %6583 = vset.pattern.permute.xlu0 0
  %6584 = vperm.xlu0 %6583, %v6558
  %v6585 = vpop.permute.xlu0 %6584
  %6588 = vset.pattern.permute.xlu0 0
  %6589 = vperm.xlu0 %6588, %v6559
  %v6590 = vpop.permute.xlu0 %6589
  %6593 = vset.pattern.permute.xlu0 0
  %6594 = vperm.xlu0 %6593, %v6560
  %v6595 = vpop.permute.xlu0 %6594
  %6598 = vset.pattern.permute.xlu0 0
  %6599 = vperm.xlu0 %6598, %v6561
  %v6600 = vpop.permute.xlu0 %6599
  %6603 = vset.pattern.permute.xlu0 0
  %6604 = vperm.xlu0 %6603, %v6562
  %v6605 = vpop.permute.xlu0 %6604
  %6608 = vset.pattern.permute.xlu0 0
  %6609 = vperm.xlu0 %6608, %v6563
  %v6610 = vpop.permute.xlu0 %6609
  %6613 = vset.pattern.permute.xlu0 0
  %6614 = vperm.xlu0 %6613, %v6564
  %v6615 = vpop.permute.xlu0 %6614
  %6618 = vset.pattern.permute.xlu0 0
  %6619 = vperm.xlu0 %6618, %v6565
  %v6620 = vpop.permute.xlu0 %6619
  %6623 = vset.pattern.permute.xlu0 0
  %6624 = vperm.xlu0 %6623, %v6566
  %v6625 = vpop.permute.xlu0 %6624
  %6628 = vset.pattern.permute.xlu0 0
  %6629 = vperm.xlu0 %6628, %v6567
  %v6630 = vpop.permute.xlu0 %6629
  %6633 = vset.pattern.permute.xlu0 0
  %6634 = vperm.xlu0 %6633, %v6568
  %v6635 = vpop.permute.xlu0 %6634
  %6638 = vset.pattern.permute.xlu0 0
  %6639 = vperm.xlu0 %6638, %v6569
  %v6640 = vpop.permute.xlu0 %6639
  %6643 = vset.pattern.permute.xlu0 0
  %6644 = vperm.xlu0 %6643, %v6570
  %v6645 = vpop.permute.xlu0 %6644
  %6648 = vset.pattern.permute.xlu0 0
  %6649 = vperm.xlu0 %6648, %v6571
  %v6650 = vpop.permute.xlu0 %6649
  %6653 = vset.pattern.permute.xlu0 0
  %6654 = vperm.xlu0 %6653, %v6572
  %v6655 = vpop.permute.xlu0 %6654
  %6658 = vset.pattern.permute.xlu0 0
  %6659 = vperm.xlu0 %6658, %v6573
  %v6660 = vpop.permute.xlu0 %6659
  %6663 = vset.pattern.permute.xlu0 0
  %6664 = vperm.xlu0 %6663, %v6574
  %v6665 = vpop.permute.xlu0 %6664
  %6668 = vset.pattern.permute.xlu0 0
  %6669 = vperm.xlu0 %6668, %v6575
  %v6670 = vpop.permute.xlu0 %6669
  %6673 = vset.pattern.permute.xlu0 0
  %6674 = vperm.xlu0 %6673, %v6576
  %v6675 = vpop.permute.xlu0 %6674
  %v6677 = vadd.f32 %v6537, %v6580
  %v6678 = vadd.f32 %v6538, %v6585
  %v6679 = vadd.f32 %v6539, %v6590
  %v6680 = vadd.f32 %v6540, %v6595
  %v6681 = vadd.f32 %v6541, %v6600
  %v6682 = vadd.f32 %v6542, %v6605
  %v6683 = vadd.f32 %v6543, %v6610
  %v6684 = vadd.f32 %v6544, %v6615
  %v6685 = vadd.f32 %v6545, %v6620
  %v6686 = vadd.f32 %v6546, %v6625
  %v6687 = vadd.f32 %v6547, %v6630
  %v6688 = vadd.f32 %v6548, %v6635
  %v6689 = vadd.f32 %v6549, %v6640
  %v6690 = vadd.f32 %v6550, %v6645
  %v6691 = vadd.f32 %v6551, %v6650
  %v6692 = vadd.f32 %v6552, %v6655
  %v6693 = vadd.f32 %v6553, %v6660
  %v6694 = vadd.f32 %v6554, %v6665
  %v6695 = vadd.f32 %v6555, %v6670
  %v6696 = vadd.f32 %v6556, %v6675
  %v6697 = vmax.f32 %v6677, 0.0
  %v6698 = vmax.f32 %v6678, 0.0
  %v6699 = vmax.f32 %v6679, 0.0
  %v6700 = vmax.f32 %v6680, 0.0
  %v6701 = vmax.f32 %v6681, 0.0
  %v6702 = vmax.f32 %v6682, 0.0
  %v6703 = vmax.f32 %v6683, 0.0
  %v6704 = vmax.f32 %v6684, 0.0
  %v6705 = vmax.f32 %v6685, 0.0
  %v6706 = vmax.f32 %v6686, 0.0
  %v6707 = vmax.f32 %v6687, 0.0
  %v6708 = vmax.f32 %v6688, 0.0
  %v6709 = vmax.f32 %v6689, 0.0
  %v6710 = vmax.f32 %v6690, 0.0
  %v6711 = vmax.f32 %v6691, 0.0
  %v6712 = vmax.f32 %v6692, 0.0
  %v6713 = vmax.f32 %v6693, 0.0
  %v6714 = vmax.f32 %v6694, 0.0
  %v6715 = vmax.f32 %v6695, 0.0
  %v6716 = vmax.f32 %v6696, 0.0
  %v6717 = vld [vmem:[%s2 + $0x20] sm:$0xff]
  %v6718 = vld [vmem:[%s2 + $0x28] sm:$0x3]
  %v6720 = vsel %vm1076, %v6697, 0
  %v6723 = vsel %vm1076, %v6698, 0
  %v6726 = vsel %vm1076, %v6699, 0
  %v6729 = vsel %vm1076, %v6700, 0
  %v6732 = vsel %vm1076, %v6701, 0
  %v6735 = vsel %vm1076, %v6702, 0
  %v6738 = vsel %vm1076, %v6703, 0
  %v6741 = vsel %vm1076, %v6704, 0
  %v6744 = vsel %vm1076, %v6705, 0
  %v6747 = vsel %vm1076, %v6706, 0
  %v6750 = vsel %vm1076, %v6707, 0
  %v6753 = vsel %vm1076, %v6708, 0
  %v6756 = vsel %vm1076, %v6709, 0
  %v6759 = vsel %vm1076, %v6710, 0
  %v6762 = vsel %vm1076, %v6711, 0
  %v6765 = vsel %vm1076, %v6712, 0
  %v6768 = vsel %vm1076, %v6713, 0
  %v6771 = vsel %vm1076, %v6714, 0
  %v6774 = vsel %vm1076, %v6715, 0
  %v6777 = vsel %vm1076, %v6716, 0
  %v6780 = vsel %vm1137, %v6718, 0
  %6782 = vmatprep.subr.mxu0 0.0
  %6783 = vmatpush1.msra.mxu0 %v6717
  %6784 = vmatprep.subr.mxu0 0.0
  %6785 = vmatpush1.msra.mxu0 %v6780
  %6786 = vmatprep.subr.mxu0 0.0
  %6787 = vmatpush1.msra.mxu0 0.0
  %6788 = vmatprep.subr.mxu0 0.0
  %6789 = vmatpush1.msra.mxu0 0.0
  %6790 = vmatprep.subr.mxu0 0.0
  %6791 = vmatpush1.msra.mxu0 0.0
  %6792 = vmatprep.subr.mxu0 0.0
  %6793 = vmatpush1.msra.mxu0 0.0
  %6794 = vmatprep.subr.mxu0 0.0
  %6795 = vmatpush1.msra.mxu0 0.0
  %6796 = vmatprep.subr.mxu0 0.0
  %6797 = vmatpush1.msra.mxu0 0.0
  %6798 = vmatprep.subr.mxu0 0.0
  %6799 = vmatpush1.msra.mxu0 0.0
  %6800 = vmatprep.subr.mxu0 0.0
  %6801 = vmatpush1.msra.mxu0 0.0
  %6802 = vmatprep.subr.mxu0 0.0
  %6803 = vmatpush1.msra.mxu0 0.0
  %6804 = vmatprep.subr.mxu0 0.0
  %6805 = vmatpush1.msra.mxu0 0.0
  %6806 = vmatprep.subr.mxu0 0.0
  %6807 = vmatpush1.msra.mxu0 0.0
  %6808 = vmatprep.subr.mxu0 0.0
  %6809 = vmatpush1.msra.mxu0 0.0
  %6810 = vmatprep.subr.mxu0 0.0
  %6811 = vmatpush1.msra.mxu0 0.0
  %6812 = vmatprep.subr.mxu0 0.0
  %6813 = vmatpush1.msra.mxu0 0.0
  %6814 = vmatprep.subr.mxu0 0.0
  %6815 = vmatpush1.msra.mxu0 0.0
  %6816 = vmatprep.subr.mxu0 0.0
  %6817 = vmatpush1.msra.mxu0 0.0
  %6818 = vmatprep.subr.mxu0 0.0
  %6819 = vmatpush1.msra.mxu0 0.0
  %6820 = vmatprep.subr.mxu0 0.0
  %6821 = vmatpush1.msra.mxu0 0.0
  %6822 = vmatprep.subr.mxu0 0.0
  %6823 = vmatpush1.msra.mxu0 0.0
  %6824 = vmatprep.subr.mxu0 0.0
  %6825 = vmatpush1.msra.mxu0 0.0
  %6826 = vmatprep.subr.mxu0 0.0
  %6827 = vmatpush1.msra.mxu0 0.0
  %6828 = vmatprep.subr.mxu0 0.0
  %6829 = vmatpush1.msra.mxu0 0.0
  %6830 = vmatprep.subr.mxu0 0.0
  %6831 = vmatpush1.msra.mxu0 0.0
  %6832 = vmatprep.subr.mxu0 0.0
  %6833 = vmatpush1.msra.mxu0 0.0
  %6834 = vmatprep.subr.mxu0 0.0
  %6835 = vmatpush1.msra.mxu0 0.0
  %6836 = vmatprep.subr.mxu0 0.0
  %6837 = vmatpush1.msra.mxu0 0.0
  %6838 = vmatprep.subr.mxu0 0.0
  %6839 = vmatpush1.msra.mxu0 0.0
  %6840 = vmatprep.subr.mxu0 0.0
  %6841 = vmatpush1.msra.mxu0 0.0
  %6842 = vmatprep.subr.mxu0 0.0
  %6843 = vmatpush1.msra.mxu0 0.0
  %6844 = vmatprep.subr.mxu0 0.0
  %6845 = vmatpush1.msra.mxu0 0.0
  %6846 = vmatprep.mubr.f32.mxu0 0.0
  %6847 = vmatmul.mubr.f32.gmra.mrb[0].mxu0 %v6720
  %v6848 = vpop.f32.mrb[0].mxu0
  %v6849 = vadd.f32 0.0, %v6848
  %v6850 = vpop.f32.mrb[0].mxu0
  %6851 = vmatprep.mubr.f32.mxu0 0.0
  %6852 = vmatmul.mubr.f32.gmra.mrb[0].mxu0 %v6723
  %v6853 = vpop.f32.mrb[0].mxu0
  %v6854 = vadd.f32 0.0, %v6853
  %v6855 = vpop.f32.mrb[0].mxu0
  %6856 = vmatprep.mubr.f32.mxu0 0.0
  %6857 = vmatmul.mubr.f32.gmra.mrb[0].mxu0 %v6726
  %v6858 = vpop.f32.mrb[0].mxu0
  %v6859 = vadd.f32 0.0, %v6858
  %v6860 = vpop.f32.mrb[0].mxu0
  %6861 = vmatprep.mubr.f32.mxu0 0.0
  %6862 = vmatmul.mubr.f32.gmra.mrb[0].mxu0 %v6729
  %v6863 = vpop.f32.mrb[0].mxu0
  %v6864 = vadd.f32 0.0, %v6863
  %v6865 = vpop.f32.mrb[0].mxu0
  %6866 = vmatprep.mubr.f32.mxu0 0.0
  %6867 = vmatmul.mubr.f32.gmra.mrb[0].mxu0 %v6732
  %v6868 = vpop.f32.mrb[0].mxu0
  %v6869 = vadd.f32 0.0, %v6868
  %v6870 = vpop.f32.mrb[0].mxu0
  %6871 = vmatprep.mubr.f32.mxu0 0.0
  %6872 = vmatmul.mubr.f32.gmra.mrb[0].mxu0 %v6735
  %v6873 = vpop.f32.mrb[0].mxu0
  %v6874 = vadd.f32 0.0, %v6873
  %v6875 = vpop.f32.mrb[0].mxu0
  %6876 = vmatprep.mubr.f32.mxu0 0.0
  %6877 = vmatmul.mubr.f32.gmra.mrb[0].mxu0 %v6738
  %v6878 = vpop.f32.mrb[0].mxu0
  %v6879 = vadd.f32 0.0, %v6878
  %v6880 = vpop.f32.mrb[0].mxu0
  %6881 = vmatprep.mubr.f32.mxu0 0.0
  %6882 = vmatmul.mubr.f32.gmra.mrb[0].mxu0 %v6741
  %v6883 = vpop.f32.mrb[0].mxu0
  %v6884 = vadd.f32 0.0, %v6883
  %v6885 = vpop.f32.mrb[0].mxu0
  %6886 = vmatprep.mubr.f32.mxu0 0.0
  %6887 = vmatmul.mubr.f32.gmra.mrb[0].mxu0 %v6744
  %v6888 = vpop.f32.mrb[0].mxu0
  %v6889 = vadd.f32 0.0, %v6888
  %v6890 = vpop.f32.mrb[0].mxu0
  %6891 = vmatprep.mubr.f32.mxu0 0.0
  %6892 = vmatmul.mubr.f32.gmra.mrb[0].mxu0 %v6747
  %v6893 = vpop.f32.mrb[0].mxu0
  %v6894 = vadd.f32 0.0, %v6893
  %v6895 = vpop.f32.mrb[0].mxu0
  %6896 = vmatprep.mubr.f32.mxu0 0.0
  %6897 = vmatmul.mubr.f32.gmra.mrb[0].mxu0 %v6750
  %v6898 = vpop.f32.mrb[0].mxu0
  %v6899 = vadd.f32 0.0, %v6898
  %v6900 = vpop.f32.mrb[0].mxu0
  %6901 = vmatprep.mubr.f32.mxu0 0.0
  %6902 = vmatmul.mubr.f32.gmra.mrb[0].mxu0 %v6753
  %v6903 = vpop.f32.mrb[0].mxu0
  %v6904 = vadd.f32 0.0, %v6903
  %v6905 = vpop.f32.mrb[0].mxu0
  %6906 = vmatprep.mubr.f32.mxu0 0.0
  %6907 = vmatmul.mubr.f32.gmra.mrb[0].mxu0 %v6756
  %v6908 = vpop.f32.mrb[0].mxu0
  %v6909 = vadd.f32 0.0, %v6908
  %v6910 = vpop.f32.mrb[0].mxu0
  %6911 = vmatprep.mubr.f32.mxu0 0.0
  %6912 = vmatmul.mubr.f32.gmra.mrb[0].mxu0 %v6759
  %v6913 = vpop.f32.mrb[0].mxu0
  %v6914 = vadd.f32 0.0, %v6913
  %v6915 = vpop.f32.mrb[0].mxu0
  %6916 = vmatprep.mubr.f32.mxu0 0.0
  %6917 = vmatmul.mubr.f32.gmra.mrb[0].mxu0 %v6762
  %v6918 = vpop.f32.mrb[0].mxu0
  %v6919 = vadd.f32 0.0, %v6918
  %v6920 = vpop.f32.mrb[0].mxu0
  %6921 = vmatprep.mubr.f32.mxu0 0.0
  %6922 = vmatmul.mubr.f32.gmra.mrb[0].mxu0 %v6765
  %v6923 = vpop.f32.mrb[0].mxu0
  %v6924 = vadd.f32 0.0, %v6923
  %v6925 = vpop.f32.mrb[0].mxu0
  %6926 = vmatprep.mubr.f32.mxu0 0.0
  %6927 = vmatmul.mubr.f32.gmra.mrb[0].mxu0 %v6768
  %v6928 = vpop.f32.mrb[0].mxu0
  %v6929 = vadd.f32 0.0, %v6928
  %v6930 = vpop.f32.mrb[0].mxu0
  %6931 = vmatprep.mubr.f32.mxu0 0.0
  %6932 = vmatmul.mubr.f32.gmra.mrb[0].mxu0 %v6771
  %v6933 = vpop.f32.mrb[0].mxu0
  %v6934 = vadd.f32 0.0, %v6933
  %v6935 = vpop.f32.mrb[0].mxu0
  %6936 = vmatprep.mubr.f32.mxu0 0.0
  %6937 = vmatmul.mubr.f32.gmra.mrb[0].mxu0 %v6774
  %v6938 = vpop.f32.mrb[0].mxu0
  %v6939 = vadd.f32 0.0, %v6938
  %v6940 = vpop.f32.mrb[0].mxu0
  %6941 = vmatprep.mubr.f32.mxu0 0.0
  %6942 = vmatmul.mubr.f32.gmra.mrb[0].mxu0 %v6777
  %v6943 = vpop.f32.mrb[0].mxu0
  %v6944 = vadd.f32 0.0, %v6943
  %v6945 = vpop.f32.mrb[0].mxu0
  %6946 = vdwg.mxu0
  %v6947 = vld [vmem:[%s1 + $0x3c0] sm:$0xff]
  %v6948 = vld [vmem:[%s1 + $0x3c8] sm:$0xff]
  %v6949 = vld [vmem:[%s1 + $0x3d0] sm:$0xff]
  %v6950 = vld [vmem:[%s1 + $0x3d8] sm:$0xff]
  %v6951 = vld [vmem:[%s1 + $0x3e0] sm:$0xff]
  %v6952 = vld [vmem:[%s1 + $0x3e8] sm:$0xff]
  %v6953 = vld [vmem:[%s1 + $0x3f0] sm:$0xff]
  %v6954 = vld [vmem:[%s1 + $0x3f8] sm:$0xff]
  %v6955 = vld [vmem:[%s1 + $0x400] sm:$0xff]
  %v6956 = vld [vmem:[%s1 + $0x408] sm:$0xff]
  %v6957 = vld [vmem:[%s1 + $0x410] sm:$0xff]
  %v6958 = vld [vmem:[%s1 + $0x418] sm:$0xff]
  %v6959 = vld [vmem:[%s1 + $0x420] sm:$0xff]
  %v6960 = vld [vmem:[%s1 + $0x428] sm:$0xff]
  %v6961 = vld [vmem:[%s1 + $0x430] sm:$0xff]
  %v6962 = vld [vmem:[%s1 + $0x438] sm:$0xff]
  %v6963 = vld [vmem:[%s1 + $0x440] sm:$0xff]
  %v6964 = vld [vmem:[%s1 + $0x448] sm:$0xff]
  %v6965 = vld [vmem:[%s1 + $0x450] sm:$0xff]
  %v6966 = vld [vmem:[%s1 + $0x458] sm:$0xff]
  %v6968 = vsel %vm1326, %v6948, 0
  %v6971 = vsel %vm1326, %v6950, 0
  %v6974 = vsel %vm1326, %v6952, 0
  %v6977 = vsel %vm1326, %v6954, 0
  %v6980 = vsel %vm1326, %v6956, 0
  %v6983 = vsel %vm1326, %v6958, 0
  %v6986 = vsel %vm1326, %v6960, 0
  %v6989 = vsel %vm1326, %v6962, 0
  %v6992 = vsel %vm1326, %v6964, 0
  %v6995 = vsel %vm1326, %v6966, 0
  %6997 = vmatprep.subr.mxu0 0.0
  %6998 = vmatpush1.msra.mxu0 %v6849
  %6999 = vmatprep.subr.mxu0 0.0
  %7000 = vmatpush1.msra.mxu0 %v6854
  %7001 = vmatprep.subr.mxu0 0.0
  %7002 = vmatpush1.msra.mxu0 %v6859
  %7003 = vmatprep.subr.mxu0 0.0
  %7004 = vmatpush1.msra.mxu0 %v6864
  %7005 = vmatprep.subr.mxu0 0.0
  %7006 = vmatpush1.msra.mxu0 %v6869
  %7007 = vmatprep.subr.mxu0 0.0
  %7008 = vmatpush1.msra.mxu0 %v6874
  %7009 = vmatprep.subr.mxu0 0.0
  %7010 = vmatpush1.msra.mxu0 %v6879
  %7011 = vmatprep.subr.mxu0 0.0
  %7012 = vmatpush1.msra.mxu0 %v6884
  %7013 = vmatprep.subr.mxu0 0.0
  %7014 = vmatpush1.msra.mxu0 %v6889
  %7015 = vmatprep.subr.mxu0 0.0
  %7016 = vmatpush1.msra.mxu0 %v6894
  %7017 = vmatprep.subr.mxu0 0.0
  %7018 = vmatpush1.msra.mxu0 %v6899
  %7019 = vmatprep.subr.mxu0 0.0
  %7020 = vmatpush1.msra.mxu0 %v6904
  %7021 = vmatprep.subr.mxu0 0.0
  %7022 = vmatpush1.msra.mxu0 %v6909
  %7023 = vmatprep.subr.mxu0 0.0
  %7024 = vmatpush1.msra.mxu0 %v6914
  %7025 = vmatprep.subr.mxu0 0.0
  %7026 = vmatpush1.msra.mxu0 %v6919
  %7027 = vmatprep.subr.mxu0 0.0
  %7028 = vmatpush1.msra.mxu0 %v6924
  %7029 = vmatprep.subr.mxu0 0.0
  %7030 = vmatpush1.msra.mxu0 %v6929
  %7031 = vmatprep.subr.mxu0 0.0
  %7032 = vmatpush1.msra.mxu0 %v6934
  %7033 = vmatprep.subr.mxu0 0.0
  %7034 = vmatpush1.msra.mxu0 %v6939
  %7035 = vmatprep.subr.mxu0 0.0
  %7036 = vmatpush1.msra.mxu0 %v6944
  %7037 = vmatprep.subr.mxu0 0.0
  %7038 = vmatpush1.msra.mxu0 0.0
  %7039 = vmatprep.subr.mxu0 0.0
  %7040 = vmatpush1.msra.mxu0 0.0
  %7041 = vmatprep.subr.mxu0 0.0
  %7042 = vmatpush1.msra.mxu0 0.0
  %7043 = vmatprep.subr.mxu0 0.0
  %7044 = vmatpush1.msra.mxu0 0.0
  %7045 = vmatprep.subr.mxu0 0.0
  %7046 = vmatpush1.msra.mxu0 0.0
  %7047 = vmatprep.subr.mxu0 0.0
  %7048 = vmatpush1.msra.mxu0 0.0
  %7049 = vmatprep.subr.mxu0 0.0
  %7050 = vmatpush1.msra.mxu0 0.0
  %7051 = vmatprep.subr.mxu0 0.0
  %7052 = vmatpush1.msra.mxu0 0.0
  %7053 = vmatprep.subr.mxu0 0.0
  %7054 = vmatpush1.msra.mxu0 0.0
  %7055 = vmatprep.subr.mxu0 0.0
  %7056 = vmatpush1.msra.mxu0 0.0
  %7057 = vmatprep.subr.mxu0 0.0
  %7058 = vmatpush1.msra.mxu0 0.0
  %7059 = vmatprep.subr.mxu0 0.0
  %7060 = vmatpush1.msra.mxu0 0.0
  %7061 = vmatprep.mubr.f32.mxu0 %v6968
  %7062 = vmatmul.mubr.f32.gmra.mrb[0].mxu0 %v6947
  %v7063 = vpop.f32.mrb[0].mxu0
  %v7064 = vadd.f32 0.0, %v7063
  %v7065 = vpop.f32.mrb[0].mxu0
  %7066 = vmatprep.mubr.f32.mxu0 %v6971
  %7067 = vmatmul.mubr.f32.gmra.mrb[0].mxu0 %v6949
  %v7068 = vpop.f32.mrb[0].mxu0
  %v7069 = vadd.f32 0.0, %v7068
  %v7070 = vpop.f32.mrb[0].mxu0
  %7071 = vmatprep.mubr.f32.mxu0 %v6974
  %7072 = vmatmul.mubr.f32.gmra.mrb[0].mxu0 %v6951
  %v7073 = vpop.f32.mrb[0].mxu0
  %v7074 = vadd.f32 0.0, %v7073
  %v7075 = vpop.f32.mrb[0].mxu0
  %7076 = vmatprep.mubr.f32.mxu0 %v6977
  %7077 = vmatmul.mubr.f32.gmra.mrb[0].mxu0 %v6953
  %v7078 = vpop.f32.mrb[0].mxu0
  %v7079 = vadd.f32 0.0, %v7078
  %v7080 = vpop.f32.mrb[0].mxu0
  %7081 = vmatprep.mubr.f32.mxu0 %v6980
  %7082 = vmatmul.mubr.f32.gmra.mrb[0].mxu0 %v6955
  %v7083 = vpop.f32.mrb[0].mxu0
  %v7084 = vadd.f32 0.0, %v7083
  %v7085 = vpop.f32.mrb[0].mxu0
  %7086 = vmatprep.mubr.f32.mxu0 %v6983
  %7087 = vmatmul.mubr.f32.gmra.mrb[0].mxu0 %v6957
  %v7088 = vpop.f32.mrb[0].mxu0
  %v7089 = vadd.f32 0.0, %v7088
  %v7090 = vpop.f32.mrb[0].mxu0
  %7091 = vmatprep.mubr.f32.mxu0 %v6986
  %7092 = vmatmul.mubr.f32.gmra.mrb[0].mxu0 %v6959
  %v7093 = vpop.f32.mrb[0].mxu0
  %v7094 = vadd.f32 0.0, %v7093
  %v7095 = vpop.f32.mrb[0].mxu0
  %7096 = vmatprep.mubr.f32.mxu0 %v6989
  %7097 = vmatmul.mubr.f32.gmra.mrb[0].mxu0 %v6961
  %v7098 = vpop.f32.mrb[0].mxu0
  %v7099 = vadd.f32 0.0, %v7098
  %v7100 = vpop.f32.mrb[0].mxu0
  %7101 = vmatprep.mubr.f32.mxu0 %v6992
  %7102 = vmatmul.mubr.f32.gmra.mrb[0].mxu0 %v6963
  %v7103 = vpop.f32.mrb[0].mxu0
  %v7104 = vadd.f32 0.0, %v7103
  %v7105 = vpop.f32.mrb[0].mxu0
  %7106 = vmatprep.mubr.f32.mxu0 %v6995
  %7107 = vmatmul.mubr.f32.gmra.mrb[0].mxu0 %v6965
  %v7108 = vpop.f32.mrb[0].mxu0
  %v7109 = vadd.f32 0.0, %v7108
  %v7110 = vpop.f32.mrb[0].mxu0
  %7111 = vdwg.mxu0
  %7122 = vrot.lane.b32.xlu0 %v7064, 123
  %v7123 = vpop.permute.xlu0 %7122
  %7124 = vrot.lane.b32.xlu0 %v7069, 123
  %v7125 = vpop.permute.xlu0 %7124
  %7126 = vrot.lane.b32.xlu0 %v7074, 123
  %v7127 = vpop.permute.xlu0 %7126
  %7128 = vrot.lane.b32.xlu0 %v7079, 123
  %v7129 = vpop.permute.xlu0 %7128
  %7130 = vrot.lane.b32.xlu0 %v7084, 123
  %v7131 = vpop.permute.xlu0 %7130
  %7132 = vrot.lane.b32.xlu0 %v7089, 123
  %v7133 = vpop.permute.xlu0 %7132
  %7134 = vrot.lane.b32.xlu0 %v7094, 123
  %v7135 = vpop.permute.xlu0 %7134
  %7136 = vrot.lane.b32.xlu0 %v7099, 123
  %v7137 = vpop.permute.xlu0 %7136
  %7138 = vrot.lane.b32.xlu0 %v7104, 123
  %v7139 = vpop.permute.xlu0 %7138
  %7140 = vrot.lane.b32.xlu0 %v7109, 123
  %v7141 = vpop.permute.xlu0 %7140
  %v7152 = vmax.f32 %v7064, %v7123
  %v7153 = vmax.f32 %v7069, %v7125
  %v7154 = vmax.f32 %v7074, %v7127
  %v7155 = vmax.f32 %v7079, %v7129
  %v7156 = vmax.f32 %v7084, %v7131
  %v7157 = vmax.f32 %v7089, %v7133
  %v7158 = vmax.f32 %v7094, %v7135
  %v7159 = vmax.f32 %v7099, %v7137
  %v7160 = vmax.f32 %v7104, %v7139
  %v7161 = vmax.f32 %v7109, %v7141
  %v7162 = vld [vmem:[%s1 + $0x460] sm:$0xff]
  %v7163 = vld [vmem:[%s1 + $0x468] sm:$0xff]
  %v7164 = vld [vmem:[%s1 + $0x470] sm:$0xff]
  %v7165 = vld [vmem:[%s1 + $0x478] sm:$0xff]
  %v7166 = vld [vmem:[%s1 + $0x480] sm:$0xff]
  %v7167 = vld [vmem:[%s1 + $0x488] sm:$0xff]
  %v7168 = vld [vmem:[%s1 + $0x490] sm:$0xff]
  %v7169 = vld [vmem:[%s1 + $0x498] sm:$0xff]
  %v7170 = vld [vmem:[%s1 + $0x4a0] sm:$0xff]
  %v7171 = vld [vmem:[%s1 + $0x4a8] sm:$0xff]
  %v7172 = vld [vmem:[%s1 + $0x4b0] sm:$0xff]
  %v7173 = vld [vmem:[%s1 + $0x4b8] sm:$0xff]
  %v7174 = vld [vmem:[%s1 + $0x4c0] sm:$0xff]
  %v7175 = vld [vmem:[%s1 + $0x4c8] sm:$0xff]
  %v7176 = vld [vmem:[%s1 + $0x4d0] sm:$0xff]
  %v7177 = vld [vmem:[%s1 + $0x4d8] sm:$0xff]
  %v7178 = vld [vmem:[%s1 + $0x4e0] sm:$0xff]
  %v7179 = vld [vmem:[%s1 + $0x4e8] sm:$0xff]
  %v7180 = vld [vmem:[%s1 + $0x4f0] sm:$0xff]
  %v7181 = vld [vmem:[%s1 + $0x4f8] sm:$0xff]
  %v7183 = vsel %vm1326, %v7163, 0
  %v7186 = vsel %vm1326, %v7165, 0
  %v7189 = vsel %vm1326, %v7167, 0
  %v7192 = vsel %vm1326, %v7169, 0
  %v7195 = vsel %vm1326, %v7171, 0
  %v7198 = vsel %vm1326, %v7173, 0
  %v7201 = vsel %vm1326, %v7175, 0
  %v7204 = vsel %vm1326, %v7177, 0
  %v7207 = vsel %vm1326, %v7179, 0
  %v7210 = vsel %vm1326, %v7181, 0
  %7212 = vmatprep.subr.mxu0 0.0
  %7213 = vmatpush1.msra.mxu0 %v6849
  %7214 = vmatprep.subr.mxu0 0.0
  %7215 = vmatpush1.msra.mxu0 %v6854
  %7216 = vmatprep.subr.mxu0 0.0
  %7217 = vmatpush1.msra.mxu0 %v6859
  %7218 = vmatprep.subr.mxu0 0.0
  %7219 = vmatpush1.msra.mxu0 %v6864
  %7220 = vmatprep.subr.mxu0 0.0
  %7221 = vmatpush1.msra.mxu0 %v6869
  %7222 = vmatprep.subr.mxu0 0.0
  %7223 = vmatpush1.msra.mxu0 %v6874
  %7224 = vmatprep.subr.mxu0 0.0
  %7225 = vmatpush1.msra.mxu0 %v6879
  %7226 = vmatprep.subr.mxu0 0.0
  %7227 = vmatpush1.msra.mxu0 %v6884
  %7228 = vmatprep.subr.mxu0 0.0
  %7229 = vmatpush1.msra.mxu0 %v6889
  %7230 = vmatprep.subr.mxu0 0.0
  %7231 = vmatpush1.msra.mxu0 %v6894
  %7232 = vmatprep.subr.mxu0 0.0
  %7233 = vmatpush1.msra.mxu0 %v6899
  %7234 = vmatprep.subr.mxu0 0.0
  %7235 = vmatpush1.msra.mxu0 %v6904
  %7236 = vmatprep.subr.mxu0 0.0
  %7237 = vmatpush1.msra.mxu0 %v6909
  %7238 = vmatprep.subr.mxu0 0.0
  %7239 = vmatpush1.msra.mxu0 %v6914
  %7240 = vmatprep.subr.mxu0 0.0
  %7241 = vmatpush1.msra.mxu0 %v6919
  %7242 = vmatprep.subr.mxu0 0.0
  %7243 = vmatpush1.msra.mxu0 %v6924
  %7244 = vmatprep.subr.mxu0 0.0
  %7245 = vmatpush1.msra.mxu0 %v6929
  %7246 = vmatprep.subr.mxu0 0.0
  %7247 = vmatpush1.msra.mxu0 %v6934
  %7248 = vmatprep.subr.mxu0 0.0
  %7249 = vmatpush1.msra.mxu0 %v6939
  %7250 = vmatprep.subr.mxu0 0.0
  %7251 = vmatpush1.msra.mxu0 %v6944
  %7252 = vmatprep.subr.mxu0 0.0
  %7253 = vmatpush1.msra.mxu0 0.0
  %7254 = vmatprep.subr.mxu0 0.0
  %7255 = vmatpush1.msra.mxu0 0.0
  %7256 = vmatprep.subr.mxu0 0.0
  %7257 = vmatpush1.msra.mxu0 0.0
  %7258 = vmatprep.subr.mxu0 0.0
  %7259 = vmatpush1.msra.mxu0 0.0
  %7260 = vmatprep.subr.mxu0 0.0
  %7261 = vmatpush1.msra.mxu0 0.0
  %7262 = vmatprep.subr.mxu0 0.0
  %7263 = vmatpush1.msra.mxu0 0.0
  %7264 = vmatprep.subr.mxu0 0.0
  %7265 = vmatpush1.msra.mxu0 0.0
  %7266 = vmatprep.subr.mxu0 0.0
  %7267 = vmatpush1.msra.mxu0 0.0
  %7268 = vmatprep.subr.mxu0 0.0
  %7269 = vmatpush1.msra.mxu0 0.0
  %7270 = vmatprep.subr.mxu0 0.0
  %7271 = vmatpush1.msra.mxu0 0.0
  %7272 = vmatprep.subr.mxu0 0.0
  %7273 = vmatpush1.msra.mxu0 0.0
  %7274 = vmatprep.subr.mxu0 0.0
  %7275 = vmatpush1.msra.mxu0 0.0
  %7276 = vmatprep.mubr.f32.mxu0 %v7183
  %7277 = vmatmul.mubr.f32.gmra.mrb[0].mxu0 %v7162
  %v7278 = vpop.f32.mrb[0].mxu0
  %v7279 = vadd.f32 0.0, %v7278
  %v7280 = vpop.f32.mrb[0].mxu0
  %7281 = vmatprep.mubr.f32.mxu0 %v7186
  %7282 = vmatmul.mubr.f32.gmra.mrb[0].mxu0 %v7164
  %v7283 = vpop.f32.mrb[0].mxu0
  %v7284 = vadd.f32 0.0, %v7283
  %v7285 = vpop.f32.mrb[0].mxu0
  %7286 = vmatprep.mubr.f32.mxu0 %v7189
  %7287 = vmatmul.mubr.f32.gmra.mrb[0].mxu0 %v7166
  %v7288 = vpop.f32.mrb[0].mxu0
  %v7289 = vadd.f32 0.0, %v7288
  %v7290 = vpop.f32.mrb[0].mxu0
  %7291 = vmatprep.mubr.f32.mxu0 %v7192
  %7292 = vmatmul.mubr.f32.gmra.mrb[0].mxu0 %v7168
  %v7293 = vpop.f32.mrb[0].mxu0
  %v7294 = vadd.f32 0.0, %v7293
  %v7295 = vpop.f32.mrb[0].mxu0
  %7296 = vmatprep.mubr.f32.mxu0 %v7195
  %7297 = vmatmul.mubr.f32.gmra.mrb[0].mxu0 %v7170
  %v7298 = vpop.f32.mrb[0].mxu0
  %v7299 = vadd.f32 0.0, %v7298
  %v7300 = vpop.f32.mrb[0].mxu0
  %7301 = vmatprep.mubr.f32.mxu0 %v7198
  %7302 = vmatmul.mubr.f32.gmra.mrb[0].mxu0 %v7172
  %v7303 = vpop.f32.mrb[0].mxu0
  %v7304 = vadd.f32 0.0, %v7303
  %v7305 = vpop.f32.mrb[0].mxu0
  %7306 = vmatprep.mubr.f32.mxu0 %v7201
  %7307 = vmatmul.mubr.f32.gmra.mrb[0].mxu0 %v7174
  %v7308 = vpop.f32.mrb[0].mxu0
  %v7309 = vadd.f32 0.0, %v7308
  %v7310 = vpop.f32.mrb[0].mxu0
  %7311 = vmatprep.mubr.f32.mxu0 %v7204
  %7312 = vmatmul.mubr.f32.gmra.mrb[0].mxu0 %v7176
  %v7313 = vpop.f32.mrb[0].mxu0
  %v7314 = vadd.f32 0.0, %v7313
  %v7315 = vpop.f32.mrb[0].mxu0
  %7316 = vmatprep.mubr.f32.mxu0 %v7207
  %7317 = vmatmul.mubr.f32.gmra.mrb[0].mxu0 %v7178
  %v7318 = vpop.f32.mrb[0].mxu0
  %v7319 = vadd.f32 0.0, %v7318
  %v7320 = vpop.f32.mrb[0].mxu0
  %7321 = vmatprep.mubr.f32.mxu0 %v7210
  %7322 = vmatmul.mubr.f32.gmra.mrb[0].mxu0 %v7180
  %v7323 = vpop.f32.mrb[0].mxu0
  %v7324 = vadd.f32 0.0, %v7323
  %v7325 = vpop.f32.mrb[0].mxu0
  %7326 = vdwg.mxu0
  %v7327 = vmax.f32 %v7152, %v7279
  %v7328 = vmax.f32 %v7153, %v7284
  %v7329 = vmax.f32 %v7154, %v7289
  %v7330 = vmax.f32 %v7155, %v7294
  %v7331 = vmax.f32 %v7156, %v7299
  %v7332 = vmax.f32 %v7157, %v7304
  %v7333 = vmax.f32 %v7158, %v7309
  %v7334 = vmax.f32 %v7159, %v7314
  %v7335 = vmax.f32 %v7160, %v7319
  %v7336 = vmax.f32 %v7161, %v7324
  %7347 = vrot.lane.b32.xlu0 %v7279, 123
  %v7348 = vpop.permute.xlu0 %7347
  %7349 = vrot.lane.b32.xlu0 %v7284, 123
  %v7350 = vpop.permute.xlu0 %7349
  %7351 = vrot.lane.b32.xlu0 %v7289, 123
  %v7352 = vpop.permute.xlu0 %7351
  %7353 = vrot.lane.b32.xlu0 %v7294, 123
  %v7354 = vpop.permute.xlu0 %7353
  %7355 = vrot.lane.b32.xlu0 %v7299, 123
  %v7356 = vpop.permute.xlu0 %7355
  %7357 = vrot.lane.b32.xlu0 %v7304, 123
  %v7358 = vpop.permute.xlu0 %7357
  %7359 = vrot.lane.b32.xlu0 %v7309, 123
  %v7360 = vpop.permute.xlu0 %7359
  %7361 = vrot.lane.b32.xlu0 %v7314, 123
  %v7362 = vpop.permute.xlu0 %7361
  %7363 = vrot.lane.b32.xlu0 %v7319, 123
  %v7364 = vpop.permute.xlu0 %7363
  %7365 = vrot.lane.b32.xlu0 %v7324, 123
  %v7366 = vpop.permute.xlu0 %7365
  %v7377 = vmax.f32 %v7327, %v7348
  %v7378 = vmax.f32 %v7328, %v7350
  %v7379 = vmax.f32 %v7329, %v7352
  %v7380 = vmax.f32 %v7330, %v7354
  %v7381 = vmax.f32 %v7331, %v7356
  %v7382 = vmax.f32 %v7332, %v7358
  %v7383 = vmax.f32 %v7333, %v7360
  %v7384 = vmax.f32 %v7334, %v7362
  %v7385 = vmax.f32 %v7335, %v7364
  %v7386 = vmax.f32 %v7336, %v7366
  %v7387 = vld [vmem:[%s2 + $0x30] sm:$0x1f]
  %v7389 = vsel %vm1748, %v7377, 0
  %v7392 = vsel %vm1748, %v7378, 0
  %v7395 = vsel %vm1748, %v7379, 0
  %v7398 = vsel %vm1748, %v7380, 0
  %v7401 = vsel %vm1748, %v7381, 0
  %v7404 = vsel %vm1748, %v7382, 0
  %v7407 = vsel %vm1748, %v7383, 0
  %v7410 = vsel %vm1748, %v7384, 0
  %v7413 = vsel %vm1748, %v7385, 0
  %v7416 = vsel %vm1748, %v7386, 0
  %v7419 = vsel %vm1779, %v7387, 0
  %7421 = vmatprep.subr.mxu0 0.0
  %7422 = vmatpush1.msra.mxu0 %v7419
  %7423 = vmatprep.subr.mxu0 0.0
  %7424 = vmatpush1.msra.mxu0 0.0
  %7425 = vmatprep.subr.mxu0 0.0
  %7426 = vmatpush1.msra.mxu0 0.0
  %7427 = vmatprep.subr.mxu0 0.0
  %7428 = vmatpush1.msra.mxu0 0.0
  %7429 = vmatprep.subr.mxu0 0.0
  %7430 = vmatpush1.msra.mxu0 0.0
  %7431 = vmatprep.subr.mxu0 0.0
  %7432 = vmatpush1.msra.mxu0 0.0
  %7433 = vmatprep.subr.mxu0 0.0
  %7434 = vmatpush1.msra.mxu0 0.0
  %7435 = vmatprep.subr.mxu0 0.0
  %7436 = vmatpush1.msra.mxu0 0.0
  %7437 = vmatprep.subr.mxu0 0.0
  %7438 = vmatpush1.msra.mxu0 0.0
  %7439 = vmatprep.subr.mxu0 0.0
  %7440 = vmatpush1.msra.mxu0 0.0
  %7441 = vmatprep.subr.mxu0 0.0
  %7442 = vmatpush1.msra.mxu0 0.0
  %7443 = vmatprep.subr.mxu0 0.0
  %7444 = vmatpush1.msra.mxu0 0.0
  %7445 = vmatprep.subr.mxu0 0.0
  %7446 = vmatpush1.msra.mxu0 0.0
  %7447 = vmatprep.subr.mxu0 0.0
  %7448 = vmatpush1.msra.mxu0 0.0
  %7449 = vmatprep.subr.mxu0 0.0
  %7450 = vmatpush1.msra.mxu0 0.0
  %7451 = vmatprep.subr.mxu0 0.0
  %7452 = vmatpush1.msra.mxu0 0.0
  %7453 = vmatprep.subr.mxu0 0.0
  %7454 = vmatpush1.msra.mxu0 0.0
  %7455 = vmatprep.subr.mxu0 0.0
  %7456 = vmatpush1.msra.mxu0 0.0
  %7457 = vmatprep.subr.mxu0 0.0
  %7458 = vmatpush1.msra.mxu0 0.0
  %7459 = vmatprep.subr.mxu0 0.0
  %7460 = vmatpush1.msra.mxu0 0.0
  %7461 = vmatprep.subr.mxu0 0.0
  %7462 = vmatpush1.msra.mxu0 0.0
  %7463 = vmatprep.subr.mxu0 0.0
  %7464 = vmatpush1.msra.mxu0 0.0
  %7465 = vmatprep.subr.mxu0 0.0
  %7466 = vmatpush1.msra.mxu0 0.0
  %7467 = vmatprep.subr.mxu0 0.0
  %7468 = vmatpush1.msra.mxu0 0.0
  %7469 = vmatprep.subr.mxu0 0.0
  %7470 = vmatpush1.msra.mxu0 0.0
  %7471 = vmatprep.subr.mxu0 0.0
  %7472 = vmatpush1.msra.mxu0 0.0
  %7473 = vmatprep.subr.mxu0 0.0
  %7474 = vmatpush1.msra.mxu0 0.0
  %7475 = vmatprep.subr.mxu0 0.0
  %7476 = vmatpush1.msra.mxu0 0.0
  %7477 = vmatprep.subr.mxu0 0.0
  %7478 = vmatpush1.msra.mxu0 0.0
  %7479 = vmatprep.subr.mxu0 0.0
  %7480 = vmatpush1.msra.mxu0 0.0
  %7481 = vmatprep.subr.mxu0 0.0
  %7482 = vmatpush1.msra.mxu0 0.0
  %7483 = vmatprep.subr.mxu0 0.0
  %7484 = vmatpush1.msra.mxu0 0.0
  %7485 = vmatprep.mubr.f32.mxu0 0.0
  %7486 = vmatmul.mubr.f32.gmra.mrb[0].mxu0 %v7389
  %v7487 = vpop.f32.mrb[0].mxu0
  %v7488 = vadd.f32 0.0, %v7487
  %v7489 = vpop.f32.mrb[0].mxu0
  %7490 = vmatprep.mubr.f32.mxu0 0.0
  %7491 = vmatmul.mubr.f32.gmra.mrb[0].mxu0 %v7392
  %v7492 = vpop.f32.mrb[0].mxu0
  %v7493 = vadd.f32 0.0, %v7492
  %v7494 = vpop.f32.mrb[0].mxu0
  %7495 = vmatprep.mubr.f32.mxu0 0.0
  %7496 = vmatmul.mubr.f32.gmra.mrb[0].mxu0 %v7395
  %v7497 = vpop.f32.mrb[0].mxu0
  %v7498 = vadd.f32 0.0, %v7497
  %v7499 = vpop.f32.mrb[0].mxu0
  %7500 = vmatprep.mubr.f32.mxu0 0.0
  %7501 = vmatmul.mubr.f32.gmra.mrb[0].mxu0 %v7398
  %v7502 = vpop.f32.mrb[0].mxu0
  %v7503 = vadd.f32 0.0, %v7502
  %v7504 = vpop.f32.mrb[0].mxu0
  %7505 = vmatprep.mubr.f32.mxu0 0.0
  %7506 = vmatmul.mubr.f32.gmra.mrb[0].mxu0 %v7401
  %v7507 = vpop.f32.mrb[0].mxu0
  %v7508 = vadd.f32 0.0, %v7507
  %v7509 = vpop.f32.mrb[0].mxu0
  %7510 = vmatprep.mubr.f32.mxu0 0.0
  %7511 = vmatmul.mubr.f32.gmra.mrb[0].mxu0 %v7404
  %v7512 = vpop.f32.mrb[0].mxu0
  %v7513 = vadd.f32 0.0, %v7512
  %v7514 = vpop.f32.mrb[0].mxu0
  %7515 = vmatprep.mubr.f32.mxu0 0.0
  %7516 = vmatmul.mubr.f32.gmra.mrb[0].mxu0 %v7407
  %v7517 = vpop.f32.mrb[0].mxu0
  %v7518 = vadd.f32 0.0, %v7517
  %v7519 = vpop.f32.mrb[0].mxu0
  %7520 = vmatprep.mubr.f32.mxu0 0.0
  %7521 = vmatmul.mubr.f32.gmra.mrb[0].mxu0 %v7410
  %v7522 = vpop.f32.mrb[0].mxu0
  %v7523 = vadd.f32 0.0, %v7522
  %v7524 = vpop.f32.mrb[0].mxu0
  %7525 = vmatprep.mubr.f32.mxu0 0.0
  %7526 = vmatmul.mubr.f32.gmra.mrb[0].mxu0 %v7413
  %v7527 = vpop.f32.mrb[0].mxu0
  %v7528 = vadd.f32 0.0, %v7527
  %v7529 = vpop.f32.mrb[0].mxu0
  %7530 = vmatprep.mubr.f32.mxu0 0.0
  %7531 = vmatmul.mubr.f32.gmra.mrb[0].mxu0 %v7416
  %v7532 = vpop.f32.mrb[0].mxu0
  %v7533 = vadd.f32 0.0, %v7532
  %v7534 = vpop.f32.mrb[0].mxu0
  %7535 = vdwg.mxu0
  %v7536 = vld [vmem:[%s1 + $0x500] sm:$0xff]
  %v7537 = vld [vmem:[%s1 + $0x510] sm:$0xff]
  %v7538 = vld [vmem:[%s1 + $0x520] sm:$0xff]
  %v7539 = vld [vmem:[%s1 + $0x530] sm:$0xff]
  %v7540 = vld [vmem:[%s1 + $0x540] sm:$0xff]
  %v7541 = vld [vmem:[%s1 + $0x550] sm:$0xff]
  %7552 = vrot.lane.b32.xlu0 %v7488, 125
  %v7553 = vpop.permute.xlu0 %7552
  %7554 = vrot.lane.b32.xlu0 %v7493, 125
  %v7555 = vpop.permute.xlu0 %7554
  %7556 = vrot.lane.b32.xlu0 %v7498, 125
  %v7557 = vpop.permute.xlu0 %7556
  %7558 = vrot.lane.b32.xlu0 %v7503, 125
  %v7559 = vpop.permute.xlu0 %7558
  %7560 = vrot.lane.b32.xlu0 %v7508, 125
  %v7561 = vpop.permute.xlu0 %7560
  %7562 = vrot.lane.b32.xlu0 %v7513, 125
  %v7563 = vpop.permute.xlu0 %7562
  %7564 = vrot.lane.b32.xlu0 %v7518, 125
  %v7565 = vpop.permute.xlu0 %7564
  %7566 = vrot.lane.b32.xlu0 %v7523, 125
  %v7567 = vpop.permute.xlu0 %7566
  %7568 = vrot.lane.b32.xlu0 %v7528, 125
  %v7569 = vpop.permute.xlu0 %7568
  %7570 = vrot.lane.b32.xlu0 %v7533, 125
  %v7571 = vpop.permute.xlu0 %7570
  %v7583 = vsel %vm1944, %v7539, 0
  %v7586 = vsel %vm1944, %v7540, 0
  %v7589 = vsel %vm1944, %v7541, 0
  %7591 = vmatprep.subr.mxu0 0.0
  %7592 = vmatpush1.msra.mxu0 %v7553
  %7593 = vmatprep.subr.mxu0 0.0
  %7594 = vmatpush1.msra.mxu0 %v7555
  %7595 = vmatprep.subr.mxu0 0.0
  %7596 = vmatpush1.msra.mxu0 %v7557
  %7597 = vmatprep.subr.mxu0 0.0
  %7598 = vmatpush1.msra.mxu0 %v7559
  %7599 = vmatprep.subr.mxu0 0.0
  %7600 = vmatpush1.msra.mxu0 %v7561
  %7601 = vmatprep.subr.mxu0 0.0
  %7602 = vmatpush1.msra.mxu0 %v7563
  %7603 = vmatprep.subr.mxu0 0.0
  %7604 = vmatpush1.msra.mxu0 %v7565
  %7605 = vmatprep.subr.mxu0 0.0
  %7606 = vmatpush1.msra.mxu0 %v7567
  %7607 = vmatprep.subr.mxu0 0.0
  %7608 = vmatpush1.msra.mxu0 %v7569
  %7609 = vmatprep.subr.mxu0 0.0
  %7610 = vmatpush1.msra.mxu0 %v7571
  %7611 = vmatprep.subr.mxu0 0.0
  %7612 = vmatpush1.msra.mxu0 0.0
  %7613 = vmatprep.subr.mxu0 0.0
  %7614 = vmatpush1.msra.mxu0 0.0
  %7615 = vmatprep.subr.mxu0 0.0
  %7616 = vmatpush1.msra.mxu0 0.0
  %7617 = vmatprep.subr.mxu0 0.0
  %7618 = vmatpush1.msra.mxu0 0.0
  %7619 = vmatprep.subr.mxu0 0.0
  %7620 = vmatpush1.msra.mxu0 0.0
  %7621 = vmatprep.subr.mxu0 0.0
  %7622 = vmatpush1.msra.mxu0 0.0
  %7623 = vmatprep.subr.mxu0 0.0
  %7624 = vmatpush1.msra.mxu0 0.0
  %7625 = vmatprep.subr.mxu0 0.0
  %7626 = vmatpush1.msra.mxu0 0.0
  %7627 = vmatprep.subr.mxu0 0.0
  %7628 = vmatpush1.msra.mxu0 0.0
  %7629 = vmatprep.subr.mxu0 0.0
  %7630 = vmatpush1.msra.mxu0 0.0
  %7631 = vmatprep.subr.mxu0 0.0
  %7632 = vmatpush1.msra.mxu0 0.0
  %7633 = vmatprep.subr.mxu0 0.0
  %7634 = vmatpush1.msra.mxu0 0.0
  %7635 = vmatprep.subr.mxu0 0.0
  %7636 = vmatpush1.msra.mxu0 0.0
  %7637 = vmatprep.subr.mxu0 0.0
  %7638 = vmatpush1.msra.mxu0 0.0
  %7639 = vmatprep.subr.mxu0 0.0
  %7640 = vmatpush1.msra.mxu0 0.0
  %7641 = vmatprep.subr.mxu0 0.0
  %7642 = vmatpush1.msra.mxu0 0.0
  %7643 = vmatprep.subr.mxu0 0.0
  %7644 = vmatpush1.msra.mxu0 0.0
  %7645 = vmatprep.subr.mxu0 0.0
  %7646 = vmatpush1.msra.mxu0 0.0
  %7647 = vmatprep.subr.mxu0 0.0
  %7648 = vmatpush1.msra.mxu0 0.0
  %7649 = vmatprep.subr.mxu0 0.0
  %7650 = vmatpush1.msra.mxu0 0.0
  %7651 = vmatprep.subr.mxu0 0.0
  %7652 = vmatpush1.msra.mxu0 0.0
  %7653 = vmatprep.subr.mxu0 0.0
  %7654 = vmatpush1.msra.mxu0 0.0
  %7655 = vmatprep.mubr.f32.mxu0 0.0
  %7656 = vmatmul.mubr.f32.gmra.mrb[0].mxu0 %v7583
  %v7657 = vpop.f32.mrb[0].mxu0
  %v7658 = vadd.f32 0.0, %v7657
  %v7659 = vpop.f32.mrb[0].mxu0
  %7660 = vmatprep.mubr.f32.mxu0 0.0
  %7661 = vmatmul.mubr.f32.gmra.mrb[0].mxu0 %v7586
  %v7662 = vpop.f32.mrb[0].mxu0
  %v7663 = vadd.f32 0.0, %v7662
  %v7664 = vpop.f32.mrb[0].mxu0
  %7665 = vmatprep.mubr.f32.mxu0 0.0
  %7666 = vmatmul.mubr.f32.gmra.mrb[0].mxu0 %v7589
  %v7667 = vpop.f32.mrb[0].mxu0
  %v7668 = vadd.f32 0.0, %v7667
  %v7669 = vpop.f32.mrb[0].mxu0
  %7670 = vdwg.mxu0
  %v7672 = vsel %vm1944, %v7536, 0
  %v7675 = vsel %vm1944, %v7537, 0
  %v7678 = vsel %vm1944, %v7538, 0
  %7680 = vmatprep.subr.mxu0 0.0
  %7681 = vmatpush1.msra.mxu0 %v7488
  %7682 = vmatprep.subr.mxu0 0.0
  %7683 = vmatpush1.msra.mxu0 %v7493
  %7684 = vmatprep.subr.mxu0 0.0
  %7685 = vmatpush1.msra.mxu0 %v7498
  %7686 = vmatprep.subr.mxu0 0.0
  %7687 = vmatpush1.msra.mxu0 %v7503
  %7688 = vmatprep.subr.mxu0 0.0
  %7689 = vmatpush1.msra.mxu0 %v7508
  %7690 = vmatprep.subr.mxu0 0.0
  %7691 = vmatpush1.msra.mxu0 %v7513
  %7692 = vmatprep.subr.mxu0 0.0
  %7693 = vmatpush1.msra.mxu0 %v7518
  %7694 = vmatprep.subr.mxu0 0.0
  %7695 = vmatpush1.msra.mxu0 %v7523
  %7696 = vmatprep.subr.mxu0 0.0
  %7697 = vmatpush1.msra.mxu0 %v7528
  %7698 = vmatprep.subr.mxu0 0.0
  %7699 = vmatpush1.msra.mxu0 %v7533
  %7700 = vmatprep.subr.mxu0 0.0
  %7701 = vmatpush1.msra.mxu0 0.0
  %7702 = vmatprep.subr.mxu0 0.0
  %7703 = vmatpush1.msra.mxu0 0.0
  %7704 = vmatprep.subr.mxu0 0.0
  %7705 = vmatpush1.msra.mxu0 0.0
  %7706 = vmatprep.subr.mxu0 0.0
  %7707 = vmatpush1.msra.mxu0 0.0
  %7708 = vmatprep.subr.mxu0 0.0
  %7709 = vmatpush1.msra.mxu0 0.0
  %7710 = vmatprep.subr.mxu0 0.0
  %7711 = vmatpush1.msra.mxu0 0.0
  %7712 = vmatprep.subr.mxu0 0.0
  %7713 = vmatpush1.msra.mxu0 0.0
  %7714 = vmatprep.subr.mxu0 0.0
  %7715 = vmatpush1.msra.mxu0 0.0
  %7716 = vmatprep.subr.mxu0 0.0
  %7717 = vmatpush1.msra.mxu0 0.0
  %7718 = vmatprep.subr.mxu0 0.0
  %7719 = vmatpush1.msra.mxu0 0.0
  %7720 = vmatprep.subr.mxu0 0.0
  %7721 = vmatpush1.msra.mxu0 0.0
  %7722 = vmatprep.subr.mxu0 0.0
  %7723 = vmatpush1.msra.mxu0 0.0
  %7724 = vmatprep.subr.mxu0 0.0
  %7725 = vmatpush1.msra.mxu0 0.0
  %7726 = vmatprep.subr.mxu0 0.0
  %7727 = vmatpush1.msra.mxu0 0.0
  %7728 = vmatprep.subr.mxu0 0.0
  %7729 = vmatpush1.msra.mxu0 0.0
  %7730 = vmatprep.subr.mxu0 0.0
  %7731 = vmatpush1.msra.mxu0 0.0
  %7732 = vmatprep.subr.mxu0 0.0
  %7733 = vmatpush1.msra.mxu0 0.0
  %7734 = vmatprep.subr.mxu0 0.0
  %7735 = vmatpush1.msra.mxu0 0.0
  %7736 = vmatprep.subr.mxu0 0.0
  %7737 = vmatpush1.msra.mxu0 0.0
  %7738 = vmatprep.subr.mxu0 0.0
  %7739 = vmatpush1.msra.mxu0 0.0
  %7740 = vmatprep.subr.mxu0 0.0
  %7741 = vmatpush1.msra.mxu0 0.0
  %7742 = vmatprep.subr.mxu0 0.0
  %7743 = vmatpush1.msra.mxu0 0.0
  %7744 = vmatprep.mubr.f32.mxu0 0.0
  %7745 = vmatmul.mubr.f32.gmra.mrb[0].mxu0 %v7672
  %v7746 = vpop.f32.mrb[0].mxu0
  %v7747 = vadd.f32 %v7658, %v7746
  %v7748 = vpop.f32.mrb[0].mxu0
  %7749 = vmatprep.mubr.f32.mxu0 0.0
  %7750 = vmatmul.mubr.f32.gmra.mrb[0].mxu0 %v7675
  %v7751 = vpop.f32.mrb[0].mxu0
  %v7752 = vadd.f32 %v7663, %v7751
  %v7753 = vpop.f32.mrb[0].mxu0
  %7754 = vmatprep.mubr.f32.mxu0 0.0
  %7755 = vmatmul.mubr.f32.gmra.mrb[0].mxu0 %v7678
  %v7756 = vpop.f32.mrb[0].mxu0
  %v7757 = vadd.f32 %v7668, %v7756
  %v7758 = vpop.f32.mrb[0].mxu0
  %7759 = vdwg.mxu0
  %v7760 = vld [vmem:[%s1 + $0x560] sm:$0xff]
  %v7761 = vld [vmem:[%s1 + $0x570] sm:$0xff]
  %v7762 = vld [vmem:[%s1 + $0x580] sm:$0xff]
  %7763 = vrot.lane.b32.xlu0 %v7488, 122
  %v7764 = vpop.permute.xlu0 %7763
  %7765 = vrot.lane.b32.xlu0 %v7493, 122
  %v7766 = vpop.permute.xlu0 %7765
  %7767 = vrot.lane.b32.xlu0 %v7498, 122
  %v7768 = vpop.permute.xlu0 %7767
  %7769 = vrot.lane.b32.xlu0 %v7503, 122
  %v7770 = vpop.permute.xlu0 %7769
  %7771 = vrot.lane.b32.xlu0 %v7508, 122
  %v7772 = vpop.permute.xlu0 %7771
  %7773 = vrot.lane.b32.xlu0 %v7513, 122
  %v7774 = vpop.permute.xlu0 %7773
  %7775 = vrot.lane.b32.xlu0 %v7518, 122
  %v7776 = vpop.permute.xlu0 %7775
  %7777 = vrot.lane.b32.xlu0 %v7523, 122
  %v7778 = vpop.permute.xlu0 %7777
  %7779 = vrot.lane.b32.xlu0 %v7528, 122
  %v7780 = vpop.permute.xlu0 %7779
  %7781 = vrot.lane.b32.xlu0 %v7533, 122
  %v7782 = vpop.permute.xlu0 %7781
  %v7794 = vsel %vm1944, %v7760, 0
  %v7797 = vsel %vm1944, %v7761, 0
  %v7800 = vsel %vm1944, %v7762, 0
  %7802 = vmatprep.subr.mxu0 0.0
  %7803 = vmatpush1.msra.mxu0 %v7764
  %7804 = vmatprep.subr.mxu0 0.0
  %7805 = vmatpush1.msra.mxu0 %v7766
  %7806 = vmatprep.subr.mxu0 0.0
  %7807 = vmatpush1.msra.mxu0 %v7768
  %7808 = vmatprep.subr.mxu0 0.0
  %7809 = vmatpush1.msra.mxu0 %v7770
  %7810 = vmatprep.subr.mxu0 0.0
  %7811 = vmatpush1.msra.mxu0 %v7772
  %7812 = vmatprep.subr.mxu0 0.0
  %7813 = vmatpush1.msra.mxu0 %v7774
  %7814 = vmatprep.subr.mxu0 0.0
  %7815 = vmatpush1.msra.mxu0 %v7776
  %7816 = vmatprep.subr.mxu0 0.0
  %7817 = vmatpush1.msra.mxu0 %v7778
  %7818 = vmatprep.subr.mxu0 0.0
  %7819 = vmatpush1.msra.mxu0 %v7780
  %7820 = vmatprep.subr.mxu0 0.0
  %7821 = vmatpush1.msra.mxu0 %v7782
  %7822 = vmatprep.subr.mxu0 0.0
  %7823 = vmatpush1.msra.mxu0 0.0
  %7824 = vmatprep.subr.mxu0 0.0
  %7825 = vmatpush1.msra.mxu0 0.0
  %7826 = vmatprep.subr.mxu0 0.0
  %7827 = vmatpush1.msra.mxu0 0.0
  %7828 = vmatprep.subr.mxu0 0.0
  %7829 = vmatpush1.msra.mxu0 0.0
  %7830 = vmatprep.subr.mxu0 0.0
  %7831 = vmatpush1.msra.mxu0 0.0
  %7832 = vmatprep.subr.mxu0 0.0
  %7833 = vmatpush1.msra.mxu0 0.0
  %7834 = vmatprep.subr.mxu0 0.0
  %7835 = vmatpush1.msra.mxu0 0.0
  %7836 = vmatprep.subr.mxu0 0.0
  %7837 = vmatpush1.msra.mxu0 0.0
  %7838 = vmatprep.subr.mxu0 0.0
  %7839 = vmatpush1.msra.mxu0 0.0
  %7840 = vmatprep.subr.mxu0 0.0
  %7841 = vmatpush1.msra.mxu0 0.0
  %7842 = vmatprep.subr.mxu0 0.0
  %7843 = vmatpush1.msra.mxu0 0.0
  %7844 = vmatprep.subr.mxu0 0.0
  %7845 = vmatpush1.msra.mxu0 0.0
  %7846 = vmatprep.subr.mxu0 0.0
  %7847 = vmatpush1.msra.mxu0 0.0
  %7848 = vmatprep.subr.mxu0 0.0
  %7849 = vmatpush1.msra.mxu0 0.0
  %7850 = vmatprep.subr.mxu0 0.0
  %7851 = vmatpush1.msra.mxu0 0.0
  %7852 = vmatprep.subr.mxu0 0.0
  %7853 = vmatpush1.msra.mxu0 0.0
  %7854 = vmatprep.subr.mxu0 0.0
  %7855 = vmatpush1.msra.mxu0 0.0
  %7856 = vmatprep.subr.mxu0 0.0
  %7857 = vmatpush1.msra.mxu0 0.0
  %7858 = vmatprep.subr.mxu0 0.0
  %7859 = vmatpush1.msra.mxu0 0.0
  %7860 = vmatprep.subr.mxu0 0.0
  %7861 = vmatpush1.msra.mxu0 0.0
  %7862 = vmatprep.subr.mxu0 0.0
  %7863 = vmatpush1.msra.mxu0 0.0
  %7864 = vmatprep.subr.mxu0 0.0
  %7865 = vmatpush1.msra.mxu0 0.0
  %7866 = vmatprep.mubr.f32.mxu0 0.0
  %7867 = vmatmul.mubr.f32.gmra.mrb[0].mxu0 %v7794
  %v7868 = vpop.f32.mrb[0].mxu0
  %v7869 = vadd.f32 0.0, %v7868
  %v7870 = vpop.f32.mrb[0].mxu0
  %7871 = vmatprep.mubr.f32.mxu0 0.0
  %7872 = vmatmul.mubr.f32.gmra.mrb[0].mxu0 %v7797
  %v7873 = vpop.f32.mrb[0].mxu0
  %v7874 = vadd.f32 0.0, %v7873
  %v7875 = vpop.f32.mrb[0].mxu0
  %7876 = vmatprep.mubr.f32.mxu0 0.0
  %7877 = vmatmul.mubr.f32.gmra.mrb[0].mxu0 %v7800
  %v7878 = vpop.f32.mrb[0].mxu0
  %v7879 = vadd.f32 0.0, %v7878
  %v7880 = vpop.f32.mrb[0].mxu0
  %7881 = vdwg.mxu0
  %v7882 = vadd.f32 %v7747, %v7869
  %v7883 = vadd.f32 %v7752, %v7874
  %v7884 = vadd.f32 %v7757, %v7879
  %v7885 = vld [vmem:[%s3 + $0xa0] sm:$0xff]
  %v7886 = vld [vmem:[%s3 + $0xa8] sm:$0xff]
  %v7887 = vld [vmem:[%s3 + $0xb0] sm:$0xff]
  %7889 = vset.pattern.permute.xlu0 0
  %7890 = vperm.xlu0 %7889, %v7885
  %v7891 = vpop.permute.xlu0 %7890
  %7894 = vset.pattern.permute.xlu0 0
  %7895 = vperm.xlu0 %7894, %v7886
  %v7896 = vpop.permute.xlu0 %7895
  %7899 = vset.pattern.permute.xlu0 0
  %7900 = vperm.xlu0 %7899, %v7887
  %v7901 = vpop.permute.xlu0 %7900
  %v7903 = vadd.f32 %v7882, %v7891
  %v7904 = vadd.f32 %v7883, %v7896
  %v7905 = vadd.f32 %v7884, %v7901
  %v7906 = vmax.f32 %v7903, 0.0
  %v7907 = vmax.f32 %v7904, 0.0
  %v7908 = vmax.f32 %v7905, 0.0
  %v7909 = vld [vmem:[%s2 + $0x38] sm:$0x7]
  %v7911 = vsel %vm2273, %v7906, 0
  %v7914 = vsel %vm2273, %v7907, 0
  %v7917 = vsel %vm2273, %v7908, 0
  %v7920 = vsel %vm2283, %v7909, 0
  %7922 = vmatprep.subr.mxu0 0.0
  %7923 = vmatpush1.msra.mxu0 %v7920
  %7924 = vmatprep.subr.mxu0 0.0
  %7925 = vmatpush1.msra.mxu0 0.0
  %7926 = vmatprep.subr.mxu0 0.0
  %7927 = vmatpush1.msra.mxu0 0.0
  %7928 = vmatprep.subr.mxu0 0.0
  %7929 = vmatpush1.msra.mxu0 0.0
  %7930 = vmatprep.subr.mxu0 0.0
  %7931 = vmatpush1.msra.mxu0 0.0
  %7932 = vmatprep.subr.mxu0 0.0
  %7933 = vmatpush1.msra.mxu0 0.0
  %7934 = vmatprep.subr.mxu0 0.0
  %7935 = vmatpush1.msra.mxu0 0.0
  %7936 = vmatprep.subr.mxu0 0.0
  %7937 = vmatpush1.msra.mxu0 0.0
  %7938 = vmatprep.subr.mxu0 0.0
  %7939 = vmatpush1.msra.mxu0 0.0
  %7940 = vmatprep.subr.mxu0 0.0
  %7941 = vmatpush1.msra.mxu0 0.0
  %7942 = vmatprep.subr.mxu0 0.0
  %7943 = vmatpush1.msra.mxu0 0.0
  %7944 = vmatprep.subr.mxu0 0.0
  %7945 = vmatpush1.msra.mxu0 0.0
  %7946 = vmatprep.subr.mxu0 0.0
  %7947 = vmatpush1.msra.mxu0 0.0
  %7948 = vmatprep.subr.mxu0 0.0
  %7949 = vmatpush1.msra.mxu0 0.0
  %7950 = vmatprep.subr.mxu0 0.0
  %7951 = vmatpush1.msra.mxu0 0.0
  %7952 = vmatprep.subr.mxu0 0.0
  %7953 = vmatpush1.msra.mxu0 0.0
  %7954 = vmatprep.subr.mxu0 0.0
  %7955 = vmatpush1.msra.mxu0 0.0
  %7956 = vmatprep.subr.mxu0 0.0
  %7957 = vmatpush1.msra.mxu0 0.0
  %7958 = vmatprep.subr.mxu0 0.0
  %7959 = vmatpush1.msra.mxu0 0.0
  %7960 = vmatprep.subr.mxu0 0.0
  %7961 = vmatpush1.msra.mxu0 0.0
  %7962 = vmatprep.subr.mxu0 0.0
  %7963 = vmatpush1.msra.mxu0 0.0
  %7964 = vmatprep.subr.mxu0 0.0
  %7965 = vmatpush1.msra.mxu0 0.0
  %7966 = vmatprep.subr.mxu0 0.0
  %7967 = vmatpush1.msra.mxu0 0.0
  %7968 = vmatprep.subr.mxu0 0.0
  %7969 = vmatpush1.msra.mxu0 0.0
  %7970 = vmatprep.subr.mxu0 0.0
  %7971 = vmatpush1.msra.mxu0 0.0
  %7972 = vmatprep.subr.mxu0 0.0
  %7973 = vmatpush1.msra.mxu0 0.0
  %7974 = vmatprep.subr.mxu0 0.0
  %7975 = vmatpush1.msra.mxu0 0.0
  %7976 = vmatprep.subr.mxu0 0.0
  %7977 = vmatpush1.msra.mxu0 0.0
  %7978 = vmatprep.subr.mxu0 0.0
  %7979 = vmatpush1.msra.mxu0 0.0
  %7980 = vmatprep.subr.mxu0 0.0
  %7981 = vmatpush1.msra.mxu0 0.0
  %7982 = vmatprep.subr.mxu0 0.0
  %7983 = vmatpush1.msra.mxu0 0.0
  %7984 = vmatprep.subr.mxu0 0.0
  %7985 = vmatpush1.msra.mxu0 0.0
  %7986 = vmatprep.mubr.f32.mxu0 0.0
  %7987 = vmatmul.mubr.f32.gmra.mrb[0].mxu0 %v7911
  %v7988 = vpop.f32.mrb[0].mxu0
  %v7989 = vadd.f32 0.0, %v7988
  %v7990 = vpop.f32.mrb[0].mxu0
  %7991 = vmatprep.mubr.f32.mxu0 0.0
  %7992 = vmatmul.mubr.f32.gmra.mrb[0].mxu0 %v7914
  %v7993 = vpop.f32.mrb[0].mxu0
  %v7994 = vadd.f32 0.0, %v7993
  %v7995 = vpop.f32.mrb[0].mxu0
  %7996 = vmatprep.mubr.f32.mxu0 0.0
  %7997 = vmatmul.mubr.f32.gmra.mrb[0].mxu0 %v7917
  %v7998 = vpop.f32.mrb[0].mxu0
  %v7999 = vadd.f32 0.0, %v7998
  %v8000 = vpop.f32.mrb[0].mxu0
  %8001 = vdwg.mxu0
  %v8002 = vld [vmem:[%s1 + $0x590] sm:$0xff]
  %v8003 = vld [vmem:[%s1 + $0x5a0] sm:$0xff]
  %v8005 = vsel %vm2369, %v8002, 0
  %v8008 = vsel %vm2369, %v8003, 0
  %8010 = vmatprep.subr.mxu0 0.0
  %8011 = vmatpush1.msra.mxu0 %v7989
  %8012 = vmatprep.subr.mxu0 0.0
  %8013 = vmatpush1.msra.mxu0 %v7994
  %8014 = vmatprep.subr.mxu0 0.0
  %8015 = vmatpush1.msra.mxu0 %v7999
  %8016 = vmatprep.subr.mxu0 0.0
  %8017 = vmatpush1.msra.mxu0 0.0
  %8018 = vmatprep.subr.mxu0 0.0
  %8019 = vmatpush1.msra.mxu0 0.0
  %8020 = vmatprep.subr.mxu0 0.0
  %8021 = vmatpush1.msra.mxu0 0.0
  %8022 = vmatprep.subr.mxu0 0.0
  %8023 = vmatpush1.msra.mxu0 0.0
  %8024 = vmatprep.subr.mxu0 0.0
  %8025 = vmatpush1.msra.mxu0 0.0
  %8026 = vmatprep.subr.mxu0 0.0
  %8027 = vmatpush1.msra.mxu0 0.0
  %8028 = vmatprep.subr.mxu0 0.0
  %8029 = vmatpush1.msra.mxu0 0.0
  %8030 = vmatprep.subr.mxu0 0.0
  %8031 = vmatpush1.msra.mxu0 0.0
  %8032 = vmatprep.subr.mxu0 0.0
  %8033 = vmatpush1.msra.mxu0 0.0
  %8034 = vmatprep.subr.mxu0 0.0
  %8035 = vmatpush1.msra.mxu0 0.0
  %8036 = vmatprep.subr.mxu0 0.0
  %8037 = vmatpush1.msra.mxu0 0.0
  %8038 = vmatprep.subr.mxu0 0.0
  %8039 = vmatpush1.msra.mxu0 0.0
  %8040 = vmatprep.subr.mxu0 0.0
  %8041 = vmatpush1.msra.mxu0 0.0
  %8042 = vmatprep.subr.mxu0 0.0
  %8043 = vmatpush1.msra.mxu0 0.0
  %8044 = vmatprep.subr.mxu0 0.0
  %8045 = vmatpush1.msra.mxu0 0.0
  %8046 = vmatprep.subr.mxu0 0.0
  %8047 = vmatpush1.msra.mxu0 0.0
  %8048 = vmatprep.subr.mxu0 0.0
  %8049 = vmatpush1.msra.mxu0 0.0
  %8050 = vmatprep.subr.mxu0 0.0
  %8051 = vmatpush1.msra.mxu0 0.0
  %8052 = vmatprep.subr.mxu0 0.0
  %8053 = vmatpush1.msra.mxu0 0.0
  %8054 = vmatprep.subr.mxu0 0.0
  %8055 = vmatpush1.msra.mxu0 0.0
  %8056 = vmatprep.subr.mxu0 0.0
  %8057 = vmatpush1.msra.mxu0 0.0
  %8058 = vmatprep.subr.mxu0 0.0
  %8059 = vmatpush1.msra.mxu0 0.0
  %8060 = vmatprep.subr.mxu0 0.0
  %8061 = vmatpush1.msra.mxu0 0.0
  %8062 = vmatprep.subr.mxu0 0.0
  %8063 = vmatpush1.msra.mxu0 0.0
  %8064 = vmatprep.subr.mxu0 0.0
  %8065 = vmatpush1.msra.mxu0 0.0
  %8066 = vmatprep.subr.mxu0 0.0
  %8067 = vmatpush1.msra.mxu0 0.0
  %8068 = vmatprep.subr.mxu0 0.0
  %8069 = vmatpush1.msra.mxu0 0.0
  %8070 = vmatprep.subr.mxu0 0.0
  %8071 = vmatpush1.msra.mxu0 0.0
  %8072 = vmatprep.subr.mxu0 0.0
  %8073 = vmatpush1.msra.mxu0 0.0
  %8074 = vmatprep.mubr.f32.mxu0 0.0
  %8075 = vmatmul.mubr.f32.gmra.mrb[0].mxu0 %v8005
  %v8076 = vpop.f32.mrb[0].mxu0
  %v8077 = vadd.f32 0.0, %v8076
  %v8078 = vpop.f32.mrb[0].mxu0
  %8079 = vmatprep.mubr.f32.mxu0 0.0
  %8080 = vmatmul.mubr.f32.gmra.mrb[0].mxu0 %v8008
  %v8081 = vpop.f32.mrb[0].mxu0
  %v8082 = vadd.f32 0.0, %v8081
  %v8083 = vpop.f32.mrb[0].mxu0
  %8084 = vdwg.mxu0
  %8087 = vrot.lane.b32.xlu0 %v8077, 126
  %v8088 = vpop.permute.xlu0 %8087
  %8089 = vrot.lane.b32.xlu0 %v8082, 126
  %v8090 = vpop.permute.xlu0 %8089
  %v8093 = vmax.f32 %v8077, %v8088
  %v8094 = vmax.f32 %v8082, %v8090
  %v8095 = vld [vmem:[%s1 + $0x5b0] sm:$0xff]
  %v8096 = vld [vmem:[%s1 + $0x5c0] sm:$0xff]
  %v8098 = vsel %vm2369, %v8095, 0
  %v8101 = vsel %vm2369, %v8096, 0
  %8103 = vmatprep.subr.mxu0 0.0
  %8104 = vmatpush1.msra.mxu0 %v7989
  %8105 = vmatprep.subr.mxu0 0.0
  %8106 = vmatpush1.msra.mxu0 %v7994
  %8107 = vmatprep.subr.mxu0 0.0
  %8108 = vmatpush1.msra.mxu0 %v7999
  %8109 = vmatprep.subr.mxu0 0.0
  %8110 = vmatpush1.msra.mxu0 0.0
  %8111 = vmatprep.subr.mxu0 0.0
  %8112 = vmatpush1.msra.mxu0 0.0
  %8113 = vmatprep.subr.mxu0 0.0
  %8114 = vmatpush1.msra.mxu0 0.0
  %8115 = vmatprep.subr.mxu0 0.0
  %8116 = vmatpush1.msra.mxu0 0.0
  %8117 = vmatprep.subr.mxu0 0.0
  %8118 = vmatpush1.msra.mxu0 0.0
  %8119 = vmatprep.subr.mxu0 0.0
  %8120 = vmatpush1.msra.mxu0 0.0
  %8121 = vmatprep.subr.mxu0 0.0
  %8122 = vmatpush1.msra.mxu0 0.0
  %8123 = vmatprep.subr.mxu0 0.0
  %8124 = vmatpush1.msra.mxu0 0.0
  %8125 = vmatprep.subr.mxu0 0.0
  %8126 = vmatpush1.msra.mxu0 0.0
  %8127 = vmatprep.subr.mxu0 0.0
  %8128 = vmatpush1.msra.mxu0 0.0
  %8129 = vmatprep.subr.mxu0 0.0
  %8130 = vmatpush1.msra.mxu0 0.0
  %8131 = vmatprep.subr.mxu0 0.0
  %8132 = vmatpush1.msra.mxu0 0.0
  %8133 = vmatprep.subr.mxu0 0.0
  %8134 = vmatpush1.msra.mxu0 0.0
  %8135 = vmatprep.subr.mxu0 0.0
  %8136 = vmatpush1.msra.mxu0 0.0
  %8137 = vmatprep.subr.mxu0 0.0
  %8138 = vmatpush1.msra.mxu0 0.0
  %8139 = vmatprep.subr.mxu0 0.0
  %8140 = vmatpush1.msra.mxu0 0.0
  %8141 = vmatprep.subr.mxu0 0.0
  %8142 = vmatpush1.msra.mxu0 0.0
  %8143 = vmatprep.subr.mxu0 0.0
  %8144 = vmatpush1.msra.mxu0 0.0
  %8145 = vmatprep.subr.mxu0 0.0
  %8146 = vmatpush1.msra.mxu0 0.0
  %8147 = vmatprep.subr.mxu0 0.0
  %8148 = vmatpush1.msra.mxu0 0.0
  %8149 = vmatprep.subr.mxu0 0.0
  %8150 = vmatpush1.msra.mxu0 0.0
  %8151 = vmatprep.subr.mxu0 0.0
  %8152 = vmatpush1.msra.mxu0 0.0
  %8153 = vmatprep.subr.mxu0 0.0
  %8154 = vmatpush1.msra.mxu0 0.0
  %8155 = vmatprep.subr.mxu0 0.0
  %8156 = vmatpush1.msra.mxu0 0.0
  %8157 = vmatprep.subr.mxu0 0.0
  %8158 = vmatpush1.msra.mxu0 0.0
  %8159 = vmatprep.subr.mxu0 0.0
  %8160 = vmatpush1.msra.mxu0 0.0
  %8161 = vmatprep.subr.mxu0 0.0
  %8162 = vmatpush1.msra.mxu0 0.0
  %8163 = vmatprep.subr.mxu0 0.0
  %8164 = vmatpush1.msra.mxu0 0.0
  %8165 = vmatprep.subr.mxu0 0.0
  %8166 = vmatpush1.msra.mxu0 0.0
  %8167 = vmatprep.mubr.f32.mxu0 0.0
  %8168 = vmatmul.mubr.f32.gmra.mrb[0].mxu0 %v8098
  %v8169 = vpop.f32.mrb[0].mxu0
  %v8170 = vadd.f32 0.0, %v8169
  %v8171 = vpop.f32.mrb[0].mxu0
  %8172 = vmatprep.mubr.f32.mxu0 0.0
  %8173 = vmatmul.mubr.f32.gmra.mrb[0].mxu0 %v8101
  %v8174 = vpop.f32.mrb[0].mxu0
  %v8175 = vadd.f32 0.0, %v8174
  %v8176 = vpop.f32.mrb[0].mxu0
  %8177 = vdwg.mxu0
  %v8178 = vmax.f32 %v8093, %v8170
  %v8179 = vmax.f32 %v8094, %v8175
  %8182 = vrot.lane.b32.xlu0 %v8170, 126
  %v8183 = vpop.permute.xlu0 %8182
  %8184 = vrot.lane.b32.xlu0 %v8175, 126
  %v8185 = vpop.permute.xlu0 %8184
  %v8188 = vmax.f32 %v8178, %v8183
  %v8189 = vmax.f32 %v8179, %v8185
  %v8190 = vld [vmem:[%s1 + $0x5d0] sm:$0xff]
  %v8191 = vld [vmem:[%s1 + $0x5e0] sm:$0xff]
  %v8192 = vld [vmem:[%s1 + $0x5f0] sm:$0xff]
  %v8193 = vld [vmem:[%s1 + $0x600] sm:$0xff]
  %v8194 = vld [vmem:[%s1 + $0x610] sm:$0xff]
  %v8195 = vld [vmem:[%s1 + $0x620] sm:$0xff]
  %v8196 = vld [vmem:[%s1 + $0x630] sm:$0xff]
  %v8197 = vld [vmem:[%s1 + $0x640] sm:$0xff]
  %v8198 = vld [vmem:[%s1 + $0x650] sm:$0xff]
  %v8199 = vld [vmem:[%s1 + $0x660] sm:$0xff]
  %v8200 = vld [vmem:[%s1 + $0x670] sm:$0xff]
  %v8201 = vld [vmem:[%s1 + $0x680] sm:$0xff]
  %v8202 = vld [vmem:[%s1 + $0x690] sm:$0xff]
  %v8203 = vld [vmem:[%s1 + $0x6a0] sm:$0xff]
  %v8204 = vld [vmem:[%s1 + $0x6b0] sm:$0xff]
  %v8205 = vld [vmem:[%s1 + $0x6c0] sm:$0xff]
  %v8206 = vld [vmem:[%s1 + $0x6d0] sm:$0xff]
  %v8207 = vld [vmem:[%s1 + $0x6e0] sm:$0xff]
  %v8208 = vld [vmem:[%s1 + $0x6f0] sm:$0xff]
  %v8209 = vld [vmem:[%s1 + $0x700] sm:$0xff]
  %v8210 = vld [vmem:[%s1 + $0x710] sm:$0xff]
  %v8211 = vld [vmem:[%s1 + $0x720] sm:$0xff]
  %v8212 = vld [vmem:[%s1 + $0x730] sm:$0xff]
  %v8213 = vld [vmem:[%s1 + $0x740] sm:$0xff]
  %v8214 = vld [vmem:[%s1 + $0x750] sm:$0xff]
  %v8215 = vld [vmem:[%s1 + $0x760] sm:$0xff]
  %v8216 = vld [vmem:[%s1 + $0x770] sm:$0xff]
  %v8217 = vld [vmem:[%s1 + $0x780] sm:$0xff]
  %v8218 = vld [vmem:[%s1 + $0x790] sm:$0xff]
  %v8219 = vld [vmem:[%s1 + $0x7a0] sm:$0xff]
  %v8221 = vsel %vm2586, %v8190, 0
  %v8224 = vsel %vm2586, %v8191, 0
  %v8227 = vsel %vm2586, %v8192, 0
  %v8230 = vsel %vm2586, %v8193, 0
  %v8233 = vsel %vm2586, %v8194, 0
  %v8236 = vsel %vm2586, %v8195, 0
  %v8239 = vsel %vm2586, %v8196, 0
  %v8242 = vsel %vm2586, %v8197, 0
  %v8245 = vsel %vm2586, %v8198, 0
  %v8248 = vsel %vm2586, %v8199, 0
  %v8251 = vsel %vm2586, %v8200, 0
  %v8254 = vsel %vm2586, %v8201, 0
  %v8257 = vsel %vm2586, %v8202, 0
  %v8260 = vsel %vm2586, %v8203, 0
  %v8263 = vsel %vm2586, %v8204, 0
  %v8266 = vsel %vm2586, %v8205, 0
  %v8269 = vsel %vm2586, %v8206, 0
  %v8272 = vsel %vm2586, %v8207, 0
  %v8275 = vsel %vm2586, %v8208, 0
  %v8278 = vsel %vm2586, %v8209, 0
  %v8281 = vsel %vm2586, %v8210, 0
  %v8284 = vsel %vm2586, %v8211, 0
  %v8287 = vsel %vm2586, %v8212, 0
  %v8290 = vsel %vm2586, %v8213, 0
  %v8293 = vsel %vm2586, %v8214, 0
  %v8296 = vsel %vm2586, %v8215, 0
  %v8299 = vsel %vm2586, %v8216, 0
  %v8302 = vsel %vm2586, %v8217, 0
  %v8305 = vsel %vm2586, %v8218, 0
  %v8308 = vsel %vm2586, %v8219, 0
  %8310 = vmatprep.subr.mxu0 0.0
  %8311 = vmatpush1.msra.mxu0 %v8188
  %8312 = vmatprep.subr.mxu0 0.0
  %8313 = vmatpush1.msra.mxu0 %v8189
  %8314 = vmatprep.subr.mxu0 0.0
  %8315 = vmatpush1.msra.mxu0 0.0
  %8316 = vmatprep.subr.mxu0 0.0
  %8317 = vmatpush1.msra.mxu0 0.0
  %8318 = vmatprep.subr.mxu0 0.0
  %8319 = vmatpush1.msra.mxu0 0.0
  %8320 = vmatprep.subr.mxu0 0.0
  %8321 = vmatpush1.msra.mxu0 0.0
  %8322 = vmatprep.subr.mxu0 0.0
  %8323 = vmatpush1.msra.mxu0 0.0
  %8324 = vmatprep.subr.mxu0 0.0
  %8325 = vmatpush1.msra.mxu0 0.0
  %8326 = vmatprep.subr.mxu0 0.0
  %8327 = vmatpush1.msra.mxu0 0.0
  %8328 = vmatprep.subr.mxu0 0.0
  %8329 = vmatpush1.msra.mxu0 0.0
  %8330 = vmatprep.subr.mxu0 0.0
  %8331 = vmatpush1.msra.mxu0 0.0
  %8332 = vmatprep.subr.mxu0 0.0
  %8333 = vmatpush1.msra.mxu0 0.0
  %8334 = vmatprep.subr.mxu0 0.0
  %8335 = vmatpush1.msra.mxu0 0.0
  %8336 = vmatprep.subr.mxu0 0.0
  %8337 = vmatpush1.msra.mxu0 0.0
  %8338 = vmatprep.subr.mxu0 0.0
  %8339 = vmatpush1.msra.mxu0 0.0
  %8340 = vmatprep.subr.mxu0 0.0
  %8341 = vmatpush1.msra.mxu0 0.0
  %8342 = vmatprep.subr.mxu0 0.0
  %8343 = vmatpush1.msra.mxu0 0.0
  %8344 = vmatprep.subr.mxu0 0.0
  %8345 = vmatpush1.msra.mxu0 0.0
  %8346 = vmatprep.subr.mxu0 0.0
  %8347 = vmatpush1.msra.mxu0 0.0
  %8348 = vmatprep.subr.mxu0 0.0
  %8349 = vmatpush1.msra.mxu0 0.0
  %8350 = vmatprep.subr.mxu0 0.0
  %8351 = vmatpush1.msra.mxu0 0.0
  %8352 = vmatprep.subr.mxu0 0.0
  %8353 = vmatpush1.msra.mxu0 0.0
  %8354 = vmatprep.subr.mxu0 0.0
  %8355 = vmatpush1.msra.mxu0 0.0
  %8356 = vmatprep.subr.mxu0 0.0
  %8357 = vmatpush1.msra.mxu0 0.0
  %8358 = vmatprep.subr.mxu0 0.0
  %8359 = vmatpush1.msra.mxu0 0.0
  %8360 = vmatprep.subr.mxu0 0.0
  %8361 = vmatpush1.msra.mxu0 0.0
  %8362 = vmatprep.subr.mxu0 0.0
  %8363 = vmatpush1.msra.mxu0 0.0
  %8364 = vmatprep.subr.mxu0 0.0
  %8365 = vmatpush1.msra.mxu0 0.0
  %8366 = vmatprep.subr.mxu0 0.0
  %8367 = vmatpush1.msra.mxu0 0.0
  %8368 = vmatprep.subr.mxu0 0.0
  %8369 = vmatpush1.msra.mxu0 0.0
  %8370 = vmatprep.subr.mxu0 0.0
  %8371 = vmatpush1.msra.mxu0 0.0
  %8372 = vmatprep.subr.mxu0 0.0
  %8373 = vmatpush1.msra.mxu0 0.0
  %8374 = vmatprep.mubr.f32.mxu0 0.0
  %8375 = vmatmul.mubr.f32.gmra.mrb[0].mxu0 %v8221
  %v8376 = vpop.f32.mrb[0].mxu0
  %v8377 = vadd.f32 0.0, %v8376
  %v8378 = vpop.f32.mrb[0].mxu0
  %8379 = vmatprep.mubr.f32.mxu0 0.0
  %8380 = vmatmul.mubr.f32.gmra.mrb[0].mxu0 %v8224
  %v8381 = vpop.f32.mrb[0].mxu0
  %v8382 = vadd.f32 0.0, %v8381
  %v8383 = vpop.f32.mrb[0].mxu0
  %8384 = vmatprep.mubr.f32.mxu0 0.0
  %8385 = vmatmul.mubr.f32.gmra.mrb[0].mxu0 %v8227
  %v8386 = vpop.f32.mrb[0].mxu0
  %v8387 = vadd.f32 0.0, %v8386
  %v8388 = vpop.f32.mrb[0].mxu0
  %8389 = vmatprep.mubr.f32.mxu0 0.0
  %8390 = vmatmul.mubr.f32.gmra.mrb[0].mxu0 %v8230
  %v8391 = vpop.f32.mrb[0].mxu0
  %v8392 = vadd.f32 0.0, %v8391
  %v8393 = vpop.f32.mrb[0].mxu0
  %8394 = vmatprep.mubr.f32.mxu0 0.0
  %8395 = vmatmul.mubr.f32.gmra.mrb[0].mxu0 %v8233
  %v8396 = vpop.f32.mrb[0].mxu0
  %v8397 = vadd.f32 0.0, %v8396
  %v8398 = vpop.f32.mrb[0].mxu0
  %8399 = vmatprep.mubr.f32.mxu0 0.0
  %8400 = vmatmul.mubr.f32.gmra.mrb[0].mxu0 %v8236
  %v8401 = vpop.f32.mrb[0].mxu0
  %v8402 = vadd.f32 0.0, %v8401
  %v8403 = vpop.f32.mrb[0].mxu0
  %8404 = vmatprep.mubr.f32.mxu0 0.0
  %8405 = vmatmul.mubr.f32.gmra.mrb[0].mxu0 %v8239
  %v8406 = vpop.f32.mrb[0].mxu0
  %v8407 = vadd.f32 0.0, %v8406
  %v8408 = vpop.f32.mrb[0].mxu0
  %8409 = vmatprep.mubr.f32.mxu0 0.0
  %8410 = vmatmul.mubr.f32.gmra.mrb[0].mxu0 %v8242
  %v8411 = vpop.f32.mrb[0].mxu0
  %v8412 = vadd.f32 0.0, %v8411
  %v8413 = vpop.f32.mrb[0].mxu0
  %8414 = vmatprep.mubr.f32.mxu0 0.0
  %8415 = vmatmul.mubr.f32.gmra.mrb[0].mxu0 %v8245
  %v8416 = vpop.f32.mrb[0].mxu0
  %v8417 = vadd.f32 0.0, %v8416
  %v8418 = vpop.f32.mrb[0].mxu0
  %8419 = vmatprep.mubr.f32.mxu0 0.0
  %8420 = vmatmul.mubr.f32.gmra.mrb[0].mxu0 %v8248
  %v8421 = vpop.f32.mrb[0].mxu0
  %v8422 = vadd.f32 0.0, %v8421
  %v8423 = vpop.f32.mrb[0].mxu0
  %8424 = vmatprep.mubr.f32.mxu0 0.0
  %8425 = vmatmul.mubr.f32.gmra.mrb[0].mxu0 %v8251
  %v8426 = vpop.f32.mrb[0].mxu0
  %v8427 = vadd.f32 0.0, %v8426
  %v8428 = vpop.f32.mrb[0].mxu0
  %8429 = vmatprep.mubr.f32.mxu0 0.0
  %8430 = vmatmul.mubr.f32.gmra.mrb[0].mxu0 %v8254
  %v8431 = vpop.f32.mrb[0].mxu0
  %v8432 = vadd.f32 0.0, %v8431
  %v8433 = vpop.f32.mrb[0].mxu0
  %8434 = vmatprep.mubr.f32.mxu0 0.0
  %8435 = vmatmul.mubr.f32.gmra.mrb[0].mxu0 %v8257
  %v8436 = vpop.f32.mrb[0].mxu0
  %v8437 = vadd.f32 0.0, %v8436
  %v8438 = vpop.f32.mrb[0].mxu0
  %8439 = vmatprep.mubr.f32.mxu0 0.0
  %8440 = vmatmul.mubr.f32.gmra.mrb[0].mxu0 %v8260
  %v8441 = vpop.f32.mrb[0].mxu0
  %v8442 = vadd.f32 0.0, %v8441
  %v8443 = vpop.f32.mrb[0].mxu0
  %8444 = vmatprep.mubr.f32.mxu0 0.0
  %8445 = vmatmul.mubr.f32.gmra.mrb[0].mxu0 %v8263
  %v8446 = vpop.f32.mrb[0].mxu0
  %v8447 = vadd.f32 0.0, %v8446
  %v8448 = vpop.f32.mrb[0].mxu0
  %8449 = vmatprep.mubr.f32.mxu0 0.0
  %8450 = vmatmul.mubr.f32.gmra.mrb[0].mxu0 %v8266
  %v8451 = vpop.f32.mrb[0].mxu0
  %v8452 = vadd.f32 0.0, %v8451
  %v8453 = vpop.f32.mrb[0].mxu0
  %8454 = vmatprep.mubr.f32.mxu0 0.0
  %8455 = vmatmul.mubr.f32.gmra.mrb[0].mxu0 %v8269
  %v8456 = vpop.f32.mrb[0].mxu0
  %v8457 = vadd.f32 0.0, %v8456
  %v8458 = vpop.f32.mrb[0].mxu0
  %8459 = vmatprep.mubr.f32.mxu0 0.0
  %8460 = vmatmul.mubr.f32.gmra.mrb[0].mxu0 %v8272
  %v8461 = vpop.f32.mrb[0].mxu0
  %v8462 = vadd.f32 0.0, %v8461
  %v8463 = vpop.f32.mrb[0].mxu0
  %8464 = vmatprep.mubr.f32.mxu0 0.0
  %8465 = vmatmul.mubr.f32.gmra.mrb[0].mxu0 %v8275
  %v8466 = vpop.f32.mrb[0].mxu0
  %v8467 = vadd.f32 0.0, %v8466
  %v8468 = vpop.f32.mrb[0].mxu0
  %8469 = vmatprep.mubr.f32.mxu0 0.0
  %8470 = vmatmul.mubr.f32.gmra.mrb[0].mxu0 %v8278
  %v8471 = vpop.f32.mrb[0].mxu0
  %v8472 = vadd.f32 0.0, %v8471
  %v8473 = vpop.f32.mrb[0].mxu0
  %8474 = vmatprep.mubr.f32.mxu0 0.0
  %8475 = vmatmul.mubr.f32.gmra.mrb[0].mxu0 %v8281
  %v8476 = vpop.f32.mrb[0].mxu0
  %v8477 = vadd.f32 0.0, %v8476
  %v8478 = vpop.f32.mrb[0].mxu0
  %8479 = vmatprep.mubr.f32.mxu0 0.0
  %8480 = vmatmul.mubr.f32.gmra.mrb[0].mxu0 %v8284
  %v8481 = vpop.f32.mrb[0].mxu0
  %v8482 = vadd.f32 0.0, %v8481
  %v8483 = vpop.f32.mrb[0].mxu0
  %8484 = vmatprep.mubr.f32.mxu0 0.0
  %8485 = vmatmul.mubr.f32.gmra.mrb[0].mxu0 %v8287
  %v8486 = vpop.f32.mrb[0].mxu0
  %v8487 = vadd.f32 0.0, %v8486
  %v8488 = vpop.f32.mrb[0].mxu0
  %8489 = vmatprep.mubr.f32.mxu0 0.0
  %8490 = vmatmul.mubr.f32.gmra.mrb[0].mxu0 %v8290
  %v8491 = vpop.f32.mrb[0].mxu0
  %v8492 = vadd.f32 0.0, %v8491
  %v8493 = vpop.f32.mrb[0].mxu0
  %8494 = vmatprep.mubr.f32.mxu0 0.0
  %8495 = vmatmul.mubr.f32.gmra.mrb[0].mxu0 %v8293
  %v8496 = vpop.f32.mrb[0].mxu0
  %v8497 = vadd.f32 0.0, %v8496
  %v8498 = vpop.f32.mrb[0].mxu0
  %8499 = vmatprep.mubr.f32.mxu0 0.0
  %8500 = vmatmul.mubr.f32.gmra.mrb[0].mxu0 %v8296
  %v8501 = vpop.f32.mrb[0].mxu0
  %v8502 = vadd.f32 0.0, %v8501
  %v8503 = vpop.f32.mrb[0].mxu0
  %8504 = vmatprep.mubr.f32.mxu0 0.0
  %8505 = vmatmul.mubr.f32.gmra.mrb[0].mxu0 %v8299
  %v8506 = vpop.f32.mrb[0].mxu0
  %v8507 = vadd.f32 0.0, %v8506
  %v8508 = vpop.f32.mrb[0].mxu0
  %8509 = vmatprep.mubr.f32.mxu0 0.0
  %8510 = vmatmul.mubr.f32.gmra.mrb[0].mxu0 %v8302
  %v8511 = vpop.f32.mrb[0].mxu0
  %v8512 = vadd.f32 0.0, %v8511
  %v8513 = vpop.f32.mrb[0].mxu0
  %8514 = vmatprep.mubr.f32.mxu0 0.0
  %8515 = vmatmul.mubr.f32.gmra.mrb[0].mxu0 %v8305
  %v8516 = vpop.f32.mrb[0].mxu0
  %v8517 = vadd.f32 0.0, %v8516
  %v8518 = vpop.f32.mrb[0].mxu0
  %8519 = vmatprep.mubr.f32.mxu0 0.0
  %8520 = vmatmul.mubr.f32.gmra.mrb[0].mxu0 %v8308
  %v8521 = vpop.f32.mrb[0].mxu0
  %v8522 = vadd.f32 0.0, %v8521
  %v8523 = vpop.f32.mrb[0].mxu0
  %8524 = vdwg.mxu0
  %v8525 = vld [vmem:[%s2 + $0x40] sm:$0x3]
  %8527 = vrot.lane.b32.xlu0 %v8525, 123
  %v8528 = vpop.permute.xlu0 %8527
  %v8530 = vsel %vm2896, %v8427, 0
  %v8533 = vsel %vm2896, %v8432, 0
  %v8536 = vsel %vm2896, %v8437, 0
  %v8539 = vsel %vm2896, %v8442, 0
  %v8542 = vsel %vm2896, %v8447, 0
  %v8545 = vsel %vm2896, %v8452, 0
  %v8548 = vsel %vm2896, %v8457, 0
  %v8551 = vsel %vm2896, %v8462, 0
  %v8554 = vsel %vm2896, %v8467, 0
  %v8557 = vsel %vm2896, %v8472, 0
  %v8559 = vsel %vm1137, %v8528, 0
  %8561 = vmatprep.subr.mxu0 0.0
  %8562 = vmatpush1.msra.mxu0 %v8559
  %8563 = vmatprep.subr.mxu0 0.0
  %8564 = vmatpush1.msra.mxu0 0.0
  %8565 = vmatprep.subr.mxu0 0.0
  %8566 = vmatpush1.msra.mxu0 0.0
  %8567 = vmatprep.subr.mxu0 0.0
  %8568 = vmatpush1.msra.mxu0 0.0
  %8569 = vmatprep.subr.mxu0 0.0
  %8570 = vmatpush1.msra.mxu0 0.0
  %8571 = vmatprep.subr.mxu0 0.0
  %8572 = vmatpush1.msra.mxu0 0.0
  %8573 = vmatprep.subr.mxu0 0.0
  %8574 = vmatpush1.msra.mxu0 0.0
  %8575 = vmatprep.subr.mxu0 0.0
  %8576 = vmatpush1.msra.mxu0 0.0
  %8577 = vmatprep.subr.mxu0 0.0
  %8578 = vmatpush1.msra.mxu0 0.0
  %8579 = vmatprep.subr.mxu0 0.0
  %8580 = vmatpush1.msra.mxu0 0.0
  %8581 = vmatprep.subr.mxu0 0.0
  %8582 = vmatpush1.msra.mxu0 0.0
  %8583 = vmatprep.subr.mxu0 0.0
  %8584 = vmatpush1.msra.mxu0 0.0
  %8585 = vmatprep.subr.mxu0 0.0
  %8586 = vmatpush1.msra.mxu0 0.0
  %8587 = vmatprep.subr.mxu0 0.0
  %8588 = vmatpush1.msra.mxu0 0.0
  %8589 = vmatprep.subr.mxu0 0.0
  %8590 = vmatpush1.msra.mxu0 0.0
  %8591 = vmatprep.subr.mxu0 0.0
  %8592 = vmatpush1.msra.mxu0 0.0
  %8593 = vmatprep.subr.mxu0 0.0
  %8594 = vmatpush1.msra.mxu0 0.0
  %8595 = vmatprep.subr.mxu0 0.0
  %8596 = vmatpush1.msra.mxu0 0.0
  %8597 = vmatprep.subr.mxu0 0.0
  %8598 = vmatpush1.msra.mxu0 0.0
  %8599 = vmatprep.subr.mxu0 0.0
  %8600 = vmatpush1.msra.mxu0 0.0
  %8601 = vmatprep.subr.mxu0 0.0
  %8602 = vmatpush1.msra.mxu0 0.0
  %8603 = vmatprep.subr.mxu0 0.0
  %8604 = vmatpush1.msra.mxu0 0.0
  %8605 = vmatprep.subr.mxu0 0.0
  %8606 = vmatpush1.msra.mxu0 0.0
  %8607 = vmatprep.subr.mxu0 0.0
  %8608 = vmatpush1.msra.mxu0 0.0
  %8609 = vmatprep.subr.mxu0 0.0
  %8610 = vmatpush1.msra.mxu0 0.0
  %8611 = vmatprep.subr.mxu0 0.0
  %8612 = vmatpush1.msra.mxu0 0.0
  %8613 = vmatprep.subr.mxu0 0.0
  %8614 = vmatpush1.msra.mxu0 0.0
  %8615 = vmatprep.subr.mxu0 0.0
  %8616 = vmatpush1.msra.mxu0 0.0
  %8617 = vmatprep.subr.mxu0 0.0
  %8618 = vmatpush1.msra.mxu0 0.0
  %8619 = vmatprep.subr.mxu0 0.0
  %8620 = vmatpush1.msra.mxu0 0.0
  %8621 = vmatprep.subr.mxu0 0.0
  %8622 = vmatpush1.msra.mxu0 0.0
  %8623 = vmatprep.subr.mxu0 0.0
  %8624 = vmatpush1.msra.mxu0 0.0
  %8625 = vmatprep.mubr.f32.mxu0 0.0
  %8626 = vmatmul.mubr.f32.gmra.mrb[0].mxu0 %v8530
  %v8627 = vpop.f32.mrb[0].mxu0
  %v8628 = vadd.f32 0.0, %v8627
  %v8629 = vpop.f32.mrb[0].mxu0
  %8630 = vmatprep.mubr.f32.mxu0 0.0
  %8631 = vmatmul.mubr.f32.gmra.mrb[0].mxu0 %v8533
  %v8632 = vpop.f32.mrb[0].mxu0
  %v8633 = vadd.f32 0.0, %v8632
  %v8634 = vpop.f32.mrb[0].mxu0
  %8635 = vmatprep.mubr.f32.mxu0 0.0
  %8636 = vmatmul.mubr.f32.gmra.mrb[0].mxu0 %v8536
  %v8637 = vpop.f32.mrb[0].mxu0
  %v8638 = vadd.f32 0.0, %v8637
  %v8639 = vpop.f32.mrb[0].mxu0
  %8640 = vmatprep.mubr.f32.mxu0 0.0
  %8641 = vmatmul.mubr.f32.gmra.mrb[0].mxu0 %v8539
  %v8642 = vpop.f32.mrb[0].mxu0
  %v8643 = vadd.f32 0.0, %v8642
  %v8644 = vpop.f32.mrb[0].mxu0
  %8645 = vmatprep.mubr.f32.mxu0 0.0
  %8646 = vmatmul.mubr.f32.gmra.mrb[0].mxu0 %v8542
  %v8647 = vpop.f32.mrb[0].mxu0
  %v8648 = vadd.f32 0.0, %v8647
  %v8649 = vpop.f32.mrb[0].mxu0
  %8650 = vmatprep.mubr.f32.mxu0 0.0
  %8651 = vmatmul.mubr.f32.gmra.mrb[0].mxu0 %v8545
  %v8652 = vpop.f32.mrb[0].mxu0
  %v8653 = vadd.f32 0.0, %v8652
  %v8654 = vpop.f32.mrb[0].mxu0
  %8655 = vmatprep.mubr.f32.mxu0 0.0
  %8656 = vmatmul.mubr.f32.gmra.mrb[0].mxu0 %v8548
  %v8657 = vpop.f32.mrb[0].mxu0
  %v8658 = vadd.f32 0.0, %v8657
  %v8659 = vpop.f32.mrb[0].mxu0
  %8660 = vmatprep.mubr.f32.mxu0 0.0
  %8661 = vmatmul.mubr.f32.gmra.mrb[0].mxu0 %v8551
  %v8662 = vpop.f32.mrb[0].mxu0
  %v8663 = vadd.f32 0.0, %v8662
  %v8664 = vpop.f32.mrb[0].mxu0
  %8665 = vmatprep.mubr.f32.mxu0 0.0
  %8666 = vmatmul.mubr.f32.gmra.mrb[0].mxu0 %v8554
  %v8667 = vpop.f32.mrb[0].mxu0
  %v8668 = vadd.f32 0.0, %v8667
  %v8669 = vpop.f32.mrb[0].mxu0
  %8670 = vmatprep.mubr.f32.mxu0 0.0
  %8671 = vmatmul.mubr.f32.gmra.mrb[0].mxu0 %v8557
  %v8672 = vpop.f32.mrb[0].mxu0
  %v8673 = vadd.f32 0.0, %v8672
  %v8674 = vpop.f32.mrb[0].mxu0
  %8675 = vdwg.mxu0
  %v8677 = vsel %vm2896, %v8377, 0
  %v8680 = vsel %vm2896, %v8382, 0
  %v8683 = vsel %vm2896, %v8387, 0
  %v8686 = vsel %vm2896, %v8392, 0
  %v8689 = vsel %vm2896, %v8397, 0
  %v8692 = vsel %vm2896, %v8402, 0
  %v8695 = vsel %vm2896, %v8407, 0
  %v8698 = vsel %vm2896, %v8412, 0
  %v8701 = vsel %vm2896, %v8417, 0
  %v8704 = vsel %vm2896, %v8422, 0
  %v8706 = vsel %vm1137, %v8525, 0
  %8708 = vmatprep.subr.mxu0 0.0
  %8709 = vmatpush1.msra.mxu0 %v8706
  %8710 = vmatprep.subr.mxu0 0.0
  %8711 = vmatpush1.msra.mxu0 0.0
  %8712 = vmatprep.subr.mxu0 0.0
  %8713 = vmatpush1.msra.mxu0 0.0
  %8714 = vmatprep.subr.mxu0 0.0
  %8715 = vmatpush1.msra.mxu0 0.0
  %8716 = vmatprep.subr.mxu0 0.0
  %8717 = vmatpush1.msra.mxu0 0.0
  %8718 = vmatprep.subr.mxu0 0.0
  %8719 = vmatpush1.msra.mxu0 0.0
  %8720 = vmatprep.subr.mxu0 0.0
  %8721 = vmatpush1.msra.mxu0 0.0
  %8722 = vmatprep.subr.mxu0 0.0
  %8723 = vmatpush1.msra.mxu0 0.0
  %8724 = vmatprep.subr.mxu0 0.0
  %8725 = vmatpush1.msra.mxu0 0.0
  %8726 = vmatprep.subr.mxu0 0.0
  %8727 = vmatpush1.msra.mxu0 0.0
  %8728 = vmatprep.subr.mxu0 0.0
  %8729 = vmatpush1.msra.mxu0 0.0
  %8730 = vmatprep.subr.mxu0 0.0
  %8731 = vmatpush1.msra.mxu0 0.0
  %8732 = vmatprep.subr.mxu0 0.0
  %8733 = vmatpush1.msra.mxu0 0.0
  %8734 = vmatprep.subr.mxu0 0.0
  %8735 = vmatpush1.msra.mxu0 0.0
  %8736 = vmatprep.subr.mxu0 0.0
  %8737 = vmatpush1.msra.mxu0 0.0
  %8738 = vmatprep.subr.mxu0 0.0
  %8739 = vmatpush1.msra.mxu0 0.0
  %8740 = vmatprep.subr.mxu0 0.0
  %8741 = vmatpush1.msra.mxu0 0.0
  %8742 = vmatprep.subr.mxu0 0.0
  %8743 = vmatpush1.msra.mxu0 0.0
  %8744 = vmatprep.subr.mxu0 0.0
  %8745 = vmatpush1.msra.mxu0 0.0
  %8746 = vmatprep.subr.mxu0 0.0
  %8747 = vmatpush1.msra.mxu0 0.0
  %8748 = vmatprep.subr.mxu0 0.0
  %8749 = vmatpush1.msra.mxu0 0.0
  %8750 = vmatprep.subr.mxu0 0.0
  %8751 = vmatpush1.msra.mxu0 0.0
  %8752 = vmatprep.subr.mxu0 0.0
  %8753 = vmatpush1.msra.mxu0 0.0
  %8754 = vmatprep.subr.mxu0 0.0
  %8755 = vmatpush1.msra.mxu0 0.0
  %8756 = vmatprep.subr.mxu0 0.0
  %8757 = vmatpush1.msra.mxu0 0.0
  %8758 = vmatprep.subr.mxu0 0.0
  %8759 = vmatpush1.msra.mxu0 0.0
  %8760 = vmatprep.subr.mxu0 0.0
  %8761 = vmatpush1.msra.mxu0 0.0
  %8762 = vmatprep.subr.mxu0 0.0
  %8763 = vmatpush1.msra.mxu0 0.0
  %8764 = vmatprep.subr.mxu0 0.0
  %8765 = vmatpush1.msra.mxu0 0.0
  %8766 = vmatprep.subr.mxu0 0.0
  %8767 = vmatpush1.msra.mxu0 0.0
  %8768 = vmatprep.subr.mxu0 0.0
  %8769 = vmatpush1.msra.mxu0 0.0
  %8770 = vmatprep.subr.mxu0 0.0
  %8771 = vmatpush1.msra.mxu0 0.0
  %8772 = vmatprep.mubr.f32.mxu0 0.0
  %8773 = vmatmul.mubr.f32.gmra.mrb[0].mxu0 %v8677
  %v8774 = vpop.f32.mrb[0].mxu0
  %v8775 = vadd.f32 %v8628, %v8774
  %v8776 = vpop.f32.mrb[0].mxu0
  %8777 = vmatprep.mubr.f32.mxu0 0.0
  %8778 = vmatmul.mubr.f32.gmra.mrb[0].mxu0 %v8680
  %v8779 = vpop.f32.mrb[0].mxu0
  %v8780 = vadd.f32 %v8633, %v8779
  %v8781 = vpop.f32.mrb[0].mxu0
  %8782 = vmatprep.mubr.f32.mxu0 0.0
  %8783 = vmatmul.mubr.f32.gmra.mrb[0].mxu0 %v8683
  %v8784 = vpop.f32.mrb[0].mxu0
  %v8785 = vadd.f32 %v8638, %v8784
  %v8786 = vpop.f32.mrb[0].mxu0
  %8787 = vmatprep.mubr.f32.mxu0 0.0
  %8788 = vmatmul.mubr.f32.gmra.mrb[0].mxu0 %v8686
  %v8789 = vpop.f32.mrb[0].mxu0
  %v8790 = vadd.f32 %v8643, %v8789
  %v8791 = vpop.f32.mrb[0].mxu0
  %8792 = vmatprep.mubr.f32.mxu0 0.0
  %8793 = vmatmul.mubr.f32.gmra.mrb[0].mxu0 %v8689
  %v8794 = vpop.f32.mrb[0].mxu0
  %v8795 = vadd.f32 %v8648, %v8794
  %v8796 = vpop.f32.mrb[0].mxu0
  %8797 = vmatprep.mubr.f32.mxu0 0.0
  %8798 = vmatmul.mubr.f32.gmra.mrb[0].mxu0 %v8692
  %v8799 = vpop.f32.mrb[0].mxu0
  %v8800 = vadd.f32 %v8653, %v8799
  %v8801 = vpop.f32.mrb[0].mxu0
  %8802 = vmatprep.mubr.f32.mxu0 0.0
  %8803 = vmatmul.mubr.f32.gmra.mrb[0].mxu0 %v8695
  %v8804 = vpop.f32.mrb[0].mxu0
  %v8805 = vadd.f32 %v8658, %v8804
  %v8806 = vpop.f32.mrb[0].mxu0
  %8807 = vmatprep.mubr.f32.mxu0 0.0
  %8808 = vmatmul.mubr.f32.gmra.mrb[0].mxu0 %v8698
  %v8809 = vpop.f32.mrb[0].mxu0
  %v8810 = vadd.f32 %v8663, %v8809
  %v8811 = vpop.f32.mrb[0].mxu0
  %8812 = vmatprep.mubr.f32.mxu0 0.0
  %8813 = vmatmul.mubr.f32.gmra.mrb[0].mxu0 %v8701
  %v8814 = vpop.f32.mrb[0].mxu0
  %v8815 = vadd.f32 %v8668, %v8814
  %v8816 = vpop.f32.mrb[0].mxu0
  %8817 = vmatprep.mubr.f32.mxu0 0.0
  %8818 = vmatmul.mubr.f32.gmra.mrb[0].mxu0 %v8704
  %v8819 = vpop.f32.mrb[0].mxu0
  %v8820 = vadd.f32 %v8673, %v8819
  %v8821 = vpop.f32.mrb[0].mxu0
  %8822 = vdwg.mxu0
  %8823 = vrot.lane.b32.xlu0 %v8525, 118
  %v8824 = vpop.permute.xlu0 %8823
  %v8826 = vsel %vm2896, %v8477, 0
  %v8829 = vsel %vm2896, %v8482, 0
  %v8832 = vsel %vm2896, %v8487, 0
  %v8835 = vsel %vm2896, %v8492, 0
  %v8838 = vsel %vm2896, %v8497, 0
  %v8841 = vsel %vm2896, %v8502, 0
  %v8844 = vsel %vm2896, %v8507, 0
  %v8847 = vsel %vm2896, %v8512, 0
  %v8850 = vsel %vm2896, %v8517, 0
  %v8853 = vsel %vm2896, %v8522, 0
  %v8855 = vsel %vm1137, %v8824, 0
  %8857 = vmatprep.subr.mxu0 0.0
  %8858 = vmatpush1.msra.mxu0 %v8855
  %8859 = vmatprep.subr.mxu0 0.0
  %8860 = vmatpush1.msra.mxu0 0.0
  %8861 = vmatprep.subr.mxu0 0.0
  %8862 = vmatpush1.msra.mxu0 0.0
  %8863 = vmatprep.subr.mxu0 0.0
  %8864 = vmatpush1.msra.mxu0 0.0
  %8865 = vmatprep.subr.mxu0 0.0
  %8866 = vmatpush1.msra.mxu0 0.0
  %8867 = vmatprep.subr.mxu0 0.0
  %8868 = vmatpush1.msra.mxu0 0.0
  %8869 = vmatprep.subr.mxu0 0.0
  %8870 = vmatpush1.msra.mxu0 0.0
  %8871 = vmatprep.subr.mxu0 0.0
  %8872 = vmatpush1.msra.mxu0 0.0
  %8873 = vmatprep.subr.mxu0 0.0
  %8874 = vmatpush1.msra.mxu0 0.0
  %8875 = vmatprep.subr.mxu0 0.0
  %8876 = vmatpush1.msra.mxu0 0.0
  %8877 = vmatprep.subr.mxu0 0.0
  %8878 = vmatpush1.msra.mxu0 0.0
  %8879 = vmatprep.subr.mxu0 0.0
  %8880 = vmatpush1.msra.mxu0 0.0
  %8881 = vmatprep.subr.mxu0 0.0
  %8882 = vmatpush1.msra.mxu0 0.0
  %8883 = vmatprep.subr.mxu0 0.0
  %8884 = vmatpush1.msra.mxu0 0.0
  %8885 = vmatprep.subr.mxu0 0.0
  %8886 = vmatpush1.msra.mxu0 0.0
  %8887 = vmatprep.subr.mxu0 0.0
  %8888 = vmatpush1.msra.mxu0 0.0
  %8889 = vmatprep.subr.mxu0 0.0
  %8890 = vmatpush1.msra.mxu0 0.0
  %8891 = vmatprep.subr.mxu0 0.0
  %8892 = vmatpush1.msra.mxu0 0.0
  %8893 = vmatprep.subr.mxu0 0.0
  %8894 = vmatpush1.msra.mxu0 0.0
  %8895 = vmatprep.subr.mxu0 0.0
  %8896 = vmatpush1.msra.mxu0 0.0
  %8897 = vmatprep.subr.mxu0 0.0
  %8898 = vmatpush1.msra.mxu0 0.0
  %8899 = vmatprep.subr.mxu0 0.0
  %8900 = vmatpush1.msra.mxu0 0.0
  %8901 = vmatprep.subr.mxu0 0.0
  %8902 = vmatpush1.msra.mxu0 0.0
  %8903 = vmatprep.subr.mxu0 0.0
  %8904 = vmatpush1.msra.mxu0 0.0
  %8905 = vmatprep.subr.mxu0 0.0
  %8906 = vmatpush1.msra.mxu0 0.0
  %8907 = vmatprep.subr.mxu0 0.0
  %8908 = vmatpush1.msra.mxu0 0.0
  %8909 = vmatprep.subr.mxu0 0.0
  %8910 = vmatpush1.msra.mxu0 0.0
  %8911 = vmatprep.subr.mxu0 0.0
  %8912 = vmatpush1.msra.mxu0 0.0
  %8913 = vmatprep.subr.mxu0 0.0
  %8914 = vmatpush1.msra.mxu0 0.0
  %8915 = vmatprep.subr.mxu0 0.0
  %8916 = vmatpush1.msra.mxu0 0.0
  %8917 = vmatprep.subr.mxu0 0.0
  %8918 = vmatpush1.msra.mxu0 0.0
  %8919 = vmatprep.subr.mxu0 0.0
  %8920 = vmatpush1.msra.mxu0 0.0
  %8921 = vmatprep.mubr.f32.mxu0 0.0
  %8922 = vmatmul.mubr.f32.gmra.mrb[0].mxu0 %v8826
  %v8923 = vpop.f32.mrb[0].mxu0
  %v8924 = vadd.f32 0.0, %v8923
  %v8925 = vpop.f32.mrb[0].mxu0
  %8926 = vmatprep.mubr.f32.mxu0 0.0
  %8927 = vmatmul.mubr.f32.gmra.mrb[0].mxu0 %v8829
  %v8928 = vpop.f32.mrb[0].mxu0
  %v8929 = vadd.f32 0.0, %v8928
  %v8930 = vpop.f32.mrb[0].mxu0
  %8931 = vmatprep.mubr.f32.mxu0 0.0
  %8932 = vmatmul.mubr.f32.gmra.mrb[0].mxu0 %v8832
  %v8933 = vpop.f32.mrb[0].mxu0
  %v8934 = vadd.f32 0.0, %v8933
  %v8935 = vpop.f32.mrb[0].mxu0
  %8936 = vmatprep.mubr.f32.mxu0 0.0
  %8937 = vmatmul.mubr.f32.gmra.mrb[0].mxu0 %v8835
  %v8938 = vpop.f32.mrb[0].mxu0
  %v8939 = vadd.f32 0.0, %v8938
  %v8940 = vpop.f32.mrb[0].mxu0
  %8941 = vmatprep.mubr.f32.mxu0 0.0
  %8942 = vmatmul.mubr.f32.gmra.mrb[0].mxu0 %v8838
  %v8943 = vpop.f32.mrb[0].mxu0
  %v8944 = vadd.f32 0.0, %v8943
  %v8945 = vpop.f32.mrb[0].mxu0
  %8946 = vmatprep.mubr.f32.mxu0 0.0
  %8947 = vmatmul.mubr.f32.gmra.mrb[0].mxu0 %v8841
  %v8948 = vpop.f32.mrb[0].mxu0
  %v8949 = vadd.f32 0.0, %v8948
  %v8950 = vpop.f32.mrb[0].mxu0
  %8951 = vmatprep.mubr.f32.mxu0 0.0
  %8952 = vmatmul.mubr.f32.gmra.mrb[0].mxu0 %v8844
  %v8953 = vpop.f32.mrb[0].mxu0
  %v8954 = vadd.f32 0.0, %v8953
  %v8955 = vpop.f32.mrb[0].mxu0
  %8956 = vmatprep.mubr.f32.mxu0 0.0
  %8957 = vmatmul.mubr.f32.gmra.mrb[0].mxu0 %v8847
  %v8958 = vpop.f32.mrb[0].mxu0
  %v8959 = vadd.f32 0.0, %v8958
  %v8960 = vpop.f32.mrb[0].mxu0
  %8961 = vmatprep.mubr.f32.mxu0 0.0
  %8962 = vmatmul.mubr.f32.gmra.mrb[0].mxu0 %v8850
  %v8963 = vpop.f32.mrb[0].mxu0
  %v8964 = vadd.f32 0.0, %v8963
  %v8965 = vpop.f32.mrb[0].mxu0
  %8966 = vmatprep.mubr.f32.mxu0 0.0
  %8967 = vmatmul.mubr.f32.gmra.mrb[0].mxu0 %v8853
  %v8968 = vpop.f32.mrb[0].mxu0
  %v8969 = vadd.f32 0.0, %v8968
  %v8970 = vpop.f32.mrb[0].mxu0
  %8971 = vdwg.mxu0
  %v8972 = vadd.f32 %v8775, %v8924
  %v8973 = vadd.f32 %v8780, %v8929
  %v8974 = vadd.f32 %v8785, %v8934
  %v8975 = vadd.f32 %v8790, %v8939
  %v8976 = vadd.f32 %v8795, %v8944
  %v8977 = vadd.f32 %v8800, %v8949
  %v8978 = vadd.f32 %v8805, %v8954
  %v8979 = vadd.f32 %v8810, %v8959
  %v8980 = vadd.f32 %v8815, %v8964
  %v8981 = vadd.f32 %v8820, %v8969
  %v8982 = vld [vmem:[%s3 + $0xb8] sm:$0xff]
  %v8983 = vld [vmem:[%s3 + $0xc0] sm:$0xff]
  %v8984 = vld [vmem:[%s3 + $0xc8] sm:$0xff]
  %v8985 = vld [vmem:[%s3 + $0xd0] sm:$0xff]
  %v8986 = vld [vmem:[%s3 + $0xd8] sm:$0xff]
  %v8987 = vld [vmem:[%s3 + $0xe0] sm:$0xff]
  %v8988 = vld [vmem:[%s3 + $0xe8] sm:$0xff]
  %v8989 = vld [vmem:[%s3 + $0xf0] sm:$0xff]
  %v8990 = vld [vmem:[%s3 + $0xf8] sm:$0xff]
  %v8991 = vld [vmem:[%s3 + $0x100] sm:$0xff]
  %8993 = vset.pattern.permute.xlu0 0
  %8994 = vperm.xlu0 %8993, %v8982
  %v8995 = vpop.permute.xlu0 %8994
  %8998 = vset.pattern.permute.xlu0 0
  %8999 = vperm.xlu0 %8998, %v8983
  %v9000 = vpop.permute.xlu0 %8999
  %9003 = vset.pattern.permute.xlu0 0
  %9004 = vperm.xlu0 %9003, %v8984
  %v9005 = vpop.permute.xlu0 %9004
  %9008 = vset.pattern.permute.xlu0 0
  %9009 = vperm.xlu0 %9008, %v8985
  %v9010 = vpop.permute.xlu0 %9009
  %9013 = vset.pattern.permute.xlu0 0
  %9014 = vperm.xlu0 %9013, %v8986
  %v9015 = vpop.permute.xlu0 %9014
  %9018 = vset.pattern.permute.xlu0 0
  %9019 = vperm.xlu0 %9018, %v8987
  %v9020 = vpop.permute.xlu0 %9019
  %9023 = vset.pattern.permute.xlu0 0
  %9024 = vperm.xlu0 %9023, %v8988
  %v9025 = vpop.permute.xlu0 %9024
  %9028 = vset.pattern.permute.xlu0 0
  %9029 = vperm.xlu0 %9028, %v8989
  %v9030 = vpop.permute.xlu0 %9029
  %9033 = vset.pattern.permute.xlu0 0
  %9034 = vperm.xlu0 %9033, %v8990
  %v9035 = vpop.permute.xlu0 %9034
  %9038 = vset.pattern.permute.xlu0 0
  %9039 = vperm.xlu0 %9038, %v8991
  %v9040 = vpop.permute.xlu0 %9039
  %v9042 = vadd.f32 %v8972, %v8995
  %v9043 = vadd.f32 %v8973, %v9000
  %v9044 = vadd.f32 %v8974, %v9005
  %v9045 = vadd.f32 %v8975, %v9010
  %v9046 = vadd.f32 %v8976, %v9015
  %v9047 = vadd.f32 %v8977, %v9020
  %v9048 = vadd.f32 %v8978, %v9025
  %v9049 = vadd.f32 %v8979, %v9030
  %v9050 = vadd.f32 %v8980, %v9035
  %v9051 = vadd.f32 %v8981, %v9040
  %v9052 = vmax.f32 %v9042, 0.0
  %v9053 = vmax.f32 %v9043, 0.0
  %v9054 = vmax.f32 %v9044, 0.0
  %v9055 = vmax.f32 %v9045, 0.0
  %v9056 = vmax.f32 %v9046, 0.0
  %v9057 = vmax.f32 %v9047, 0.0
  %v9058 = vmax.f32 %v9048, 0.0
  %v9059 = vmax.f32 %v9049, 0.0
  %v9060 = vmax.f32 %v9050, 0.0
  %v9061 = vmax.f32 %v9051, 0.0
  %v9062 = vld [vmem:[%s1 + $0x7b0] sm:$0xff]
  %v9063 = vld [vmem:[%s1 + $0x7c0] sm:$0xff]
  %v9064 = vld [vmem:[%s1 + $0x7d0] sm:$0xff]
  %v9065 = vld [vmem:[%s1 + $0x7e0] sm:$0xff]
  %v9066 = vld [vmem:[%s1 + $0x7f0] sm:$0xff]
  %v9067 = vld [vmem:[%s1 + $0x800] sm:$0xff]
  %v9068 = vld [vmem:[%s1 + $0x810] sm:$0xff]
  %v9069 = vld [vmem:[%s1 + $0x820] sm:$0xff]
  %v9070 = vld [vmem:[%s1 + $0x830] sm:$0xff]
  %v9071 = vld [vmem:[%s1 + $0x840] sm:$0xff]
  %v9072 = vld [vmem:[%s1 + $0x850] sm:$0xff]
  %v9073 = vld [vmem:[%s1 + $0x860] sm:$0xff]
  %v9074 = vld [vmem:[%s1 + $0x870] sm:$0xff]
  %v9075 = vld [vmem:[%s1 + $0x880] sm:$0xff]
  %v9076 = vld [vmem:[%s1 + $0x890] sm:$0xff]
  %v9077 = vld [vmem:[%s1 + $0x8a0] sm:$0xff]
  %v9078 = vld [vmem:[%s1 + $0x8b0] sm:$0xff]
  %v9079 = vld [vmem:[%s1 + $0x8c0] sm:$0xff]
  %v9080 = vld [vmem:[%s1 + $0x8d0] sm:$0xff]
  %v9081 = vld [vmem:[%s1 + $0x8e0] sm:$0xff]
  %v9082 = vld [vmem:[%s1 + $0x8f0] sm:$0xff]
  %v9083 = vld [vmem:[%s1 + $0x900] sm:$0xff]
  %v9084 = vld [vmem:[%s1 + $0x910] sm:$0xff]
  %v9085 = vld [vmem:[%s1 + $0x920] sm:$0xff]
  %v9086 = vld [vmem:[%s1 + $0x930] sm:$0xff]
  %v9087 = vld [vmem:[%s1 + $0x940] sm:$0xff]
  %v9088 = vld [vmem:[%s1 + $0x950] sm:$0xff]
  %v9089 = vld [vmem:[%s1 + $0x960] sm:$0xff]
  %v9090 = vld [vmem:[%s1 + $0x970] sm:$0xff]
  %v9091 = vld [vmem:[%s1 + $0x980] sm:$0xff]
  %v9092 = vld [vmem:[%s1 + $0x990] sm:$0xff]
  %v9093 = vld [vmem:[%s1 + $0x9a0] sm:$0xff]
  %v9094 = vld [vmem:[%s1 + $0x9b0] sm:$0xff]
  %v9095 = vld [vmem:[%s1 + $0x9c0] sm:$0xff]
  %v9096 = vld [vmem:[%s1 + $0x9d0] sm:$0xff]
  %v9097 = vld [vmem:[%s1 + $0x9e0] sm:$0xff]
  %v9098 = vld [vmem:[%s1 + $0x9f0] sm:$0xff]
  %v9099 = vld [vmem:[%s1 + $0xa00] sm:$0xff]
  %v9100 = vld [vmem:[%s1 + $0xa10] sm:$0xff]
  %v9101 = vld [vmem:[%s1 + $0xa20] sm:$0xff]
  %v9102 = vld [vmem:[%s1 + $0xa30] sm:$0xff]
  %v9103 = vld [vmem:[%s1 + $0xa40] sm:$0xff]
  %v9104 = vld [vmem:[%s1 + $0xa50] sm:$0xff]
  %v9105 = vld [vmem:[%s1 + $0xa60] sm:$0xff]
  %v9106 = vld [vmem:[%s1 + $0xa70] sm:$0xff]
  %v9107 = vld [vmem:[%s1 + $0xa80] sm:$0xff]
  %v9108 = vld [vmem:[%s1 + $0xa90] sm:$0xff]
  %v9109 = vld [vmem:[%s1 + $0xaa0] sm:$0xff]
  %v9110 = vld [vmem:[%s1 + $0xab0] sm:$0xff]
  %v9111 = vld [vmem:[%s1 + $0xac0] sm:$0xff]
  %v9112 = vld [vmem:[%s1 + $0xad0] sm:$0xff]
  %v9113 = vld [vmem:[%s1 + $0xae0] sm:$0xff]
  %v9114 = vld [vmem:[%s1 + $0xaf0] sm:$0xff]
  %v9115 = vld [vmem:[%s1 + $0xb00] sm:$0xff]
  %v9116 = vld [vmem:[%s1 + $0xb10] sm:$0xff]
  %v9117 = vld [vmem:[%s1 + $0xb20] sm:$0xff]
  %v9118 = vld [vmem:[%s1 + $0xb30] sm:$0xff]
  %v9119 = vld [vmem:[%s1 + $0xb40] sm:$0xff]
  %v9120 = vld [vmem:[%s1 + $0xb50] sm:$0xff]
  %v9121 = vld [vmem:[%s1 + $0xb60] sm:$0xff]
  %v9122 = vld [vmem:[%s1 + $0xb70] sm:$0xff]
  %v9123 = vld [vmem:[%s1 + $0xb80] sm:$0xff]
  %v9124 = vld [vmem:[%s1 + $0xb90] sm:$0xff]
  %v9125 = vld [vmem:[%s1 + $0xba0] sm:$0xff]
  %v9126 = vld [vmem:[%s1 + $0xbb0] sm:$0xff]
  %v9127 = vld [vmem:[%s1 + $0xbc0] sm:$0xff]
  %v9128 = vld [vmem:[%s1 + $0xbd0] sm:$0xff]
  %v9129 = vld [vmem:[%s1 + $0xbe0] sm:$0xff]
  %v9130 = vld [vmem:[%s1 + $0xbf0] sm:$0xff]
  %v9131 = vld [vmem:[%s1 + $0xc00] sm:$0xff]
  %v9132 = vld [vmem:[%s1 + $0xc10] sm:$0xff]
  %v9133 = vld [vmem:[%s1 + $0xc20] sm:$0xff]
  %v9134 = vld [vmem:[%s1 + $0xc30] sm:$0xff]
  %v9135 = vld [vmem:[%s1 + $0xc40] sm:$0xff]
  %v9136 = vld [vmem:[%s1 + $0xc50] sm:$0xff]
  %v9138 = vsel %vm1944, %v9062, 0
  %v9141 = vsel %vm1944, %v9063, 0
  %v9144 = vsel %vm1944, %v9064, 0
  %v9147 = vsel %vm1944, %v9065, 0
  %v9150 = vsel %vm1944, %v9066, 0
  %v9153 = vsel %vm1944, %v9067, 0
  %v9156 = vsel %vm1944, %v9068, 0
  %v9159 = vsel %vm1944, %v9069, 0
  %v9162 = vsel %vm1944, %v9070, 0
  %v9165 = vsel %vm1944, %v9071, 0
  %v9168 = vsel %vm1944, %v9072, 0
  %v9171 = vsel %vm1944, %v9073, 0
  %v9174 = vsel %vm1944, %v9074, 0
  %v9177 = vsel %vm1944, %v9075, 0
  %v9180 = vsel %vm1944, %v9076, 0
  %v9183 = vsel %vm1944, %v9077, 0
  %v9186 = vsel %vm1944, %v9078, 0
  %v9189 = vsel %vm1944, %v9079, 0
  %v9192 = vsel %vm1944, %v9080, 0
  %v9195 = vsel %vm1944, %v9081, 0
  %v9198 = vsel %vm1944, %v9082, 0
  %v9201 = vsel %vm1944, %v9083, 0
  %v9204 = vsel %vm1944, %v9084, 0
  %v9207 = vsel %vm1944, %v9085, 0
  %v9210 = vsel %vm1944, %v9086, 0
  %v9213 = vsel %vm1944, %v9087, 0
  %v9216 = vsel %vm1944, %v9088, 0
  %v9219 = vsel %vm1944, %v9089, 0
  %v9222 = vsel %vm1944, %v9090, 0
  %v9225 = vsel %vm1944, %v9091, 0
  %v9228 = vsel %vm1944, %v9092, 0
  %v9231 = vsel %vm1944, %v9093, 0
  %v9234 = vsel %vm1944, %v9094, 0
  %v9237 = vsel %vm1944, %v9095, 0
  %v9240 = vsel %vm1944, %v9096, 0
  %v9243 = vsel %vm1944, %v9097, 0
  %v9246 = vsel %vm1944, %v9098, 0
  %v9249 = vsel %vm1944, %v9099, 0
  %v9252 = vsel %vm1944, %v9100, 0
  %v9255 = vsel %vm1944, %v9101, 0
  %v9258 = vsel %vm1944, %v9102, 0
  %v9261 = vsel %vm1944, %v9103, 0
  %v9264 = vsel %vm1944, %v9104, 0
  %v9267 = vsel %vm1944, %v9105, 0
  %v9270 = vsel %vm1944, %v9106, 0
  %v9273 = vsel %vm1944, %v9107, 0
  %v9276 = vsel %vm1944, %v9108, 0
  %v9279 = vsel %vm1944, %v9109, 0
  %v9282 = vsel %vm1944, %v9110, 0
  %v9285 = vsel %vm1944, %v9111, 0
  %v9288 = vsel %vm1944, %v9112, 0
  %v9291 = vsel %vm1944, %v9113, 0
  %v9294 = vsel %vm1944, %v9114, 0
  %v9297 = vsel %vm1944, %v9115, 0
  %v9300 = vsel %vm1944, %v9116, 0
  %v9303 = vsel %vm1944, %v9117, 0
  %v9306 = vsel %vm1944, %v9118, 0
  %v9309 = vsel %vm1944, %v9119, 0
  %v9312 = vsel %vm1944, %v9120, 0
  %v9315 = vsel %vm1944, %v9121, 0
  %v9318 = vsel %vm1944, %v9122, 0
  %v9321 = vsel %vm1944, %v9123, 0
  %v9324 = vsel %vm1944, %v9124, 0
  %v9327 = vsel %vm1944, %v9125, 0
  %v9330 = vsel %vm1944, %v9126, 0
  %v9333 = vsel %vm1944, %v9127, 0
  %v9336 = vsel %vm1944, %v9128, 0
  %v9339 = vsel %vm1944, %v9129, 0
  %v9342 = vsel %vm1944, %v9130, 0
  %v9345 = vsel %vm1944, %v9131, 0
  %v9348 = vsel %vm1944, %v9132, 0
  %v9351 = vsel %vm1944, %v9133, 0
  %v9354 = vsel %vm1944, %v9134, 0
  %v9357 = vsel %vm1944, %v9135, 0
  %v9360 = vsel %vm1944, %v9136, 0
  %9362 = vmatprep.subr.mxu0 0.0
  %9363 = vmatpush1.msra.mxu0 %v9052
  %9364 = vmatprep.subr.mxu0 0.0
  %9365 = vmatpush1.msra.mxu0 %v9053
  %9366 = vmatprep.subr.mxu0 0.0
  %9367 = vmatpush1.msra.mxu0 %v9054
  %9368 = vmatprep.subr.mxu0 0.0
  %9369 = vmatpush1.msra.mxu0 %v9055
  %9370 = vmatprep.subr.mxu0 0.0
  %9371 = vmatpush1.msra.mxu0 %v9056
  %9372 = vmatprep.subr.mxu0 0.0
  %9373 = vmatpush1.msra.mxu0 %v9057
  %9374 = vmatprep.subr.mxu0 0.0
  %9375 = vmatpush1.msra.mxu0 %v9058
  %9376 = vmatprep.subr.mxu0 0.0
  %9377 = vmatpush1.msra.mxu0 %v9059
  %9378 = vmatprep.subr.mxu0 0.0
  %9379 = vmatpush1.msra.mxu0 %v9060
  %9380 = vmatprep.subr.mxu0 0.0
  %9381 = vmatpush1.msra.mxu0 %v9061
  %9382 = vmatprep.subr.mxu0 0.0
  %9383 = vmatpush1.msra.mxu0 0.0
  %9384 = vmatprep.subr.mxu0 0.0
  %9385 = vmatpush1.msra.mxu0 0.0
  %9386 = vmatprep.subr.mxu0 0.0
  %9387 = vmatpush1.msra.mxu0 0.0
  %9388 = vmatprep.subr.mxu0 0.0
  %9389 = vmatpush1.msra.mxu0 0.0
  %9390 = vmatprep.subr.mxu0 0.0
  %9391 = vmatpush1.msra.mxu0 0.0
  %9392 = vmatprep.subr.mxu0 0.0
  %9393 = vmatpush1.msra.mxu0 0.0
  %9394 = vmatprep.subr.mxu0 0.0
  %9395 = vmatpush1.msra.mxu0 0.0
  %9396 = vmatprep.subr.mxu0 0.0
  %9397 = vmatpush1.msra.mxu0 0.0
  %9398 = vmatprep.subr.mxu0 0.0
  %9399 = vmatpush1.msra.mxu0 0.0
  %9400 = vmatprep.subr.mxu0 0.0
  %9401 = vmatpush1.msra.mxu0 0.0
  %9402 = vmatprep.subr.mxu0 0.0
  %9403 = vmatpush1.msra.mxu0 0.0
  %9404 = vmatprep.subr.mxu0 0.0
  %9405 = vmatpush1.msra.mxu0 0.0
  %9406 = vmatprep.subr.mxu0 0.0
  %9407 = vmatpush1.msra.mxu0 0.0
  %9408 = vmatprep.subr.mxu0 0.0
  %9409 = vmatpush1.msra.mxu0 0.0
  %9410 = vmatprep.subr.mxu0 0.0
  %9411 = vmatpush1.msra.mxu0 0.0
  %9412 = vmatprep.subr.mxu0 0.0
  %9413 = vmatpush1.msra.mxu0 0.0
  %9414 = vmatprep.subr.mxu0 0.0
  %9415 = vmatpush1.msra.mxu0 0.0
  %9416 = vmatprep.subr.mxu0 0.0
  %9417 = vmatpush1.msra.mxu0 0.0
  %9418 = vmatprep.subr.mxu0 0.0
  %9419 = vmatpush1.msra.mxu0 0.0
  %9420 = vmatprep.subr.mxu0 0.0
  %9421 = vmatpush1.msra.mxu0 0.0
  %9422 = vmatprep.subr.mxu0 0.0
  %9423 = vmatpush1.msra.mxu0 0.0
  %9424 = vmatprep.subr.mxu0 0.0
  %9425 = vmatpush1.msra.mxu0 0.0
  %9426 = vmatprep.mubr.f32.mxu0 0.0
  %9427 = vmatmul.mubr.f32.gmra.mrb[0].mxu0 %v9138
  %v9428 = vpop.f32.mrb[0].mxu0
  %v9429 = vadd.f32 0.0, %v9428
  %v9430 = vpop.f32.mrb[0].mxu0
  %9431 = vmatprep.mubr.f32.mxu0 0.0
  %9432 = vmatmul.mubr.f32.gmra.mrb[0].mxu0 %v9141
  %v9433 = vpop.f32.mrb[0].mxu0
  %v9434 = vadd.f32 0.0, %v9433
  %v9435 = vpop.f32.mrb[0].mxu0
  %9436 = vmatprep.mubr.f32.mxu0 0.0
  %9437 = vmatmul.mubr.f32.gmra.mrb[0].mxu0 %v9144
  %v9438 = vpop.f32.mrb[0].mxu0
  %v9439 = vadd.f32 0.0, %v9438
  %v9440 = vpop.f32.mrb[0].mxu0
  %9441 = vmatprep.mubr.f32.mxu0 0.0
  %9442 = vmatmul.mubr.f32.gmra.mrb[0].mxu0 %v9147
  %v9443 = vpop.f32.mrb[0].mxu0
  %v9444 = vadd.f32 0.0, %v9443
  %v9445 = vpop.f32.mrb[0].mxu0
  %9446 = vmatprep.mubr.f32.mxu0 0.0
  %9447 = vmatmul.mubr.f32.gmra.mrb[0].mxu0 %v9150
  %v9448 = vpop.f32.mrb[0].mxu0
  %v9449 = vadd.f32 0.0, %v9448
  %v9450 = vpop.f32.mrb[0].mxu0
  %9451 = vmatprep.mubr.f32.mxu0 0.0
  %9452 = vmatmul.mubr.f32.gmra.mrb[0].mxu0 %v9153
  %v9453 = vpop.f32.mrb[0].mxu0
  %v9454 = vadd.f32 0.0, %v9453
  %v9455 = vpop.f32.mrb[0].mxu0
  %9456 = vmatprep.mubr.f32.mxu0 0.0
  %9457 = vmatmul.mubr.f32.gmra.mrb[0].mxu0 %v9156
  %v9458 = vpop.f32.mrb[0].mxu0
  %v9459 = vadd.f32 0.0, %v9458
  %v9460 = vpop.f32.mrb[0].mxu0
  %9461 = vmatprep.mubr.f32.mxu0 0.0
  %9462 = vmatmul.mubr.f32.gmra.mrb[0].mxu0 %v9159
  %v9463 = vpop.f32.mrb[0].mxu0
  %v9464 = vadd.f32 0.0, %v9463
  %v9465 = vpop.f32.mrb[0].mxu0
  %9466 = vmatprep.mubr.f32.mxu0 0.0
  %9467 = vmatmul.mubr.f32.gmra.mrb[0].mxu0 %v9162
  %v9468 = vpop.f32.mrb[0].mxu0
  %v9469 = vadd.f32 0.0, %v9468
  %v9470 = vpop.f32.mrb[0].mxu0
  %9471 = vmatprep.mubr.f32.mxu0 0.0
  %9472 = vmatmul.mubr.f32.gmra.mrb[0].mxu0 %v9165
  %v9473 = vpop.f32.mrb[0].mxu0
  %v9474 = vadd.f32 0.0, %v9473
  %v9475 = vpop.f32.mrb[0].mxu0
  %9476 = vmatprep.mubr.f32.mxu0 0.0
  %9477 = vmatmul.mubr.f32.gmra.mrb[0].mxu0 %v9168
  %v9478 = vpop.f32.mrb[0].mxu0
  %v9479 = vadd.f32 0.0, %v9478
  %v9480 = vpop.f32.mrb[0].mxu0
  %9481 = vmatprep.mubr.f32.mxu0 0.0
  %9482 = vmatmul.mubr.f32.gmra.mrb[0].mxu0 %v9171
  %v9483 = vpop.f32.mrb[0].mxu0
  %v9484 = vadd.f32 0.0, %v9483
  %v9485 = vpop.f32.mrb[0].mxu0
  %9486 = vmatprep.mubr.f32.mxu0 0.0
  %9487 = vmatmul.mubr.f32.gmra.mrb[0].mxu0 %v9174
  %v9488 = vpop.f32.mrb[0].mxu0
  %v9489 = vadd.f32 0.0, %v9488
  %v9490 = vpop.f32.mrb[0].mxu0
  %9491 = vmatprep.mubr.f32.mxu0 0.0
  %9492 = vmatmul.mubr.f32.gmra.mrb[0].mxu0 %v9177
  %v9493 = vpop.f32.mrb[0].mxu0
  %v9494 = vadd.f32 0.0, %v9493
  %v9495 = vpop.f32.mrb[0].mxu0
  %9496 = vmatprep.mubr.f32.mxu0 0.0
  %9497 = vmatmul.mubr.f32.gmra.mrb[0].mxu0 %v9180
  %v9498 = vpop.f32.mrb[0].mxu0
  %v9499 = vadd.f32 0.0, %v9498
  %v9500 = vpop.f32.mrb[0].mxu0
  %9501 = vmatprep.mubr.f32.mxu0 0.0
  %9502 = vmatmul.mubr.f32.gmra.mrb[0].mxu0 %v9183
  %v9503 = vpop.f32.mrb[0].mxu0
  %v9504 = vadd.f32 0.0, %v9503
  %v9505 = vpop.f32.mrb[0].mxu0
  %9506 = vmatprep.mubr.f32.mxu0 0.0
  %9507 = vmatmul.mubr.f32.gmra.mrb[0].mxu0 %v9186
  %v9508 = vpop.f32.mrb[0].mxu0
  %v9509 = vadd.f32 0.0, %v9508
  %v9510 = vpop.f32.mrb[0].mxu0
  %9511 = vmatprep.mubr.f32.mxu0 0.0
  %9512 = vmatmul.mubr.f32.gmra.mrb[0].mxu0 %v9189
  %v9513 = vpop.f32.mrb[0].mxu0
  %v9514 = vadd.f32 0.0, %v9513
  %v9515 = vpop.f32.mrb[0].mxu0
  %9516 = vmatprep.mubr.f32.mxu0 0.0
  %9517 = vmatmul.mubr.f32.gmra.mrb[0].mxu0 %v9192
  %v9518 = vpop.f32.mrb[0].mxu0
  %v9519 = vadd.f32 0.0, %v9518
  %v9520 = vpop.f32.mrb[0].mxu0
  %9521 = vmatprep.mubr.f32.mxu0 0.0
  %9522 = vmatmul.mubr.f32.gmra.mrb[0].mxu0 %v9195
  %v9523 = vpop.f32.mrb[0].mxu0
  %v9524 = vadd.f32 0.0, %v9523
  %v9525 = vpop.f32.mrb[0].mxu0
  %9526 = vmatprep.mubr.f32.mxu0 0.0
  %9527 = vmatmul.mubr.f32.gmra.mrb[0].mxu0 %v9198
  %v9528 = vpop.f32.mrb[0].mxu0
  %v9529 = vadd.f32 0.0, %v9528
  %v9530 = vpop.f32.mrb[0].mxu0
  %9531 = vmatprep.mubr.f32.mxu0 0.0
  %9532 = vmatmul.mubr.f32.gmra.mrb[0].mxu0 %v9201
  %v9533 = vpop.f32.mrb[0].mxu0
  %v9534 = vadd.f32 0.0, %v9533
  %v9535 = vpop.f32.mrb[0].mxu0
  %9536 = vmatprep.mubr.f32.mxu0 0.0
  %9537 = vmatmul.mubr.f32.gmra.mrb[0].mxu0 %v9204
  %v9538 = vpop.f32.mrb[0].mxu0
  %v9539 = vadd.f32 0.0, %v9538
  %v9540 = vpop.f32.mrb[0].mxu0
  %9541 = vmatprep.mubr.f32.mxu0 0.0
  %9542 = vmatmul.mubr.f32.gmra.mrb[0].mxu0 %v9207
  %v9543 = vpop.f32.mrb[0].mxu0
  %v9544 = vadd.f32 0.0, %v9543
  %v9545 = vpop.f32.mrb[0].mxu0
  %9546 = vmatprep.mubr.f32.mxu0 0.0
  %9547 = vmatmul.mubr.f32.gmra.mrb[0].mxu0 %v9210
  %v9548 = vpop.f32.mrb[0].mxu0
  %v9549 = vadd.f32 0.0, %v9548
  %v9550 = vpop.f32.mrb[0].mxu0
  %9551 = vmatprep.mubr.f32.mxu0 0.0
  %9552 = vmatmul.mubr.f32.gmra.mrb[0].mxu0 %v9213
  %v9553 = vpop.f32.mrb[0].mxu0
  %v9554 = vadd.f32 0.0, %v9553
  %v9555 = vpop.f32.mrb[0].mxu0
  %9556 = vmatprep.mubr.f32.mxu0 0.0
  %9557 = vmatmul.mubr.f32.gmra.mrb[0].mxu0 %v9216
  %v9558 = vpop.f32.mrb[0].mxu0
  %v9559 = vadd.f32 0.0, %v9558
  %v9560 = vpop.f32.mrb[0].mxu0
  %9561 = vmatprep.mubr.f32.mxu0 0.0
  %9562 = vmatmul.mubr.f32.gmra.mrb[0].mxu0 %v9219
  %v9563 = vpop.f32.mrb[0].mxu0
  %v9564 = vadd.f32 0.0, %v9563
  %v9565 = vpop.f32.mrb[0].mxu0
  %9566 = vmatprep.mubr.f32.mxu0 0.0
  %9567 = vmatmul.mubr.f32.gmra.mrb[0].mxu0 %v9222
  %v9568 = vpop.f32.mrb[0].mxu0
  %v9569 = vadd.f32 0.0, %v9568
  %v9570 = vpop.f32.mrb[0].mxu0
  %9571 = vmatprep.mubr.f32.mxu0 0.0
  %9572 = vmatmul.mubr.f32.gmra.mrb[0].mxu0 %v9225
  %v9573 = vpop.f32.mrb[0].mxu0
  %v9574 = vadd.f32 0.0, %v9573
  %v9575 = vpop.f32.mrb[0].mxu0
  %9576 = vmatprep.mubr.f32.mxu0 0.0
  %9577 = vmatmul.mubr.f32.gmra.mrb[0].mxu0 %v9228
  %v9578 = vpop.f32.mrb[0].mxu0
  %v9579 = vadd.f32 0.0, %v9578
  %v9580 = vpop.f32.mrb[0].mxu0
  %9581 = vmatprep.mubr.f32.mxu0 0.0
  %9582 = vmatmul.mubr.f32.gmra.mrb[0].mxu0 %v9231
  %v9583 = vpop.f32.mrb[0].mxu0
  %v9584 = vadd.f32 0.0, %v9583
  %v9585 = vpop.f32.mrb[0].mxu0
  %9586 = vmatprep.mubr.f32.mxu0 0.0
  %9587 = vmatmul.mubr.f32.gmra.mrb[0].mxu0 %v9234
  %v9588 = vpop.f32.mrb[0].mxu0
  %v9589 = vadd.f32 0.0, %v9588
  %v9590 = vpop.f32.mrb[0].mxu0
  %9591 = vmatprep.mubr.f32.mxu0 0.0
  %9592 = vmatmul.mubr.f32.gmra.mrb[0].mxu0 %v9237
  %v9593 = vpop.f32.mrb[0].mxu0
  %v9594 = vadd.f32 0.0, %v9593
  %v9595 = vpop.f32.mrb[0].mxu0
  %9596 = vmatprep.mubr.f32.mxu0 0.0
  %9597 = vmatmul.mubr.f32.gmra.mrb[0].mxu0 %v9240
  %v9598 = vpop.f32.mrb[0].mxu0
  %v9599 = vadd.f32 0.0, %v9598
  %v9600 = vpop.f32.mrb[0].mxu0
  %9601 = vmatprep.mubr.f32.mxu0 0.0
  %9602 = vmatmul.mubr.f32.gmra.mrb[0].mxu0 %v9243
  %v9603 = vpop.f32.mrb[0].mxu0
  %v9604 = vadd.f32 0.0, %v9603
  %v9605 = vpop.f32.mrb[0].mxu0
  %9606 = vmatprep.mubr.f32.mxu0 0.0
  %9607 = vmatmul.mubr.f32.gmra.mrb[0].mxu0 %v9246
  %v9608 = vpop.f32.mrb[0].mxu0
  %v9609 = vadd.f32 0.0, %v9608
  %v9610 = vpop.f32.mrb[0].mxu0
  %9611 = vmatprep.mubr.f32.mxu0 0.0
  %9612 = vmatmul.mubr.f32.gmra.mrb[0].mxu0 %v9249
  %v9613 = vpop.f32.mrb[0].mxu0
  %v9614 = vadd.f32 0.0, %v9613
  %v9615 = vpop.f32.mrb[0].mxu0
  %9616 = vmatprep.mubr.f32.mxu0 0.0
  %9617 = vmatmul.mubr.f32.gmra.mrb[0].mxu0 %v9252
  %v9618 = vpop.f32.mrb[0].mxu0
  %v9619 = vadd.f32 0.0, %v9618
  %v9620 = vpop.f32.mrb[0].mxu0
  %9621 = vmatprep.mubr.f32.mxu0 0.0
  %9622 = vmatmul.mubr.f32.gmra.mrb[0].mxu0 %v9255
  %v9623 = vpop.f32.mrb[0].mxu0
  %v9624 = vadd.f32 0.0, %v9623
  %v9625 = vpop.f32.mrb[0].mxu0
  %9626 = vmatprep.mubr.f32.mxu0 0.0
  %9627 = vmatmul.mubr.f32.gmra.mrb[0].mxu0 %v9258
  %v9628 = vpop.f32.mrb[0].mxu0
  %v9629 = vadd.f32 0.0, %v9628
  %v9630 = vpop.f32.mrb[0].mxu0
  %9631 = vmatprep.mubr.f32.mxu0 0.0
  %9632 = vmatmul.mubr.f32.gmra.mrb[0].mxu0 %v9261
  %v9633 = vpop.f32.mrb[0].mxu0
  %v9634 = vadd.f32 0.0, %v9633
  %v9635 = vpop.f32.mrb[0].mxu0
  %9636 = vmatprep.mubr.f32.mxu0 0.0
  %9637 = vmatmul.mubr.f32.gmra.mrb[0].mxu0 %v9264
  %v9638 = vpop.f32.mrb[0].mxu0
  %v9639 = vadd.f32 0.0, %v9638
  %v9640 = vpop.f32.mrb[0].mxu0
  %9641 = vmatprep.mubr.f32.mxu0 0.0
  %9642 = vmatmul.mubr.f32.gmra.mrb[0].mxu0 %v9267
  %v9643 = vpop.f32.mrb[0].mxu0
  %v9644 = vadd.f32 0.0, %v9643
  %v9645 = vpop.f32.mrb[0].mxu0
  %9646 = vmatprep.mubr.f32.mxu0 0.0
  %9647 = vmatmul.mubr.f32.gmra.mrb[0].mxu0 %v9270
  %v9648 = vpop.f32.mrb[0].mxu0
  %v9649 = vadd.f32 0.0, %v9648
  %v9650 = vpop.f32.mrb[0].mxu0
  %9651 = vmatprep.mubr.f32.mxu0 0.0
  %9652 = vmatmul.mubr.f32.gmra.mrb[0].mxu0 %v9273
  %v9653 = vpop.f32.mrb[0].mxu0
  %v9654 = vadd.f32 0.0, %v9653
  %v9655 = vpop.f32.mrb[0].mxu0
  %9656 = vmatprep.mubr.f32.mxu0 0.0
  %9657 = vmatmul.mubr.f32.gmra.mrb[0].mxu0 %v9276
  %v9658 = vpop.f32.mrb[0].mxu0
  %v9659 = vadd.f32 0.0, %v9658
  %v9660 = vpop.f32.mrb[0].mxu0
  %9661 = vmatprep.mubr.f32.mxu0 0.0
  %9662 = vmatmul.mubr.f32.gmra.mrb[0].mxu0 %v9279
  %v9663 = vpop.f32.mrb[0].mxu0
  %v9664 = vadd.f32 0.0, %v9663
  %v9665 = vpop.f32.mrb[0].mxu0
  %9666 = vmatprep.mubr.f32.mxu0 0.0
  %9667 = vmatmul.mubr.f32.gmra.mrb[0].mxu0 %v9282
  %v9668 = vpop.f32.mrb[0].mxu0
  %v9669 = vadd.f32 0.0, %v9668
  %v9670 = vpop.f32.mrb[0].mxu0
  %9671 = vmatprep.mubr.f32.mxu0 0.0
  %9672 = vmatmul.mubr.f32.gmra.mrb[0].mxu0 %v9285
  %v9673 = vpop.f32.mrb[0].mxu0
  %v9674 = vadd.f32 0.0, %v9673
  %v9675 = vpop.f32.mrb[0].mxu0
  %9676 = vmatprep.mubr.f32.mxu0 0.0
  %9677 = vmatmul.mubr.f32.gmra.mrb[0].mxu0 %v9288
  %v9678 = vpop.f32.mrb[0].mxu0
  %v9679 = vadd.f32 0.0, %v9678
  %v9680 = vpop.f32.mrb[0].mxu0
  %9681 = vmatprep.mubr.f32.mxu0 0.0
  %9682 = vmatmul.mubr.f32.gmra.mrb[0].mxu0 %v9291
  %v9683 = vpop.f32.mrb[0].mxu0
  %v9684 = vadd.f32 0.0, %v9683
  %v9685 = vpop.f32.mrb[0].mxu0
  %9686 = vmatprep.mubr.f32.mxu0 0.0
  %9687 = vmatmul.mubr.f32.gmra.mrb[0].mxu0 %v9294
  %v9688 = vpop.f32.mrb[0].mxu0
  %v9689 = vadd.f32 0.0, %v9688
  %v9690 = vpop.f32.mrb[0].mxu0
  %9691 = vmatprep.mubr.f32.mxu0 0.0
  %9692 = vmatmul.mubr.f32.gmra.mrb[0].mxu0 %v9297
  %v9693 = vpop.f32.mrb[0].mxu0
  %v9694 = vadd.f32 0.0, %v9693
  %v9695 = vpop.f32.mrb[0].mxu0
  %9696 = vmatprep.mubr.f32.mxu0 0.0
  %9697 = vmatmul.mubr.f32.gmra.mrb[0].mxu0 %v9300
  %v9698 = vpop.f32.mrb[0].mxu0
  %v9699 = vadd.f32 0.0, %v9698
  %v9700 = vpop.f32.mrb[0].mxu0
  %9701 = vmatprep.mubr.f32.mxu0 0.0
  %9702 = vmatmul.mubr.f32.gmra.mrb[0].mxu0 %v9303
  %v9703 = vpop.f32.mrb[0].mxu0
  %v9704 = vadd.f32 0.0, %v9703
  %v9705 = vpop.f32.mrb[0].mxu0
  %9706 = vmatprep.mubr.f32.mxu0 0.0
  %9707 = vmatmul.mubr.f32.gmra.mrb[0].mxu0 %v9306
  %v9708 = vpop.f32.mrb[0].mxu0
  %v9709 = vadd.f32 0.0, %v9708
  %v9710 = vpop.f32.mrb[0].mxu0
  %9711 = vmatprep.mubr.f32.mxu0 0.0
  %9712 = vmatmul.mubr.f32.gmra.mrb[0].mxu0 %v9309
  %v9713 = vpop.f32.mrb[0].mxu0
  %v9714 = vadd.f32 0.0, %v9713
  %v9715 = vpop.f32.mrb[0].mxu0
  %9716 = vmatprep.mubr.f32.mxu0 0.0
  %9717 = vmatmul.mubr.f32.gmra.mrb[0].mxu0 %v9312
  %v9718 = vpop.f32.mrb[0].mxu0
  %v9719 = vadd.f32 0.0, %v9718
  %v9720 = vpop.f32.mrb[0].mxu0
  %9721 = vmatprep.mubr.f32.mxu0 0.0
  %9722 = vmatmul.mubr.f32.gmra.mrb[0].mxu0 %v9315
  %v9723 = vpop.f32.mrb[0].mxu0
  %v9724 = vadd.f32 0.0, %v9723
  %v9725 = vpop.f32.mrb[0].mxu0
  %9726 = vmatprep.mubr.f32.mxu0 0.0
  %9727 = vmatmul.mubr.f32.gmra.mrb[0].mxu0 %v9318
  %v9728 = vpop.f32.mrb[0].mxu0
  %v9729 = vadd.f32 0.0, %v9728
  %v9730 = vpop.f32.mrb[0].mxu0
  %9731 = vmatprep.mubr.f32.mxu0 0.0
  %9732 = vmatmul.mubr.f32.gmra.mrb[0].mxu0 %v9321
  %v9733 = vpop.f32.mrb[0].mxu0
  %v9734 = vadd.f32 0.0, %v9733
  %v9735 = vpop.f32.mrb[0].mxu0
  %9736 = vmatprep.mubr.f32.mxu0 0.0
  %9737 = vmatmul.mubr.f32.gmra.mrb[0].mxu0 %v9324
  %v9738 = vpop.f32.mrb[0].mxu0
  %v9739 = vadd.f32 0.0, %v9738
  %v9740 = vpop.f32.mrb[0].mxu0
  %9741 = vmatprep.mubr.f32.mxu0 0.0
  %9742 = vmatmul.mubr.f32.gmra.mrb[0].mxu0 %v9327
  %v9743 = vpop.f32.mrb[0].mxu0
  %v9744 = vadd.f32 0.0, %v9743
  %v9745 = vpop.f32.mrb[0].mxu0
  %9746 = vmatprep.mubr.f32.mxu0 0.0
  %9747 = vmatmul.mubr.f32.gmra.mrb[0].mxu0 %v9330
  %v9748 = vpop.f32.mrb[0].mxu0
  %v9749 = vadd.f32 0.0, %v9748
  %v9750 = vpop.f32.mrb[0].mxu0
  %9751 = vmatprep.mubr.f32.mxu0 0.0
  %9752 = vmatmul.mubr.f32.gmra.mrb[0].mxu0 %v9333
  %v9753 = vpop.f32.mrb[0].mxu0
  %v9754 = vadd.f32 0.0, %v9753
  %v9755 = vpop.f32.mrb[0].mxu0
  %9756 = vmatprep.mubr.f32.mxu0 0.0
  %9757 = vmatmul.mubr.f32.gmra.mrb[0].mxu0 %v9336
  %v9758 = vpop.f32.mrb[0].mxu0
  %v9759 = vadd.f32 0.0, %v9758
  %v9760 = vpop.f32.mrb[0].mxu0
  %9761 = vmatprep.mubr.f32.mxu0 0.0
  %9762 = vmatmul.mubr.f32.gmra.mrb[0].mxu0 %v9339
  %v9763 = vpop.f32.mrb[0].mxu0
  %v9764 = vadd.f32 0.0, %v9763
  %v9765 = vpop.f32.mrb[0].mxu0
  %9766 = vmatprep.mubr.f32.mxu0 0.0
  %9767 = vmatmul.mubr.f32.gmra.mrb[0].mxu0 %v9342
  %v9768 = vpop.f32.mrb[0].mxu0
  %v9769 = vadd.f32 0.0, %v9768
  %v9770 = vpop.f32.mrb[0].mxu0
  %9771 = vmatprep.mubr.f32.mxu0 0.0
  %9772 = vmatmul.mubr.f32.gmra.mrb[0].mxu0 %v9345
  %v9773 = vpop.f32.mrb[0].mxu0
  %v9774 = vadd.f32 0.0, %v9773
  %v9775 = vpop.f32.mrb[0].mxu0
  %9776 = vmatprep.mubr.f32.mxu0 0.0
  %9777 = vmatmul.mubr.f32.gmra.mrb[0].mxu0 %v9348
  %v9778 = vpop.f32.mrb[0].mxu0
  %v9779 = vadd.f32 0.0, %v9778
  %v9780 = vpop.f32.mrb[0].mxu0
  %9781 = vmatprep.mubr.f32.mxu0 0.0
  %9782 = vmatmul.mubr.f32.gmra.mrb[0].mxu0 %v9351
  %v9783 = vpop.f32.mrb[0].mxu0
  %v9784 = vadd.f32 0.0, %v9783
  %v9785 = vpop.f32.mrb[0].mxu0
  %9786 = vmatprep.mubr.f32.mxu0 0.0
  %9787 = vmatmul.mubr.f32.gmra.mrb[0].mxu0 %v9354
  %v9788 = vpop.f32.mrb[0].mxu0
  %v9789 = vadd.f32 0.0, %v9788
  %v9790 = vpop.f32.mrb[0].mxu0
  %9791 = vmatprep.mubr.f32.mxu0 0.0
  %9792 = vmatmul.mubr.f32.gmra.mrb[0].mxu0 %v9357
  %v9793 = vpop.f32.mrb[0].mxu0
  %v9794 = vadd.f32 0.0, %v9793
  %v9795 = vpop.f32.mrb[0].mxu0
  %9796 = vmatprep.mubr.f32.mxu0 0.0
  %9797 = vmatmul.mubr.f32.gmra.mrb[0].mxu0 %v9360
  %v9798 = vpop.f32.mrb[0].mxu0
  %v9799 = vadd.f32 0.0, %v9798
  %v9800 = vpop.f32.mrb[0].mxu0
  %9801 = vdwg.mxu0
  %v9802 = vld [vmem:[%s2 + $0x48] sm:$0x1f]
  %9804 = vrot.lane.b32.xlu0 %v9802, 113
  %v9805 = vpop.permute.xlu0 %9804
  %v9807 = vsel %vm1748, %v9504, 0
  %v9810 = vsel %vm1748, %v9509, 0
  %v9813 = vsel %vm1748, %v9514, 0
  %v9816 = vsel %vm1748, %v9519, 0
  %v9819 = vsel %vm1748, %v9524, 0
  %v9822 = vsel %vm1748, %v9529, 0
  %v9825 = vsel %vm1748, %v9534, 0
  %v9828 = vsel %vm1748, %v9539, 0
  %v9831 = vsel %vm1748, %v9544, 0
  %v9834 = vsel %vm1748, %v9549, 0
  %v9837 = vsel %vm1748, %v9554, 0
  %v9840 = vsel %vm1748, %v9559, 0
  %v9843 = vsel %vm1748, %v9564, 0
  %v9846 = vsel %vm1748, %v9569, 0
  %v9849 = vsel %vm1748, %v9574, 0
  %v9851 = vsel %vm1779, %v9805, 0
  %9853 = vmatprep.subr.mxu0 0.0
  %9854 = vmatpush1.msra.mxu0 %v9851
  %9855 = vmatprep.subr.mxu0 0.0
  %9856 = vmatpush1.msra.mxu0 0.0
  %9857 = vmatprep.subr.mxu0 0.0
  %9858 = vmatpush1.msra.mxu0 0.0
  %9859 = vmatprep.subr.mxu0 0.0
  %9860 = vmatpush1.msra.mxu0 0.0
  %9861 = vmatprep.subr.mxu0 0.0
  %9862 = vmatpush1.msra.mxu0 0.0
  %9863 = vmatprep.subr.mxu0 0.0
  %9864 = vmatpush1.msra.mxu0 0.0
  %9865 = vmatprep.subr.mxu0 0.0
  %9866 = vmatpush1.msra.mxu0 0.0
  %9867 = vmatprep.subr.mxu0 0.0
  %9868 = vmatpush1.msra.mxu0 0.0
  %9869 = vmatprep.subr.mxu0 0.0
  %9870 = vmatpush1.msra.mxu0 0.0
  %9871 = vmatprep.subr.mxu0 0.0
  %9872 = vmatpush1.msra.mxu0 0.0
  %9873 = vmatprep.subr.mxu0 0.0
  %9874 = vmatpush1.msra.mxu0 0.0
  %9875 = vmatprep.subr.mxu0 0.0
  %9876 = vmatpush1.msra.mxu0 0.0
  %9877 = vmatprep.subr.mxu0 0.0
  %9878 = vmatpush1.msra.mxu0 0.0
  %9879 = vmatprep.subr.mxu0 0.0
  %9880 = vmatpush1.msra.mxu0 0.0
  %9881 = vmatprep.subr.mxu0 0.0
  %9882 = vmatpush1.msra.mxu0 0.0
  %9883 = vmatprep.subr.mxu0 0.0
  %9884 = vmatpush1.msra.mxu0 0.0
  %9885 = vmatprep.subr.mxu0 0.0
  %9886 = vmatpush1.msra.mxu0 0.0
  %9887 = vmatprep.subr.mxu0 0.0
  %9888 = vmatpush1.msra.mxu0 0.0
  %9889 = vmatprep.subr.mxu0 0.0
  %9890 = vmatpush1.msra.mxu0 0.0
  %9891 = vmatprep.subr.mxu0 0.0
  %9892 = vmatpush1.msra.mxu0 0.0
  %9893 = vmatprep.subr.mxu0 0.0
  %9894 = vmatpush1.msra.mxu0 0.0
  %9895 = vmatprep.subr.mxu0 0.0
  %9896 = vmatpush1.msra.mxu0 0.0
  %9897 = vmatprep.subr.mxu0 0.0
  %9898 = vmatpush1.msra.mxu0 0.0
  %9899 = vmatprep.subr.mxu0 0.0
  %9900 = vmatpush1.msra.mxu0 0.0
  %9901 = vmatprep.subr.mxu0 0.0
  %9902 = vmatpush1.msra.mxu0 0.0
  %9903 = vmatprep.subr.mxu0 0.0
  %9904 = vmatpush1.msra.mxu0 0.0
  %9905 = vmatprep.subr.mxu0 0.0
  %9906 = vmatpush1.msra.mxu0 0.0
  %9907 = vmatprep.subr.mxu0 0.0
  %9908 = vmatpush1.msra.mxu0 0.0
  %9909 = vmatprep.subr.mxu0 0.0
  %9910 = vmatpush1.msra.mxu0 0.0
  %9911 = vmatprep.subr.mxu0 0.0
  %9912 = vmatpush1.msra.mxu0 0.0
  %9913 = vmatprep.subr.mxu0 0.0
  %9914 = vmatpush1.msra.mxu0 0.0
  %9915 = vmatprep.subr.mxu0 0.0
  %9916 = vmatpush1.msra.mxu0 0.0
  %9917 = vmatprep.mubr.f32.mxu0 0.0
  %9918 = vmatmul.mubr.f32.gmra.mrb[0].mxu0 %v9807
  %v9919 = vpop.f32.mrb[0].mxu0
  %v9920 = vadd.f32 0.0, %v9919
  %v9921 = vpop.f32.mrb[0].mxu0
  %9922 = vmatprep.mubr.f32.mxu0 0.0
  %9923 = vmatmul.mubr.f32.gmra.mrb[0].mxu0 %v9810
  %v9924 = vpop.f32.mrb[0].mxu0
  %v9925 = vadd.f32 0.0, %v9924
  %v9926 = vpop.f32.mrb[0].mxu0
  %9927 = vmatprep.mubr.f32.mxu0 0.0
  %9928 = vmatmul.mubr.f32.gmra.mrb[0].mxu0 %v9813
  %v9929 = vpop.f32.mrb[0].mxu0
  %v9930 = vadd.f32 0.0, %v9929
  %v9931 = vpop.f32.mrb[0].mxu0
  %9932 = vmatprep.mubr.f32.mxu0 0.0
  %9933 = vmatmul.mubr.f32.gmra.mrb[0].mxu0 %v9816
  %v9934 = vpop.f32.mrb[0].mxu0
  %v9935 = vadd.f32 0.0, %v9934
  %v9936 = vpop.f32.mrb[0].mxu0
  %9937 = vmatprep.mubr.f32.mxu0 0.0
  %9938 = vmatmul.mubr.f32.gmra.mrb[0].mxu0 %v9819
  %v9939 = vpop.f32.mrb[0].mxu0
  %v9940 = vadd.f32 0.0, %v9939
  %v9941 = vpop.f32.mrb[0].mxu0
  %9942 = vmatprep.mubr.f32.mxu0 0.0
  %9943 = vmatmul.mubr.f32.gmra.mrb[0].mxu0 %v9822
  %v9944 = vpop.f32.mrb[0].mxu0
  %v9945 = vadd.f32 0.0, %v9944
  %v9946 = vpop.f32.mrb[0].mxu0
  %9947 = vmatprep.mubr.f32.mxu0 0.0
  %9948 = vmatmul.mubr.f32.gmra.mrb[0].mxu0 %v9825
  %v9949 = vpop.f32.mrb[0].mxu0
  %v9950 = vadd.f32 0.0, %v9949
  %v9951 = vpop.f32.mrb[0].mxu0
  %9952 = vmatprep.mubr.f32.mxu0 0.0
  %9953 = vmatmul.mubr.f32.gmra.mrb[0].mxu0 %v9828
  %v9954 = vpop.f32.mrb[0].mxu0
  %v9955 = vadd.f32 0.0, %v9954
  %v9956 = vpop.f32.mrb[0].mxu0
  %9957 = vmatprep.mubr.f32.mxu0 0.0
  %9958 = vmatmul.mubr.f32.gmra.mrb[0].mxu0 %v9831
  %v9959 = vpop.f32.mrb[0].mxu0
  %v9960 = vadd.f32 0.0, %v9959
  %v9961 = vpop.f32.mrb[0].mxu0
  %9962 = vmatprep.mubr.f32.mxu0 0.0
  %9963 = vmatmul.mubr.f32.gmra.mrb[0].mxu0 %v9834
  %v9964 = vpop.f32.mrb[0].mxu0
  %v9965 = vadd.f32 0.0, %v9964
  %v9966 = vpop.f32.mrb[0].mxu0
  %9967 = vmatprep.mubr.f32.mxu0 0.0
  %9968 = vmatmul.mubr.f32.gmra.mrb[0].mxu0 %v9837
  %v9969 = vpop.f32.mrb[0].mxu0
  %v9970 = vadd.f32 0.0, %v9969
  %v9971 = vpop.f32.mrb[0].mxu0
  %9972 = vmatprep.mubr.f32.mxu0 0.0
  %9973 = vmatmul.mubr.f32.gmra.mrb[0].mxu0 %v9840
  %v9974 = vpop.f32.mrb[0].mxu0
  %v9975 = vadd.f32 0.0, %v9974
  %v9976 = vpop.f32.mrb[0].mxu0
  %9977 = vmatprep.mubr.f32.mxu0 0.0
  %9978 = vmatmul.mubr.f32.gmra.mrb[0].mxu0 %v9843
  %v9979 = vpop.f32.mrb[0].mxu0
  %v9980 = vadd.f32 0.0, %v9979
  %v9981 = vpop.f32.mrb[0].mxu0
  %9982 = vmatprep.mubr.f32.mxu0 0.0
  %9983 = vmatmul.mubr.f32.gmra.mrb[0].mxu0 %v9846
  %v9984 = vpop.f32.mrb[0].mxu0
  %v9985 = vadd.f32 0.0, %v9984
  %v9986 = vpop.f32.mrb[0].mxu0
  %9987 = vmatprep.mubr.f32.mxu0 0.0
  %9988 = vmatmul.mubr.f32.gmra.mrb[0].mxu0 %v9849
  %v9989 = vpop.f32.mrb[0].mxu0
  %v9990 = vadd.f32 0.0, %v9989
  %v9991 = vpop.f32.mrb[0].mxu0
  %9992 = vdwg.mxu0
  %v9994 = vsel %vm1748, %v9429, 0
  %v9997 = vsel %vm1748, %v9434, 0
  %v10000 = vsel %vm1748, %v9439, 0
  %v10003 = vsel %vm1748, %v9444, 0
  %v10006 = vsel %vm1748, %v9449, 0
  %v10009 = vsel %vm1748, %v9454, 0
  %v10012 = vsel %vm1748, %v9459, 0
  %v10015 = vsel %vm1748, %v9464, 0
  %v10018 = vsel %vm1748, %v9469, 0
  %v10021 = vsel %vm1748, %v9474, 0
  %v10024 = vsel %vm1748, %v9479, 0
  %v10027 = vsel %vm1748, %v9484, 0
  %v10030 = vsel %vm1748, %v9489, 0
  %v10033 = vsel %vm1748, %v9494, 0
  %v10036 = vsel %vm1748, %v9499, 0
  %v10038 = vsel %vm1779, %v9802, 0
  %10040 = vmatprep.subr.mxu0 0.0
  %10041 = vmatpush1.msra.mxu0 %v10038
  %10042 = vmatprep.subr.mxu0 0.0
  %10043 = vmatpush1.msra.mxu0 0.0
  %10044 = vmatprep.subr.mxu0 0.0
  %10045 = vmatpush1.msra.mxu0 0.0
  %10046 = vmatprep.subr.mxu0 0.0
  %10047 = vmatpush1.msra.mxu0 0.0
  %10048 = vmatprep.subr.mxu0 0.0
  %10049 = vmatpush1.msra.mxu0 0.0
  %10050 = vmatprep.subr.mxu0 0.0
  %10051 = vmatpush1.msra.mxu0 0.0
  %10052 = vmatprep.subr.mxu0 0.0
  %10053 = vmatpush1.msra.mxu0 0.0
  %10054 = vmatprep.subr.mxu0 0.0
  %10055 = vmatpush1.msra.mxu0 0.0
  %10056 = vmatprep.subr.mxu0 0.0
  %10057 = vmatpush1.msra.mxu0 0.0
  %10058 = vmatprep.subr.mxu0 0.0
  %10059 = vmatpush1.msra.mxu0 0.0
  %10060 = vmatprep.subr.mxu0 0.0
  %10061 = vmatpush1.msra.mxu0 0.0
  %10062 = vmatprep.subr.mxu0 0.0
  %10063 = vmatpush1.msra.mxu0 0.0
  %10064 = vmatprep.subr.mxu0 0.0
  %10065 = vmatpush1.msra.mxu0 0.0
  %10066 = vmatprep.subr.mxu0 0.0
  %10067 = vmatpush1.msra.mxu0 0.0
  %10068 = vmatprep.subr.mxu0 0.0
  %10069 = vmatpush1.msra.mxu0 0.0
  %10070 = vmatprep.subr.mxu0 0.0
  %10071 = vmatpush1.msra.mxu0 0.0
  %10072 = vmatprep.subr.mxu0 0.0
  %10073 = vmatpush1.msra.mxu0 0.0
  %10074 = vmatprep.subr.mxu0 0.0
  %10075 = vmatpush1.msra.mxu0 0.0
  %10076 = vmatprep.subr.mxu0 0.0
  %10077 = vmatpush1.msra.mxu0 0.0
  %10078 = vmatprep.subr.mxu0 0.0
  %10079 = vmatpush1.msra.mxu0 0.0
  %10080 = vmatprep.subr.mxu0 0.0
  %10081 = vmatpush1.msra.mxu0 0.0
  %10082 = vmatprep.subr.mxu0 0.0
  %10083 = vmatpush1.msra.mxu0 0.0
  %10084 = vmatprep.subr.mxu0 0.0
  %10085 = vmatpush1.msra.mxu0 0.0
  %10086 = vmatprep.subr.mxu0 0.0
  %10087 = vmatpush1.msra.mxu0 0.0
  %10088 = vmatprep.subr.mxu0 0.0
  %10089 = vmatpush1.msra.mxu0 0.0
  %10090 = vmatprep.subr.mxu0 0.0
  %10091 = vmatpush1.msra.mxu0 0.0
  %10092 = vmatprep.subr.mxu0 0.0
  %10093 = vmatpush1.msra.mxu0 0.0
  %10094 = vmatprep.subr.mxu0 0.0
  %10095 = vmatpush1.msra.mxu0 0.0
  %10096 = vmatprep.subr.mxu0 0.0
  %10097 = vmatpush1.msra.mxu0 0.0
  %10098 = vmatprep.subr.mxu0 0.0
  %10099 = vmatpush1.msra.mxu0 0.0
  %10100 = vmatprep.subr.mxu0 0.0
  %10101 = vmatpush1.msra.mxu0 0.0
  %10102 = vmatprep.subr.mxu0 0.0
  %10103 = vmatpush1.msra.mxu0 0.0
  %10104 = vmatprep.mubr.f32.mxu0 0.0
  %10105 = vmatmul.mubr.f32.gmra.mrb[0].mxu0 %v9994
  %v10106 = vpop.f32.mrb[0].mxu0
  %v10107 = vadd.f32 %v9920, %v10106
  %v10108 = vpop.f32.mrb[0].mxu0
  %10109 = vmatprep.mubr.f32.mxu0 0.0
  %10110 = vmatmul.mubr.f32.gmra.mrb[0].mxu0 %v9997
  %v10111 = vpop.f32.mrb[0].mxu0
  %v10112 = vadd.f32 %v9925, %v10111
  %v10113 = vpop.f32.mrb[0].mxu0
  %10114 = vmatprep.mubr.f32.mxu0 0.0
  %10115 = vmatmul.mubr.f32.gmra.mrb[0].mxu0 %v10000
  %v10116 = vpop.f32.mrb[0].mxu0
  %v10117 = vadd.f32 %v9930, %v10116
  %v10118 = vpop.f32.mrb[0].mxu0
  %10119 = vmatprep.mubr.f32.mxu0 0.0
  %10120 = vmatmul.mubr.f32.gmra.mrb[0].mxu0 %v10003
  %v10121 = vpop.f32.mrb[0].mxu0
  %v10122 = vadd.f32 %v9935, %v10121
  %v10123 = vpop.f32.mrb[0].mxu0
  %10124 = vmatprep.mubr.f32.mxu0 0.0
  %10125 = vmatmul.mubr.f32.gmra.mrb[0].mxu0 %v10006
  %v10126 = vpop.f32.mrb[0].mxu0
  %v10127 = vadd.f32 %v9940, %v10126
  %v10128 = vpop.f32.mrb[0].mxu0
  %10129 = vmatprep.mubr.f32.mxu0 0.0
  %10130 = vmatmul.mubr.f32.gmra.mrb[0].mxu0 %v10009
  %v10131 = vpop.f32.mrb[0].mxu0
  %v10132 = vadd.f32 %v9945, %v10131
  %v10133 = vpop.f32.mrb[0].mxu0
  %10134 = vmatprep.mubr.f32.mxu0 0.0
  %10135 = vmatmul.mubr.f32.gmra.mrb[0].mxu0 %v10012
  %v10136 = vpop.f32.mrb[0].mxu0
  %v10137 = vadd.f32 %v9950, %v10136
  %v10138 = vpop.f32.mrb[0].mxu0
  %10139 = vmatprep.mubr.f32.mxu0 0.0
  %10140 = vmatmul.mubr.f32.gmra.mrb[0].mxu0 %v10015
  %v10141 = vpop.f32.mrb[0].mxu0
  %v10142 = vadd.f32 %v9955, %v10141
  %v10143 = vpop.f32.mrb[0].mxu0
  %10144 = vmatprep.mubr.f32.mxu0 0.0
  %10145 = vmatmul.mubr.f32.gmra.mrb[0].mxu0 %v10018
  %v10146 = vpop.f32.mrb[0].mxu0
  %v10147 = vadd.f32 %v9960, %v10146
  %v10148 = vpop.f32.mrb[0].mxu0
  %10149 = vmatprep.mubr.f32.mxu0 0.0
  %10150 = vmatmul.mubr.f32.gmra.mrb[0].mxu0 %v10021
  %v10151 = vpop.f32.mrb[0].mxu0
  %v10152 = vadd.f32 %v9965, %v10151
  %v10153 = vpop.f32.mrb[0].mxu0
  %10154 = vmatprep.mubr.f32.mxu0 0.0
  %10155 = vmatmul.mubr.f32.gmra.mrb[0].mxu0 %v10024
  %v10156 = vpop.f32.mrb[0].mxu0
  %v10157 = vadd.f32 %v9970, %v10156
  %v10158 = vpop.f32.mrb[0].mxu0
  %10159 = vmatprep.mubr.f32.mxu0 0.0
  %10160 = vmatmul.mubr.f32.gmra.mrb[0].mxu0 %v10027
  %v10161 = vpop.f32.mrb[0].mxu0
  %v10162 = vadd.f32 %v9975, %v10161
  %v10163 = vpop.f32.mrb[0].mxu0
  %10164 = vmatprep.mubr.f32.mxu0 0.0
  %10165 = vmatmul.mubr.f32.gmra.mrb[0].mxu0 %v10030
  %v10166 = vpop.f32.mrb[0].mxu0
  %v10167 = vadd.f32 %v9980, %v10166
  %v10168 = vpop.f32.mrb[0].mxu0
  %10169 = vmatprep.mubr.f32.mxu0 0.0
  %10170 = vmatmul.mubr.f32.gmra.mrb[0].mxu0 %v10033
  %v10171 = vpop.f32.mrb[0].mxu0
  %v10172 = vadd.f32 %v9985, %v10171
  %v10173 = vpop.f32.mrb[0].mxu0
  %10174 = vmatprep.mubr.f32.mxu0 0.0
  %10175 = vmatmul.mubr.f32.gmra.mrb[0].mxu0 %v10036
  %v10176 = vpop.f32.mrb[0].mxu0
  %v10177 = vadd.f32 %v9990, %v10176
  %v10178 = vpop.f32.mrb[0].mxu0
  %10179 = vdwg.mxu0
  %10180 = vrot.lane.b32.xlu0 %v9802, 98
  %v10181 = vpop.permute.xlu0 %10180
  %v10183 = vsel %vm1748, %v9579, 0
  %v10186 = vsel %vm1748, %v9584, 0
  %v10189 = vsel %vm1748, %v9589, 0
  %v10192 = vsel %vm1748, %v9594, 0
  %v10195 = vsel %vm1748, %v9599, 0
  %v10198 = vsel %vm1748, %v9604, 0
  %v10201 = vsel %vm1748, %v9609, 0
  %v10204 = vsel %vm1748, %v9614, 0
  %v10207 = vsel %vm1748, %v9619, 0
  %v10210 = vsel %vm1748, %v9624, 0
  %v10213 = vsel %vm1748, %v9629, 0
  %v10216 = vsel %vm1748, %v9634, 0
  %v10219 = vsel %vm1748, %v9639, 0
  %v10222 = vsel %vm1748, %v9644, 0
  %v10225 = vsel %vm1748, %v9649, 0
  %v10227 = vsel %vm1779, %v10181, 0
  %10229 = vmatprep.subr.mxu0 0.0
  %10230 = vmatpush1.msra.mxu0 %v10227
  %10231 = vmatprep.subr.mxu0 0.0
  %10232 = vmatpush1.msra.mxu0 0.0
  %10233 = vmatprep.subr.mxu0 0.0
  %10234 = vmatpush1.msra.mxu0 0.0
  %10235 = vmatprep.subr.mxu0 0.0
  %10236 = vmatpush1.msra.mxu0 0.0
  %10237 = vmatprep.subr.mxu0 0.0
  %10238 = vmatpush1.msra.mxu0 0.0
  %10239 = vmatprep.subr.mxu0 0.0
  %10240 = vmatpush1.msra.mxu0 0.0
  %10241 = vmatprep.subr.mxu0 0.0
  %10242 = vmatpush1.msra.mxu0 0.0
  %10243 = vmatprep.subr.mxu0 0.0
  %10244 = vmatpush1.msra.mxu0 0.0
  %10245 = vmatprep.subr.mxu0 0.0
  %10246 = vmatpush1.msra.mxu0 0.0
  %10247 = vmatprep.subr.mxu0 0.0
  %10248 = vmatpush1.msra.mxu0 0.0
  %10249 = vmatprep.subr.mxu0 0.0
  %10250 = vmatpush1.msra.mxu0 0.0
  %10251 = vmatprep.subr.mxu0 0.0
  %10252 = vmatpush1.msra.mxu0 0.0
  %10253 = vmatprep.subr.mxu0 0.0
  %10254 = vmatpush1.msra.mxu0 0.0
  %10255 = vmatprep.subr.mxu0 0.0
  %10256 = vmatpush1.msra.mxu0 0.0
  %10257 = vmatprep.subr.mxu0 0.0
  %10258 = vmatpush1.msra.mxu0 0.0
  %10259 = vmatprep.subr.mxu0 0.0
  %10260 = vmatpush1.msra.mxu0 0.0
  %10261 = vmatprep.subr.mxu0 0.0
  %10262 = vmatpush1.msra.mxu0 0.0
  %10263 = vmatprep.subr.mxu0 0.0
  %10264 = vmatpush1.msra.mxu0 0.0
  %10265 = vmatprep.subr.mxu0 0.0
  %10266 = vmatpush1.msra.mxu0 0.0
  %10267 = vmatprep.subr.mxu0 0.0
  %10268 = vmatpush1.msra.mxu0 0.0
  %10269 = vmatprep.subr.mxu0 0.0
  %10270 = vmatpush1.msra.mxu0 0.0
  %10271 = vmatprep.subr.mxu0 0.0
  %10272 = vmatpush1.msra.mxu0 0.0
  %10273 = vmatprep.subr.mxu0 0.0
  %10274 = vmatpush1.msra.mxu0 0.0
  %10275 = vmatprep.subr.mxu0 0.0
  %10276 = vmatpush1.msra.mxu0 0.0
  %10277 = vmatprep.subr.mxu0 0.0
  %10278 = vmatpush1.msra.mxu0 0.0
  %10279 = vmatprep.subr.mxu0 0.0
  %10280 = vmatpush1.msra.mxu0 0.0
  %10281 = vmatprep.subr.mxu0 0.0
  %10282 = vmatpush1.msra.mxu0 0.0
  %10283 = vmatprep.subr.mxu0 0.0
  %10284 = vmatpush1.msra.mxu0 0.0
  %10285 = vmatprep.subr.mxu0 0.0
  %10286 = vmatpush1.msra.mxu0 0.0
  %10287 = vmatprep.subr.mxu0 0.0
  %10288 = vmatpush1.msra.mxu0 0.0
  %10289 = vmatprep.subr.mxu0 0.0
  %10290 = vmatpush1.msra.mxu0 0.0
  %10291 = vmatprep.subr.mxu0 0.0
  %10292 = vmatpush1.msra.mxu0 0.0
  %10293 = vmatprep.mubr.f32.mxu0 0.0
  %10294 = vmatmul.mubr.f32.gmra.mrb[0].mxu0 %v10183
  %v10295 = vpop.f32.mrb[0].mxu0
  %v10296 = vadd.f32 0.0, %v10295
  %v10297 = vpop.f32.mrb[0].mxu0
  %10298 = vmatprep.mubr.f32.mxu0 0.0
  %10299 = vmatmul.mubr.f32.gmra.mrb[0].mxu0 %v10186
  %v10300 = vpop.f32.mrb[0].mxu0
  %v10301 = vadd.f32 0.0, %v10300
  %v10302 = vpop.f32.mrb[0].mxu0
  %10303 = vmatprep.mubr.f32.mxu0 0.0
  %10304 = vmatmul.mubr.f32.gmra.mrb[0].mxu0 %v10189
  %v10305 = vpop.f32.mrb[0].mxu0
  %v10306 = vadd.f32 0.0, %v10305
  %v10307 = vpop.f32.mrb[0].mxu0
  %10308 = vmatprep.mubr.f32.mxu0 0.0
  %10309 = vmatmul.mubr.f32.gmra.mrb[0].mxu0 %v10192
  %v10310 = vpop.f32.mrb[0].mxu0
  %v10311 = vadd.f32 0.0, %v10310
  %v10312 = vpop.f32.mrb[0].mxu0
  %10313 = vmatprep.mubr.f32.mxu0 0.0
  %10314 = vmatmul.mubr.f32.gmra.mrb[0].mxu0 %v10195
  %v10315 = vpop.f32.mrb[0].mxu0
  %v10316 = vadd.f32 0.0, %v10315
  %v10317 = vpop.f32.mrb[0].mxu0
  %10318 = vmatprep.mubr.f32.mxu0 0.0
  %10319 = vmatmul.mubr.f32.gmra.mrb[0].mxu0 %v10198
  %v10320 = vpop.f32.mrb[0].mxu0
  %v10321 = vadd.f32 0.0, %v10320
  %v10322 = vpop.f32.mrb[0].mxu0
  %10323 = vmatprep.mubr.f32.mxu0 0.0
  %10324 = vmatmul.mubr.f32.gmra.mrb[0].mxu0 %v10201
  %v10325 = vpop.f32.mrb[0].mxu0
  %v10326 = vadd.f32 0.0, %v10325
  %v10327 = vpop.f32.mrb[0].mxu0
  %10328 = vmatprep.mubr.f32.mxu0 0.0
  %10329 = vmatmul.mubr.f32.gmra.mrb[0].mxu0 %v10204
  %v10330 = vpop.f32.mrb[0].mxu0
  %v10331 = vadd.f32 0.0, %v10330
  %v10332 = vpop.f32.mrb[0].mxu0
  %10333 = vmatprep.mubr.f32.mxu0 0.0
  %10334 = vmatmul.mubr.f32.gmra.mrb[0].mxu0 %v10207
  %v10335 = vpop.f32.mrb[0].mxu0
  %v10336 = vadd.f32 0.0, %v10335
  %v10337 = vpop.f32.mrb[0].mxu0
  %10338 = vmatprep.mubr.f32.mxu0 0.0
  %10339 = vmatmul.mubr.f32.gmra.mrb[0].mxu0 %v10210
  %v10340 = vpop.f32.mrb[0].mxu0
  %v10341 = vadd.f32 0.0, %v10340
  %v10342 = vpop.f32.mrb[0].mxu0
  %10343 = vmatprep.mubr.f32.mxu0 0.0
  %10344 = vmatmul.mubr.f32.gmra.mrb[0].mxu0 %v10213
  %v10345 = vpop.f32.mrb[0].mxu0
  %v10346 = vadd.f32 0.0, %v10345
  %v10347 = vpop.f32.mrb[0].mxu0
  %10348 = vmatprep.mubr.f32.mxu0 0.0
  %10349 = vmatmul.mubr.f32.gmra.mrb[0].mxu0 %v10216
  %v10350 = vpop.f32.mrb[0].mxu0
  %v10351 = vadd.f32 0.0, %v10350
  %v10352 = vpop.f32.mrb[0].mxu0
  %10353 = vmatprep.mubr.f32.mxu0 0.0
  %10354 = vmatmul.mubr.f32.gmra.mrb[0].mxu0 %v10219
  %v10355 = vpop.f32.mrb[0].mxu0
  %v10356 = vadd.f32 0.0, %v10355
  %v10357 = vpop.f32.mrb[0].mxu0
  %10358 = vmatprep.mubr.f32.mxu0 0.0
  %10359 = vmatmul.mubr.f32.gmra.mrb[0].mxu0 %v10222
  %v10360 = vpop.f32.mrb[0].mxu0
  %v10361 = vadd.f32 0.0, %v10360
  %v10362 = vpop.f32.mrb[0].mxu0
  %10363 = vmatprep.mubr.f32.mxu0 0.0
  %10364 = vmatmul.mubr.f32.gmra.mrb[0].mxu0 %v10225
  %v10365 = vpop.f32.mrb[0].mxu0
  %v10366 = vadd.f32 0.0, %v10365
  %v10367 = vpop.f32.mrb[0].mxu0
  %10368 = vdwg.mxu0
  %v10369 = vadd.f32 %v10107, %v10296
  %v10370 = vadd.f32 %v10112, %v10301
  %v10371 = vadd.f32 %v10117, %v10306
  %v10372 = vadd.f32 %v10122, %v10311
  %v10373 = vadd.f32 %v10127, %v10316
  %v10374 = vadd.f32 %v10132, %v10321
  %v10375 = vadd.f32 %v10137, %v10326
  %v10376 = vadd.f32 %v10142, %v10331
  %v10377 = vadd.f32 %v10147, %v10336
  %v10378 = vadd.f32 %v10152, %v10341
  %v10379 = vadd.f32 %v10157, %v10346
  %v10380 = vadd.f32 %v10162, %v10351
  %v10381 = vadd.f32 %v10167, %v10356
  %v10382 = vadd.f32 %v10172, %v10361
  %v10383 = vadd.f32 %v10177, %v10366
  %10384 = vrot.lane.b32.xlu0 %v9802, 83
  %v10385 = vpop.permute.xlu0 %10384
  %v10387 = vsel %vm1748, %v9654, 0
  %v10390 = vsel %vm1748, %v9659, 0
  %v10393 = vsel %vm1748, %v9664, 0
  %v10396 = vsel %vm1748, %v9669, 0
  %v10399 = vsel %vm1748, %v9674, 0
  %v10402 = vsel %vm1748, %v9679, 0
  %v10405 = vsel %vm1748, %v9684, 0
  %v10408 = vsel %vm1748, %v9689, 0
  %v10411 = vsel %vm1748, %v9694, 0
  %v10414 = vsel %vm1748, %v9699, 0
  %v10417 = vsel %vm1748, %v9704, 0
  %v10420 = vsel %vm1748, %v9709, 0
  %v10423 = vsel %vm1748, %v9714, 0
  %v10426 = vsel %vm1748, %v9719, 0
  %v10429 = vsel %vm1748, %v9724, 0
  %v10431 = vsel %vm1779, %v10385, 0
  %10433 = vmatprep.subr.mxu0 0.0
  %10434 = vmatpush1.msra.mxu0 %v10431
  %10435 = vmatprep.subr.mxu0 0.0
  %10436 = vmatpush1.msra.mxu0 0.0
  %10437 = vmatprep.subr.mxu0 0.0
  %10438 = vmatpush1.msra.mxu0 0.0
  %10439 = vmatprep.subr.mxu0 0.0
  %10440 = vmatpush1.msra.mxu0 0.0
  %10441 = vmatprep.subr.mxu0 0.0
  %10442 = vmatpush1.msra.mxu0 0.0
  %10443 = vmatprep.subr.mxu0 0.0
  %10444 = vmatpush1.msra.mxu0 0.0
  %10445 = vmatprep.subr.mxu0 0.0
  %10446 = vmatpush1.msra.mxu0 0.0
  %10447 = vmatprep.subr.mxu0 0.0
  %10448 = vmatpush1.msra.mxu0 0.0
  %10449 = vmatprep.subr.mxu0 0.0
  %10450 = vmatpush1.msra.mxu0 0.0
  %10451 = vmatprep.subr.mxu0 0.0
  %10452 = vmatpush1.msra.mxu0 0.0
  %10453 = vmatprep.subr.mxu0 0.0
  %10454 = vmatpush1.msra.mxu0 0.0
  %10455 = vmatprep.subr.mxu0 0.0
  %10456 = vmatpush1.msra.mxu0 0.0
  %10457 = vmatprep.subr.mxu0 0.0
  %10458 = vmatpush1.msra.mxu0 0.0
  %10459 = vmatprep.subr.mxu0 0.0
  %10460 = vmatpush1.msra.mxu0 0.0
  %10461 = vmatprep.subr.mxu0 0.0
  %10462 = vmatpush1.msra.mxu0 0.0
  %10463 = vmatprep.subr.mxu0 0.0
  %10464 = vmatpush1.msra.mxu0 0.0
  %10465 = vmatprep.subr.mxu0 0.0
  %10466 = vmatpush1.msra.mxu0 0.0
  %10467 = vmatprep.subr.mxu0 0.0
  %10468 = vmatpush1.msra.mxu0 0.0
  %10469 = vmatprep.subr.mxu0 0.0
  %10470 = vmatpush1.msra.mxu0 0.0
  %10471 = vmatprep.subr.mxu0 0.0
  %10472 = vmatpush1.msra.mxu0 0.0
  %10473 = vmatprep.subr.mxu0 0.0
  %10474 = vmatpush1.msra.mxu0 0.0
  %10475 = vmatprep.subr.mxu0 0.0
  %10476 = vmatpush1.msra.mxu0 0.0
  %10477 = vmatprep.subr.mxu0 0.0
  %10478 = vmatpush1.msra.mxu0 0.0
  %10479 = vmatprep.subr.mxu0 0.0
  %10480 = vmatpush1.msra.mxu0 0.0
  %10481 = vmatprep.subr.mxu0 0.0
  %10482 = vmatpush1.msra.mxu0 0.0
  %10483 = vmatprep.subr.mxu0 0.0
  %10484 = vmatpush1.msra.mxu0 0.0
  %10485 = vmatprep.subr.mxu0 0.0
  %10486 = vmatpush1.msra.mxu0 0.0
  %10487 = vmatprep.subr.mxu0 0.0
  %10488 = vmatpush1.msra.mxu0 0.0
  %10489 = vmatprep.subr.mxu0 0.0
  %10490 = vmatpush1.msra.mxu0 0.0
  %10491 = vmatprep.subr.mxu0 0.0
  %10492 = vmatpush1.msra.mxu0 0.0
  %10493 = vmatprep.subr.mxu0 0.0
  %10494 = vmatpush1.msra.mxu0 0.0
  %10495 = vmatprep.subr.mxu0 0.0
  %10496 = vmatpush1.msra.mxu0 0.0
  %10497 = vmatprep.mubr.f32.mxu0 0.0
  %10498 = vmatmul.mubr.f32.gmra.mrb[0].mxu0 %v10387
  %v10499 = vpop.f32.mrb[0].mxu0
  %v10500 = vadd.f32 0.0, %v10499
  %v10501 = vpop.f32.mrb[0].mxu0
  %10502 = vmatprep.mubr.f32.mxu0 0.0
  %10503 = vmatmul.mubr.f32.gmra.mrb[0].mxu0 %v10390
  %v10504 = vpop.f32.mrb[0].mxu0
  %v10505 = vadd.f32 0.0, %v10504
  %v10506 = vpop.f32.mrb[0].mxu0
  %10507 = vmatprep.mubr.f32.mxu0 0.0
  %10508 = vmatmul.mubr.f32.gmra.mrb[0].mxu0 %v10393
  %v10509 = vpop.f32.mrb[0].mxu0
  %v10510 = vadd.f32 0.0, %v10509
  %v10511 = vpop.f32.mrb[0].mxu0
  %10512 = vmatprep.mubr.f32.mxu0 0.0
  %10513 = vmatmul.mubr.f32.gmra.mrb[0].mxu0 %v10396
  %v10514 = vpop.f32.mrb[0].mxu0
  %v10515 = vadd.f32 0.0, %v10514
  %v10516 = vpop.f32.mrb[0].mxu0
  %10517 = vmatprep.mubr.f32.mxu0 0.0
  %10518 = vmatmul.mubr.f32.gmra.mrb[0].mxu0 %v10399
  %v10519 = vpop.f32.mrb[0].mxu0
  %v10520 = vadd.f32 0.0, %v10519
  %v10521 = vpop.f32.mrb[0].mxu0
  %10522 = vmatprep.mubr.f32.mxu0 0.0
  %10523 = vmatmul.mubr.f32.gmra.mrb[0].mxu0 %v10402
  %v10524 = vpop.f32.mrb[0].mxu0
  %v10525 = vadd.f32 0.0, %v10524
  %v10526 = vpop.f32.mrb[0].mxu0
  %10527 = vmatprep.mubr.f32.mxu0 0.0
  %10528 = vmatmul.mubr.f32.gmra.mrb[0].mxu0 %v10405
  %v10529 = vpop.f32.mrb[0].mxu0
  %v10530 = vadd.f32 0.0, %v10529
  %v10531 = vpop.f32.mrb[0].mxu0
  %10532 = vmatprep.mubr.f32.mxu0 0.0
  %10533 = vmatmul.mubr.f32.gmra.mrb[0].mxu0 %v10408
  %v10534 = vpop.f32.mrb[0].mxu0
  %v10535 = vadd.f32 0.0, %v10534
  %v10536 = vpop.f32.mrb[0].mxu0
  %10537 = vmatprep.mubr.f32.mxu0 0.0
  %10538 = vmatmul.mubr.f32.gmra.mrb[0].mxu0 %v10411
  %v10539 = vpop.f32.mrb[0].mxu0
  %v10540 = vadd.f32 0.0, %v10539
  %v10541 = vpop.f32.mrb[0].mxu0
  %10542 = vmatprep.mubr.f32.mxu0 0.0
  %10543 = vmatmul.mubr.f32.gmra.mrb[0].mxu0 %v10414
  %v10544 = vpop.f32.mrb[0].mxu0
  %v10545 = vadd.f32 0.0, %v10544
  %v10546 = vpop.f32.mrb[0].mxu0
  %10547 = vmatprep.mubr.f32.mxu0 0.0
  %10548 = vmatmul.mubr.f32.gmra.mrb[0].mxu0 %v10417
  %v10549 = vpop.f32.mrb[0].mxu0
  %v10550 = vadd.f32 0.0, %v10549
  %v10551 = vpop.f32.mrb[0].mxu0
  %10552 = vmatprep.mubr.f32.mxu0 0.0
  %10553 = vmatmul.mubr.f32.gmra.mrb[0].mxu0 %v10420
  %v10554 = vpop.f32.mrb[0].mxu0
  %v10555 = vadd.f32 0.0, %v10554
  %v10556 = vpop.f32.mrb[0].mxu0
  %10557 = vmatprep.mubr.f32.mxu0 0.0
  %10558 = vmatmul.mubr.f32.gmra.mrb[0].mxu0 %v10423
  %v10559 = vpop.f32.mrb[0].mxu0
  %v10560 = vadd.f32 0.0, %v10559
  %v10561 = vpop.f32.mrb[0].mxu0
  %10562 = vmatprep.mubr.f32.mxu0 0.0
  %10563 = vmatmul.mubr.f32.gmra.mrb[0].mxu0 %v10426
  %v10564 = vpop.f32.mrb[0].mxu0
  %v10565 = vadd.f32 0.0, %v10564
  %v10566 = vpop.f32.mrb[0].mxu0
  %10567 = vmatprep.mubr.f32.mxu0 0.0
  %10568 = vmatmul.mubr.f32.gmra.mrb[0].mxu0 %v10429
  %v10569 = vpop.f32.mrb[0].mxu0
  %v10570 = vadd.f32 0.0, %v10569
  %v10571 = vpop.f32.mrb[0].mxu0
  %10572 = vdwg.mxu0
  %v10573 = vadd.f32 %v10369, %v10500
  %v10574 = vadd.f32 %v10370, %v10505
  %v10575 = vadd.f32 %v10371, %v10510
  %v10576 = vadd.f32 %v10372, %v10515
  %v10577 = vadd.f32 %v10373, %v10520
  %v10578 = vadd.f32 %v10374, %v10525
  %v10579 = vadd.f32 %v10375, %v10530
  %v10580 = vadd.f32 %v10376, %v10535
  %v10581 = vadd.f32 %v10377, %v10540
  %v10582 = vadd.f32 %v10378, %v10545
  %v10583 = vadd.f32 %v10379, %v10550
  %v10584 = vadd.f32 %v10380, %v10555
  %v10585 = vadd.f32 %v10381, %v10560
  %v10586 = vadd.f32 %v10382, %v10565
  %v10587 = vadd.f32 %v10383, %v10570
  %10588 = vrot.lane.b32.xlu0 %v9802, 68
  %v10589 = vpop.permute.xlu0 %10588
  %v10591 = vsel %vm1748, %v9729, 0
  %v10594 = vsel %vm1748, %v9734, 0
  %v10597 = vsel %vm1748, %v9739, 0
  %v10600 = vsel %vm1748, %v9744, 0
  %v10603 = vsel %vm1748, %v9749, 0
  %v10606 = vsel %vm1748, %v9754, 0
  %v10609 = vsel %vm1748, %v9759, 0
  %v10612 = vsel %vm1748, %v9764, 0
  %v10615 = vsel %vm1748, %v9769, 0
  %v10618 = vsel %vm1748, %v9774, 0
  %v10621 = vsel %vm1748, %v9779, 0
  %v10624 = vsel %vm1748, %v9784, 0
  %v10627 = vsel %vm1748, %v9789, 0
  %v10630 = vsel %vm1748, %v9794, 0
  %v10633 = vsel %vm1748, %v9799, 0
  %v10635 = vsel %vm1779, %v10589, 0
  %10637 = vmatprep.subr.mxu0 0.0
  %10638 = vmatpush1.msra.mxu0 %v10635
  %10639 = vmatprep.subr.mxu0 0.0
  %10640 = vmatpush1.msra.mxu0 0.0
  %10641 = vmatprep.subr.mxu0 0.0
  %10642 = vmatpush1.msra.mxu0 0.0
  %10643 = vmatprep.subr.mxu0 0.0
  %10644 = vmatpush1.msra.mxu0 0.0
  %10645 = vmatprep.subr.mxu0 0.0
  %10646 = vmatpush1.msra.mxu0 0.0
  %10647 = vmatprep.subr.mxu0 0.0
  %10648 = vmatpush1.msra.mxu0 0.0
  %10649 = vmatprep.subr.mxu0 0.0
  %10650 = vmatpush1.msra.mxu0 0.0
  %10651 = vmatprep.subr.mxu0 0.0
  %10652 = vmatpush1.msra.mxu0 0.0
  %10653 = vmatprep.subr.mxu0 0.0
  %10654 = vmatpush1.msra.mxu0 0.0
  %10655 = vmatprep.subr.mxu0 0.0
  %10656 = vmatpush1.msra.mxu0 0.0
  %10657 = vmatprep.subr.mxu0 0.0
  %10658 = vmatpush1.msra.mxu0 0.0
  %10659 = vmatprep.subr.mxu0 0.0
  %10660 = vmatpush1.msra.mxu0 0.0
  %10661 = vmatprep.subr.mxu0 0.0
  %10662 = vmatpush1.msra.mxu0 0.0
  %10663 = vmatprep.subr.mxu0 0.0
  %10664 = vmatpush1.msra.mxu0 0.0
  %10665 = vmatprep.subr.mxu0 0.0
  %10666 = vmatpush1.msra.mxu0 0.0
  %10667 = vmatprep.subr.mxu0 0.0
  %10668 = vmatpush1.msra.mxu0 0.0
  %10669 = vmatprep.subr.mxu0 0.0
  %10670 = vmatpush1.msra.mxu0 0.0
  %10671 = vmatprep.subr.mxu0 0.0
  %10672 = vmatpush1.msra.mxu0 0.0
  %10673 = vmatprep.subr.mxu0 0.0
  %10674 = vmatpush1.msra.mxu0 0.0
  %10675 = vmatprep.subr.mxu0 0.0
  %10676 = vmatpush1.msra.mxu0 0.0
  %10677 = vmatprep.subr.mxu0 0.0
  %10678 = vmatpush1.msra.mxu0 0.0
  %10679 = vmatprep.subr.mxu0 0.0
  %10680 = vmatpush1.msra.mxu0 0.0
  %10681 = vmatprep.subr.mxu0 0.0
  %10682 = vmatpush1.msra.mxu0 0.0
  %10683 = vmatprep.subr.mxu0 0.0
  %10684 = vmatpush1.msra.mxu0 0.0
  %10685 = vmatprep.subr.mxu0 0.0
  %10686 = vmatpush1.msra.mxu0 0.0
  %10687 = vmatprep.subr.mxu0 0.0
  %10688 = vmatpush1.msra.mxu0 0.0
  %10689 = vmatprep.subr.mxu0 0.0
  %10690 = vmatpush1.msra.mxu0 0.0
  %10691 = vmatprep.subr.mxu0 0.0
  %10692 = vmatpush1.msra.mxu0 0.0
  %10693 = vmatprep.subr.mxu0 0.0
  %10694 = vmatpush1.msra.mxu0 0.0
  %10695 = vmatprep.subr.mxu0 0.0
  %10696 = vmatpush1.msra.mxu0 0.0
  %10697 = vmatprep.subr.mxu0 0.0
  %10698 = vmatpush1.msra.mxu0 0.0
  %10699 = vmatprep.subr.mxu0 0.0
  %10700 = vmatpush1.msra.mxu0 0.0
  %10701 = vmatprep.mubr.f32.mxu0 0.0
  %10702 = vmatmul.mubr.f32.gmra.mrb[0].mxu0 %v10591
  %v10703 = vpop.f32.mrb[0].mxu0
  %v10704 = vadd.f32 0.0, %v10703
  %v10705 = vpop.f32.mrb[0].mxu0
  %10706 = vmatprep.mubr.f32.mxu0 0.0
  %10707 = vmatmul.mubr.f32.gmra.mrb[0].mxu0 %v10594
  %v10708 = vpop.f32.mrb[0].mxu0
  %v10709 = vadd.f32 0.0, %v10708
  %v10710 = vpop.f32.mrb[0].mxu0
  %10711 = vmatprep.mubr.f32.mxu0 0.0
  %10712 = vmatmul.mubr.f32.gmra.mrb[0].mxu0 %v10597
  %v10713 = vpop.f32.mrb[0].mxu0
  %v10714 = vadd.f32 0.0, %v10713
  %v10715 = vpop.f32.mrb[0].mxu0
  %10716 = vmatprep.mubr.f32.mxu0 0.0
  %10717 = vmatmul.mubr.f32.gmra.mrb[0].mxu0 %v10600
  %v10718 = vpop.f32.mrb[0].mxu0
  %v10719 = vadd.f32 0.0, %v10718
  %v10720 = vpop.f32.mrb[0].mxu0
  %10721 = vmatprep.mubr.f32.mxu0 0.0
  %10722 = vmatmul.mubr.f32.gmra.mrb[0].mxu0 %v10603
  %v10723 = vpop.f32.mrb[0].mxu0
  %v10724 = vadd.f32 0.0, %v10723
  %v10725 = vpop.f32.mrb[0].mxu0
  %10726 = vmatprep.mubr.f32.mxu0 0.0
  %10727 = vmatmul.mubr.f32.gmra.mrb[0].mxu0 %v10606
  %v10728 = vpop.f32.mrb[0].mxu0
  %v10729 = vadd.f32 0.0, %v10728
  %v10730 = vpop.f32.mrb[0].mxu0
  %10731 = vmatprep.mubr.f32.mxu0 0.0
  %10732 = vmatmul.mubr.f32.gmra.mrb[0].mxu0 %v10609
  %v10733 = vpop.f32.mrb[0].mxu0
  %v10734 = vadd.f32 0.0, %v10733
  %v10735 = vpop.f32.mrb[0].mxu0
  %10736 = vmatprep.mubr.f32.mxu0 0.0
  %10737 = vmatmul.mubr.f32.gmra.mrb[0].mxu0 %v10612
  %v10738 = vpop.f32.mrb[0].mxu0
  %v10739 = vadd.f32 0.0, %v10738
  %v10740 = vpop.f32.mrb[0].mxu0
  %10741 = vmatprep.mubr.f32.mxu0 0.0
  %10742 = vmatmul.mubr.f32.gmra.mrb[0].mxu0 %v10615
  %v10743 = vpop.f32.mrb[0].mxu0
  %v10744 = vadd.f32 0.0, %v10743
  %v10745 = vpop.f32.mrb[0].mxu0
  %10746 = vmatprep.mubr.f32.mxu0 0.0
  %10747 = vmatmul.mubr.f32.gmra.mrb[0].mxu0 %v10618
  %v10748 = vpop.f32.mrb[0].mxu0
  %v10749 = vadd.f32 0.0, %v10748
  %v10750 = vpop.f32.mrb[0].mxu0
  %10751 = vmatprep.mubr.f32.mxu0 0.0
  %10752 = vmatmul.mubr.f32.gmra.mrb[0].mxu0 %v10621
  %v10753 = vpop.f32.mrb[0].mxu0
  %v10754 = vadd.f32 0.0, %v10753
  %v10755 = vpop.f32.mrb[0].mxu0
  %10756 = vmatprep.mubr.f32.mxu0 0.0
  %10757 = vmatmul.mubr.f32.gmra.mrb[0].mxu0 %v10624
  %v10758 = vpop.f32.mrb[0].mxu0
  %v10759 = vadd.f32 0.0, %v10758
  %v10760 = vpop.f32.mrb[0].mxu0
  %10761 = vmatprep.mubr.f32.mxu0 0.0
  %10762 = vmatmul.mubr.f32.gmra.mrb[0].mxu0 %v10627
  %v10763 = vpop.f32.mrb[0].mxu0
  %v10764 = vadd.f32 0.0, %v10763
  %v10765 = vpop.f32.mrb[0].mxu0
  %10766 = vmatprep.mubr.f32.mxu0 0.0
  %10767 = vmatmul.mubr.f32.gmra.mrb[0].mxu0 %v10630
  %v10768 = vpop.f32.mrb[0].mxu0
  %v10769 = vadd.f32 0.0, %v10768
  %v10770 = vpop.f32.mrb[0].mxu0
  %10771 = vmatprep.mubr.f32.mxu0 0.0
  %10772 = vmatmul.mubr.f32.gmra.mrb[0].mxu0 %v10633
  %v10773 = vpop.f32.mrb[0].mxu0
  %v10774 = vadd.f32 0.0, %v10773
  %v10775 = vpop.f32.mrb[0].mxu0
  %10776 = vdwg.mxu0
  %v10777 = vadd.f32 %v10573, %v10704
  %v10778 = vadd.f32 %v10574, %v10709
  %v10779 = vadd.f32 %v10575, %v10714
  %v10780 = vadd.f32 %v10576, %v10719
  %v10781 = vadd.f32 %v10577, %v10724
  %v10782 = vadd.f32 %v10578, %v10729
  %v10783 = vadd.f32 %v10579, %v10734
  %v10784 = vadd.f32 %v10580, %v10739
  %v10785 = vadd.f32 %v10581, %v10744
  %v10786 = vadd.f32 %v10582, %v10749
  %v10787 = vadd.f32 %v10583, %v10754
  %v10788 = vadd.f32 %v10584, %v10759
  %v10789 = vadd.f32 %v10585, %v10764
  %v10790 = vadd.f32 %v10586, %v10769
  %v10791 = vadd.f32 %v10587, %v10774
  %v10792 = vld [vmem:[%s3 + $0x108] sm:$0xff]
  %v10793 = vld [vmem:[%s3 + $0x110] sm:$0xff]
  %v10794 = vld [vmem:[%s3 + $0x118] sm:$0xff]
  %v10795 = vld [vmem:[%s3 + $0x120] sm:$0xff]
  %v10796 = vld [vmem:[%s3 + $0x128] sm:$0xff]
  %v10797 = vld [vmem:[%s3 + $0x130] sm:$0xff]
  %v10798 = vld [vmem:[%s3 + $0x138] sm:$0xff]
  %v10799 = vld [vmem:[%s3 + $0x140] sm:$0xff]
  %v10800 = vld [vmem:[%s3 + $0x148] sm:$0xff]
  %v10801 = vld [vmem:[%s3 + $0x150] sm:$0xff]
  %v10802 = vld [vmem:[%s3 + $0x158] sm:$0xff]
  %v10803 = vld [vmem:[%s3 + $0x160] sm:$0xff]
  %v10804 = vld [vmem:[%s3 + $0x168] sm:$0xff]
  %v10805 = vld [vmem:[%s3 + $0x170] sm:$0xff]
  %v10806 = vld [vmem:[%s3 + $0x178] sm:$0xff]
  %10808 = vset.pattern.permute.xlu0 0
  %10809 = vperm.xlu0 %10808, %v10792
  %v10810 = vpop.permute.xlu0 %10809
  %10813 = vset.pattern.permute.xlu0 0
  %10814 = vperm.xlu0 %10813, %v10793
  %v10815 = vpop.permute.xlu0 %10814
  %10818 = vset.pattern.permute.xlu0 0
  %10819 = vperm.xlu0 %10818, %v10794
  %v10820 = vpop.permute.xlu0 %10819
  %10823 = vset.pattern.permute.xlu0 0
  %10824 = vperm.xlu0 %10823, %v10795
  %v10825 = vpop.permute.xlu0 %10824
  %10828 = vset.pattern.permute.xlu0 0
  %10829 = vperm.xlu0 %10828, %v10796
  %v10830 = vpop.permute.xlu0 %10829
  %10833 = vset.pattern.permute.xlu0 0
  %10834 = vperm.xlu0 %10833, %v10797
  %v10835 = vpop.permute.xlu0 %10834
  %10838 = vset.pattern.permute.xlu0 0
  %10839 = vperm.xlu0 %10838, %v10798
  %v10840 = vpop.permute.xlu0 %10839
  %10843 = vset.pattern.permute.xlu0 0
  %10844 = vperm.xlu0 %10843, %v10799
  %v10845 = vpop.permute.xlu0 %10844
  %10848 = vset.pattern.permute.xlu0 0
  %10849 = vperm.xlu0 %10848, %v10800
  %v10850 = vpop.permute.xlu0 %10849
  %10853 = vset.pattern.permute.xlu0 0
  %10854 = vperm.xlu0 %10853, %v10801
  %v10855 = vpop.permute.xlu0 %10854
  %10858 = vset.pattern.permute.xlu0 0
  %10859 = vperm.xlu0 %10858, %v10802
  %v10860 = vpop.permute.xlu0 %10859
  %10863 = vset.pattern.permute.xlu0 0
  %10864 = vperm.xlu0 %10863, %v10803
  %v10865 = vpop.permute.xlu0 %10864
  %10868 = vset.pattern.permute.xlu0 0
  %10869 = vperm.xlu0 %10868, %v10804
  %v10870 = vpop.permute.xlu0 %10869
  %10873 = vset.pattern.permute.xlu0 0
  %10874 = vperm.xlu0 %10873, %v10805
  %v10875 = vpop.permute.xlu0 %10874
  %10878 = vset.pattern.permute.xlu0 0
  %10879 = vperm.xlu0 %10878, %v10806
  %v10880 = vpop.permute.xlu0 %10879
  %v10882 = vadd.f32 %v10777, %v10810
  %v10883 = vadd.f32 %v10778, %v10815
  %v10884 = vadd.f32 %v10779, %v10820
  %v10885 = vadd.f32 %v10780, %v10825
  %v10886 = vadd.f32 %v10781, %v10830
  %v10887 = vadd.f32 %v10782, %v10835
  %v10888 = vadd.f32 %v10783, %v10840
  %v10889 = vadd.f32 %v10784, %v10845
  %v10890 = vadd.f32 %v10785, %v10850
  %v10891 = vadd.f32 %v10786, %v10855
  %v10892 = vadd.f32 %v10787, %v10860
  %v10893 = vadd.f32 %v10788, %v10865
  %v10894 = vadd.f32 %v10789, %v10870
  %v10895 = vadd.f32 %v10790, %v10875
  %v10896 = vadd.f32 %v10791, %v10880
  %v10897 = vmax.f32 %v10882, 0.0
  %v10898 = vmax.f32 %v10883, 0.0
  %v10899 = vmax.f32 %v10884, 0.0
  %v10900 = vmax.f32 %v10885, 0.0
  %v10901 = vmax.f32 %v10886, 0.0
  %v10902 = vmax.f32 %v10887, 0.0
  %v10903 = vmax.f32 %v10888, 0.0
  %v10904 = vmax.f32 %v10889, 0.0
  %v10905 = vmax.f32 %v10890, 0.0
  %v10906 = vmax.f32 %v10891, 0.0
  %v10907 = vmax.f32 %v10892, 0.0
  %v10908 = vmax.f32 %v10893, 0.0
  %v10909 = vmax.f32 %v10894, 0.0
  %v10910 = vmax.f32 %v10895, 0.0
  %v10911 = vmax.f32 %v10896, 0.0
  %v10912 = vld [vmem:[%s1 + $0xc60] sm:$0xff]
  %v10913 = vld [vmem:[%s1 + $0xc70] sm:$0xff]
  %v10914 = vld [vmem:[%s1 + $0xc80] sm:$0xff]
  %v10915 = vld [vmem:[%s1 + $0xc90] sm:$0xff]
  %v10916 = vld [vmem:[%s1 + $0xca0] sm:$0xff]
  %v10917 = vld [vmem:[%s1 + $0xcb0] sm:$0xff]
  %v10918 = vld [vmem:[%s1 + $0xcc0] sm:$0xff]
  %v10920 = vsel %vm5287, %v10912, 0
  %v10923 = vsel %vm5287, %v10913, 0
  %v10926 = vsel %vm5287, %v10914, 0
  %v10929 = vsel %vm5287, %v10915, 0
  %v10932 = vsel %vm5287, %v10916, 0
  %v10935 = vsel %vm5287, %v10917, 0
  %v10938 = vsel %vm5287, %v10918, 0
  %10940 = vmatprep.subr.mxu0 0.0
  %10941 = vmatpush1.msra.mxu0 %v10897
  %10942 = vmatprep.subr.mxu0 0.0
  %10943 = vmatpush1.msra.mxu0 %v10898
  %10944 = vmatprep.subr.mxu0 0.0
  %10945 = vmatpush1.msra.mxu0 %v10899
  %10946 = vmatprep.subr.mxu0 0.0
  %10947 = vmatpush1.msra.mxu0 %v10900
  %10948 = vmatprep.subr.mxu0 0.0
  %10949 = vmatpush1.msra.mxu0 %v10901
  %10950 = vmatprep.subr.mxu0 0.0
  %10951 = vmatpush1.msra.mxu0 %v10902
  %10952 = vmatprep.subr.mxu0 0.0
  %10953 = vmatpush1.msra.mxu0 %v10903
  %10954 = vmatprep.subr.mxu0 0.0
  %10955 = vmatpush1.msra.mxu0 %v10904
  %10956 = vmatprep.subr.mxu0 0.0
  %10957 = vmatpush1.msra.mxu0 %v10905
  %10958 = vmatprep.subr.mxu0 0.0
  %10959 = vmatpush1.msra.mxu0 %v10906
  %10960 = vmatprep.subr.mxu0 0.0
  %10961 = vmatpush1.msra.mxu0 %v10907
  %10962 = vmatprep.subr.mxu0 0.0
  %10963 = vmatpush1.msra.mxu0 %v10908
  %10964 = vmatprep.subr.mxu0 0.0
  %10965 = vmatpush1.msra.mxu0 %v10909
  %10966 = vmatprep.subr.mxu0 0.0
  %10967 = vmatpush1.msra.mxu0 %v10910
  %10968 = vmatprep.subr.mxu0 0.0
  %10969 = vmatpush1.msra.mxu0 %v10911
  %10970 = vmatprep.subr.mxu0 0.0
  %10971 = vmatpush1.msra.mxu0 0.0
  %10972 = vmatprep.subr.mxu0 0.0
  %10973 = vmatpush1.msra.mxu0 0.0
  %10974 = vmatprep.subr.mxu0 0.0
  %10975 = vmatpush1.msra.mxu0 0.0
  %10976 = vmatprep.subr.mxu0 0.0
  %10977 = vmatpush1.msra.mxu0 0.0
  %10978 = vmatprep.subr.mxu0 0.0
  %10979 = vmatpush1.msra.mxu0 0.0
  %10980 = vmatprep.subr.mxu0 0.0
  %10981 = vmatpush1.msra.mxu0 0.0
  %10982 = vmatprep.subr.mxu0 0.0
  %10983 = vmatpush1.msra.mxu0 0.0
  %10984 = vmatprep.subr.mxu0 0.0
  %10985 = vmatpush1.msra.mxu0 0.0
  %10986 = vmatprep.subr.mxu0 0.0
  %10987 = vmatpush1.msra.mxu0 0.0
  %10988 = vmatprep.subr.mxu0 0.0
  %10989 = vmatpush1.msra.mxu0 0.0
  %10990 = vmatprep.subr.mxu0 0.0
  %10991 = vmatpush1.msra.mxu0 0.0
  %10992 = vmatprep.subr.mxu0 0.0
  %10993 = vmatpush1.msra.mxu0 0.0
  %10994 = vmatprep.subr.mxu0 0.0
  %10995 = vmatpush1.msra.mxu0 0.0
  %10996 = vmatprep.subr.mxu0 0.0
  %10997 = vmatpush1.msra.mxu0 0.0
  %10998 = vmatprep.subr.mxu0 0.0
  %10999 = vmatpush1.msra.mxu0 0.0
  %11000 = vmatprep.subr.mxu0 0.0
  %11001 = vmatpush1.msra.mxu0 0.0
  %11002 = vmatprep.subr.mxu0 0.0
  %11003 = vmatpush1.msra.mxu0 0.0
  %11004 = vmatprep.mubr.f32.mxu0 0.0
  %11005 = vmatmul.mubr.f32.gmra.mrb[0].mxu0 %v10920
  %v11006 = vpop.f32.mrb[0].mxu0
  %v11007 = vadd.f32 0.0, %v11006
  %v11008 = vpop.f32.mrb[0].mxu0
  %11009 = vmatprep.mubr.f32.mxu0 0.0
  %11010 = vmatmul.mubr.f32.gmra.mrb[0].mxu0 %v10923
  %v11011 = vpop.f32.mrb[0].mxu0
  %v11012 = vadd.f32 0.0, %v11011
  %v11013 = vpop.f32.mrb[0].mxu0
  %11014 = vmatprep.mubr.f32.mxu0 0.0
  %11015 = vmatmul.mubr.f32.gmra.mrb[0].mxu0 %v10926
  %v11016 = vpop.f32.mrb[0].mxu0
  %v11017 = vadd.f32 0.0, %v11016
  %v11018 = vpop.f32.mrb[0].mxu0
  %11019 = vmatprep.mubr.f32.mxu0 0.0
  %11020 = vmatmul.mubr.f32.gmra.mrb[0].mxu0 %v10929
  %v11021 = vpop.f32.mrb[0].mxu0
  %v11022 = vadd.f32 0.0, %v11021
  %v11023 = vpop.f32.mrb[0].mxu0
  %11024 = vmatprep.mubr.f32.mxu0 0.0
  %11025 = vmatmul.mubr.f32.gmra.mrb[0].mxu0 %v10932
  %v11026 = vpop.f32.mrb[0].mxu0
  %v11027 = vadd.f32 0.0, %v11026
  %v11028 = vpop.f32.mrb[0].mxu0
  %11029 = vmatprep.mubr.f32.mxu0 0.0
  %11030 = vmatmul.mubr.f32.gmra.mrb[0].mxu0 %v10935
  %v11031 = vpop.f32.mrb[0].mxu0
  %v11032 = vadd.f32 0.0, %v11031
  %v11033 = vpop.f32.mrb[0].mxu0
  %11034 = vmatprep.mubr.f32.mxu0 0.0
  %11035 = vmatmul.mubr.f32.gmra.mrb[0].mxu0 %v10938
  %v11036 = vpop.f32.mrb[0].mxu0
  %v11037 = vadd.f32 0.0, %v11036
  %v11038 = vpop.f32.mrb[0].mxu0
  %11039 = vdwg.mxu0
  %v11040 = vld [vmem:[%s2 + $0x50] sm:$0xff]
  %v11041 = vld [vmem:[%s2 + $0x58] sm:$0x7f]
  %v11046 = vrot.slane %v11022, 4
  %v11047 = vrot.slane %v11027, 4
  %v11048 = vsel %vm38, %v11046, %v11047
  %v11049 = vrot.slane %v11032, 4
  %v11050 = vsel %vm38, %v11047, %v11049
  %v11051 = vrot.slane %v11037, 4
  %v11052 = vsel %vm38, %v11049, %v11051
  %11055 = vrot.lane.b32.xlu0 %v11040, 100
  %v11056 = vpop.permute.xlu0 %11055
  %11057 = vrot.lane.b32.xlu0 %v11041, 100
  %v11058 = vpop.permute.xlu0 %11057
  %v11060 = vsel %vm5429, %v11048, 0
  %v11062 = vsel %vm5429, %v11050, 0
  %v11064 = vsel %vm5429, %v11052, 0
  %v11066 = vsel %vm5429, %v11051, 0
  %v11068 = vsel %vm5438, %v11058, 0
  %11070 = vmatprep.subr.mxu0 0.0
  %11071 = vmatpush1.msra.mxu0 %v11056
  %11072 = vmatprep.subr.mxu0 0.0
  %11073 = vmatpush1.msra.mxu0 %v11068
  %11074 = vmatprep.subr.mxu0 0.0
  %11075 = vmatpush1.msra.mxu0 0.0
  %11076 = vmatprep.subr.mxu0 0.0
  %11077 = vmatpush1.msra.mxu0 0.0
  %11078 = vmatprep.subr.mxu0 0.0
  %11079 = vmatpush1.msra.mxu0 0.0
  %11080 = vmatprep.subr.mxu0 0.0
  %11081 = vmatpush1.msra.mxu0 0.0
  %11082 = vmatprep.subr.mxu0 0.0
  %11083 = vmatpush1.msra.mxu0 0.0
  %11084 = vmatprep.subr.mxu0 0.0
  %11085 = vmatpush1.msra.mxu0 0.0
  %11086 = vmatprep.subr.mxu0 0.0
  %11087 = vmatpush1.msra.mxu0 0.0
  %11088 = vmatprep.subr.mxu0 0.0
  %11089 = vmatpush1.msra.mxu0 0.0
  %11090 = vmatprep.subr.mxu0 0.0
  %11091 = vmatpush1.msra.mxu0 0.0
  %11092 = vmatprep.subr.mxu0 0.0
  %11093 = vmatpush1.msra.mxu0 0.0
  %11094 = vmatprep.subr.mxu0 0.0
  %11095 = vmatpush1.msra.mxu0 0.0
  %11096 = vmatprep.subr.mxu0 0.0
  %11097 = vmatpush1.msra.mxu0 0.0
  %11098 = vmatprep.subr.mxu0 0.0
  %11099 = vmatpush1.msra.mxu0 0.0
  %11100 = vmatprep.subr.mxu0 0.0
  %11101 = vmatpush1.msra.mxu0 0.0
  %11102 = vmatprep.subr.mxu0 0.0
  %11103 = vmatpush1.msra.mxu0 0.0
  %11104 = vmatprep.subr.mxu0 0.0
  %11105 = vmatpush1.msra.mxu0 0.0
  %11106 = vmatprep.subr.mxu0 0.0
  %11107 = vmatpush1.msra.mxu0 0.0
  %11108 = vmatprep.subr.mxu0 0.0
  %11109 = vmatpush1.msra.mxu0 0.0
  %11110 = vmatprep.subr.mxu0 0.0
  %11111 = vmatpush1.msra.mxu0 0.0
  %11112 = vmatprep.subr.mxu0 0.0
  %11113 = vmatpush1.msra.mxu0 0.0
  %11114 = vmatprep.subr.mxu0 0.0
  %11115 = vmatpush1.msra.mxu0 0.0
  %11116 = vmatprep.subr.mxu0 0.0
  %11117 = vmatpush1.msra.mxu0 0.0
  %11118 = vmatprep.subr.mxu0 0.0
  %11119 = vmatpush1.msra.mxu0 0.0
  %11120 = vmatprep.subr.mxu0 0.0
  %11121 = vmatpush1.msra.mxu0 0.0
  %11122 = vmatprep.subr.mxu0 0.0
  %11123 = vmatpush1.msra.mxu0 0.0
  %11124 = vmatprep.subr.mxu0 0.0
  %11125 = vmatpush1.msra.mxu0 0.0
  %11126 = vmatprep.subr.mxu0 0.0
  %11127 = vmatpush1.msra.mxu0 0.0
  %11128 = vmatprep.subr.mxu0 0.0
  %11129 = vmatpush1.msra.mxu0 0.0
  %11130 = vmatprep.subr.mxu0 0.0
  %11131 = vmatpush1.msra.mxu0 0.0
  %11132 = vmatprep.subr.mxu0 0.0
  %11133 = vmatpush1.msra.mxu0 0.0
  %11134 = vmatprep.mubr.f32.mxu0 0.0
  %11135 = vmatmul.mubr.f32.gmra.mrb[0].mxu0 %v11060
  %v11136 = vpop.f32.mrb[0].mxu0
  %v11137 = vadd.f32 0.0, %v11136
  %v11138 = vpop.f32.mrb[0].mxu0
  %11139 = vmatprep.mubr.f32.mxu0 0.0
  %11140 = vmatmul.mubr.f32.gmra.mrb[0].mxu0 %v11062
  %v11141 = vpop.f32.mrb[0].mxu0
  %v11142 = vadd.f32 0.0, %v11141
  %v11143 = vpop.f32.mrb[0].mxu0
  %11144 = vmatprep.mubr.f32.mxu0 0.0
  %11145 = vmatmul.mubr.f32.gmra.mrb[0].mxu0 %v11064
  %v11146 = vpop.f32.mrb[0].mxu0
  %v11147 = vadd.f32 0.0, %v11146
  %v11148 = vpop.f32.mrb[0].mxu0
  %11149 = vmatprep.mubr.f32.mxu0 0.0
  %11150 = vmatmul.mubr.f32.gmra.mrb[0].mxu0 %v11066
  %v11151 = vpop.f32.mrb[0].mxu0
  %v11152 = vadd.f32 0.0, %v11151
  %v11153 = vpop.f32.mrb[0].mxu0
  %11154 = vdwg.mxu0
  %v11156 = vsel %vm5429, %v11007, 0
  %v11159 = vsel %vm5429, %v11012, 0
  %v11162 = vsel %vm5429, %v11017, 0
  %v11164 = vsel %vm5429, %v11022, 0
  %v11166 = vsel %vm5438, %v11041, 0
  %11168 = vmatprep.subr.mxu0 0.0
  %11169 = vmatpush1.msra.mxu0 %v11040
  %11170 = vmatprep.subr.mxu0 0.0
  %11171 = vmatpush1.msra.mxu0 %v11166
  %11172 = vmatprep.subr.mxu0 0.0
  %11173 = vmatpush1.msra.mxu0 0.0
  %11174 = vmatprep.subr.mxu0 0.0
  %11175 = vmatpush1.msra.mxu0 0.0
  %11176 = vmatprep.subr.mxu0 0.0
  %11177 = vmatpush1.msra.mxu0 0.0
  %11178 = vmatprep.subr.mxu0 0.0
  %11179 = vmatpush1.msra.mxu0 0.0
  %11180 = vmatprep.subr.mxu0 0.0
  %11181 = vmatpush1.msra.mxu0 0.0
  %11182 = vmatprep.subr.mxu0 0.0
  %11183 = vmatpush1.msra.mxu0 0.0
  %11184 = vmatprep.subr.mxu0 0.0
  %11185 = vmatpush1.msra.mxu0 0.0
  %11186 = vmatprep.subr.mxu0 0.0
  %11187 = vmatpush1.msra.mxu0 0.0
  %11188 = vmatprep.subr.mxu0 0.0
  %11189 = vmatpush1.msra.mxu0 0.0
  %11190 = vmatprep.subr.mxu0 0.0
  %11191 = vmatpush1.msra.mxu0 0.0
  %11192 = vmatprep.subr.mxu0 0.0
  %11193 = vmatpush1.msra.mxu0 0.0
  %11194 = vmatprep.subr.mxu0 0.0
  %11195 = vmatpush1.msra.mxu0 0.0
  %11196 = vmatprep.subr.mxu0 0.0
  %11197 = vmatpush1.msra.mxu0 0.0
  %11198 = vmatprep.subr.mxu0 0.0
  %11199 = vmatpush1.msra.mxu0 0.0
  %11200 = vmatprep.subr.mxu0 0.0
  %11201 = vmatpush1.msra.mxu0 0.0
  %11202 = vmatprep.subr.mxu0 0.0
  %11203 = vmatpush1.msra.mxu0 0.0
  %11204 = vmatprep.subr.mxu0 0.0
  %11205 = vmatpush1.msra.mxu0 0.0
  %11206 = vmatprep.subr.mxu0 0.0
  %11207 = vmatpush1.msra.mxu0 0.0
  %11208 = vmatprep.subr.mxu0 0.0
  %11209 = vmatpush1.msra.mxu0 0.0
  %11210 = vmatprep.subr.mxu0 0.0
  %11211 = vmatpush1.msra.mxu0 0.0
  %11212 = vmatprep.subr.mxu0 0.0
  %11213 = vmatpush1.msra.mxu0 0.0
  %11214 = vmatprep.subr.mxu0 0.0
  %11215 = vmatpush1.msra.mxu0 0.0
  %11216 = vmatprep.subr.mxu0 0.0
  %11217 = vmatpush1.msra.mxu0 0.0
  %11218 = vmatprep.subr.mxu0 0.0
  %11219 = vmatpush1.msra.mxu0 0.0
  %11220 = vmatprep.subr.mxu0 0.0
  %11221 = vmatpush1.msra.mxu0 0.0
  %11222 = vmatprep.subr.mxu0 0.0
  %11223 = vmatpush1.msra.mxu0 0.0
  %11224 = vmatprep.subr.mxu0 0.0
  %11225 = vmatpush1.msra.mxu0 0.0
  %11226 = vmatprep.subr.mxu0 0.0
  %11227 = vmatpush1.msra.mxu0 0.0
  %11228 = vmatprep.subr.mxu0 0.0
  %11229 = vmatpush1.msra.mxu0 0.0
  %11230 = vmatprep.subr.mxu0 0.0
  %11231 = vmatpush1.msra.mxu0 0.0
  %11232 = vmatprep.mubr.f32.mxu0 0.0
  %11233 = vmatmul.mubr.f32.gmra.mrb[0].mxu0 %v11156
  %v11234 = vpop.f32.mrb[0].mxu0
  %v11235 = vadd.f32 %v11137, %v11234
  %v11236 = vpop.f32.mrb[0].mxu0
  %11237 = vmatprep.mubr.f32.mxu0 0.0
  %11238 = vmatmul.mubr.f32.gmra.mrb[0].mxu0 %v11159
  %v11239 = vpop.f32.mrb[0].mxu0
  %v11240 = vadd.f32 %v11142, %v11239
  %v11241 = vpop.f32.mrb[0].mxu0
  %11242 = vmatprep.mubr.f32.mxu0 0.0
  %11243 = vmatmul.mubr.f32.gmra.mrb[0].mxu0 %v11162
  %v11244 = vpop.f32.mrb[0].mxu0
  %v11245 = vadd.f32 %v11147, %v11244
  %v11246 = vpop.f32.mrb[0].mxu0
  %11247 = vmatprep.mubr.f32.mxu0 0.0
  %11248 = vmatmul.mubr.f32.gmra.mrb[0].mxu0 %v11164
  %v11249 = vpop.f32.mrb[0].mxu0
  %v11250 = vadd.f32 %v11152, %v11249
  %v11251 = vpop.f32.mrb[0].mxu0
  %11252 = vdwg.mxu0
  %v11253 = vld [vmem:[%s3 + $0x180] sm:$0xff]
  %v11254 = vld [vmem:[%s3 + $0x188] sm:$0xff]
  %v11255 = vld [vmem:[%s3 + $0x190] sm:$0xff]
  %v11256 = vld [vmem:[%s3 + $0x198] sm:$0xf]
  %11258 = vset.pattern.permute.xlu0 0
  %11259 = vperm.xlu0 %11258, %v11253
  %v11260 = vpop.permute.xlu0 %11259
  %11263 = vset.pattern.permute.xlu0 0
  %11264 = vperm.xlu0 %11263, %v11254
  %v11265 = vpop.permute.xlu0 %11264
  %11268 = vset.pattern.permute.xlu0 0
  %11269 = vperm.xlu0 %11268, %v11255
  %v11270 = vpop.permute.xlu0 %11269
  %11273 = vset.pattern.permute.xlu0 0
  %11274 = vperm.xlu0 %11273, %v11256
  %v11275 = vpop.permute.xlu0 %11274
  %v11277 = vadd.f32 %v11235, %v11260
  %v11278 = vadd.f32 %v11240, %v11265
  %v11279 = vadd.f32 %v11245, %v11270
  %v11280 = vadd.f32 %v11250, %v11275
  %v11281 = vtanh.pop %v11277
  %v11282 = vtanh.pop %v11278
  %v11283 = vtanh.pop %v11279
  %v11284 = vtanh.pop %v11280
  %s11285 = scalar_lea.vmem %s4, 32
  %11286 = vst.msk [vmem:[%s11285] sm:$0xff] %vm25, %v11281
  %11287 = vst.msk [vmem:[%s11285 + $0x8] sm:$0xff] %vm25, %v11282
  %11288 = vst.msk [vmem:[%s11285 + $0x10] sm:$0xff] %vm25, %v11283
  %11289 = vst.msk [vmem:[%s11285 + $0x18] sm:$0xf] %vm5659, %v11284
  // Predicated region
  $region18: #{_lambda_.1} parent=0 // pred_check
    _
  $region19: #{_lambda_.1} parent=0 // pred_check_branch
    %11291 = sbr.rel (0) target = $region21
  $region20: #{_lambda_.1} parent=0 // pred_region
    _
  $region21: #{_lambda_.1} parent=0 // pred_fallthru
    _
  // Predicated region
  $region22: #{_lambda_.1} parent=0 // pred_check
    _
  $region23: #{_lambda_.1} parent=0 // pred_check_branch
    %11293 = sbr.rel (0) target = $region25
  $region24: #{_lambda_.1} parent=0 // pred_region
    _
  $region25: #{_lambda_.1} parent=0 // pred_fallthru
    _

</llo_original>
